<compile_context>
chip_gen: v7x
topology: tpu7x:2x2x1
jax: 0.10.0
libtpu: 0.0.40
codegen_flags: <defaults>
</compile_context>

<pallas_src>
import jax
import jax.numpy as jnp
from jax.experimental import pallas as pl
from jax.experimental.pallas import tpu as pltpu

CPAD = 128          # lane-dense channel padding for conv1/conv2 outputs
FC1_OUT = 320
FC1_OUT_PAD = 384   # 128-aligned hidden width
FC2_OUT = 10
FC2_OUT_PAD = 128   # lane-dense final output
C1_OUT, C2_IN, C2_OUT = 20, 20, 50
KSIZE = 5


# ----------------------------------------------------------------------------
# Pallas kernels
# ----------------------------------------------------------------------------
def _conv_pool_kernel(p_ref, w_ref, b_ref, o_ref):
    """Fused conv(as matmul) + 2x2 max-pool + bias + ReLU for one image.

    p_ref: (1, 4, Pp, K)  im2col patches, quadrant-major (the 4 positions of each
                          2x2 pool window), rows ordered (oh_pooled, ow_pooled).
    w_ref: (K, CPAD)      bf16 weight matrix (zero-padded channels).
    b_ref: (1, CPAD)      f32 bias (zero-padded).
    o_ref: (1, Pp, CPAD)  pooled activation, lane-dense.
    """
    w = w_ref[...]
    # max-pool commutes with per-channel bias add and ReLU (both monotone), so
    # pool the raw matmul outputs first and apply the epilogue once.
    acc = jnp.dot(p_ref[0, 0], w, preferred_element_type=jnp.float32)
    for q in range(1, 4):
        acc = jnp.maximum(
            acc, jnp.dot(p_ref[0, q], w, preferred_element_type=jnp.float32)
        )
    acc = jnp.maximum(acc + b_ref[...], 0.0)          # f32 epilogue (v5e-safe)
    o_ref[0] = acc.astype(o_ref.dtype)


def _mlp_kernel(x_ref, w1_ref, b1_ref, w2_ref, b2_ref, o_ref):
    """Fused fc1 + ReLU + fc2 on the VMEM-resident flattened activation."""
    h = jnp.dot(x_ref[...], w1_ref[...], preferred_element_type=jnp.float32)
    h = jnp.maximum(h + b1_ref[...], 0.0)                       # f32 epilogue
    out = jnp.dot(h.astype(w2_ref.dtype), w2_ref[...],
                  preferred_element_type=jnp.float32)
    o_ref[...] = (out + b2_ref[...]).astype(o_ref.dtype)


# ----------------------------------------------------------------------------
# Pallas wrappers
# ----------------------------------------------------------------------------
def conv_pool(patches, w_mat, bias):
    """patches: (B, 4, Pp, K) bf16; returns (B, Pp, CPAD) bf16 pooled+ReLU'd."""
    B, _, Pp, K = patches.shape
    Cp = w_mat.shape[1]
    return pl.pallas_call(
        _conv_pool_kernel,
        out_shape=jax.ShapeDtypeStruct((B, Pp, Cp), jnp.bfloat16),
        grid=(B,),
        in_specs=[
            pl.BlockSpec((1, 4, Pp, K), lambda b: (b, 0, 0, 0)),
            pl.BlockSpec((K, Cp), lambda b: (0, 0)),
            pl.BlockSpec((1, Cp), lambda b: (0, 0)),
        ],
        out_specs=pl.BlockSpec((1, Pp, Cp), lambda b: (b, 0, 0)),
        compiler_params=pltpu.CompilerParams(
            dimension_semantics=("parallel",)),
    )(patches, w_mat, bias)


def mlp(x, w1, b1, w2, b2):
    """x: (B, K) bf16 -> (B, FC2_OUT_PAD) f32, fc1+ReLU+fc2 in one kernel."""
    B, K = x.shape
    H = w1.shape[1]
    N = w2.shape[1]
    return pl.pallas_call(
        _mlp_kernel,
        out_shape=jax.ShapeDtypeStruct((B, N), jnp.float32),
        grid=(1,),
        in_specs=[
            pl.BlockSpec((B, K), lambda i: (0, 0)),
            pl.BlockSpec((K, H), lambda i: (0, 0)),
            pl.BlockSpec((1, H), lambda i: (0, 0)),
            pl.BlockSpec((H, N), lambda i: (0, 0)),
            pl.BlockSpec((1, N), lambda i: (0, 0)),
        ],
        out_specs=pl.BlockSpec((B, N), lambda i: (0, 0)),
    )(x, w1, b1, w2, b2)


# ----------------------------------------------------------------------------
# Glue: quadrant-ordered im2col (XLA) so pooling fuses into the conv kernel
# ----------------------------------------------------------------------------
def _im2col_pooled(x_nhwc, ksize, padding):
    """Returns (B, 4, Pp, K) patches.

    Quadrant q = (dh, dw) holds the im2col patches of the stride-2 conv grid
    starting at spatial offset (dh, dw); row (oh_p*OWp + ow_p) corresponds to the
    conv output at (2*oh_p + dh, 2*ow_p + dw).  Max over the 4 quadrants at a
    fixed row == 2x2/stride-2 max pool.  Feature index = (i*ksize + j)*C + c.
    """
    B, H, W, C = x_nhwc.shape
    if padding > 0:
        x_nhwc = jnp.pad(
            x_nhwc, ((0, 0), (padding, padding), (padding, padding), (0, 0))
        )
    OH = H + 2 * padding - ksize + 1
    OW = W + 2 * padding - ksize + 1
    OHp, OWp = OH // 2, OW // 2
    quads = []
    for dh in range(2):
        for dw in range(2):
            pieces = []
            for i in range(ksize):
                for j in range(ksize):
                    r0, c0 = dh + i, dw + j
                    sl = x_nhwc[:, r0: r0 + 2 * OHp: 2, c0: c0 + 2 * OWp: 2, :]
                    pieces.append(sl)                    # (B, OHp, OWp, C)
            q = jnp.stack(pieces, axis=3)                # (B, OHp, OWp, k*k, C)
            quads.append(q.reshape(B, OHp * OWp, ksize * ksize * C))
    return jnp.stack(quads, axis=1), OHp, OWp            # (B, 4, Pp, K)


# ----------------------------------------------------------------------------
# TT parameter construction (deterministic init, contracted to full weights)
# ----------------------------------------------------------------------------
def tt_conv_weight(key, in_factors, out_factors, ranks, ksize):
    """TT-conv cores -> full conv weight of shape (Cout, Cin, KH, KW)."""
    i1, i2 = in_factors
    o1, o2 = out_factors
    r1, r2 = ranks[1], ranks[2]
    k0, k1, k2 = jax.random.split(key, 3)
    g0 = 0.1 * jax.random.normal(k0, (ksize * ksize, r1), dtype=jnp.float32)
    g1 = 0.1 * jax.random.normal(k1, (r1, i1, o1, r2), dtype=jnp.float32)
    g2 = 0.1 * jax.random.normal(k2, (r2, i2, o2), dtype=jnp.float32)
    w = jnp.einsum("ka,aipb,bjq->kijpq", g0, g1, g2)   # (k*k, i1, i2, o1, o2)
    cin, cout = i1 * i2, o1 * o2
    w = w.reshape(ksize, ksize, cin, cout)             # (KH, KW, Cin, Cout)
    return jnp.transpose(w, (3, 2, 0, 1))              # (Cout, Cin, KH, KW)


def tt_linear_weight(key, in_factors, out_factors, ranks):
    """TT-matrix cores -> full weight of shape (in_features, out_features)."""
    d = len(in_factors)
    keys = jax.random.split(key, d)
    cores = [
        0.1
        * jax.random.normal(
            keys[m],
            (ranks[m], in_factors[m], out_factors[m], ranks[m + 1]),
            dtype=jnp.float32,
        )
        for m in range(d)
    ]
    w = cores[0][0]  # (i0, o0, r1)
    for m in range(1, d):
        w = jnp.einsum("IOr,riob->IiOob", w, cores[m])
        I, i, O, o, b = w.shape
        w = w.reshape(I * i, O * o, b)
    return w[..., 0]  # (prod(in_factors), prod(out_factors))


def init_params(key, layer_ranks=(20, 20, 20, 20)):
    r = layer_ranks
    ks = jax.random.split(key, 8)
    return {
        "conv1_w": tt_conv_weight(ks[0], [1, 1], [4, 5], [1, r[0], r[0], 1], 5),
        "conv1_b": 0.1 * jax.random.normal(ks[1], (20,), jnp.float32),
        "conv2_w": tt_conv_weight(ks[2], [4, 5], [5, 10], [1, r[1], r[1], 1], 5),
        "conv2_b": 0.1 * jax.random.normal(ks[3], (50,), jnp.float32),
        "fc1_w": tt_linear_weight(
            ks[4], [5, 5, 5, 10], [4, 4, 4, 5], [1, r[2], r[2], r[2], 1]
        ),
        "fc1_b": 0.1 * jax.random.normal(ks[5], (320,), jnp.float32),
        "fc2_w": tt_linear_weight(
            ks[6], [4, 4, 4, 5], [1, 1, 1, 10], [1, r[3], r[3], r[3], 1]
        ),
        "fc2_b": 0.1 * jax.random.normal(ks[7], (10,), jnp.float32),
    }


def prepare_params(p):
    """One-time setup: PyTorch-layout weights -> padded, permuted, bf16 kernel mats."""
    kp = {}
    # conv1: (20,1,5,5) -> (kh*kw*cin, CPAD); feature row order (i, j, c).
    w1 = jnp.transpose(p["conv1_w"], (2, 3, 1, 0)).reshape(KSIZE * KSIZE * 1, C1_OUT)
    kp["conv1_w"] = jnp.pad(w1, ((0, 0), (0, CPAD - C1_OUT))).astype(jnp.bfloat16)
    kp["conv1_b"] = (
        jnp.pad(p["conv1_b"], (0, CPAD - C1_OUT)).reshape(1, CPAD).astype(jnp.float32)
    )
    # conv2: (50,20,5,5) -> (kh,kw,cin,cout); cin padded to CPAD because conv1's
    # output carries CPAD (zero-padded) channels; cout padded to CPAD.
    w2 = jnp.transpose(p["conv2_w"], (2, 3, 1, 0))
    w2 = jnp.pad(w2, ((0, 0), (0, 0), (0, CPAD - C2_IN), (0, CPAD - C2_OUT)))
    kp["conv2_w"] = w2.reshape(KSIZE * KSIZE * CPAD, CPAD).astype(jnp.bfloat16)
    kp["conv2_b"] = (
        jnp.pad(p["conv2_b"], (0, CPAD - C2_OUT)).reshape(1, CPAD).astype(jnp.float32)
    )
    # fc1: PyTorch flatten is channel-major (row = c*25 + p).  Permute rows to the
    # kernel's (p, c_padded) flatten (row = p*CPAD + c) and pad out 320 -> 384.
    f1 = p["fc1_w"].reshape(C2_OUT, 25, FC1_OUT)      # (c, p, out)
    f1 = jnp.transpose(f1, (1, 0, 2))                 # (p, c, out)
    f1 = jnp.pad(f1, ((0, 0), (0, CPAD - C2_OUT), (0, FC1_OUT_PAD - FC1_OUT)))
    kp["fc1_w"] = f1.reshape(25 * CPAD, FC1_OUT_PAD).astype(jnp.bfloat16)
    kp["fc1_b"] = (
        jnp.pad(p["fc1_b"], (0, FC1_OUT_PAD - FC1_OUT))
        .reshape(1, FC1_OUT_PAD)
        .astype(jnp.float32)
    )
    # fc2: (320,10) -> (384,128); padded rows/cols are zero.
    kp["fc2_w"] = jnp.pad(
        p["fc2_w"], ((0, FC1_OUT_PAD - FC1_OUT), (0, FC2_OUT_PAD - FC2_OUT))
    ).astype(jnp.bfloat16)
    kp["fc2_b"] = (
        jnp.pad(p["fc2_b"], (0, FC2_OUT_PAD - FC2_OUT))
        .reshape(1, FC2_OUT_PAD)
        .astype(jnp.float32)
    )
    return kp


# ----------------------------------------------------------------------------
# Full forward (matches LeNet5_TT2.forward)
# ----------------------------------------------------------------------------
def lenet5_tt2_forward(kp, x_nchw):
    B = x_nchw.shape[0]
    x = jnp.transpose(x_nchw, (0, 2, 3, 1)).astype(jnp.bfloat16)   # NHWC, bf16

    # conv1 (5x5, pad 2) + bias + ReLU + 2x2 max-pool, fused.
    p1, oh1, ow1 = _im2col_pooled(x, KSIZE, padding=2)             # (B,4,196,25)
    a1 = conv_pool(p1, kp["conv1_w"], kp["conv1_b"])               # (B,196,128)
    a1 = a1.reshape(B, oh1, ow1, CPAD)                             # (B,14,14,128)

    # conv2 (5x5, pad 0) + bias + ReLU + 2x2 max-pool, fused.
    p2, oh2, ow2 = _im2col_pooled(a1, KSIZE, padding=0)            # (B,4,25,3200)
    a2 = conv_pool(p2, kp["conv2_w"], kp["conv2_b"])               # (B,25,128)

    # Flatten (free reshape; fc1 rows were permuted/padded at init to match) and
    # run fc1 + ReLU + fc2 in one fused kernel; slice off the lane padding.
    flat = a2.reshape(B, oh2 * ow2 * CPAD)                         # (B, 3200)
    y = mlp(flat, kp["fc1_w"], kp["fc1_b"], kp["fc2_w"], kp["fc2_b"])  # (B,128)
    return y[:, :FC2_OUT]                                          # (B, 10)


if __name__ == "__main__":
    key = jax.random.PRNGKey(0)
    pkey, xkey = jax.random.split(key)
    params = prepare_params(init_params(pkey))
    # LeNet-5 / MNIST-style input: NCHW, 1 channel, 28x28, small batch of 2.
    x = jax.random.normal(xkey, (2, 1, 28, 28), dtype=jnp.float32)

    fwd = jax.jit(lenet5_tt2_forward)
    out = fwd(params, x)
    jax.block_until_ready(out)

    assert out.shape == (2, 10), out.shape
    assert bool(jnp.all(jnp.isfinite(out)))
    print("KERNEL_OK")
</pallas_src>

<mosaic_0001>
module attributes {stable_mosaic.version = 11 : i64} {
  func.func @_conv_pool_kernel(%arg0: i32, %arg1: memref<1x4x196x25xbf16, #tpu.memory_space<vmem>>, %arg2: memref<25x128xbf16, #tpu.memory_space<vmem>>, %arg3: memref<1x128xf32, #tpu.memory_space<vmem>>, %arg4: memref<1x196x128xbf16, #tpu.memory_space<vmem>>) attributes {dimension_semantics = [#tpu.dimension_semantics<parallel>], iteration_bounds = array<i64: 2>, scalar_prefetch = 0 : i64, scratch_operands = 0 : i64, tpu.core_type = #tpu.core_type<tc>, window_params = [{transform_indices = @transform_0, window_bounds = array<i64: 1, 4, 196, 25>}, {pipeline_mode = #tpu.pipeline_mode<synchronous>, transform_indices = @transform_1, window_bounds = array<i64: 25, 128>}, {pipeline_mode = #tpu.pipeline_mode<synchronous>, transform_indices = @transform_2, window_bounds = array<i64: 1, 128>}, {transform_indices = @transform_3, window_bounds = array<i64: 1, 196, 128>}]} {
    %c0 = arith.constant 0 : index
    %c0_0 = arith.constant 0 : index
    %0 = vector.load %arg2[%c0, %c0_0] : memref<25x128xbf16, #tpu.memory_space<vmem>>, vector<25x128xbf16>
    %c0_1 = arith.constant 0 : index
    %c0_2 = arith.constant 0 : index
    %c0_3 = arith.constant 0 : index
    %c0_4 = arith.constant 0 : index
    %1 = vector.load %arg1[%c0_1, %c0_2, %c0_3, %c0_4] : memref<1x4x196x25xbf16, #tpu.memory_space<vmem>>, vector<1x1x196x25xbf16>
    %2 = vector.shape_cast %1 : vector<1x1x196x25xbf16> to vector<196x25xbf16>
    %cst = arith.constant dense<0.000000e+00> : vector<196x128xf32>
    %3 = tpu.matmul %2, %0, %cst {dimension_numbers = #tpu.dot_dimension_numbers<[1], [0], [0], [1], [0, 0, 1, 1], [], []>} : vector<196x25xbf16>, vector<25x128xbf16>, vector<196x128xf32> -> vector<196x128xf32>
    %c0_5 = arith.constant 0 : index
    %c1 = arith.constant 1 : index
    %c0_6 = arith.constant 0 : index
    %c0_7 = arith.constant 0 : index
    %4 = vector.load %arg1[%c0_5, %c1, %c0_6, %c0_7] : memref<1x4x196x25xbf16, #tpu.memory_space<vmem>>, vector<1x1x196x25xbf16>
    %5 = vector.shape_cast %4 : vector<1x1x196x25xbf16> to vector<196x25xbf16>
    %cst_8 = arith.constant dense<0.000000e+00> : vector<196x128xf32>
    %6 = tpu.matmul %5, %0, %cst_8 {dimension_numbers = #tpu.dot_dimension_numbers<[1], [0], [0], [1], [0, 0, 1, 1], [], []>} : vector<196x25xbf16>, vector<25x128xbf16>, vector<196x128xf32> -> vector<196x128xf32>
    %7 = arith.maximumf %3, %6 : vector<196x128xf32>
    %c0_9 = arith.constant 0 : index
    %c2 = arith.constant 2 : index
    %c0_10 = arith.constant 0 : index
    %c0_11 = arith.constant 0 : index
    %8 = vector.load %arg1[%c0_9, %c2, %c0_10, %c0_11] : memref<1x4x196x25xbf16, #tpu.memory_space<vmem>>, vector<1x1x196x25xbf16>
    %9 = vector.shape_cast %8 : vector<1x1x196x25xbf16> to vector<196x25xbf16>
    %cst_12 = arith.constant dense<0.000000e+00> : vector<196x128xf32>
    %10 = tpu.matmul %9, %0, %cst_12 {dimension_numbers = #tpu.dot_dimension_numbers<[1], [0], [0], [1], [0, 0, 1, 1], [], []>} : vector<196x25xbf16>, vector<25x128xbf16>, vector<196x128xf32> -> vector<196x128xf32>
    %11 = arith.maximumf %7, %10 : vector<196x128xf32>
    %c0_13 = arith.constant 0 : index
    %c3 = arith.constant 3 : index
    %c0_14 = arith.constant 0 : index
    %c0_15 = arith.constant 0 : index
    %12 = vector.load %arg1[%c0_13, %c3, %c0_14, %c0_15] : memref<1x4x196x25xbf16, #tpu.memory_space<vmem>>, vector<1x1x196x25xbf16>
    %13 = vector.shape_cast %12 : vector<1x1x196x25xbf16> to vector<196x25xbf16>
    %cst_16 = arith.constant dense<0.000000e+00> : vector<196x128xf32>
    %14 = tpu.matmul %13, %0, %cst_16 {dimension_numbers = #tpu.dot_dimension_numbers<[1], [0], [0], [1], [0, 0, 1, 1], [], []>} : vector<196x25xbf16>, vector<25x128xbf16>, vector<196x128xf32> -> vector<196x128xf32>
    %15 = arith.maximumf %11, %14 : vector<196x128xf32>
    %c0_17 = arith.constant 0 : index
    %c0_18 = arith.constant 0 : index
    %16 = vector.load %arg3[%c0_17, %c0_18] : memref<1x128xf32, #tpu.memory_space<vmem>>, vector<1x128xf32>
    %17 = vector.broadcast %16 : vector<1x128xf32> to vector<196x128xf32>
    %18 = arith.addf %15, %17 : vector<196x128xf32>
    %cst_19 = arith.constant 0.000000e+00 : f32
    %19 = vector.broadcast %cst_19 : f32 to vector<196x128xf32>
    %20 = arith.maximumf %18, %19 : vector<196x128xf32>
    %21 = arith.truncf %20 : vector<196x128xf32> to vector<196x128xbf16>
    %c0_20 = arith.constant 0 : index
    %c0_21 = arith.constant 0 : index
    %c0_22 = arith.constant 0 : index
    %22 = vector.load %arg4[%c0_20, %c0_21, %c0_22] : memref<1x196x128xbf16, #tpu.memory_space<vmem>>, vector<1x196x128xbf16>
    %23 = vector.shape_cast %22 : vector<1x196x128xbf16> to vector<196x128xbf16>
    %24 = vector.shape_cast %21 : vector<196x128xbf16> to vector<1x196x128xbf16>
    tpu.vector_store %arg4[%c0_20, %c0_21, %c0_22], %24 {strides = array<i32>} : memref<1x196x128xbf16, #tpu.memory_space<vmem>>, vector<1x196x128xbf16>,
    return
  }
  func.func @transform_0(%arg0: i32) -> (i32, i32, i32, i32) {
    %c0_i32 = arith.constant 0 : i32
    %c0_i32_0 = arith.constant 0 : i32
    %c0_i32_1 = arith.constant 0 : i32
    %c0_i32_2 = arith.constant 0 : i32
    return %arg0, %c0_i32, %c0_i32_0, %c0_i32_1 : i32, i32, i32, i32
  }
  func.func @transform_1(%arg0: i32) -> (i32, i32) {
    %c0_i32 = arith.constant 0 : i32
    %c0_i32_0 = arith.constant 0 : i32
    %c0_i32_1 = arith.constant 0 : i32
    return %c0_i32, %c0_i32_0 : i32, i32
  }
  func.func @transform_2(%arg0: i32) -> (i32, i32) {
    %c0_i32 = arith.constant 0 : i32
    %c0_i32_0 = arith.constant 0 : i32
    %c0_i32_1 = arith.constant 0 : i32
    return %c0_i32, %c0_i32_0 : i32, i32
  }
  func.func @transform_3(%arg0: i32) -> (i32, i32, i32) {
    %c0_i32 = arith.constant 0 : i32
    %c0_i32_0 = arith.constant 0 : i32
    %c0_i32_1 = arith.constant 0 : i32
    return %arg0, %c0_i32, %c0_i32_0 : i32, i32, i32
  }
}

module attributes {stable_mosaic.version = 11 : i64} {
  func.func @_mlp_kernel(%arg0: i32, %arg1: memref<2x3200xbf16, #tpu.memory_space<vmem>>, %arg2: memref<3200x384xbf16, #tpu.memory_space<vmem>>, %arg3: memref<1x384xf32, #tpu.memory_space<vmem>>, %arg4: memref<384x128xbf16, #tpu.memory_space<vmem>>, %arg5: memref<1x128xf32, #tpu.memory_space<vmem>>, %arg6: memref<2x128xf32, #tpu.memory_space<vmem>>) attributes {dimension_semantics = [#tpu.dimension_semantics<arbitrary>], iteration_bounds = array<i64: 1>, scalar_prefetch = 0 : i64, scratch_operands = 0 : i64, tpu.core_type = #tpu.core_type<tc>, window_params = [{pipeline_mode = #tpu.pipeline_mode<synchronous>, transform_indices = @transform_0, window_bounds = array<i64: 2, 3200>}, {pipeline_mode = #tpu.pipeline_mode<synchronous>, transform_indices = @transform_1, window_bounds = array<i64: 3200, 384>}, {pipeline_mode = #tpu.pipeline_mode<synchronous>, transform_indices = @transform_2, window_bounds = array<i64: 1, 384>}, {pipeline_mode = #tpu.pipeline_mode<synchronous>, transform_indices = @transform_3, window_bounds = array<i64: 384, 128>}, {pipeline_mode = #tpu.pipeline_mode<synchronous>, transform_indices = @transform_4, window_bounds = array<i64: 1, 128>}, {pipeline_mode = #tpu.pipeline_mode<synchronous>, transform_indices = @transform_5, window_bounds = array<i64: 2, 128>}]} {
    %c0 = arith.constant 0 : index
    %c0_0 = arith.constant 0 : index
    %0 = vector.load %arg1[%c0, %c0_0] : memref<2x3200xbf16, #tpu.memory_space<vmem>>, vector<2x3200xbf16>
    %c0_1 = arith.constant 0 : index
    %c0_2 = arith.constant 0 : index
    %1 = vector.load %arg2[%c0_1, %c0_2] : memref<3200x384xbf16, #tpu.memory_space<vmem>>, vector<3200x384xbf16>
    %cst = arith.constant dense<0.000000e+00> : vector<2x384xf32>
    %2 = tpu.matmul %0, %1, %cst {dimension_numbers = #tpu.dot_dimension_numbers<[1], [0], [0], [1], [0, 0, 1, 1], [], []>} : vector<2x3200xbf16>, vector<3200x384xbf16>, vector<2x384xf32> -> vector<2x384xf32>
    %c0_3 = arith.constant 0 : index
    %c0_4 = arith.constant 0 : index
    %3 = vector.load %arg3[%c0_3, %c0_4] : memref<1x384xf32, #tpu.memory_space<vmem>>, vector<1x384xf32>
    %4 = vector.broadcast %3 : vector<1x384xf32> to vector<2x384xf32>
    %5 = arith.addf %2, %4 : vector<2x384xf32>
    %cst_5 = arith.constant 0.000000e+00 : f32
    %6 = vector.broadcast %cst_5 : f32 to vector<2x384xf32>
    %7 = arith.maximumf %5, %6 : vector<2x384xf32>
    %8 = arith.truncf %7 : vector<2x384xf32> to vector<2x384xbf16>
    %c0_6 = arith.constant 0 : index
    %c0_7 = arith.constant 0 : index
    %9 = vector.load %arg4[%c0_6, %c0_7] : memref<384x128xbf16, #tpu.memory_space<vmem>>, vector<384x128xbf16>
    %cst_8 = arith.constant dense<0.000000e+00> : vector<2x128xf32>
    %10 = tpu.matmul %8, %9, %cst_8 {dimension_numbers = #tpu.dot_dimension_numbers<[1], [0], [0], [1], [0, 0, 1, 1], [], []>} : vector<2x384xbf16>, vector<384x128xbf16>, vector<2x128xf32> -> vector<2x128xf32>
    %c0_9 = arith.constant 0 : index
    %c0_10 = arith.constant 0 : index
    %11 = vector.load %arg5[%c0_9, %c0_10] : memref<1x128xf32, #tpu.memory_space<vmem>>, vector<1x128xf32>
    %12 = vector.broadcast %11 : vector<1x128xf32> to vector<2x128xf32>
    %13 = arith.addf %10, %12 : vector<2x128xf32>
    %c0_11 = arith.constant 0 : index
    %c0_12 = arith.constant 0 : index
    %14 = vector.load %arg6[%c0_11, %c0_12] : memref<2x128xf32, #tpu.memory_space<vmem>>, vector<2x128xf32>
    tpu.vector_store %arg6[%c0_11, %c0_12], %13 {strides = array<i32>} : memref<2x128xf32, #tpu.memory_space<vmem>>, vector<2x128xf32>,
    return
  }
  func.func @transform_0(%arg0: i32) -> (i32, i32) {
    %c0_i32 = arith.constant 0 : i32
    %c0_i32_0 = arith.constant 0 : i32
    %c0_i32_1 = arith.constant 0 : i32
    return %c0_i32, %c0_i32_0 : i32, i32
  }
  func.func @transform_1(%arg0: i32) -> (i32, i32) {
    %c0_i32 = arith.constant 0 : i32
    %c0_i32_0 = arith.constant 0 : i32
    %c0_i32_1 = arith.constant 0 : i32
    return %c0_i32, %c0_i32_0 : i32, i32
  }
  func.func @transform_2(%arg0: i32) -> (i32, i32) {
    %c0_i32 = arith.constant 0 : i32
    %c0_i32_0 = arith.constant 0 : i32
    %c0_i32_1 = arith.constant 0 : i32
    return %c0_i32, %c0_i32_0 : i32, i32
  }
  func.func @transform_3(%arg0: i32) -> (i32, i32) {
    %c0_i32 = arith.constant 0 : i32
    %c0_i32_0 = arith.constant 0 : i32
    %c0_i32_1 = arith.constant 0 : i32
    return %c0_i32, %c0_i32_0 : i32, i32
  }
  func.func @transform_4(%arg0: i32) -> (i32, i32) {
    %c0_i32 = arith.constant 0 : i32
    %c0_i32_0 = arith.constant 0 : i32
    %c0_i32_1 = arith.constant 0 : i32
    return %c0_i32, %c0_i32_0 : i32, i32
  }
  func.func @transform_5(%arg0: i32) -> (i32, i32) {
    %c0_i32 = arith.constant 0 : i32
    %c0_i32_0 = arith.constant 0 : i32
    %c0_i32_1 = arith.constant 0 : i32
    return %c0_i32, %c0_i32_0 : i32, i32
  }
}

module attributes {stable_mosaic.version = 11 : i64} {
  func.func @_conv_pool_kernel(%arg0: i32, %arg1: memref<1x4x25x3200xbf16, #tpu.memory_space<vmem>>, %arg2: memref<3200x128xbf16, #tpu.memory_space<vmem>>, %arg3: memref<1x128xf32, #tpu.memory_space<vmem>>, %arg4: memref<1x25x128xbf16, #tpu.memory_space<vmem>>) attributes {dimension_semantics = [#tpu.dimension_semantics<parallel>], iteration_bounds = array<i64: 2>, scalar_prefetch = 0 : i64, scratch_operands = 0 : i64, tpu.core_type = #tpu.core_type<tc>, window_params = [{transform_indices = @transform_0, window_bounds = array<i64: 1, 4, 25, 3200>}, {pipeline_mode = #tpu.pipeline_mode<synchronous>, transform_indices = @transform_1, window_bounds = array<i64: 3200, 128>}, {pipeline_mode = #tpu.pipeline_mode<synchronous>, transform_indices = @transform_2, window_bounds = array<i64: 1, 128>}, {transform_indices = @transform_3, window_bounds = array<i64: 1, 25, 128>}]} {
    %c0 = arith.constant 0 : index
    %c0_0 = arith.constant 0 : index
    %0 = vector.load %arg2[%c0, %c0_0] : memref<3200x128xbf16, #tpu.memory_space<vmem>>, vector<3200x128xbf16>
    %c0_1 = arith.constant 0 : index
    %c0_2 = arith.constant 0 : index
    %c0_3 = arith.constant 0 : index
    %c0_4 = arith.constant 0 : index
    %1 = vector.load %arg1[%c0_1, %c0_2, %c0_3, %c0_4] : memref<1x4x25x3200xbf16, #tpu.memory_space<vmem>>, vector<1x1x25x3200xbf16>
    %2 = vector.shape_cast %1 : vector<1x1x25x3200xbf16> to vector<25x3200xbf16>
    %cst = arith.constant dense<0.000000e+00> : vector<25x128xf32>
    %3 = tpu.matmul %2, %0, %cst {dimension_numbers = #tpu.dot_dimension_numbers<[1], [0], [0], [1], [0, 0, 1, 1], [], []>} : vector<25x3200xbf16>, vector<3200x128xbf16>, vector<25x128xf32> -> vector<25x128xf32>
    %c0_5 = arith.constant 0 : index
    %c1 = arith.constant 1 : index
    %c0_6 = arith.constant 0 : index
    %c0_7 = arith.constant 0 : index
    %4 = vector.load %arg1[%c0_5, %c1, %c0_6, %c0_7] : memref<1x4x25x3200xbf16, #tpu.memory_space<vmem>>, vector<1x1x25x3200xbf16>
    %5 = vector.shape_cast %4 : vector<1x1x25x3200xbf16> to vector<25x3200xbf16>
    %cst_8 = arith.constant dense<0.000000e+00> : vector<25x128xf32>
    %6 = tpu.matmul %5, %0, %cst_8 {dimension_numbers = #tpu.dot_dimension_numbers<[1], [0], [0], [1], [0, 0, 1, 1], [], []>} : vector<25x3200xbf16>, vector<3200x128xbf16>, vector<25x128xf32> -> vector<25x128xf32>
    %7 = arith.maximumf %3, %6 : vector<25x128xf32>
    %c0_9 = arith.constant 0 : index
    %c2 = arith.constant 2 : index
    %c0_10 = arith.constant 0 : index
    %c0_11 = arith.constant 0 : index
    %8 = vector.load %arg1[%c0_9, %c2, %c0_10, %c0_11] : memref<1x4x25x3200xbf16, #tpu.memory_space<vmem>>, vector<1x1x25x3200xbf16>
    %9 = vector.shape_cast %8 : vector<1x1x25x3200xbf16> to vector<25x3200xbf16>
    %cst_12 = arith.constant dense<0.000000e+00> : vector<25x128xf32>
    %10 = tpu.matmul %9, %0, %cst_12 {dimension_numbers = #tpu.dot_dimension_numbers<[1], [0], [0], [1], [0, 0, 1, 1], [], []>} : vector<25x3200xbf16>, vector<3200x128xbf16>, vector<25x128xf32> -> vector<25x128xf32>
    %11 = arith.maximumf %7, %10 : vector<25x128xf32>
    %c0_13 = arith.constant 0 : index
    %c3 = arith.constant 3 : index
    %c0_14 = arith.constant 0 : index
    %c0_15 = arith.constant 0 : index
    %12 = vector.load %arg1[%c0_13, %c3, %c0_14, %c0_15] : memref<1x4x25x3200xbf16, #tpu.memory_space<vmem>>, vector<1x1x25x3200xbf16>
    %13 = vector.shape_cast %12 : vector<1x1x25x3200xbf16> to vector<25x3200xbf16>
    %cst_16 = arith.constant dense<0.000000e+00> : vector<25x128xf32>
    %14 = tpu.matmul %13, %0, %cst_16 {dimension_numbers = #tpu.dot_dimension_numbers<[1], [0], [0], [1], [0, 0, 1, 1], [], []>} : vector<25x3200xbf16>, vector<3200x128xbf16>, vector<25x128xf32> -> vector<25x128xf32>
    %15 = arith.maximumf %11, %14 : vector<25x128xf32>
    %c0_17 = arith.constant 0 : index
    %c0_18 = arith.constant 0 : index
    %16 = vector.load %arg3[%c0_17, %c0_18] : memref<1x128xf32, #tpu.memory_space<vmem>>, vector<1x128xf32>
    %17 = vector.broadcast %16 : vector<1x128xf32> to vector<25x128xf32>
    %18 = arith.addf %15, %17 : vector<25x128xf32>
    %cst_19 = arith.constant 0.000000e+00 : f32
    %19 = vector.broadcast %cst_19 : f32 to vector<25x128xf32>
    %20 = arith.maximumf %18, %19 : vector<25x128xf32>
    %21 = arith.truncf %20 : vector<25x128xf32> to vector<25x128xbf16>
    %c0_20 = arith.constant 0 : index
    %c0_21 = arith.constant 0 : index
    %c0_22 = arith.constant 0 : index
    %22 = vector.load %arg4[%c0_20, %c0_21, %c0_22] : memref<1x25x128xbf16, #tpu.memory_space<vmem>>, vector<1x25x128xbf16>
    %23 = vector.shape_cast %22 : vector<1x25x128xbf16> to vector<25x128xbf16>
    %24 = vector.shape_cast %21 : vector<25x128xbf16> to vector<1x25x128xbf16>
    tpu.vector_store %arg4[%c0_20, %c0_21, %c0_22], %24 {strides = array<i32>} : memref<1x25x128xbf16, #tpu.memory_space<vmem>>, vector<1x25x128xbf16>,
    return
  }
  func.func @transform_0(%arg0: i32) -> (i32, i32, i32, i32) {
    %c0_i32 = arith.constant 0 : i32
    %c0_i32_0 = arith.constant 0 : i32
    %c0_i32_1 = arith.constant 0 : i32
    %c0_i32_2 = arith.constant 0 : i32
    return %arg0, %c0_i32, %c0_i32_0, %c0_i32_1 : i32, i32, i32, i32
  }
  func.func @transform_1(%arg0: i32) -> (i32, i32) {
    %c0_i32 = arith.constant 0 : i32
    %c0_i32_0 = arith.constant 0 : i32
    %c0_i32_1 = arith.constant 0 : i32
    return %c0_i32, %c0_i32_0 : i32, i32
  }
  func.func @transform_2(%arg0: i32) -> (i32, i32) {
    %c0_i32 = arith.constant 0 : i32
    %c0_i32_0 = arith.constant 0 : i32
    %c0_i32_1 = arith.constant 0 : i32
    return %c0_i32, %c0_i32_0 : i32, i32
  }
  func.func @transform_3(%arg0: i32) -> (i32, i32, i32) {
    %c0_i32 = arith.constant 0 : i32
    %c0_i32_0 = arith.constant 0 : i32
    %c0_i32_1 = arith.constant 0 : i32
    return %arg0, %c0_i32, %c0_i32_0 : i32, i32, i32
  }
}

</mosaic_0001>

<llo_original>
// kernel: lenet5_tt2_forward.3
$region0: #{lenet5_tt2_forward.3}
  #allocation0 [shape = 'u32[]', space=smem, size = 0x4, offset = 0x4, fixed_abs, tag = 'smem constant byte address 0x4 - core index']
  #allocation1 [shape = 'u32[144,128]{1,0:T(1,128)}', space=vmem, size = 0x12000, scoped, tag = 'internal scratch']
  %s0 = inlined_call_operand.vmem [shape: bf16[2,4,196,25], index: 0, kind: input, shape index: {}]
  %s1 = inlined_call_operand.vmem [shape: bf16[25,128], index: 1, kind: input, shape index: {}]
  %s2 = inlined_call_operand.vmem [shape: f32[1,128], index: 2, kind: input, shape index: {}]
  %s3 = inlined_call_operand.vmem [shape: bf16[2,196,128], index: 3, kind: output, shape index: {}]
  %s4 = sld [smem:[#allocation0]]
  $region45: #{lenet5_tt2_forward.3} parent=0
    _
  %s6 = ssub.s32 1, %s4
  %s7 = scalar_select 0, %s6, %s4
  loop: start=0, step=1, limit=4
  $region2: #{lenet5_tt2_forward.3} parent=0 // loop_pre_header
    _
  $region3: #{lenet5_tt2_forward.3} parent=0 // loop_header
    %s9 = sphi 0, %s13
    %p10 = scmp.ge.s32.totalorder %s9, 4
    %s19 = sphi 0, %s21
    %s22 = sphi 0, %s19
    %s23 = sphi 0, %s22
    %s39 = sphi 0, %s23
    %s43 = sphi 0, %s43
    %s45 = sphi 0, %s43
    %s46 = sphi 0, %s45
    %s60 = sphi 0, %s46
    %s64 = sphi 0, %s64
    %s66 = sphi 0, %s64
    %s67 = sphi 0, %s66
    %s81 = sphi 0, %s67
    %s87 = sphi 0, %s89
    %s90 = sphi 0, %s87
    %s91 = sphi 0, %s90
    %s107 = sphi 0, %s91
  $region4: #{lenet5_tt2_forward.3} parent=0 // loop_header_branch
    %12 = sbr.rel (%p10) target = $region8
  $region5: #{lenet5_tt2_forward.3} parent=0 // loop_body
    %s14 = ssub.s32 %s9, 1
    %s15 = ssub.s32 %s9, 2
    %s16 = sadd.s32 %s9, 1
    %s17 = ssub.s32 %s9, %s16
    %p18 = scmp.eq.s32.totalorder %s17, 0
    %s20 = sadd.s32 %s19, 1
    %s21 = scalar_select %p18, %s19, %s20
    %p24 = pneg %p18
    %p25 = scmp.eq.s32.totalorder %s9, 1
    %p26 = por %p24, %p25
    %p27 = scmp.ne.s32.totalorder %s19, %s22
    %p28 = scmp.eq.s32.totalorder %s9, 0
    %p29 = por %p27, %p28
    %p30 = scmp.ne.s32.totalorder %s19, %s22
    %p31 = scmp.eq.s32.totalorder %s14, 1
    %p32 = por %p30, %p31
    %p33 = scmp.ne.s32.totalorder %s22, %s23
    %p34 = scmp.eq.s32.totalorder %s14, 0
    %p35 = por %p33, %p34
    %p36 = scmp.ne.s32.totalorder %s22, %s23
    %p37 = scmp.eq.s32.totalorder %s15, 1
    %p38 = por %p36, %p37
    %p40 = scmp.ne.s32.totalorder %s23, %s39
    %p41 = scmp.eq.s32.totalorder %s15, 0
    %p42 = por %p40, %p41
    %s44 = sadd.s32 %s43, 1
    %p47 = scmp.eq.s32.totalorder %s9, 1
    %p48 = scmp.ne.s32.totalorder %s43, %s45
    %p49 = scmp.eq.s32.totalorder %s9, 0
    %p50 = por %p48, %p49
    %p51 = scmp.ne.s32.totalorder %s43, %s45
    %p52 = scmp.eq.s32.totalorder %s14, 1
    %p53 = por %p51, %p52
    %p54 = scmp.ne.s32.totalorder %s45, %s46
    %p55 = scmp.eq.s32.totalorder %s14, 0
    %p56 = por %p54, %p55
    %p57 = scmp.ne.s32.totalorder %s45, %s46
    %p58 = scmp.eq.s32.totalorder %s15, 1
    %p59 = por %p57, %p58
    %p61 = scmp.ne.s32.totalorder %s46, %s60
    %p62 = scmp.eq.s32.totalorder %s15, 0
    %p63 = por %p61, %p62
    %s65 = sadd.s32 %s64, 1
    %p68 = scmp.eq.s32.totalorder %s9, 1
    %p69 = scmp.ne.s32.totalorder %s64, %s66
    %p70 = scmp.eq.s32.totalorder %s9, 0
    %p71 = por %p69, %p70
    %p72 = scmp.ne.s32.totalorder %s64, %s66
    %p73 = scmp.eq.s32.totalorder %s14, 1
    %p74 = por %p72, %p73
    %p75 = scmp.ne.s32.totalorder %s66, %s67
    %p76 = scmp.eq.s32.totalorder %s14, 0
    %p77 = por %p75, %p76
    %p78 = scmp.ne.s32.totalorder %s66, %s67
    %p79 = scmp.eq.s32.totalorder %s15, 1
    %p80 = por %p78, %p79
    %p82 = scmp.ne.s32.totalorder %s67, %s81
    %p83 = scmp.eq.s32.totalorder %s15, 0
    %p84 = por %p82, %p83
    %s85 = ssub.s32 %s9, %s16
    %p86 = scmp.eq.s32.totalorder %s85, 0
    %s88 = sadd.s32 %s87, 1
    %s89 = scalar_select %p86, %s87, %s88
    %p92 = pneg %p86
    %p93 = scmp.eq.s32.totalorder %s9, 1
    %p94 = por %p92, %p93
    %p95 = scmp.ne.s32.totalorder %s87, %s90
    %p96 = scmp.eq.s32.totalorder %s9, 0
    %p97 = por %p95, %p96
    %p98 = scmp.ne.s32.totalorder %s87, %s90
    %p99 = scmp.eq.s32.totalorder %s14, 1
    %p100 = por %p98, %p99
    %p101 = scmp.ne.s32.totalorder %s90, %s91
    %p102 = scmp.eq.s32.totalorder %s14, 0
    %p103 = por %p101, %p102
    %p104 = scmp.ne.s32.totalorder %s90, %s91
    %p105 = scmp.eq.s32.totalorder %s15, 1
    %p106 = por %p104, %p105
    %p108 = scmp.ne.s32.totalorder %s91, %s107
    %p109 = scmp.eq.s32.totalorder %s15, 0
    %p110 = por %p108, %p109
    %p111 = scmp.le.s32.totalorder 1, %s9
    %p112 = scmp.lt.s32.totalorder %s9, 3
    %p113 = pnand %p111, %p112
    %p114 = pneg %p113
    // Predicated region
    $region9: #{lenet5_tt2_forward.3} parent=5 // pred_check
      _
    $region10: #{lenet5_tt2_forward.3} parent=5 // pred_check_branch
      %116 = sbr.rel (%p113) target = $region12
    $region11: #{lenet5_tt2_forward.3} parent=5 // pred_region
      %s117 = ssub.s32 %s9, 1
      // Predicated region
      $region13: #{lenet5_tt2_forward.3} parent=11 // pred_check
        %p118 = pneg %p56
      $region14: #{lenet5_tt2_forward.3} parent=11 // pred_check_branch
        %120 = sbr.rel (%p118) target = $region16
      $region15: #{lenet5_tt2_forward.3} parent=11 // pred_region
        _
      $region16: #{lenet5_tt2_forward.3} parent=11 // pred_fallthru
        _
      // Predicated region
      $region17: #{lenet5_tt2_forward.3} parent=11 // pred_check
        %p121 = pneg %p77
      $region18: #{lenet5_tt2_forward.3} parent=11 // pred_check_branch
        %123 = sbr.rel (%p121) target = $region20
      $region19: #{lenet5_tt2_forward.3} parent=11 // pred_region
        _
      $region20: #{lenet5_tt2_forward.3} parent=11 // pred_fallthru
        _
    $region12: #{lenet5_tt2_forward.3} parent=5 // pred_fallthru
      _
    %p124 = scmp.lt.s32.totalorder %s9, 2
    // Predicated region
    $region21: #{lenet5_tt2_forward.3} parent=5 // pred_check
      %p125 = pneg %p124
    $region22: #{lenet5_tt2_forward.3} parent=5 // pred_check_branch
      %127 = sbr.rel (%p125) target = $region24
    $region23: #{lenet5_tt2_forward.3} parent=5 // pred_region
      // Predicated region
      $region25: #{lenet5_tt2_forward.3} parent=23 // pred_check
        %p128 = pneg %p29
      $region26: #{lenet5_tt2_forward.3} parent=23 // pred_check_branch
        %130 = sbr.rel (%p128) target = $region28
      $region27: #{lenet5_tt2_forward.3} parent=23 // pred_region
        %p131 = scmp.lt.s32.totalorder %s9, 1
        %s132 = scalar_select %p131, %s9, 1
        %s133 = smul.addr %s132, 100
        %s134 = smul.addr %s133, 4
        %s135 = scalar_lea.vmem %s0, %s134
      $region28: #{lenet5_tt2_forward.3} parent=23 // pred_fallthru
        _
    $region24: #{lenet5_tt2_forward.3} parent=5 // pred_fallthru
      _
    %p136 = scmp.le.s32.totalorder 1, %s9
    %p137 = scmp.lt.s32.totalorder %s9, 3
    %p138 = pnand %p136, %p137
    %p139 = pneg %p138
    // Predicated region
    $region29: #{lenet5_tt2_forward.3} parent=5 // pred_check
      _
    $region30: #{lenet5_tt2_forward.3} parent=5 // pred_check_branch
      %141 = sbr.rel (%p138) target = $region32
    $region31: #{lenet5_tt2_forward.3} parent=5 // pred_region
      %s142 = ssub.s32 %s9, 1
      %p143 = scmp.lt.s32.totalorder %s14, 1
      %s144 = scalar_select %p143, %s14, 1
      %s145 = smul.addr %s144, 100
      %s146 = smul.addr %s145, 4
      %s147 = scalar_lea.vmem %s0, %s146
      %p148 = pneg %p35
      %p149 = pneg %p32
      %p150 = pneg %p56
      %p151 = pneg %p53
      %p152 = pneg %p77
      %p153 = pneg %p74
      %p154 = pneg %p103
      %p155 = pneg %p100
      %p156 = scmp.lt.s32.totalorder %s14, 1
      %s157 = scalar_select %p156, %s14, 1
      %s158 = smul.addr %s157, 25
      %s159 = smul.addr %s158, 4
      %s160 = scalar_lea.vmem %s3, %s159
      %p161 = scmp.lt.s32.totalorder %s14, 1
      %s162 = scalar_select %p161, %s14, 1
      %s163 = smul.addr %s162, 100
      %s164 = smul.addr %s163, 4
      %s165 = scalar_lea.vmem %s0, %s164
      %p166 = scmp.lt.s32.totalorder %s14, 1
      %s167 = scalar_select %p166, %s14, 1
      %s168 = smul.addr %s167, 25
      %s169 = smul.addr %s168, 4
      %s170 = scalar_lea.vmem %s3, %s169
      %v172 = vld [vmem:[%s1] sm:$0xf]
      %v173 = vld [vmem:[%s1 + $0x4] sm:$0xf]
      %v174 = vld [vmem:[%s1 + $0x8] sm:$0xf]
      %v175 = vld [vmem:[%s1 + $0xc] sm:$0x1]
      %v176 = vld [vmem:[%s165] sm:$0xf]
      %v177 = vld [vmem:[%s165 + $0x4] sm:$0xf]
      %v178 = vld [vmem:[%s165 + $0x8] sm:$0xf]
      %v179 = vld [vmem:[%s165 + $0xc] sm:$0xf]
      %v180 = vld [vmem:[%s165 + $0x10] sm:$0xf]
      %v181 = vld [vmem:[%s165 + $0x14] sm:$0xf]
      %v182 = vld [vmem:[%s165 + $0x18] sm:$0xf]
      %v183 = vld [vmem:[%s165 + $0x1c] sm:$0xf]
      %v184 = vld [vmem:[%s165 + $0x20] sm:$0xf]
      %v185 = vld [vmem:[%s165 + $0x24] sm:$0xf]
      %v186 = vld [vmem:[%s165 + $0x28] sm:$0xf]
      %v187 = vld [vmem:[%s165 + $0x2c] sm:$0xf]
      %v188 = vld [vmem:[%s165 + $0x30] sm:$0xf]
      %v189 = vld [vmem:[%s165 + $0x34] sm:$0xf]
      %v190 = vld [vmem:[%s165 + $0x38] sm:$0xf]
      %v191 = vld [vmem:[%s165 + $0x3c] sm:$0xf]
      %v192 = vld [vmem:[%s165 + $0x40] sm:$0xf]
      %v193 = vld [vmem:[%s165 + $0x44] sm:$0xf]
      %v194 = vld [vmem:[%s165 + $0x48] sm:$0xf]
      %v195 = vld [vmem:[%s165 + $0x4c] sm:$0xf]
      %v196 = vld [vmem:[%s165 + $0x50] sm:$0xf]
      %v197 = vld [vmem:[%s165 + $0x54] sm:$0xf]
      %v198 = vld [vmem:[%s165 + $0x58] sm:$0xf]
      %v199 = vld [vmem:[%s165 + $0x5c] sm:$0xf]
      %v200 = vld [vmem:[%s165 + $0x60] sm:$0x3]
      %v226 = vunpack.c.l.b16 %v176
      %v227 = vunpack.c.l.b16 %v177
      %v228 = vunpack.c.l.b16 %v178
      %v229 = vunpack.c.l.b16 %v179
      %v230 = vunpack.c.l.b16 %v180
      %v231 = vunpack.c.l.b16 %v181
      %v232 = vunpack.c.l.b16 %v182
      %v233 = vunpack.c.l.b16 %v183
      %v234 = vunpack.c.l.b16 %v184
      %v235 = vunpack.c.l.b16 %v185
      %v236 = vunpack.c.l.b16 %v186
      %v237 = vunpack.c.l.b16 %v187
      %v238 = vunpack.c.l.b16 %v188
      %v239 = vunpack.c.l.b16 %v189
      %v240 = vunpack.c.l.b16 %v190
      %v241 = vunpack.c.l.b16 %v191
      %v242 = vunpack.c.l.b16 %v192
      %v243 = vunpack.c.l.b16 %v193
      %v244 = vunpack.c.l.b16 %v194
      %v245 = vunpack.c.l.b16 %v195
      %v246 = vunpack.c.l.b16 %v196
      %v247 = vunpack.c.l.b16 %v197
      %v248 = vunpack.c.l.b16 %v198
      %v249 = vunpack.c.l.b16 %v199
      %v250 = vunpack.c.l.b16 %v200
      %v251 = vpack.c.b16 %v227, %v226
      %v252 = vpack.c.b16 %v229, %v228
      %v253 = vpack.c.b16 %v231, %v230
      %v254 = vpack.c.b16 %v233, %v232
      %v255 = vpack.c.b16 %v235, %v234
      %v256 = vpack.c.b16 %v237, %v236
      %v257 = vpack.c.b16 %v239, %v238
      %v258 = vpack.c.b16 %v241, %v240
      %v259 = vpack.c.b16 %v243, %v242
      %v260 = vpack.c.b16 %v245, %v244
      %v261 = vpack.c.b16 %v247, %v246
      %v262 = vpack.c.b16 %v249, %v248
      %v263 = vpack.c.b16 %v250, %v250
      %v268 = vunpack.c.l.b16 %v172
      %v269 = vunpack.c.l.b16 %v173
      %v270 = vunpack.c.l.b16 %v174
      %v271 = vunpack.c.l.b16 %v175
      %v272 = vpack.c.b16 %v269, %v268
      %v273 = vpack.c.b16 %v271, %v270
      %vm275 = vcmask 203776
      %v277 = vsel %vm275, %v251, 0
      %v280 = vsel %vm275, %v252, 0
      %v283 = vsel %vm275, %v253, 0
      %v286 = vsel %vm275, %v254, 0
      %v289 = vsel %vm275, %v255, 0
      %v292 = vsel %vm275, %v256, 0
      %v295 = vsel %vm275, %v257, 0
      %v298 = vsel %vm275, %v258, 0
      %v301 = vsel %vm275, %v259, 0
      %v304 = vsel %vm275, %v260, 0
      %v307 = vsel %vm275, %v261, 0
      %v310 = vsel %vm275, %v262, 0
      %v313 = vsel %vm275, %v263, 0
      %vm315 = vcmask 1043456
      %vm316 = vcmask 1044480
      %v317 = vsel %vm315, 4294967295, 65535
      %v318 = vsel %vm316, %v317, 0
      %v320 = vand.u32 %v273, %v318
      %322 = vmatprep.subr.bf16.mxu0 0
      %323 = vmatpush1.bf16.msra.mxu0 %v272
      %324 = vmatprep.subr.bf16.mxu0 0
      %325 = vmatpush1.bf16.msra.mxu0 %v320
      %326 = vmatprep.subr.bf16.mxu0 0
      %327 = vmatpush1.bf16.msra.mxu0 0
      %328 = vmatprep.subr.bf16.mxu0 0
      %329 = vmatpush1.bf16.msra.mxu0 0
      %330 = vmatprep.subr.bf16.mxu0 0
      %331 = vmatpush1.bf16.msra.mxu0 0
      %332 = vmatprep.subr.bf16.mxu0 0
      %333 = vmatpush1.bf16.msra.mxu0 0
      %334 = vmatprep.subr.bf16.mxu0 0
      %335 = vmatpush1.bf16.msra.mxu0 0
      %336 = vmatprep.subr.bf16.mxu0 0
      %337 = vmatpush1.bf16.msra.mxu0 0
      %338 = vmatprep.subr.bf16.mxu0 0
      %339 = vmatpush1.bf16.msra.mxu0 0
      %340 = vmatprep.subr.bf16.mxu0 0
      %341 = vmatpush1.bf16.msra.mxu0 0
      %342 = vmatprep.subr.bf16.mxu0 0
      %343 = vmatpush1.bf16.msra.mxu0 0
      %344 = vmatprep.subr.bf16.mxu0 0
      %345 = vmatpush1.bf16.msra.mxu0 0
      %346 = vmatprep.subr.bf16.mxu0 0
      %347 = vmatpush1.bf16.msra.mxu0 0
      %348 = vmatprep.subr.bf16.mxu0 0
      %349 = vmatpush1.bf16.msra.mxu0 0
      %350 = vmatprep.subr.bf16.mxu0 0
      %351 = vmatpush1.bf16.msra.mxu0 0
      %352 = vmatprep.subr.bf16.mxu0 0
      %353 = vmatpush1.bf16.msra.mxu0 0
      %354 = vmatprep.mubr.bf16.mxu0 0
      %355 = vmatmul.mubr.bf16.gmra.mrb[0].mxu0 %v277
      %v356 = vpop.f32.mrb[0].mxu0
      %v357 = vadd.f32 0.0, %v356
      %v358 = vpop.f32.mrb[0].mxu0
      %v359 = vpop.f32.mrb[0].mxu0
      %v360 = vadd.f32 0.0, %v359
      %v361 = vpop.f32.mrb[0].mxu0
      %362 = vmatprep.mubr.bf16.mxu0 0
      %363 = vmatmul.mubr.bf16.gmra.mrb[0].mxu0 %v280
      %v364 = vpop.f32.mrb[0].mxu0
      %v365 = vadd.f32 0.0, %v364
      %v366 = vpop.f32.mrb[0].mxu0
      %v367 = vpop.f32.mrb[0].mxu0
      %v368 = vadd.f32 0.0, %v367
      %v369 = vpop.f32.mrb[0].mxu0
      %370 = vmatprep.mubr.bf16.mxu0 0
      %371 = vmatmul.mubr.bf16.gmra.mrb[0].mxu0 %v283
      %v372 = vpop.f32.mrb[0].mxu0
      %v373 = vadd.f32 0.0, %v372
      %v374 = vpop.f32.mrb[0].mxu0
      %v375 = vpop.f32.mrb[0].mxu0
      %v376 = vadd.f32 0.0, %v375
      %v377 = vpop.f32.mrb[0].mxu0
      %378 = vmatprep.mubr.bf16.mxu0 0
      %379 = vmatmul.mubr.bf16.gmra.mrb[0].mxu0 %v286
      %v380 = vpop.f32.mrb[0].mxu0
      %v381 = vadd.f32 0.0, %v380
      %v382 = vpop.f32.mrb[0].mxu0
      %v383 = vpop.f32.mrb[0].mxu0
      %v384 = vadd.f32 0.0, %v383
      %v385 = vpop.f32.mrb[0].mxu0
      %386 = vmatprep.mubr.bf16.mxu0 0
      %387 = vmatmul.mubr.bf16.gmra.mrb[0].mxu0 %v289
      %v388 = vpop.f32.mrb[0].mxu0
      %v389 = vadd.f32 0.0, %v388
      %v390 = vpop.f32.mrb[0].mxu0
      %v391 = vpop.f32.mrb[0].mxu0
      %v392 = vadd.f32 0.0, %v391
      %v393 = vpop.f32.mrb[0].mxu0
      %394 = vmatprep.mubr.bf16.mxu0 0
      %395 = vmatmul.mubr.bf16.gmra.mrb[0].mxu0 %v292
      %v396 = vpop.f32.mrb[0].mxu0
      %v397 = vadd.f32 0.0, %v396
      %v398 = vpop.f32.mrb[0].mxu0
      %v399 = vpop.f32.mrb[0].mxu0
      %v400 = vadd.f32 0.0, %v399
      %v401 = vpop.f32.mrb[0].mxu0
      %402 = vmatprep.mubr.bf16.mxu0 0
      %403 = vmatmul.mubr.bf16.gmra.mrb[0].mxu0 %v295
      %v404 = vpop.f32.mrb[0].mxu0
      %v405 = vadd.f32 0.0, %v404
      %v406 = vpop.f32.mrb[0].mxu0
      %v407 = vpop.f32.mrb[0].mxu0
      %v408 = vadd.f32 0.0, %v407
      %v409 = vpop.f32.mrb[0].mxu0
      %410 = vmatprep.mubr.bf16.mxu0 0
      %411 = vmatmul.mubr.bf16.gmra.mrb[0].mxu0 %v298
      %v412 = vpop.f32.mrb[0].mxu0
      %v413 = vadd.f32 0.0, %v412
      %v414 = vpop.f32.mrb[0].mxu0
      %v415 = vpop.f32.mrb[0].mxu0
      %v416 = vadd.f32 0.0, %v415
      %v417 = vpop.f32.mrb[0].mxu0
      %418 = vmatprep.mubr.bf16.mxu0 0
      %419 = vmatmul.mubr.bf16.gmra.mrb[0].mxu0 %v301
      %v420 = vpop.f32.mrb[0].mxu0
      %v421 = vadd.f32 0.0, %v420
      %v422 = vpop.f32.mrb[0].mxu0
      %v423 = vpop.f32.mrb[0].mxu0
      %v424 = vadd.f32 0.0, %v423
      %v425 = vpop.f32.mrb[0].mxu0
      %426 = vmatprep.mubr.bf16.mxu0 0
      %427 = vmatmul.mubr.bf16.gmra.mrb[0].mxu0 %v304
      %v428 = vpop.f32.mrb[0].mxu0
      %v429 = vadd.f32 0.0, %v428
      %v430 = vpop.f32.mrb[0].mxu0
      %v431 = vpop.f32.mrb[0].mxu0
      %v432 = vadd.f32 0.0, %v431
      %v433 = vpop.f32.mrb[0].mxu0
      %434 = vmatprep.mubr.bf16.mxu0 0
      %435 = vmatmul.mubr.bf16.gmra.mrb[0].mxu0 %v307
      %v436 = vpop.f32.mrb[0].mxu0
      %v437 = vadd.f32 0.0, %v436
      %v438 = vpop.f32.mrb[0].mxu0
      %v439 = vpop.f32.mrb[0].mxu0
      %v440 = vadd.f32 0.0, %v439
      %v441 = vpop.f32.mrb[0].mxu0
      %442 = vmatprep.mubr.bf16.mxu0 0
      %443 = vmatmul.mubr.bf16.gmra.mrb[0].mxu0 %v310
      %v444 = vpop.f32.mrb[0].mxu0
      %v445 = vadd.f32 0.0, %v444
      %v446 = vpop.f32.mrb[0].mxu0
      %v447 = vpop.f32.mrb[0].mxu0
      %v448 = vadd.f32 0.0, %v447
      %v449 = vpop.f32.mrb[0].mxu0
      %450 = vmatprep.mubr.bf16.mxu0 0
      %451 = vmatmul.mubr.bf16.gmra.mrb[0].mxu0 %v313
      %v452 = vpop.f32.mrb[0].mxu0
      %v453 = vadd.f32 0.0, %v452
      %v454 = vpop.f32.mrb[0].mxu0
      %v455 = vpop.f32.mrb[0].mxu0
      %v456 = vpop.f32.mrb[0].mxu0
      %457 = vdwg.mxu0
      %s458 = scalar_lea.vmem %s165, 100
      %v459 = vld [vmem:[%s458] sm:$0xf]
      %v460 = vld [vmem:[%s458 + $0x4] sm:$0xf]
      %v461 = vld [vmem:[%s458 + $0x8] sm:$0xf]
      %v462 = vld [vmem:[%s458 + $0xc] sm:$0xf]
      %v463 = vld [vmem:[%s458 + $0x10] sm:$0xf]
      %v464 = vld [vmem:[%s458 + $0x14] sm:$0xf]
      %v465 = vld [vmem:[%s458 + $0x18] sm:$0xf]
      %v466 = vld [vmem:[%s458 + $0x1c] sm:$0xf]
      %v467 = vld [vmem:[%s458 + $0x20] sm:$0xf]
      %v468 = vld [vmem:[%s458 + $0x24] sm:$0xf]
      %v469 = vld [vmem:[%s458 + $0x28] sm:$0xf]
      %v470 = vld [vmem:[%s458 + $0x2c] sm:$0xf]
      %v471 = vld [vmem:[%s458 + $0x30] sm:$0xf]
      %v472 = vld [vmem:[%s458 + $0x34] sm:$0xf]
      %v473 = vld [vmem:[%s458 + $0x38] sm:$0xf]
      %v474 = vld [vmem:[%s458 + $0x3c] sm:$0xf]
      %v475 = vld [vmem:[%s458 + $0x40] sm:$0xf]
      %v476 = vld [vmem:[%s458 + $0x44] sm:$0xf]
      %v477 = vld [vmem:[%s458 + $0x48] sm:$0xf]
      %v478 = vld [vmem:[%s458 + $0x4c] sm:$0xf]
      %v479 = vld [vmem:[%s458 + $0x50] sm:$0xf]
      %v480 = vld [vmem:[%s458 + $0x54] sm:$0xf]
      %v481 = vld [vmem:[%s458 + $0x58] sm:$0xf]
      %v482 = vld [vmem:[%s458 + $0x5c] sm:$0xf]
      %v483 = vld [vmem:[%s458 + $0x60] sm:$0x3]
      %v509 = vunpack.c.l.b16 %v459
      %v510 = vunpack.c.l.b16 %v460
      %v511 = vunpack.c.l.b16 %v461
      %v512 = vunpack.c.l.b16 %v462
      %v513 = vunpack.c.l.b16 %v463
      %v514 = vunpack.c.l.b16 %v464
      %v515 = vunpack.c.l.b16 %v465
      %v516 = vunpack.c.l.b16 %v466
      %v517 = vunpack.c.l.b16 %v467
      %v518 = vunpack.c.l.b16 %v468
      %v519 = vunpack.c.l.b16 %v469
      %v520 = vunpack.c.l.b16 %v470
      %v521 = vunpack.c.l.b16 %v471
      %v522 = vunpack.c.l.b16 %v472
      %v523 = vunpack.c.l.b16 %v473
      %v524 = vunpack.c.l.b16 %v474
      %v525 = vunpack.c.l.b16 %v475
      %v526 = vunpack.c.l.b16 %v476
      %v527 = vunpack.c.l.b16 %v477
      %v528 = vunpack.c.l.b16 %v478
      %v529 = vunpack.c.l.b16 %v479
      %v530 = vunpack.c.l.b16 %v480
      %v531 = vunpack.c.l.b16 %v481
      %v532 = vunpack.c.l.b16 %v482
      %v533 = vunpack.c.l.b16 %v483
      %v534 = vpack.c.b16 %v510, %v509
      %v535 = vpack.c.b16 %v512, %v511
      %v536 = vpack.c.b16 %v514, %v513
      %v537 = vpack.c.b16 %v516, %v515
      %v538 = vpack.c.b16 %v518, %v517
      %v539 = vpack.c.b16 %v520, %v519
      %v540 = vpack.c.b16 %v522, %v521
      %v541 = vpack.c.b16 %v524, %v523
      %v542 = vpack.c.b16 %v526, %v525
      %v543 = vpack.c.b16 %v528, %v527
      %v544 = vpack.c.b16 %v530, %v529
      %v545 = vpack.c.b16 %v532, %v531
      %v546 = vpack.c.b16 %v533, %v533
      %v548 = vsel %vm275, %v534, 0
      %v551 = vsel %vm275, %v535, 0
      %v554 = vsel %vm275, %v536, 0
      %v557 = vsel %vm275, %v537, 0
      %v560 = vsel %vm275, %v538, 0
      %v563 = vsel %vm275, %v539, 0
      %v566 = vsel %vm275, %v540, 0
      %v569 = vsel %vm275, %v541, 0
      %v572 = vsel %vm275, %v542, 0
      %v575 = vsel %vm275, %v543, 0
      %v578 = vsel %vm275, %v544, 0
      %v581 = vsel %vm275, %v545, 0
      %v584 = vsel %vm275, %v546, 0
      %586 = vmatprep.subr.bf16.mxu0 0
      %587 = vmatpush1.bf16.msra.mxu0 %v272
      %588 = vmatprep.subr.bf16.mxu0 0
      %589 = vmatpush1.bf16.msra.mxu0 %v320
      %590 = vmatprep.subr.bf16.mxu0 0
      %591 = vmatpush1.bf16.msra.mxu0 0
      %592 = vmatprep.subr.bf16.mxu0 0
      %593 = vmatpush1.bf16.msra.mxu0 0
      %594 = vmatprep.subr.bf16.mxu0 0
      %595 = vmatpush1.bf16.msra.mxu0 0
      %596 = vmatprep.subr.bf16.mxu0 0
      %597 = vmatpush1.bf16.msra.mxu0 0
      %598 = vmatprep.subr.bf16.mxu0 0
      %599 = vmatpush1.bf16.msra.mxu0 0
      %600 = vmatprep.subr.bf16.mxu0 0
      %601 = vmatpush1.bf16.msra.mxu0 0
      %602 = vmatprep.subr.bf16.mxu0 0
      %603 = vmatpush1.bf16.msra.mxu0 0
      %604 = vmatprep.subr.bf16.mxu0 0
      %605 = vmatpush1.bf16.msra.mxu0 0
      %606 = vmatprep.subr.bf16.mxu0 0
      %607 = vmatpush1.bf16.msra.mxu0 0
      %608 = vmatprep.subr.bf16.mxu0 0
      %609 = vmatpush1.bf16.msra.mxu0 0
      %610 = vmatprep.subr.bf16.mxu0 0
      %611 = vmatpush1.bf16.msra.mxu0 0
      %612 = vmatprep.subr.bf16.mxu0 0
      %613 = vmatpush1.bf16.msra.mxu0 0
      %614 = vmatprep.subr.bf16.mxu0 0
      %615 = vmatpush1.bf16.msra.mxu0 0
      %616 = vmatprep.subr.bf16.mxu0 0
      %617 = vmatpush1.bf16.msra.mxu0 0
      %618 = vmatprep.mubr.bf16.mxu0 0
      %619 = vmatmul.mubr.bf16.gmra.mrb[0].mxu0 %v548
      %v620 = vpop.f32.mrb[0].mxu0
      %v621 = vadd.f32 0.0, %v620
      %v622 = vpop.f32.mrb[0].mxu0
      %v623 = vpop.f32.mrb[0].mxu0
      %v624 = vadd.f32 0.0, %v623
      %v625 = vpop.f32.mrb[0].mxu0
      %626 = vmatprep.mubr.bf16.mxu0 0
      %627 = vmatmul.mubr.bf16.gmra.mrb[0].mxu0 %v551
      %v628 = vpop.f32.mrb[0].mxu0
      %v629 = vadd.f32 0.0, %v628
      %v630 = vpop.f32.mrb[0].mxu0
      %v631 = vpop.f32.mrb[0].mxu0
      %v632 = vadd.f32 0.0, %v631
      %v633 = vpop.f32.mrb[0].mxu0
      %634 = vmatprep.mubr.bf16.mxu0 0
      %635 = vmatmul.mubr.bf16.gmra.mrb[0].mxu0 %v554
      %v636 = vpop.f32.mrb[0].mxu0
      %v637 = vadd.f32 0.0, %v636
      %v638 = vpop.f32.mrb[0].mxu0
      %v639 = vpop.f32.mrb[0].mxu0
      %v640 = vadd.f32 0.0, %v639
      %v641 = vpop.f32.mrb[0].mxu0
      %642 = vmatprep.mubr.bf16.mxu0 0
      %643 = vmatmul.mubr.bf16.gmra.mrb[0].mxu0 %v557
      %v644 = vpop.f32.mrb[0].mxu0
      %v645 = vadd.f32 0.0, %v644
      %v646 = vpop.f32.mrb[0].mxu0
      %v647 = vpop.f32.mrb[0].mxu0
      %v648 = vadd.f32 0.0, %v647
      %v649 = vpop.f32.mrb[0].mxu0
      %650 = vmatprep.mubr.bf16.mxu0 0
      %651 = vmatmul.mubr.bf16.gmra.mrb[0].mxu0 %v560
      %v652 = vpop.f32.mrb[0].mxu0
      %v653 = vadd.f32 0.0, %v652
      %v654 = vpop.f32.mrb[0].mxu0
      %v655 = vpop.f32.mrb[0].mxu0
      %v656 = vadd.f32 0.0, %v655
      %v657 = vpop.f32.mrb[0].mxu0
      %658 = vmatprep.mubr.bf16.mxu0 0
      %659 = vmatmul.mubr.bf16.gmra.mrb[0].mxu0 %v563
      %v660 = vpop.f32.mrb[0].mxu0
      %v661 = vadd.f32 0.0, %v660
      %v662 = vpop.f32.mrb[0].mxu0
      %v663 = vpop.f32.mrb[0].mxu0
      %v664 = vadd.f32 0.0, %v663
      %v665 = vpop.f32.mrb[0].mxu0
      %666 = vmatprep.mubr.bf16.mxu0 0
      %667 = vmatmul.mubr.bf16.gmra.mrb[0].mxu0 %v566
      %v668 = vpop.f32.mrb[0].mxu0
      %v669 = vadd.f32 0.0, %v668
      %v670 = vpop.f32.mrb[0].mxu0
      %v671 = vpop.f32.mrb[0].mxu0
      %v672 = vadd.f32 0.0, %v671
      %v673 = vpop.f32.mrb[0].mxu0
      %674 = vmatprep.mubr.bf16.mxu0 0
      %675 = vmatmul.mubr.bf16.gmra.mrb[0].mxu0 %v569
      %v676 = vpop.f32.mrb[0].mxu0
      %v677 = vadd.f32 0.0, %v676
      %v678 = vpop.f32.mrb[0].mxu0
      %v679 = vpop.f32.mrb[0].mxu0
      %v680 = vadd.f32 0.0, %v679
      %v681 = vpop.f32.mrb[0].mxu0
      %682 = vmatprep.mubr.bf16.mxu0 0
      %683 = vmatmul.mubr.bf16.gmra.mrb[0].mxu0 %v572
      %v684 = vpop.f32.mrb[0].mxu0
      %v685 = vadd.f32 0.0, %v684
      %v686 = vpop.f32.mrb[0].mxu0
      %v687 = vpop.f32.mrb[0].mxu0
      %v688 = vadd.f32 0.0, %v687
      %v689 = vpop.f32.mrb[0].mxu0
      %690 = vmatprep.mubr.bf16.mxu0 0
      %691 = vmatmul.mubr.bf16.gmra.mrb[0].mxu0 %v575
      %v692 = vpop.f32.mrb[0].mxu0
      %v693 = vadd.f32 0.0, %v692
      %v694 = vpop.f32.mrb[0].mxu0
      %v695 = vpop.f32.mrb[0].mxu0
      %v696 = vadd.f32 0.0, %v695
      %v697 = vpop.f32.mrb[0].mxu0
      %698 = vmatprep.mubr.bf16.mxu0 0
      %699 = vmatmul.mubr.bf16.gmra.mrb[0].mxu0 %v578
      %v700 = vpop.f32.mrb[0].mxu0
      %v701 = vadd.f32 0.0, %v700
      %v702 = vpop.f32.mrb[0].mxu0
      %v703 = vpop.f32.mrb[0].mxu0
      %v704 = vadd.f32 0.0, %v703
      %v705 = vpop.f32.mrb[0].mxu0
      %706 = vmatprep.mubr.bf16.mxu0 0
      %707 = vmatmul.mubr.bf16.gmra.mrb[0].mxu0 %v581
      %v708 = vpop.f32.mrb[0].mxu0
      %v709 = vadd.f32 0.0, %v708
      %v710 = vpop.f32.mrb[0].mxu0
      %v711 = vpop.f32.mrb[0].mxu0
      %v712 = vadd.f32 0.0, %v711
      %v713 = vpop.f32.mrb[0].mxu0
      %714 = vmatprep.mubr.bf16.mxu0 0
      %715 = vmatmul.mubr.bf16.gmra.mrb[0].mxu0 %v584
      %v716 = vpop.f32.mrb[0].mxu0
      %v717 = vadd.f32 0.0, %v716
      %v718 = vpop.f32.mrb[0].mxu0
      %v719 = vpop.f32.mrb[0].mxu0
      %v720 = vpop.f32.mrb[0].mxu0
      %721 = vdwg.mxu0
      %v722 = vmax.f32 %v357, %v621
      %v723 = vmax.f32 %v360, %v624
      %v724 = vmax.f32 %v365, %v629
      %v725 = vmax.f32 %v368, %v632
      %v726 = vmax.f32 %v373, %v637
      %v727 = vmax.f32 %v376, %v640
      %v728 = vmax.f32 %v381, %v645
      %v729 = vmax.f32 %v384, %v648
      %v730 = vmax.f32 %v389, %v653
      %v731 = vmax.f32 %v392, %v656
      %v732 = vmax.f32 %v397, %v661
      %v733 = vmax.f32 %v400, %v664
      %v734 = vmax.f32 %v405, %v669
      %v735 = vmax.f32 %v408, %v672
      %v736 = vmax.f32 %v413, %v677
      %v737 = vmax.f32 %v416, %v680
      %v738 = vmax.f32 %v421, %v685
      %v739 = vmax.f32 %v424, %v688
      %v740 = vmax.f32 %v429, %v693
      %v741 = vmax.f32 %v432, %v696
      %v742 = vmax.f32 %v437, %v701
      %v743 = vmax.f32 %v440, %v704
      %v744 = vmax.f32 %v445, %v709
      %v745 = vmax.f32 %v448, %v712
      %v746 = vmax.f32 %v453, %v717
      %s747 = scalar_lea.vmem %s165, 200
      %v748 = vld [vmem:[%s747] sm:$0xf]
      %v749 = vld [vmem:[%s747 + $0x4] sm:$0xf]
      %v750 = vld [vmem:[%s747 + $0x8] sm:$0xf]
      %v751 = vld [vmem:[%s747 + $0xc] sm:$0xf]
      %v752 = vld [vmem:[%s747 + $0x10] sm:$0xf]
      %v753 = vld [vmem:[%s747 + $0x14] sm:$0xf]
      %v754 = vld [vmem:[%s747 + $0x18] sm:$0xf]
      %v755 = vld [vmem:[%s747 + $0x1c] sm:$0xf]
      %v756 = vld [vmem:[%s747 + $0x20] sm:$0xf]
      %v757 = vld [vmem:[%s747 + $0x24] sm:$0xf]
      %v758 = vld [vmem:[%s747 + $0x28] sm:$0xf]
      %v759 = vld [vmem:[%s747 + $0x2c] sm:$0xf]
      %v760 = vld [vmem:[%s747 + $0x30] sm:$0xf]
      %v761 = vld [vmem:[%s747 + $0x34] sm:$0xf]
      %v762 = vld [vmem:[%s747 + $0x38] sm:$0xf]
      %v763 = vld [vmem:[%s747 + $0x3c] sm:$0xf]
      %v764 = vld [vmem:[%s747 + $0x40] sm:$0xf]
      %v765 = vld [vmem:[%s747 + $0x44] sm:$0xf]
      %v766 = vld [vmem:[%s747 + $0x48] sm:$0xf]
      %v767 = vld [vmem:[%s747 + $0x4c] sm:$0xf]
      %v768 = vld [vmem:[%s747 + $0x50] sm:$0xf]
      %v769 = vld [vmem:[%s747 + $0x54] sm:$0xf]
      %v770 = vld [vmem:[%s747 + $0x58] sm:$0xf]
      %v771 = vld [vmem:[%s747 + $0x5c] sm:$0xf]
      %v772 = vld [vmem:[%s747 + $0x60] sm:$0x3]
      %v798 = vunpack.c.l.b16 %v748
      %v799 = vunpack.c.l.b16 %v749
      %v800 = vunpack.c.l.b16 %v750
      %v801 = vunpack.c.l.b16 %v751
      %v802 = vunpack.c.l.b16 %v752
      %v803 = vunpack.c.l.b16 %v753
      %v804 = vunpack.c.l.b16 %v754
      %v805 = vunpack.c.l.b16 %v755
      %v806 = vunpack.c.l.b16 %v756
      %v807 = vunpack.c.l.b16 %v757
      %v808 = vunpack.c.l.b16 %v758
      %v809 = vunpack.c.l.b16 %v759
      %v810 = vunpack.c.l.b16 %v760
      %v811 = vunpack.c.l.b16 %v761
      %v812 = vunpack.c.l.b16 %v762
      %v813 = vunpack.c.l.b16 %v763
      %v814 = vunpack.c.l.b16 %v764
      %v815 = vunpack.c.l.b16 %v765
      %v816 = vunpack.c.l.b16 %v766
      %v817 = vunpack.c.l.b16 %v767
      %v818 = vunpack.c.l.b16 %v768
      %v819 = vunpack.c.l.b16 %v769
      %v820 = vunpack.c.l.b16 %v770
      %v821 = vunpack.c.l.b16 %v771
      %v822 = vunpack.c.l.b16 %v772
      %v823 = vpack.c.b16 %v799, %v798
      %v824 = vpack.c.b16 %v801, %v800
      %v825 = vpack.c.b16 %v803, %v802
      %v826 = vpack.c.b16 %v805, %v804
      %v827 = vpack.c.b16 %v807, %v806
      %v828 = vpack.c.b16 %v809, %v808
      %v829 = vpack.c.b16 %v811, %v810
      %v830 = vpack.c.b16 %v813, %v812
      %v831 = vpack.c.b16 %v815, %v814
      %v832 = vpack.c.b16 %v817, %v816
      %v833 = vpack.c.b16 %v819, %v818
      %v834 = vpack.c.b16 %v821, %v820
      %v835 = vpack.c.b16 %v822, %v822
      %v837 = vsel %vm275, %v823, 0
      %v840 = vsel %vm275, %v824, 0
      %v843 = vsel %vm275, %v825, 0
      %v846 = vsel %vm275, %v826, 0
      %v849 = vsel %vm275, %v827, 0
      %v852 = vsel %vm275, %v828, 0
      %v855 = vsel %vm275, %v829, 0
      %v858 = vsel %vm275, %v830, 0
      %v861 = vsel %vm275, %v831, 0
      %v864 = vsel %vm275, %v832, 0
      %v867 = vsel %vm275, %v833, 0
      %v870 = vsel %vm275, %v834, 0
      %v873 = vsel %vm275, %v835, 0
      %875 = vmatprep.subr.bf16.mxu0 0
      %876 = vmatpush1.bf16.msra.mxu0 %v272
      %877 = vmatprep.subr.bf16.mxu0 0
      %878 = vmatpush1.bf16.msra.mxu0 %v320
      %879 = vmatprep.subr.bf16.mxu0 0
      %880 = vmatpush1.bf16.msra.mxu0 0
      %881 = vmatprep.subr.bf16.mxu0 0
      %882 = vmatpush1.bf16.msra.mxu0 0
      %883 = vmatprep.subr.bf16.mxu0 0
      %884 = vmatpush1.bf16.msra.mxu0 0
      %885 = vmatprep.subr.bf16.mxu0 0
      %886 = vmatpush1.bf16.msra.mxu0 0
      %887 = vmatprep.subr.bf16.mxu0 0
      %888 = vmatpush1.bf16.msra.mxu0 0
      %889 = vmatprep.subr.bf16.mxu0 0
      %890 = vmatpush1.bf16.msra.mxu0 0
      %891 = vmatprep.subr.bf16.mxu0 0
      %892 = vmatpush1.bf16.msra.mxu0 0
      %893 = vmatprep.subr.bf16.mxu0 0
      %894 = vmatpush1.bf16.msra.mxu0 0
      %895 = vmatprep.subr.bf16.mxu0 0
      %896 = vmatpush1.bf16.msra.mxu0 0
      %897 = vmatprep.subr.bf16.mxu0 0
      %898 = vmatpush1.bf16.msra.mxu0 0
      %899 = vmatprep.subr.bf16.mxu0 0
      %900 = vmatpush1.bf16.msra.mxu0 0
      %901 = vmatprep.subr.bf16.mxu0 0
      %902 = vmatpush1.bf16.msra.mxu0 0
      %903 = vmatprep.subr.bf16.mxu0 0
      %904 = vmatpush1.bf16.msra.mxu0 0
      %905 = vmatprep.subr.bf16.mxu0 0
      %906 = vmatpush1.bf16.msra.mxu0 0
      %907 = vmatprep.mubr.bf16.mxu0 0
      %908 = vmatmul.mubr.bf16.gmra.mrb[0].mxu0 %v837
      %v909 = vpop.f32.mrb[0].mxu0
      %v910 = vadd.f32 0.0, %v909
      %v911 = vpop.f32.mrb[0].mxu0
      %v912 = vpop.f32.mrb[0].mxu0
      %v913 = vadd.f32 0.0, %v912
      %v914 = vpop.f32.mrb[0].mxu0
      %915 = vmatprep.mubr.bf16.mxu0 0
      %916 = vmatmul.mubr.bf16.gmra.mrb[0].mxu0 %v840
      %v917 = vpop.f32.mrb[0].mxu0
      %v918 = vadd.f32 0.0, %v917
      %v919 = vpop.f32.mrb[0].mxu0
      %v920 = vpop.f32.mrb[0].mxu0
      %v921 = vadd.f32 0.0, %v920
      %v922 = vpop.f32.mrb[0].mxu0
      %923 = vmatprep.mubr.bf16.mxu0 0
      %924 = vmatmul.mubr.bf16.gmra.mrb[0].mxu0 %v843
      %v925 = vpop.f32.mrb[0].mxu0
      %v926 = vadd.f32 0.0, %v925
      %v927 = vpop.f32.mrb[0].mxu0
      %v928 = vpop.f32.mrb[0].mxu0
      %v929 = vadd.f32 0.0, %v928
      %v930 = vpop.f32.mrb[0].mxu0
      %931 = vmatprep.mubr.bf16.mxu0 0
      %932 = vmatmul.mubr.bf16.gmra.mrb[0].mxu0 %v846
      %v933 = vpop.f32.mrb[0].mxu0
      %v934 = vadd.f32 0.0, %v933
      %v935 = vpop.f32.mrb[0].mxu0
      %v936 = vpop.f32.mrb[0].mxu0
      %v937 = vadd.f32 0.0, %v936
      %v938 = vpop.f32.mrb[0].mxu0
      %939 = vmatprep.mubr.bf16.mxu0 0
      %940 = vmatmul.mubr.bf16.gmra.mrb[0].mxu0 %v849
      %v941 = vpop.f32.mrb[0].mxu0
      %v942 = vadd.f32 0.0, %v941
      %v943 = vpop.f32.mrb[0].mxu0
      %v944 = vpop.f32.mrb[0].mxu0
      %v945 = vadd.f32 0.0, %v944
      %v946 = vpop.f32.mrb[0].mxu0
      %947 = vmatprep.mubr.bf16.mxu0 0
      %948 = vmatmul.mubr.bf16.gmra.mrb[0].mxu0 %v852
      %v949 = vpop.f32.mrb[0].mxu0
      %v950 = vadd.f32 0.0, %v949
      %v951 = vpop.f32.mrb[0].mxu0
      %v952 = vpop.f32.mrb[0].mxu0
      %v953 = vadd.f32 0.0, %v952
      %v954 = vpop.f32.mrb[0].mxu0
      %955 = vmatprep.mubr.bf16.mxu0 0
      %956 = vmatmul.mubr.bf16.gmra.mrb[0].mxu0 %v855
      %v957 = vpop.f32.mrb[0].mxu0
      %v958 = vadd.f32 0.0, %v957
      %v959 = vpop.f32.mrb[0].mxu0
      %v960 = vpop.f32.mrb[0].mxu0
      %v961 = vadd.f32 0.0, %v960
      %v962 = vpop.f32.mrb[0].mxu0
      %963 = vmatprep.mubr.bf16.mxu0 0
      %964 = vmatmul.mubr.bf16.gmra.mrb[0].mxu0 %v858
      %v965 = vpop.f32.mrb[0].mxu0
      %v966 = vadd.f32 0.0, %v965
      %v967 = vpop.f32.mrb[0].mxu0
      %v968 = vpop.f32.mrb[0].mxu0
      %v969 = vadd.f32 0.0, %v968
      %v970 = vpop.f32.mrb[0].mxu0
      %971 = vmatprep.mubr.bf16.mxu0 0
      %972 = vmatmul.mubr.bf16.gmra.mrb[0].mxu0 %v861
      %v973 = vpop.f32.mrb[0].mxu0
      %v974 = vadd.f32 0.0, %v973
      %v975 = vpop.f32.mrb[0].mxu0
      %v976 = vpop.f32.mrb[0].mxu0
      %v977 = vadd.f32 0.0, %v976
      %v978 = vpop.f32.mrb[0].mxu0
      %979 = vmatprep.mubr.bf16.mxu0 0
      %980 = vmatmul.mubr.bf16.gmra.mrb[0].mxu0 %v864
      %v981 = vpop.f32.mrb[0].mxu0
      %v982 = vadd.f32 0.0, %v981
      %v983 = vpop.f32.mrb[0].mxu0
      %v984 = vpop.f32.mrb[0].mxu0
      %v985 = vadd.f32 0.0, %v984
      %v986 = vpop.f32.mrb[0].mxu0
      %987 = vmatprep.mubr.bf16.mxu0 0
      %988 = vmatmul.mubr.bf16.gmra.mrb[0].mxu0 %v867
      %v989 = vpop.f32.mrb[0].mxu0
      %v990 = vadd.f32 0.0, %v989
      %v991 = vpop.f32.mrb[0].mxu0
      %v992 = vpop.f32.mrb[0].mxu0
      %v993 = vadd.f32 0.0, %v992
      %v994 = vpop.f32.mrb[0].mxu0
      %995 = vmatprep.mubr.bf16.mxu0 0
      %996 = vmatmul.mubr.bf16.gmra.mrb[0].mxu0 %v870
      %v997 = vpop.f32.mrb[0].mxu0
      %v998 = vadd.f32 0.0, %v997
      %v999 = vpop.f32.mrb[0].mxu0
      %v1000 = vpop.f32.mrb[0].mxu0
      %v1001 = vadd.f32 0.0, %v1000
      %v1002 = vpop.f32.mrb[0].mxu0
      %1003 = vmatprep.mubr.bf16.mxu0 0
      %1004 = vmatmul.mubr.bf16.gmra.mrb[0].mxu0 %v873
      %v1005 = vpop.f32.mrb[0].mxu0
      %v1006 = vadd.f32 0.0, %v1005
      %v1007 = vpop.f32.mrb[0].mxu0
      %v1008 = vpop.f32.mrb[0].mxu0
      %v1009 = vpop.f32.mrb[0].mxu0
      %1010 = vdwg.mxu0
      %v1011 = vmax.f32 %v722, %v910
      %v1012 = vmax.f32 %v723, %v913
      %v1013 = vmax.f32 %v724, %v918
      %v1014 = vmax.f32 %v725, %v921
      %v1015 = vmax.f32 %v726, %v926
      %v1016 = vmax.f32 %v727, %v929
      %v1017 = vmax.f32 %v728, %v934
      %v1018 = vmax.f32 %v729, %v937
      %v1019 = vmax.f32 %v730, %v942
      %v1020 = vmax.f32 %v731, %v945
      %v1021 = vmax.f32 %v732, %v950
      %v1022 = vmax.f32 %v733, %v953
      %v1023 = vmax.f32 %v734, %v958
      %v1024 = vmax.f32 %v735, %v961
      %v1025 = vmax.f32 %v736, %v966
      %v1026 = vmax.f32 %v737, %v969
      %v1027 = vmax.f32 %v738, %v974
      %v1028 = vmax.f32 %v739, %v977
      %v1029 = vmax.f32 %v740, %v982
      %v1030 = vmax.f32 %v741, %v985
      %v1031 = vmax.f32 %v742, %v990
      %v1032 = vmax.f32 %v743, %v993
      %v1033 = vmax.f32 %v744, %v998
      %v1034 = vmax.f32 %v745, %v1001
      %v1035 = vmax.f32 %v746, %v1006
      %s1036 = scalar_lea.vmem %s165, 300
      %v1037 = vld [vmem:[%s1036] sm:$0xf]
      %v1038 = vld [vmem:[%s1036 + $0x4] sm:$0xf]
      %v1039 = vld [vmem:[%s1036 + $0x8] sm:$0xf]
      %v1040 = vld [vmem:[%s1036 + $0xc] sm:$0xf]
      %v1041 = vld [vmem:[%s1036 + $0x10] sm:$0xf]
      %v1042 = vld [vmem:[%s1036 + $0x14] sm:$0xf]
      %v1043 = vld [vmem:[%s1036 + $0x18] sm:$0xf]
      %v1044 = vld [vmem:[%s1036 + $0x1c] sm:$0xf]
      %v1045 = vld [vmem:[%s1036 + $0x20] sm:$0xf]
      %v1046 = vld [vmem:[%s1036 + $0x24] sm:$0xf]
      %v1047 = vld [vmem:[%s1036 + $0x28] sm:$0xf]
      %v1048 = vld [vmem:[%s1036 + $0x2c] sm:$0xf]
      %v1049 = vld [vmem:[%s1036 + $0x30] sm:$0xf]
      %v1050 = vld [vmem:[%s1036 + $0x34] sm:$0xf]
      %v1051 = vld [vmem:[%s1036 + $0x38] sm:$0xf]
      %v1052 = vld [vmem:[%s1036 + $0x3c] sm:$0xf]
      %v1053 = vld [vmem:[%s1036 + $0x40] sm:$0xf]
      %v1054 = vld [vmem:[%s1036 + $0x44] sm:$0xf]
      %v1055 = vld [vmem:[%s1036 + $0x48] sm:$0xf]
      %v1056 = vld [vmem:[%s1036 + $0x4c] sm:$0xf]
      %v1057 = vld [vmem:[%s1036 + $0x50] sm:$0xf]
      %v1058 = vld [vmem:[%s1036 + $0x54] sm:$0xf]
      %v1059 = vld [vmem:[%s1036 + $0x58] sm:$0xf]
      %v1060 = vld [vmem:[%s1036 + $0x5c] sm:$0xf]
      %v1061 = vld [vmem:[%s1036 + $0x60] sm:$0x3]
      %v1087 = vunpack.c.l.b16 %v1037
      %v1088 = vunpack.c.l.b16 %v1038
      %v1089 = vunpack.c.l.b16 %v1039
      %v1090 = vunpack.c.l.b16 %v1040
      %v1091 = vunpack.c.l.b16 %v1041
      %v1092 = vunpack.c.l.b16 %v1042
      %v1093 = vunpack.c.l.b16 %v1043
      %v1094 = vunpack.c.l.b16 %v1044
      %v1095 = vunpack.c.l.b16 %v1045
      %v1096 = vunpack.c.l.b16 %v1046
      %v1097 = vunpack.c.l.b16 %v1047
      %v1098 = vunpack.c.l.b16 %v1048
      %v1099 = vunpack.c.l.b16 %v1049
      %v1100 = vunpack.c.l.b16 %v1050
      %v1101 = vunpack.c.l.b16 %v1051
      %v1102 = vunpack.c.l.b16 %v1052
      %v1103 = vunpack.c.l.b16 %v1053
      %v1104 = vunpack.c.l.b16 %v1054
      %v1105 = vunpack.c.l.b16 %v1055
      %v1106 = vunpack.c.l.b16 %v1056
      %v1107 = vunpack.c.l.b16 %v1057
      %v1108 = vunpack.c.l.b16 %v1058
      %v1109 = vunpack.c.l.b16 %v1059
      %v1110 = vunpack.c.l.b16 %v1060
      %v1111 = vunpack.c.l.b16 %v1061
      %v1112 = vpack.c.b16 %v1088, %v1087
      %v1113 = vpack.c.b16 %v1090, %v1089
      %v1114 = vpack.c.b16 %v1092, %v1091
      %v1115 = vpack.c.b16 %v1094, %v1093
      %v1116 = vpack.c.b16 %v1096, %v1095
      %v1117 = vpack.c.b16 %v1098, %v1097
      %v1118 = vpack.c.b16 %v1100, %v1099
      %v1119 = vpack.c.b16 %v1102, %v1101
      %v1120 = vpack.c.b16 %v1104, %v1103
      %v1121 = vpack.c.b16 %v1106, %v1105
      %v1122 = vpack.c.b16 %v1108, %v1107
      %v1123 = vpack.c.b16 %v1110, %v1109
      %v1124 = vpack.c.b16 %v1111, %v1111
      %v1126 = vsel %vm275, %v1112, 0
      %v1129 = vsel %vm275, %v1113, 0
      %v1132 = vsel %vm275, %v1114, 0
      %v1135 = vsel %vm275, %v1115, 0
      %v1138 = vsel %vm275, %v1116, 0
      %v1141 = vsel %vm275, %v1117, 0
      %v1144 = vsel %vm275, %v1118, 0
      %v1147 = vsel %vm275, %v1119, 0
      %v1150 = vsel %vm275, %v1120, 0
      %v1153 = vsel %vm275, %v1121, 0
      %v1156 = vsel %vm275, %v1122, 0
      %v1159 = vsel %vm275, %v1123, 0
      %v1162 = vsel %vm275, %v1124, 0
      %1164 = vmatprep.subr.bf16.mxu0 0
      %1165 = vmatpush1.bf16.msra.mxu0 %v272
      %1166 = vmatprep.subr.bf16.mxu0 0
      %1167 = vmatpush1.bf16.msra.mxu0 %v320
      %1168 = vmatprep.subr.bf16.mxu0 0
      %1169 = vmatpush1.bf16.msra.mxu0 0
      %1170 = vmatprep.subr.bf16.mxu0 0
      %1171 = vmatpush1.bf16.msra.mxu0 0
      %1172 = vmatprep.subr.bf16.mxu0 0
      %1173 = vmatpush1.bf16.msra.mxu0 0
      %1174 = vmatprep.subr.bf16.mxu0 0
      %1175 = vmatpush1.bf16.msra.mxu0 0
      %1176 = vmatprep.subr.bf16.mxu0 0
      %1177 = vmatpush1.bf16.msra.mxu0 0
      %1178 = vmatprep.subr.bf16.mxu0 0
      %1179 = vmatpush1.bf16.msra.mxu0 0
      %1180 = vmatprep.subr.bf16.mxu0 0
      %1181 = vmatpush1.bf16.msra.mxu0 0
      %1182 = vmatprep.subr.bf16.mxu0 0
      %1183 = vmatpush1.bf16.msra.mxu0 0
      %1184 = vmatprep.subr.bf16.mxu0 0
      %1185 = vmatpush1.bf16.msra.mxu0 0
      %1186 = vmatprep.subr.bf16.mxu0 0
      %1187 = vmatpush1.bf16.msra.mxu0 0
      %1188 = vmatprep.subr.bf16.mxu0 0
      %1189 = vmatpush1.bf16.msra.mxu0 0
      %1190 = vmatprep.subr.bf16.mxu0 0
      %1191 = vmatpush1.bf16.msra.mxu0 0
      %1192 = vmatprep.subr.bf16.mxu0 0
      %1193 = vmatpush1.bf16.msra.mxu0 0
      %1194 = vmatprep.subr.bf16.mxu0 0
      %1195 = vmatpush1.bf16.msra.mxu0 0
      %1196 = vmatprep.mubr.bf16.mxu0 0
      %1197 = vmatmul.mubr.bf16.gmra.mrb[0].mxu0 %v1126
      %v1198 = vpop.f32.mrb[0].mxu0
      %v1199 = vadd.f32 0.0, %v1198
      %v1200 = vpop.f32.mrb[0].mxu0
      %v1201 = vpop.f32.mrb[0].mxu0
      %v1202 = vadd.f32 0.0, %v1201
      %v1203 = vpop.f32.mrb[0].mxu0
      %1204 = vmatprep.mubr.bf16.mxu0 0
      %1205 = vmatmul.mubr.bf16.gmra.mrb[0].mxu0 %v1129
      %v1206 = vpop.f32.mrb[0].mxu0
      %v1207 = vadd.f32 0.0, %v1206
      %v1208 = vpop.f32.mrb[0].mxu0
      %v1209 = vpop.f32.mrb[0].mxu0
      %v1210 = vadd.f32 0.0, %v1209
      %v1211 = vpop.f32.mrb[0].mxu0
      %1212 = vmatprep.mubr.bf16.mxu0 0
      %1213 = vmatmul.mubr.bf16.gmra.mrb[0].mxu0 %v1132
      %v1214 = vpop.f32.mrb[0].mxu0
      %v1215 = vadd.f32 0.0, %v1214
      %v1216 = vpop.f32.mrb[0].mxu0
      %v1217 = vpop.f32.mrb[0].mxu0
      %v1218 = vadd.f32 0.0, %v1217
      %v1219 = vpop.f32.mrb[0].mxu0
      %1220 = vmatprep.mubr.bf16.mxu0 0
      %1221 = vmatmul.mubr.bf16.gmra.mrb[0].mxu0 %v1135
      %v1222 = vpop.f32.mrb[0].mxu0
      %v1223 = vadd.f32 0.0, %v1222
      %v1224 = vpop.f32.mrb[0].mxu0
      %v1225 = vpop.f32.mrb[0].mxu0
      %v1226 = vadd.f32 0.0, %v1225
      %v1227 = vpop.f32.mrb[0].mxu0
      %1228 = vmatprep.mubr.bf16.mxu0 0
      %1229 = vmatmul.mubr.bf16.gmra.mrb[0].mxu0 %v1138
      %v1230 = vpop.f32.mrb[0].mxu0
      %v1231 = vadd.f32 0.0, %v1230
      %v1232 = vpop.f32.mrb[0].mxu0
      %v1233 = vpop.f32.mrb[0].mxu0
      %v1234 = vadd.f32 0.0, %v1233
      %v1235 = vpop.f32.mrb[0].mxu0
      %1236 = vmatprep.mubr.bf16.mxu0 0
      %1237 = vmatmul.mubr.bf16.gmra.mrb[0].mxu0 %v1141
      %v1238 = vpop.f32.mrb[0].mxu0
      %v1239 = vadd.f32 0.0, %v1238
      %v1240 = vpop.f32.mrb[0].mxu0
      %v1241 = vpop.f32.mrb[0].mxu0
      %v1242 = vadd.f32 0.0, %v1241
      %v1243 = vpop.f32.mrb[0].mxu0
      %1244 = vmatprep.mubr.bf16.mxu0 0
      %1245 = vmatmul.mubr.bf16.gmra.mrb[0].mxu0 %v1144
      %v1246 = vpop.f32.mrb[0].mxu0
      %v1247 = vadd.f32 0.0, %v1246
      %v1248 = vpop.f32.mrb[0].mxu0
      %v1249 = vpop.f32.mrb[0].mxu0
      %v1250 = vadd.f32 0.0, %v1249
      %v1251 = vpop.f32.mrb[0].mxu0
      %1252 = vmatprep.mubr.bf16.mxu0 0
      %1253 = vmatmul.mubr.bf16.gmra.mrb[0].mxu0 %v1147
      %v1254 = vpop.f32.mrb[0].mxu0
      %v1255 = vadd.f32 0.0, %v1254
      %v1256 = vpop.f32.mrb[0].mxu0
      %v1257 = vpop.f32.mrb[0].mxu0
      %v1258 = vadd.f32 0.0, %v1257
      %v1259 = vpop.f32.mrb[0].mxu0
      %1260 = vmatprep.mubr.bf16.mxu0 0
      %1261 = vmatmul.mubr.bf16.gmra.mrb[0].mxu0 %v1150
      %v1262 = vpop.f32.mrb[0].mxu0
      %v1263 = vadd.f32 0.0, %v1262
      %v1264 = vpop.f32.mrb[0].mxu0
      %v1265 = vpop.f32.mrb[0].mxu0
      %v1266 = vadd.f32 0.0, %v1265
      %v1267 = vpop.f32.mrb[0].mxu0
      %1268 = vmatprep.mubr.bf16.mxu0 0
      %1269 = vmatmul.mubr.bf16.gmra.mrb[0].mxu0 %v1153
      %v1270 = vpop.f32.mrb[0].mxu0
      %v1271 = vadd.f32 0.0, %v1270
      %v1272 = vpop.f32.mrb[0].mxu0
      %v1273 = vpop.f32.mrb[0].mxu0
      %v1274 = vadd.f32 0.0, %v1273
      %v1275 = vpop.f32.mrb[0].mxu0
      %1276 = vmatprep.mubr.bf16.mxu0 0
      %1277 = vmatmul.mubr.bf16.gmra.mrb[0].mxu0 %v1156
      %v1278 = vpop.f32.mrb[0].mxu0
      %v1279 = vadd.f32 0.0, %v1278
      %v1280 = vpop.f32.mrb[0].mxu0
      %v1281 = vpop.f32.mrb[0].mxu0
      %v1282 = vadd.f32 0.0, %v1281
      %v1283 = vpop.f32.mrb[0].mxu0
      %1284 = vmatprep.mubr.bf16.mxu0 0
      %1285 = vmatmul.mubr.bf16.gmra.mrb[0].mxu0 %v1159
      %v1286 = vpop.f32.mrb[0].mxu0
      %v1287 = vadd.f32 0.0, %v1286
      %v1288 = vpop.f32.mrb[0].mxu0
      %v1289 = vpop.f32.mrb[0].mxu0
      %v1290 = vadd.f32 0.0, %v1289
      %v1291 = vpop.f32.mrb[0].mxu0
      %1292 = vmatprep.mubr.bf16.mxu0 0
      %1293 = vmatmul.mubr.bf16.gmra.mrb[0].mxu0 %v1162
      %v1294 = vpop.f32.mrb[0].mxu0
      %v1295 = vadd.f32 0.0, %v1294
      %v1296 = vpop.f32.mrb[0].mxu0
      %v1297 = vpop.f32.mrb[0].mxu0
      %v1298 = vpop.f32.mrb[0].mxu0
      %1299 = vdwg.mxu0
      %v1300 = vmax.f32 %v1011, %v1199
      %v1301 = vmax.f32 %v1012, %v1202
      %v1302 = vmax.f32 %v1013, %v1207
      %v1303 = vmax.f32 %v1014, %v1210
      %v1304 = vmax.f32 %v1015, %v1215
      %v1305 = vmax.f32 %v1016, %v1218
      %v1306 = vmax.f32 %v1017, %v1223
      %v1307 = vmax.f32 %v1018, %v1226
      %v1308 = vmax.f32 %v1019, %v1231
      %v1309 = vmax.f32 %v1020, %v1234
      %v1310 = vmax.f32 %v1021, %v1239
      %v1311 = vmax.f32 %v1022, %v1242
      %v1312 = vmax.f32 %v1023, %v1247
      %v1313 = vmax.f32 %v1024, %v1250
      %v1314 = vmax.f32 %v1025, %v1255
      %v1315 = vmax.f32 %v1026, %v1258
      %v1316 = vmax.f32 %v1027, %v1263
      %v1317 = vmax.f32 %v1028, %v1266
      %v1318 = vmax.f32 %v1029, %v1271
      %v1319 = vmax.f32 %v1030, %v1274
      %v1320 = vmax.f32 %v1031, %v1279
      %v1321 = vmax.f32 %v1032, %v1282
      %v1322 = vmax.f32 %v1033, %v1287
      %v1323 = vmax.f32 %v1034, %v1290
      %v1324 = vmax.f32 %v1035, %v1295
      %v1325 = vld [vmem:[%s2] sm:$0x1]
      %v1327 = vlaneseq
      %v1328 = vshrl.u32 %v1327, 7
      %v1329 = vsub.s32 0, %v1328
      %v1330 = vrot.slane %v1325, %v1329
      %v1332 = vadd.f32 %v1300, %v1330
      %v1333 = vadd.f32 %v1301, %v1330
      %v1334 = vadd.f32 %v1302, %v1330
      %v1335 = vadd.f32 %v1303, %v1330
      %v1336 = vadd.f32 %v1304, %v1330
      %v1337 = vadd.f32 %v1305, %v1330
      %v1338 = vadd.f32 %v1306, %v1330
      %v1339 = vadd.f32 %v1307, %v1330
      %v1340 = vadd.f32 %v1308, %v1330
      %v1341 = vadd.f32 %v1309, %v1330
      %v1342 = vadd.f32 %v1310, %v1330
      %v1343 = vadd.f32 %v1311, %v1330
      %v1344 = vadd.f32 %v1312, %v1330
      %v1345 = vadd.f32 %v1313, %v1330
      %v1346 = vadd.f32 %v1314, %v1330
      %v1347 = vadd.f32 %v1315, %v1330
      %v1348 = vadd.f32 %v1316, %v1330
      %v1349 = vadd.f32 %v1317, %v1330
      %v1350 = vadd.f32 %v1318, %v1330
      %v1351 = vadd.f32 %v1319, %v1330
      %v1352 = vadd.f32 %v1320, %v1330
      %v1353 = vadd.f32 %v1321, %v1330
      %v1354 = vadd.f32 %v1322, %v1330
      %v1355 = vadd.f32 %v1323, %v1330
      %v1356 = vadd.f32 %v1324, %v1330
      %v1357 = vmax.f32 %v1332, 0.0
      %v1358 = vmax.f32 %v1333, 0.0
      %v1359 = vmax.f32 %v1334, 0.0
      %v1360 = vmax.f32 %v1335, 0.0
      %v1361 = vmax.f32 %v1336, 0.0
      %v1362 = vmax.f32 %v1337, 0.0
      %v1363 = vmax.f32 %v1338, 0.0
      %v1364 = vmax.f32 %v1339, 0.0
      %v1365 = vmax.f32 %v1340, 0.0
      %v1366 = vmax.f32 %v1341, 0.0
      %v1367 = vmax.f32 %v1342, 0.0
      %v1368 = vmax.f32 %v1343, 0.0
      %v1369 = vmax.f32 %v1344, 0.0
      %v1370 = vmax.f32 %v1345, 0.0
      %v1371 = vmax.f32 %v1346, 0.0
      %v1372 = vmax.f32 %v1347, 0.0
      %v1373 = vmax.f32 %v1348, 0.0
      %v1374 = vmax.f32 %v1349, 0.0
      %v1375 = vmax.f32 %v1350, 0.0
      %v1376 = vmax.f32 %v1351, 0.0
      %v1377 = vmax.f32 %v1352, 0.0
      %v1378 = vmax.f32 %v1353, 0.0
      %v1379 = vmax.f32 %v1354, 0.0
      %v1380 = vmax.f32 %v1355, 0.0
      %v1381 = vmax.f32 %v1356, 0.0
      %v1382 = vpack.c.bf16 %v1358, %v1357
      %v1383 = vpack.c.bf16 %v1360, %v1359
      %v1384 = vpack.c.bf16 %v1362, %v1361
      %v1385 = vpack.c.bf16 %v1364, %v1363
      %v1386 = vpack.c.bf16 %v1366, %v1365
      %v1387 = vpack.c.bf16 %v1368, %v1367
      %v1388 = vpack.c.bf16 %v1370, %v1369
      %v1389 = vpack.c.bf16 %v1372, %v1371
      %v1390 = vpack.c.bf16 %v1374, %v1373
      %v1391 = vpack.c.bf16 %v1376, %v1375
      %v1392 = vpack.c.bf16 %v1378, %v1377
      %v1393 = vpack.c.bf16 %v1380, %v1379
      %v1394 = vpack.c.bf16 %v1381, %v1381
      %v1408 = vunpack.c.l.b16 %v1382
      %v1409 = vunpack.c.h.b16 %v1382
      %v1410 = vunpack.c.l.b16 %v1383
      %v1411 = vunpack.c.h.b16 %v1383
      %v1412 = vunpack.c.l.b16 %v1384
      %v1413 = vunpack.c.h.b16 %v1384
      %v1414 = vunpack.c.l.b16 %v1385
      %v1415 = vunpack.c.h.b16 %v1385
      %v1416 = vunpack.c.l.b16 %v1386
      %v1417 = vunpack.c.h.b16 %v1386
      %v1418 = vunpack.c.l.b16 %v1387
      %v1419 = vunpack.c.h.b16 %v1387
      %v1420 = vunpack.c.l.b16 %v1388
      %v1421 = vunpack.c.h.b16 %v1388
      %v1422 = vunpack.c.l.b16 %v1389
      %v1423 = vunpack.c.h.b16 %v1389
      %v1424 = vunpack.c.l.b16 %v1390
      %v1425 = vunpack.c.h.b16 %v1390
      %v1426 = vunpack.c.l.b16 %v1391
      %v1427 = vunpack.c.h.b16 %v1391
      %v1428 = vunpack.c.l.b16 %v1392
      %v1429 = vunpack.c.h.b16 %v1392
      %v1430 = vunpack.c.l.b16 %v1393
      %v1431 = vunpack.c.h.b16 %v1393
      %v1432 = vunpack.c.l.b16 %v1394
      %v1433 = vpack.c.b16 %v1408, %v1408
      %v1434 = vpack.c.b16 %v1409, %v1409
      %v1435 = vpack.c.b16 %v1410, %v1410
      %v1436 = vpack.c.b16 %v1411, %v1411
      %v1437 = vpack.c.b16 %v1412, %v1412
      %v1438 = vpack.c.b16 %v1413, %v1413
      %v1439 = vpack.c.b16 %v1414, %v1414
      %v1440 = vpack.c.b16 %v1415, %v1415
      %v1441 = vpack.c.b16 %v1416, %v1416
      %v1442 = vpack.c.b16 %v1417, %v1417
      %v1443 = vpack.c.b16 %v1418, %v1418
      %v1444 = vpack.c.b16 %v1419, %v1419
      %v1445 = vpack.c.b16 %v1420, %v1420
      %v1446 = vpack.c.b16 %v1421, %v1421
      %v1447 = vpack.c.b16 %v1422, %v1422
      %v1448 = vpack.c.b16 %v1423, %v1423
      %v1449 = vpack.c.b16 %v1424, %v1424
      %v1450 = vpack.c.b16 %v1425, %v1425
      %v1451 = vpack.c.b16 %v1426, %v1426
      %v1452 = vpack.c.b16 %v1427, %v1427
      %v1453 = vpack.c.b16 %v1428, %v1428
      %v1454 = vpack.c.b16 %v1429, %v1429
      %v1455 = vpack.c.b16 %v1430, %v1430
      %v1456 = vpack.c.b16 %v1431, %v1431
      %v1457 = vpack.c.b16 %v1432, %v1432
      %1483 = vst [vmem:[%s170] sm:$0xf] %v1433
      %1484 = vst [vmem:[%s170 + $0x4] sm:$0xf] %v1434
      %1485 = vst [vmem:[%s170 + $0x8] sm:$0xf] %v1435
      %1486 = vst [vmem:[%s170 + $0xc] sm:$0xf] %v1436
      %1487 = vst [vmem:[%s170 + $0x10] sm:$0xf] %v1437
      %1488 = vst [vmem:[%s170 + $0x14] sm:$0xf] %v1438
      %1489 = vst [vmem:[%s170 + $0x18] sm:$0xf] %v1439
      %1490 = vst [vmem:[%s170 + $0x1c] sm:$0xf] %v1440
      %1491 = vst [vmem:[%s170 + $0x20] sm:$0xf] %v1441
      %1492 = vst [vmem:[%s170 + $0x24] sm:$0xf] %v1442
      %1493 = vst [vmem:[%s170 + $0x28] sm:$0xf] %v1443
      %1494 = vst [vmem:[%s170 + $0x2c] sm:$0xf] %v1444
      %1495 = vst [vmem:[%s170 + $0x30] sm:$0xf] %v1445
      %1496 = vst [vmem:[%s170 + $0x34] sm:$0xf] %v1446
      %1497 = vst [vmem:[%s170 + $0x38] sm:$0xf] %v1447
      %1498 = vst [vmem:[%s170 + $0x3c] sm:$0xf] %v1448
      %1499 = vst [vmem:[%s170 + $0x40] sm:$0xf] %v1449
      %1500 = vst [vmem:[%s170 + $0x44] sm:$0xf] %v1450
      %1501 = vst [vmem:[%s170 + $0x48] sm:$0xf] %v1451
      %1502 = vst [vmem:[%s170 + $0x4c] sm:$0xf] %v1452
      %1503 = vst [vmem:[%s170 + $0x50] sm:$0xf] %v1453
      %1504 = vst [vmem:[%s170 + $0x54] sm:$0xf] %v1454
      %1505 = vst [vmem:[%s170 + $0x58] sm:$0xf] %v1455
      %1506 = vst [vmem:[%s170 + $0x5c] sm:$0xf] %v1456
      %1507 = vst [vmem:[%s170 + $0x60] sm:$0x3] %v1457
      %p1508 = scmp.lt.s32.totalorder %s14, 1
      %s1509 = scalar_select %p1508, %s14, 1
      %s1510 = smul.addr %s1509, 25
      %s1511 = smul.addr %s1510, 4
      %s1512 = scalar_lea.vmem %s3, %s1511
      // Predicated region
      $region33: #{lenet5_tt2_forward.3} parent=31 // pred_check
        %p1513 = pneg %p100
      $region34: #{lenet5_tt2_forward.3} parent=31 // pred_check_branch
        %1515 = sbr.rel (%p1513) target = $region36
      $region35: #{lenet5_tt2_forward.3} parent=31 // pred_region
        _
      $region36: #{lenet5_tt2_forward.3} parent=31 // pred_fallthru
        _
    $region32: #{lenet5_tt2_forward.3} parent=5 // pred_fallthru
      _
    %p1516 = scmp.le.s32.totalorder 2, %s9
    // Predicated region
    $region37: #{lenet5_tt2_forward.3} parent=5 // pred_check
      %p1517 = pneg %p1516
    $region38: #{lenet5_tt2_forward.3} parent=5 // pred_check_branch
      %1519 = sbr.rel (%p1517) target = $region40
    $region39: #{lenet5_tt2_forward.3} parent=5 // pred_region
      %s1520 = ssub.s32 %s9, 2
      // Predicated region
      $region41: #{lenet5_tt2_forward.3} parent=39 // pred_check
        %p1521 = pneg %p106
      $region42: #{lenet5_tt2_forward.3} parent=39 // pred_check_branch
        %1523 = sbr.rel (%p1521) target = $region44
      $region43: #{lenet5_tt2_forward.3} parent=39 // pred_region
        %p1524 = scmp.lt.s32.totalorder %s15, 1
        %s1525 = scalar_select %p1524, %s15, 1
        %s1526 = smul.addr %s1525, 25
        %s1527 = smul.addr %s1526, 4
        %s1528 = scalar_lea.vmem %s3, %s1527
      $region44: #{lenet5_tt2_forward.3} parent=39 // pred_fallthru
        _
    $region40: #{lenet5_tt2_forward.3} parent=5 // pred_fallthru
      _
  $region6: #{lenet5_tt2_forward.3} parent=0 // loop_footer
    %s13 = sadd.s32 1, %s9
  $region7: #{lenet5_tt2_forward.3} parent=0 // loop_footer_branch
    %8 = sbr.rel target = $region3
  $region8: #{lenet5_tt2_forward.3} parent=0 // loop_exit
    _

// kernel: lenet5_tt2_forward.5
$region0: #{lenet5_tt2_forward.5}
  #allocation0 [shape = 'u32[]', space=smem, size = 0x4, offset = 0x4, fixed_abs, tag = 'smem constant byte address 0x4 - core index']
  #allocation1 [shape = 'u32[144,128]{1,0:T(1,128)}', space=vmem, size = 0x12000, scoped, tag = 'internal scratch']
  %s0 = inlined_call_operand.vmem [shape: bf16[2,3200], index: 0, kind: input, shape index: {}]
  %s1 = inlined_call_operand.vmem [shape: bf16[3200,384], index: 1, kind: input, shape index: {}]
  %s2 = inlined_call_operand.vmem [shape: f32[1,384], index: 2, kind: input, shape index: {}]
  %s3 = inlined_call_operand.vmem [shape: bf16[384,128], index: 3, kind: input, shape index: {}]
  %s4 = inlined_call_operand.vmem [shape: f32[1,128], index: 4, kind: input, shape index: {}]
  %s5 = inlined_call_operand.hbm [shape: f32[2,128], index: 5, kind: output, shape index: {}]
  %s6 = sld [smem:[#allocation0]]
  $region30: #{lenet5_tt2_forward.5} parent=0
    _
  %s8 = ssub.s32 1, %s6
  %s9 = scalar_select 0, %s8, %s6
  $region1: #{lenet5_tt2_forward.5} parent=0
    #allocation2 [shape = 'u8[1024]{0}', space=vmem, size = 0x400, scoped, tag = 'output window, operand 0, single buffered']
    #allocation3 [shape = 's32[1]{0}', space=sflag, size = 0x4, scoped, tag = 'scoped memory for lenet5_tt2_forward.5']
    %10 = vsyncpa [#allocation3], 0
    // Predicated region
    $region2: #{lenet5_tt2_forward.5} parent=1 // pred_check
      _
    $region3: #{lenet5_tt2_forward.5} parent=1 // pred_check_branch
      %12 = sbr.rel (0) target = $region5
    $region4: #{lenet5_tt2_forward.5} parent=1 // pred_region
      _
    $region5: #{lenet5_tt2_forward.5} parent=1 // pred_fallthru
      _
    // Predicated region
    $region6: #{lenet5_tt2_forward.5} parent=1 // pred_check
      _
    $region7: #{lenet5_tt2_forward.5} parent=1 // pred_check_branch
      %14 = sbr.rel (0) target = $region9
    $region8: #{lenet5_tt2_forward.5} parent=1 // pred_region
      _
    $region9: #{lenet5_tt2_forward.5} parent=1 // pred_fallthru
      _
    // Predicated region
    $region10: #{lenet5_tt2_forward.5} parent=1 // pred_check
      _
    $region11: #{lenet5_tt2_forward.5} parent=1 // pred_check_branch
      %16 = sbr.rel (0) target = $region13
    $region12: #{lenet5_tt2_forward.5} parent=1 // pred_region
      _
    $region13: #{lenet5_tt2_forward.5} parent=1 // pred_fallthru
      _
    // Predicated region
    $region14: #{lenet5_tt2_forward.5} parent=1 // pred_check
      _
    $region15: #{lenet5_tt2_forward.5} parent=1 // pred_check_branch
      %18 = sbr.rel (0) target = $region17
    $region16: #{lenet5_tt2_forward.5} parent=1 // pred_region
      _
    $region17: #{lenet5_tt2_forward.5} parent=1 // pred_fallthru
      _
    // Predicated region
    $region18: #{lenet5_tt2_forward.5} parent=1 // pred_check
      _
    $region19: #{lenet5_tt2_forward.5} parent=1 // pred_check_branch
      %20 = sbr.rel (0) target = $region21
    $region20: #{lenet5_tt2_forward.5} parent=1 // pred_region
      _
    $region21: #{lenet5_tt2_forward.5} parent=1 // pred_fallthru
      _
    %v22 = vld [vmem:[%s0] sm:$0xff]
    %v23 = vld [vmem:[%s0 + $0x8] sm:$0xff]
    %v24 = vld [vmem:[%s0 + $0x10] sm:$0xff]
    %v25 = vld [vmem:[%s0 + $0x18] sm:$0x1]
    %v26 = vld [vmem:[%s1] sm:$0xff]
    %v27 = vld [vmem:[%s1 + $0x8] sm:$0xf]
    %v28 = vld [vmem:[%s1 + $0xc] sm:$0xff]
    %v29 = vld [vmem:[%s1 + $0x14] sm:$0xf]
    %v30 = vld [vmem:[%s1 + $0x18] sm:$0xff]
    %v31 = vld [vmem:[%s1 + $0x20] sm:$0xf]
    %v32 = vld [vmem:[%s1 + $0x24] sm:$0xff]
    %v33 = vld [vmem:[%s1 + $0x2c] sm:$0xf]
    %v34 = vld [vmem:[%s1 + $0x30] sm:$0xff]
    %v35 = vld [vmem:[%s1 + $0x38] sm:$0xf]
    %v36 = vld [vmem:[%s1 + $0x3c] sm:$0xff]
    %v37 = vld [vmem:[%s1 + $0x44] sm:$0xf]
    %v38 = vld [vmem:[%s1 + $0x48] sm:$0xff]
    %v39 = vld [vmem:[%s1 + $0x50] sm:$0xf]
    %v40 = vld [vmem:[%s1 + $0x54] sm:$0xff]
    %v41 = vld [vmem:[%s1 + $0x5c] sm:$0xf]
    %v42 = vld [vmem:[%s1 + $0x60] sm:$0xff]
    %v43 = vld [vmem:[%s1 + $0x68] sm:$0xf]
    %v44 = vld [vmem:[%s1 + $0x6c] sm:$0xff]
    %v45 = vld [vmem:[%s1 + $0x74] sm:$0xf]
    %v46 = vld [vmem:[%s1 + $0x78] sm:$0xff]
    %v47 = vld [vmem:[%s1 + $0x80] sm:$0xf]
    %v48 = vld [vmem:[%s1 + $0x84] sm:$0xff]
    %v49 = vld [vmem:[%s1 + $0x8c] sm:$0xf]
    %v50 = vld [vmem:[%s1 + $0x90] sm:$0xff]
    %v51 = vld [vmem:[%s1 + $0x98] sm:$0xf]
    %v52 = vld [vmem:[%s1 + $0x9c] sm:$0xff]
    %v53 = vld [vmem:[%s1 + $0xa4] sm:$0xf]
    %v54 = vld [vmem:[%s1 + $0xa8] sm:$0xff]
    %v55 = vld [vmem:[%s1 + $0xb0] sm:$0xf]
    %v56 = vld [vmem:[%s1 + $0xb4] sm:$0xff]
    %v57 = vld [vmem:[%s1 + $0xbc] sm:$0xf]
    %v58 = vld [vmem:[%s1 + $0xc0] sm:$0xff]
    %v59 = vld [vmem:[%s1 + $0xc8] sm:$0xf]
    %v60 = vld [vmem:[%s1 + $0xcc] sm:$0xff]
    %v61 = vld [vmem:[%s1 + $0xd4] sm:$0xf]
    %v62 = vld [vmem:[%s1 + $0xd8] sm:$0xff]
    %v63 = vld [vmem:[%s1 + $0xe0] sm:$0xf]
    %v64 = vld [vmem:[%s1 + $0xe4] sm:$0xff]
    %v65 = vld [vmem:[%s1 + $0xec] sm:$0xf]
    %v66 = vld [vmem:[%s1 + $0xf0] sm:$0xff]
    %v67 = vld [vmem:[%s1 + $0xf8] sm:$0xf]
    %v68 = vld [vmem:[%s1 + $0xfc] sm:$0xff]
    %v69 = vld [vmem:[%s1 + $0x104] sm:$0xf]
    %v70 = vld [vmem:[%s1 + $0x108] sm:$0xff]
    %v71 = vld [vmem:[%s1 + $0x110] sm:$0xf]
    %v72 = vld [vmem:[%s1 + $0x114] sm:$0xff]
    %v73 = vld [vmem:[%s1 + $0x11c] sm:$0xf]
    %v74 = vld [vmem:[%s1 + $0x120] sm:$0xff]
    %v75 = vld [vmem:[%s1 + $0x128] sm:$0xf]
    %v76 = vld [vmem:[%s1 + $0x12c] sm:$0xff]
    %v77 = vld [vmem:[%s1 + $0x134] sm:$0xf]
    %v78 = vld [vmem:[%s1 + $0x138] sm:$0xff]
    %v79 = vld [vmem:[%s1 + $0x140] sm:$0xf]
    %v80 = vld [vmem:[%s1 + $0x144] sm:$0xff]
    %v81 = vld [vmem:[%s1 + $0x14c] sm:$0xf]
    %v82 = vld [vmem:[%s1 + $0x150] sm:$0xff]
    %v83 = vld [vmem:[%s1 + $0x158] sm:$0xf]
    %v84 = vld [vmem:[%s1 + $0x15c] sm:$0xff]
    %v85 = vld [vmem:[%s1 + $0x164] sm:$0xf]
    %v86 = vld [vmem:[%s1 + $0x168] sm:$0xff]
    %v87 = vld [vmem:[%s1 + $0x170] sm:$0xf]
    %v88 = vld [vmem:[%s1 + $0x174] sm:$0xff]
    %v89 = vld [vmem:[%s1 + $0x17c] sm:$0xf]
    %v90 = vld [vmem:[%s1 + $0x180] sm:$0xff]
    %v91 = vld [vmem:[%s1 + $0x188] sm:$0xf]
    %v92 = vld [vmem:[%s1 + $0x18c] sm:$0xff]
    %v93 = vld [vmem:[%s1 + $0x194] sm:$0xf]
    %v94 = vld [vmem:[%s1 + $0x198] sm:$0xff]
    %v95 = vld [vmem:[%s1 + $0x1a0] sm:$0xf]
    %v96 = vld [vmem:[%s1 + $0x1a4] sm:$0xff]
    %v97 = vld [vmem:[%s1 + $0x1ac] sm:$0xf]
    %v98 = vld [vmem:[%s1 + $0x1b0] sm:$0xff]
    %v99 = vld [vmem:[%s1 + $0x1b8] sm:$0xf]
    %v100 = vld [vmem:[%s1 + $0x1bc] sm:$0xff]
    %v101 = vld [vmem:[%s1 + $0x1c4] sm:$0xf]
    %v102 = vld [vmem:[%s1 + $0x1c8] sm:$0xff]
    %v103 = vld [vmem:[%s1 + $0x1d0] sm:$0xf]
    %v104 = vld [vmem:[%s1 + $0x1d4] sm:$0xff]
    %v105 = vld [vmem:[%s1 + $0x1dc] sm:$0xf]
    %v106 = vld [vmem:[%s1 + $0x1e0] sm:$0xff]
    %v107 = vld [vmem:[%s1 + $0x1e8] sm:$0xf]
    %v108 = vld [vmem:[%s1 + $0x1ec] sm:$0xff]
    %v109 = vld [vmem:[%s1 + $0x1f4] sm:$0xf]
    %v110 = vld [vmem:[%s1 + $0x1f8] sm:$0xff]
    %v111 = vld [vmem:[%s1 + $0x200] sm:$0xf]
    %v112 = vld [vmem:[%s1 + $0x204] sm:$0xff]
    %v113 = vld [vmem:[%s1 + $0x20c] sm:$0xf]
    %v114 = vld [vmem:[%s1 + $0x210] sm:$0xff]
    %v115 = vld [vmem:[%s1 + $0x218] sm:$0xf]
    %v116 = vld [vmem:[%s1 + $0x21c] sm:$0xff]
    %v117 = vld [vmem:[%s1 + $0x224] sm:$0xf]
    %v118 = vld [vmem:[%s1 + $0x228] sm:$0xff]
    %v119 = vld [vmem:[%s1 + $0x230] sm:$0xf]
    %v120 = vld [vmem:[%s1 + $0x234] sm:$0xff]
    %v121 = vld [vmem:[%s1 + $0x23c] sm:$0xf]
    %v122 = vld [vmem:[%s1 + $0x240] sm:$0xff]
    %v123 = vld [vmem:[%s1 + $0x248] sm:$0xf]
    %v124 = vld [vmem:[%s1 + $0x24c] sm:$0xff]
    %v125 = vld [vmem:[%s1 + $0x254] sm:$0xf]
    %v126 = vld [vmem:[%s1 + $0x258] sm:$0xff]
    %v127 = vld [vmem:[%s1 + $0x260] sm:$0xf]
    %v128 = vld [vmem:[%s1 + $0x264] sm:$0xff]
    %v129 = vld [vmem:[%s1 + $0x26c] sm:$0xf]
    %v130 = vld [vmem:[%s1 + $0x270] sm:$0xff]
    %v131 = vld [vmem:[%s1 + $0x278] sm:$0xf]
    %v132 = vld [vmem:[%s1 + $0x27c] sm:$0xff]
    %v133 = vld [vmem:[%s1 + $0x284] sm:$0xf]
    %v134 = vld [vmem:[%s1 + $0x288] sm:$0xff]
    %v135 = vld [vmem:[%s1 + $0x290] sm:$0xf]
    %v136 = vld [vmem:[%s1 + $0x294] sm:$0xff]
    %v137 = vld [vmem:[%s1 + $0x29c] sm:$0xf]
    %v138 = vld [vmem:[%s1 + $0x2a0] sm:$0xff]
    %v139 = vld [vmem:[%s1 + $0x2a8] sm:$0xf]
    %v140 = vld [vmem:[%s1 + $0x2ac] sm:$0xff]
    %v141 = vld [vmem:[%s1 + $0x2b4] sm:$0xf]
    %v142 = vld [vmem:[%s1 + $0x2b8] sm:$0xff]
    %v143 = vld [vmem:[%s1 + $0x2c0] sm:$0xf]
    %v144 = vld [vmem:[%s1 + $0x2c4] sm:$0xff]
    %v145 = vld [vmem:[%s1 + $0x2cc] sm:$0xf]
    %v146 = vld [vmem:[%s1 + $0x2d0] sm:$0xff]
    %v147 = vld [vmem:[%s1 + $0x2d8] sm:$0xf]
    %v148 = vld [vmem:[%s1 + $0x2dc] sm:$0xff]
    %v149 = vld [vmem:[%s1 + $0x2e4] sm:$0xf]
    %v150 = vld [vmem:[%s1 + $0x2e8] sm:$0xff]
    %v151 = vld [vmem:[%s1 + $0x2f0] sm:$0xf]
    %v152 = vld [vmem:[%s1 + $0x2f4] sm:$0xff]
    %v153 = vld [vmem:[%s1 + $0x2fc] sm:$0xf]
    %v154 = vld [vmem:[%s1 + $0x300] sm:$0xff]
    %v155 = vld [vmem:[%s1 + $0x308] sm:$0xf]
    %v156 = vld [vmem:[%s1 + $0x30c] sm:$0xff]
    %v157 = vld [vmem:[%s1 + $0x314] sm:$0xf]
    %v158 = vld [vmem:[%s1 + $0x318] sm:$0xff]
    %v159 = vld [vmem:[%s1 + $0x320] sm:$0xf]
    %v160 = vld [vmem:[%s1 + $0x324] sm:$0xff]
    %v161 = vld [vmem:[%s1 + $0x32c] sm:$0xf]
    %v162 = vld [vmem:[%s1 + $0x330] sm:$0xff]
    %v163 = vld [vmem:[%s1 + $0x338] sm:$0xf]
    %v164 = vld [vmem:[%s1 + $0x33c] sm:$0xff]
    %v165 = vld [vmem:[%s1 + $0x344] sm:$0xf]
    %v166 = vld [vmem:[%s1 + $0x348] sm:$0xff]
    %v167 = vld [vmem:[%s1 + $0x350] sm:$0xf]
    %v168 = vld [vmem:[%s1 + $0x354] sm:$0xff]
    %v169 = vld [vmem:[%s1 + $0x35c] sm:$0xf]
    %v170 = vld [vmem:[%s1 + $0x360] sm:$0xff]
    %v171 = vld [vmem:[%s1 + $0x368] sm:$0xf]
    %v172 = vld [vmem:[%s1 + $0x36c] sm:$0xff]
    %v173 = vld [vmem:[%s1 + $0x374] sm:$0xf]
    %v174 = vld [vmem:[%s1 + $0x378] sm:$0xff]
    %v175 = vld [vmem:[%s1 + $0x380] sm:$0xf]
    %v176 = vld [vmem:[%s1 + $0x384] sm:$0xff]
    %v177 = vld [vmem:[%s1 + $0x38c] sm:$0xf]
    %v178 = vld [vmem:[%s1 + $0x390] sm:$0xff]
    %v179 = vld [vmem:[%s1 + $0x398] sm:$0xf]
    %v180 = vld [vmem:[%s1 + $0x39c] sm:$0xff]
    %v181 = vld [vmem:[%s1 + $0x3a4] sm:$0xf]
    %v182 = vld [vmem:[%s1 + $0x3a8] sm:$0xff]
    %v183 = vld [vmem:[%s1 + $0x3b0] sm:$0xf]
    %v184 = vld [vmem:[%s1 + $0x3b4] sm:$0xff]
    %v185 = vld [vmem:[%s1 + $0x3bc] sm:$0xf]
    %v186 = vld [vmem:[%s1 + $0x3c0] sm:$0xff]
    %v187 = vld [vmem:[%s1 + $0x3c8] sm:$0xf]
    %v188 = vld [vmem:[%s1 + $0x3cc] sm:$0xff]
    %v189 = vld [vmem:[%s1 + $0x3d4] sm:$0xf]
    %v190 = vld [vmem:[%s1 + $0x3d8] sm:$0xff]
    %v191 = vld [vmem:[%s1 + $0x3e0] sm:$0xf]
    %v192 = vld [vmem:[%s1 + $0x3e4] sm:$0xff]
    %v193 = vld [vmem:[%s1 + $0x3ec] sm:$0xf]
    %v194 = vld [vmem:[%s1 + $0x3f0] sm:$0xff]
    %v195 = vld [vmem:[%s1 + $0x3f8] sm:$0xf]
    %v196 = vld [vmem:[%s1 + $0x3fc] sm:$0xff]
    %v197 = vld [vmem:[%s1 + $0x404] sm:$0xf]
    %v198 = vld [vmem:[%s1 + $0x408] sm:$0xff]
    %v199 = vld [vmem:[%s1 + $0x410] sm:$0xf]
    %v200 = vld [vmem:[%s1 + $0x414] sm:$0xff]
    %v201 = vld [vmem:[%s1 + $0x41c] sm:$0xf]
    %v202 = vld [vmem:[%s1 + $0x420] sm:$0xff]
    %v203 = vld [vmem:[%s1 + $0x428] sm:$0xf]
    %v204 = vld [vmem:[%s1 + $0x42c] sm:$0xff]
    %v205 = vld [vmem:[%s1 + $0x434] sm:$0xf]
    %v206 = vld [vmem:[%s1 + $0x438] sm:$0xff]
    %v207 = vld [vmem:[%s1 + $0x440] sm:$0xf]
    %v208 = vld [vmem:[%s1 + $0x444] sm:$0xff]
    %v209 = vld [vmem:[%s1 + $0x44c] sm:$0xf]
    %v210 = vld [vmem:[%s1 + $0x450] sm:$0xff]
    %v211 = vld [vmem:[%s1 + $0x458] sm:$0xf]
    %v212 = vld [vmem:[%s1 + $0x45c] sm:$0xff]
    %v213 = vld [vmem:[%s1 + $0x464] sm:$0xf]
    %v214 = vld [vmem:[%s1 + $0x468] sm:$0xff]
    %v215 = vld [vmem:[%s1 + $0x470] sm:$0xf]
    %v216 = vld [vmem:[%s1 + $0x474] sm:$0xff]
    %v217 = vld [vmem:[%s1 + $0x47c] sm:$0xf]
    %v218 = vld [vmem:[%s1 + $0x480] sm:$0xff]
    %v219 = vld [vmem:[%s1 + $0x488] sm:$0xf]
    %v220 = vld [vmem:[%s1 + $0x48c] sm:$0xff]
    %v221 = vld [vmem:[%s1 + $0x494] sm:$0xf]
    %v222 = vld [vmem:[%s1 + $0x498] sm:$0xff]
    %v223 = vld [vmem:[%s1 + $0x4a0] sm:$0xf]
    %v224 = vld [vmem:[%s1 + $0x4a4] sm:$0xff]
    %v225 = vld [vmem:[%s1 + $0x4ac] sm:$0xf]
    %v226 = vld [vmem:[%s1 + $0x4b0] sm:$0xff]
    %v227 = vld [vmem:[%s1 + $0x4b8] sm:$0xf]
    %v228 = vld [vmem:[%s1 + $0x4bc] sm:$0xff]
    %v229 = vld [vmem:[%s1 + $0x4c4] sm:$0xf]
    %v230 = vld [vmem:[%s1 + $0x4c8] sm:$0xff]
    %v231 = vld [vmem:[%s1 + $0x4d0] sm:$0xf]
    %v232 = vld [vmem:[%s1 + $0x4d4] sm:$0xff]
    %v233 = vld [vmem:[%s1 + $0x4dc] sm:$0xf]
    %v234 = vld [vmem:[%s1 + $0x4e0] sm:$0xff]
    %v235 = vld [vmem:[%s1 + $0x4e8] sm:$0xf]
    %v236 = vld [vmem:[%s1 + $0x4ec] sm:$0xff]
    %v237 = vld [vmem:[%s1 + $0x4f4] sm:$0xf]
    %v238 = vld [vmem:[%s1 + $0x4f8] sm:$0xff]
    %v239 = vld [vmem:[%s1 + $0x500] sm:$0xf]
    %v240 = vld [vmem:[%s1 + $0x504] sm:$0xff]
    %v241 = vld [vmem:[%s1 + $0x50c] sm:$0xf]
    %v242 = vld [vmem:[%s1 + $0x510] sm:$0xff]
    %v243 = vld [vmem:[%s1 + $0x518] sm:$0xf]
    %v244 = vld [vmem:[%s1 + $0x51c] sm:$0xff]
    %v245 = vld [vmem:[%s1 + $0x524] sm:$0xf]
    %v246 = vld [vmem:[%s1 + $0x528] sm:$0xff]
    %v247 = vld [vmem:[%s1 + $0x530] sm:$0xf]
    %v248 = vld [vmem:[%s1 + $0x534] sm:$0xff]
    %v249 = vld [vmem:[%s1 + $0x53c] sm:$0xf]
    %v250 = vld [vmem:[%s1 + $0x540] sm:$0xff]
    %v251 = vld [vmem:[%s1 + $0x548] sm:$0xf]
    %v252 = vld [vmem:[%s1 + $0x54c] sm:$0xff]
    %v253 = vld [vmem:[%s1 + $0x554] sm:$0xf]
    %v254 = vld [vmem:[%s1 + $0x558] sm:$0xff]
    %v255 = vld [vmem:[%s1 + $0x560] sm:$0xf]
    %v256 = vld [vmem:[%s1 + $0x564] sm:$0xff]
    %v257 = vld [vmem:[%s1 + $0x56c] sm:$0xf]
    %v258 = vld [vmem:[%s1 + $0x570] sm:$0xff]
    %v259 = vld [vmem:[%s1 + $0x578] sm:$0xf]
    %v260 = vld [vmem:[%s1 + $0x57c] sm:$0xff]
    %v261 = vld [vmem:[%s1 + $0x584] sm:$0xf]
    %v262 = vld [vmem:[%s1 + $0x588] sm:$0xff]
    %v263 = vld [vmem:[%s1 + $0x590] sm:$0xf]
    %v264 = vld [vmem:[%s1 + $0x594] sm:$0xff]
    %v265 = vld [vmem:[%s1 + $0x59c] sm:$0xf]
    %v266 = vld [vmem:[%s1 + $0x5a0] sm:$0xff]
    %v267 = vld [vmem:[%s1 + $0x5a8] sm:$0xf]
    %v268 = vld [vmem:[%s1 + $0x5ac] sm:$0xff]
    %v269 = vld [vmem:[%s1 + $0x5b4] sm:$0xf]
    %v270 = vld [vmem:[%s1 + $0x5b8] sm:$0xff]
    %v271 = vld [vmem:[%s1 + $0x5c0] sm:$0xf]
    %v272 = vld [vmem:[%s1 + $0x5c4] sm:$0xff]
    %v273 = vld [vmem:[%s1 + $0x5cc] sm:$0xf]
    %v274 = vld [vmem:[%s1 + $0x5d0] sm:$0xff]
    %v275 = vld [vmem:[%s1 + $0x5d8] sm:$0xf]
    %v276 = vld [vmem:[%s1 + $0x5dc] sm:$0xff]
    %v277 = vld [vmem:[%s1 + $0x5e4] sm:$0xf]
    %v278 = vld [vmem:[%s1 + $0x5e8] sm:$0xff]
    %v279 = vld [vmem:[%s1 + $0x5f0] sm:$0xf]
    %v280 = vld [vmem:[%s1 + $0x5f4] sm:$0xff]
    %v281 = vld [vmem:[%s1 + $0x5fc] sm:$0xf]
    %v282 = vld [vmem:[%s1 + $0x600] sm:$0xff]
    %v283 = vld [vmem:[%s1 + $0x608] sm:$0xf]
    %v284 = vld [vmem:[%s1 + $0x60c] sm:$0xff]
    %v285 = vld [vmem:[%s1 + $0x614] sm:$0xf]
    %v286 = vld [vmem:[%s1 + $0x618] sm:$0xff]
    %v287 = vld [vmem:[%s1 + $0x620] sm:$0xf]
    %v288 = vld [vmem:[%s1 + $0x624] sm:$0xff]
    %v289 = vld [vmem:[%s1 + $0x62c] sm:$0xf]
    %v290 = vld [vmem:[%s1 + $0x630] sm:$0xff]
    %v291 = vld [vmem:[%s1 + $0x638] sm:$0xf]
    %v292 = vld [vmem:[%s1 + $0x63c] sm:$0xff]
    %v293 = vld [vmem:[%s1 + $0x644] sm:$0xf]
    %v294 = vld [vmem:[%s1 + $0x648] sm:$0xff]
    %v295 = vld [vmem:[%s1 + $0x650] sm:$0xf]
    %v296 = vld [vmem:[%s1 + $0x654] sm:$0xff]
    %v297 = vld [vmem:[%s1 + $0x65c] sm:$0xf]
    %v298 = vld [vmem:[%s1 + $0x660] sm:$0xff]
    %v299 = vld [vmem:[%s1 + $0x668] sm:$0xf]
    %v300 = vld [vmem:[%s1 + $0x66c] sm:$0xff]
    %v301 = vld [vmem:[%s1 + $0x674] sm:$0xf]
    %v302 = vld [vmem:[%s1 + $0x678] sm:$0xff]
    %v303 = vld [vmem:[%s1 + $0x680] sm:$0xf]
    %v304 = vld [vmem:[%s1 + $0x684] sm:$0xff]
    %v305 = vld [vmem:[%s1 + $0x68c] sm:$0xf]
    %v306 = vld [vmem:[%s1 + $0x690] sm:$0xff]
    %v307 = vld [vmem:[%s1 + $0x698] sm:$0xf]
    %v308 = vld [vmem:[%s1 + $0x69c] sm:$0xff]
    %v309 = vld [vmem:[%s1 + $0x6a4] sm:$0xf]
    %v310 = vld [vmem:[%s1 + $0x6a8] sm:$0xff]
    %v311 = vld [vmem:[%s1 + $0x6b0] sm:$0xf]
    %v312 = vld [vmem:[%s1 + $0x6b4] sm:$0xff]
    %v313 = vld [vmem:[%s1 + $0x6bc] sm:$0xf]
    %v314 = vld [vmem:[%s1 + $0x6c0] sm:$0xff]
    %v315 = vld [vmem:[%s1 + $0x6c8] sm:$0xf]
    %v316 = vld [vmem:[%s1 + $0x6cc] sm:$0xff]
    %v317 = vld [vmem:[%s1 + $0x6d4] sm:$0xf]
    %v318 = vld [vmem:[%s1 + $0x6d8] sm:$0xff]
    %v319 = vld [vmem:[%s1 + $0x6e0] sm:$0xf]
    %v320 = vld [vmem:[%s1 + $0x6e4] sm:$0xff]
    %v321 = vld [vmem:[%s1 + $0x6ec] sm:$0xf]
    %v322 = vld [vmem:[%s1 + $0x6f0] sm:$0xff]
    %v323 = vld [vmem:[%s1 + $0x6f8] sm:$0xf]
    %v324 = vld [vmem:[%s1 + $0x6fc] sm:$0xff]
    %v325 = vld [vmem:[%s1 + $0x704] sm:$0xf]
    %v326 = vld [vmem:[%s1 + $0x708] sm:$0xff]
    %v327 = vld [vmem:[%s1 + $0x710] sm:$0xf]
    %v328 = vld [vmem:[%s1 + $0x714] sm:$0xff]
    %v329 = vld [vmem:[%s1 + $0x71c] sm:$0xf]
    %v330 = vld [vmem:[%s1 + $0x720] sm:$0xff]
    %v331 = vld [vmem:[%s1 + $0x728] sm:$0xf]
    %v332 = vld [vmem:[%s1 + $0x72c] sm:$0xff]
    %v333 = vld [vmem:[%s1 + $0x734] sm:$0xf]
    %v334 = vld [vmem:[%s1 + $0x738] sm:$0xff]
    %v335 = vld [vmem:[%s1 + $0x740] sm:$0xf]
    %v336 = vld [vmem:[%s1 + $0x744] sm:$0xff]
    %v337 = vld [vmem:[%s1 + $0x74c] sm:$0xf]
    %v338 = vld [vmem:[%s1 + $0x750] sm:$0xff]
    %v339 = vld [vmem:[%s1 + $0x758] sm:$0xf]
    %v340 = vld [vmem:[%s1 + $0x75c] sm:$0xff]
    %v341 = vld [vmem:[%s1 + $0x764] sm:$0xf]
    %v342 = vld [vmem:[%s1 + $0x768] sm:$0xff]
    %v343 = vld [vmem:[%s1 + $0x770] sm:$0xf]
    %v344 = vld [vmem:[%s1 + $0x774] sm:$0xff]
    %v345 = vld [vmem:[%s1 + $0x77c] sm:$0xf]
    %v346 = vld [vmem:[%s1 + $0x780] sm:$0xff]
    %v347 = vld [vmem:[%s1 + $0x788] sm:$0xf]
    %v348 = vld [vmem:[%s1 + $0x78c] sm:$0xff]
    %v349 = vld [vmem:[%s1 + $0x794] sm:$0xf]
    %v350 = vld [vmem:[%s1 + $0x798] sm:$0xff]
    %v351 = vld [vmem:[%s1 + $0x7a0] sm:$0xf]
    %v352 = vld [vmem:[%s1 + $0x7a4] sm:$0xff]
    %v353 = vld [vmem:[%s1 + $0x7ac] sm:$0xf]
    %v354 = vld [vmem:[%s1 + $0x7b0] sm:$0xff]
    %v355 = vld [vmem:[%s1 + $0x7b8] sm:$0xf]
    %v356 = vld [vmem:[%s1 + $0x7bc] sm:$0xff]
    %v357 = vld [vmem:[%s1 + $0x7c4] sm:$0xf]
    %v358 = vld [vmem:[%s1 + $0x7c8] sm:$0xff]
    %v359 = vld [vmem:[%s1 + $0x7d0] sm:$0xf]
    %v360 = vld [vmem:[%s1 + $0x7d4] sm:$0xff]
    %v361 = vld [vmem:[%s1 + $0x7dc] sm:$0xf]
    %v362 = vld [vmem:[%s1 + $0x7e0] sm:$0xff]
    %v363 = vld [vmem:[%s1 + $0x7e8] sm:$0xf]
    %v364 = vld [vmem:[%s1 + $0x7ec] sm:$0xff]
    %v365 = vld [vmem:[%s1 + $0x7f4] sm:$0xf]
    %v366 = vld [vmem:[%s1 + $0x7f8] sm:$0xff]
    %v367 = vld [vmem:[%s1 + $0x800] sm:$0xf]
    %v368 = vld [vmem:[%s1 + $0x804] sm:$0xff]
    %v369 = vld [vmem:[%s1 + $0x80c] sm:$0xf]
    %v370 = vld [vmem:[%s1 + $0x810] sm:$0xff]
    %v371 = vld [vmem:[%s1 + $0x818] sm:$0xf]
    %v372 = vld [vmem:[%s1 + $0x81c] sm:$0xff]
    %v373 = vld [vmem:[%s1 + $0x824] sm:$0xf]
    %v374 = vld [vmem:[%s1 + $0x828] sm:$0xff]
    %v375 = vld [vmem:[%s1 + $0x830] sm:$0xf]
    %v376 = vld [vmem:[%s1 + $0x834] sm:$0xff]
    %v377 = vld [vmem:[%s1 + $0x83c] sm:$0xf]
    %v378 = vld [vmem:[%s1 + $0x840] sm:$0xff]
    %v379 = vld [vmem:[%s1 + $0x848] sm:$0xf]
    %v380 = vld [vmem:[%s1 + $0x84c] sm:$0xff]
    %v381 = vld [vmem:[%s1 + $0x854] sm:$0xf]
    %v382 = vld [vmem:[%s1 + $0x858] sm:$0xff]
    %v383 = vld [vmem:[%s1 + $0x860] sm:$0xf]
    %v384 = vld [vmem:[%s1 + $0x864] sm:$0xff]
    %v385 = vld [vmem:[%s1 + $0x86c] sm:$0xf]
    %v386 = vld [vmem:[%s1 + $0x870] sm:$0xff]
    %v387 = vld [vmem:[%s1 + $0x878] sm:$0xf]
    %v388 = vld [vmem:[%s1 + $0x87c] sm:$0xff]
    %v389 = vld [vmem:[%s1 + $0x884] sm:$0xf]
    %v390 = vld [vmem:[%s1 + $0x888] sm:$0xff]
    %v391 = vld [vmem:[%s1 + $0x890] sm:$0xf]
    %v392 = vld [vmem:[%s1 + $0x894] sm:$0xff]
    %v393 = vld [vmem:[%s1 + $0x89c] sm:$0xf]
    %v394 = vld [vmem:[%s1 + $0x8a0] sm:$0xff]
    %v395 = vld [vmem:[%s1 + $0x8a8] sm:$0xf]
    %v396 = vld [vmem:[%s1 + $0x8ac] sm:$0xff]
    %v397 = vld [vmem:[%s1 + $0x8b4] sm:$0xf]
    %v398 = vld [vmem:[%s1 + $0x8b8] sm:$0xff]
    %v399 = vld [vmem:[%s1 + $0x8c0] sm:$0xf]
    %v400 = vld [vmem:[%s1 + $0x8c4] sm:$0xff]
    %v401 = vld [vmem:[%s1 + $0x8cc] sm:$0xf]
    %v402 = vld [vmem:[%s1 + $0x8d0] sm:$0xff]
    %v403 = vld [vmem:[%s1 + $0x8d8] sm:$0xf]
    %v404 = vld [vmem:[%s1 + $0x8dc] sm:$0xff]
    %v405 = vld [vmem:[%s1 + $0x8e4] sm:$0xf]
    %v406 = vld [vmem:[%s1 + $0x8e8] sm:$0xff]
    %v407 = vld [vmem:[%s1 + $0x8f0] sm:$0xf]
    %v408 = vld [vmem:[%s1 + $0x8f4] sm:$0xff]
    %v409 = vld [vmem:[%s1 + $0x8fc] sm:$0xf]
    %v410 = vld [vmem:[%s1 + $0x900] sm:$0xff]
    %v411 = vld [vmem:[%s1 + $0x908] sm:$0xf]
    %v412 = vld [vmem:[%s1 + $0x90c] sm:$0xff]
    %v413 = vld [vmem:[%s1 + $0x914] sm:$0xf]
    %v414 = vld [vmem:[%s1 + $0x918] sm:$0xff]
    %v415 = vld [vmem:[%s1 + $0x920] sm:$0xf]
    %v416 = vld [vmem:[%s1 + $0x924] sm:$0xff]
    %v417 = vld [vmem:[%s1 + $0x92c] sm:$0xf]
    %v418 = vld [vmem:[%s1 + $0x930] sm:$0xff]
    %v419 = vld [vmem:[%s1 + $0x938] sm:$0xf]
    %v420 = vld [vmem:[%s1 + $0x93c] sm:$0xff]
    %v421 = vld [vmem:[%s1 + $0x944] sm:$0xf]
    %v422 = vld [vmem:[%s1 + $0x948] sm:$0xff]
    %v423 = vld [vmem:[%s1 + $0x950] sm:$0xf]
    %v424 = vld [vmem:[%s1 + $0x954] sm:$0xff]
    %v425 = vld [vmem:[%s1 + $0x95c] sm:$0xf]
    %v426 = vld [vmem:[%s1 + $0x960] sm:$0xff]
    %v427 = vld [vmem:[%s1 + $0x968] sm:$0xf]
    %v428 = vld [vmem:[%s1 + $0x96c] sm:$0xff]
    %v429 = vld [vmem:[%s1 + $0x974] sm:$0xf]
    %v430 = vld [vmem:[%s1 + $0x978] sm:$0xff]
    %v431 = vld [vmem:[%s1 + $0x980] sm:$0xf]
    %v432 = vld [vmem:[%s1 + $0x984] sm:$0xff]
    %v433 = vld [vmem:[%s1 + $0x98c] sm:$0xf]
    %v434 = vld [vmem:[%s1 + $0x990] sm:$0xff]
    %v435 = vld [vmem:[%s1 + $0x998] sm:$0xf]
    %v436 = vld [vmem:[%s1 + $0x99c] sm:$0xff]
    %v437 = vld [vmem:[%s1 + $0x9a4] sm:$0xf]
    %v438 = vld [vmem:[%s1 + $0x9a8] sm:$0xff]
    %v439 = vld [vmem:[%s1 + $0x9b0] sm:$0xf]
    %v440 = vld [vmem:[%s1 + $0x9b4] sm:$0xff]
    %v441 = vld [vmem:[%s1 + $0x9bc] sm:$0xf]
    %v442 = vld [vmem:[%s1 + $0x9c0] sm:$0xff]
    %v443 = vld [vmem:[%s1 + $0x9c8] sm:$0xf]
    %v444 = vld [vmem:[%s1 + $0x9cc] sm:$0xff]
    %v445 = vld [vmem:[%s1 + $0x9d4] sm:$0xf]
    %v446 = vld [vmem:[%s1 + $0x9d8] sm:$0xff]
    %v447 = vld [vmem:[%s1 + $0x9e0] sm:$0xf]
    %v448 = vld [vmem:[%s1 + $0x9e4] sm:$0xff]
    %v449 = vld [vmem:[%s1 + $0x9ec] sm:$0xf]
    %v450 = vld [vmem:[%s1 + $0x9f0] sm:$0xff]
    %v451 = vld [vmem:[%s1 + $0x9f8] sm:$0xf]
    %v452 = vld [vmem:[%s1 + $0x9fc] sm:$0xff]
    %v453 = vld [vmem:[%s1 + $0xa04] sm:$0xf]
    %v454 = vld [vmem:[%s1 + $0xa08] sm:$0xff]
    %v455 = vld [vmem:[%s1 + $0xa10] sm:$0xf]
    %v456 = vld [vmem:[%s1 + $0xa14] sm:$0xff]
    %v457 = vld [vmem:[%s1 + $0xa1c] sm:$0xf]
    %v458 = vld [vmem:[%s1 + $0xa20] sm:$0xff]
    %v459 = vld [vmem:[%s1 + $0xa28] sm:$0xf]
    %v460 = vld [vmem:[%s1 + $0xa2c] sm:$0xff]
    %v461 = vld [vmem:[%s1 + $0xa34] sm:$0xf]
    %v462 = vld [vmem:[%s1 + $0xa38] sm:$0xff]
    %v463 = vld [vmem:[%s1 + $0xa40] sm:$0xf]
    %v464 = vld [vmem:[%s1 + $0xa44] sm:$0xff]
    %v465 = vld [vmem:[%s1 + $0xa4c] sm:$0xf]
    %v466 = vld [vmem:[%s1 + $0xa50] sm:$0xff]
    %v467 = vld [vmem:[%s1 + $0xa58] sm:$0xf]
    %v468 = vld [vmem:[%s1 + $0xa5c] sm:$0xff]
    %v469 = vld [vmem:[%s1 + $0xa64] sm:$0xf]
    %v470 = vld [vmem:[%s1 + $0xa68] sm:$0xff]
    %v471 = vld [vmem:[%s1 + $0xa70] sm:$0xf]
    %v472 = vld [vmem:[%s1 + $0xa74] sm:$0xff]
    %v473 = vld [vmem:[%s1 + $0xa7c] sm:$0xf]
    %v474 = vld [vmem:[%s1 + $0xa80] sm:$0xff]
    %v475 = vld [vmem:[%s1 + $0xa88] sm:$0xf]
    %v476 = vld [vmem:[%s1 + $0xa8c] sm:$0xff]
    %v477 = vld [vmem:[%s1 + $0xa94] sm:$0xf]
    %v478 = vld [vmem:[%s1 + $0xa98] sm:$0xff]
    %v479 = vld [vmem:[%s1 + $0xaa0] sm:$0xf]
    %v480 = vld [vmem:[%s1 + $0xaa4] sm:$0xff]
    %v481 = vld [vmem:[%s1 + $0xaac] sm:$0xf]
    %v482 = vld [vmem:[%s1 + $0xab0] sm:$0xff]
    %v483 = vld [vmem:[%s1 + $0xab8] sm:$0xf]
    %v484 = vld [vmem:[%s1 + $0xabc] sm:$0xff]
    %v485 = vld [vmem:[%s1 + $0xac4] sm:$0xf]
    %v486 = vld [vmem:[%s1 + $0xac8] sm:$0xff]
    %v487 = vld [vmem:[%s1 + $0xad0] sm:$0xf]
    %v488 = vld [vmem:[%s1 + $0xad4] sm:$0xff]
    %v489 = vld [vmem:[%s1 + $0xadc] sm:$0xf]
    %v490 = vld [vmem:[%s1 + $0xae0] sm:$0xff]
    %v491 = vld [vmem:[%s1 + $0xae8] sm:$0xf]
    %v492 = vld [vmem:[%s1 + $0xaec] sm:$0xff]
    %v493 = vld [vmem:[%s1 + $0xaf4] sm:$0xf]
    %v494 = vld [vmem:[%s1 + $0xaf8] sm:$0xff]
    %v495 = vld [vmem:[%s1 + $0xb00] sm:$0xf]
    %v496 = vld [vmem:[%s1 + $0xb04] sm:$0xff]
    %v497 = vld [vmem:[%s1 + $0xb0c] sm:$0xf]
    %v498 = vld [vmem:[%s1 + $0xb10] sm:$0xff]
    %v499 = vld [vmem:[%s1 + $0xb18] sm:$0xf]
    %v500 = vld [vmem:[%s1 + $0xb1c] sm:$0xff]
    %v501 = vld [vmem:[%s1 + $0xb24] sm:$0xf]
    %v502 = vld [vmem:[%s1 + $0xb28] sm:$0xff]
    %v503 = vld [vmem:[%s1 + $0xb30] sm:$0xf]
    %v504 = vld [vmem:[%s1 + $0xb34] sm:$0xff]
    %v505 = vld [vmem:[%s1 + $0xb3c] sm:$0xf]
    %v506 = vld [vmem:[%s1 + $0xb40] sm:$0xff]
    %v507 = vld [vmem:[%s1 + $0xb48] sm:$0xf]
    %v508 = vld [vmem:[%s1 + $0xb4c] sm:$0xff]
    %v509 = vld [vmem:[%s1 + $0xb54] sm:$0xf]
    %v510 = vld [vmem:[%s1 + $0xb58] sm:$0xff]
    %v511 = vld [vmem:[%s1 + $0xb60] sm:$0xf]
    %v512 = vld [vmem:[%s1 + $0xb64] sm:$0xff]
    %v513 = vld [vmem:[%s1 + $0xb6c] sm:$0xf]
    %v514 = vld [vmem:[%s1 + $0xb70] sm:$0xff]
    %v515 = vld [vmem:[%s1 + $0xb78] sm:$0xf]
    %v516 = vld [vmem:[%s1 + $0xb7c] sm:$0xff]
    %v517 = vld [vmem:[%s1 + $0xb84] sm:$0xf]
    %v518 = vld [vmem:[%s1 + $0xb88] sm:$0xff]
    %v519 = vld [vmem:[%s1 + $0xb90] sm:$0xf]
    %v520 = vld [vmem:[%s1 + $0xb94] sm:$0xff]
    %v521 = vld [vmem:[%s1 + $0xb9c] sm:$0xf]
    %v522 = vld [vmem:[%s1 + $0xba0] sm:$0xff]
    %v523 = vld [vmem:[%s1 + $0xba8] sm:$0xf]
    %v524 = vld [vmem:[%s1 + $0xbac] sm:$0xff]
    %v525 = vld [vmem:[%s1 + $0xbb4] sm:$0xf]
    %v526 = vld [vmem:[%s1 + $0xbb8] sm:$0xff]
    %v527 = vld [vmem:[%s1 + $0xbc0] sm:$0xf]
    %v528 = vld [vmem:[%s1 + $0xbc4] sm:$0xff]
    %v529 = vld [vmem:[%s1 + $0xbcc] sm:$0xf]
    %v530 = vld [vmem:[%s1 + $0xbd0] sm:$0xff]
    %v531 = vld [vmem:[%s1 + $0xbd8] sm:$0xf]
    %v532 = vld [vmem:[%s1 + $0xbdc] sm:$0xff]
    %v533 = vld [vmem:[%s1 + $0xbe4] sm:$0xf]
    %v534 = vld [vmem:[%s1 + $0xbe8] sm:$0xff]
    %v535 = vld [vmem:[%s1 + $0xbf0] sm:$0xf]
    %v536 = vld [vmem:[%s1 + $0xbf4] sm:$0xff]
    %v537 = vld [vmem:[%s1 + $0xbfc] sm:$0xf]
    %v538 = vld [vmem:[%s1 + $0xc00] sm:$0xff]
    %v539 = vld [vmem:[%s1 + $0xc08] sm:$0xf]
    %v540 = vld [vmem:[%s1 + $0xc0c] sm:$0xff]
    %v541 = vld [vmem:[%s1 + $0xc14] sm:$0xf]
    %v542 = vld [vmem:[%s1 + $0xc18] sm:$0xff]
    %v543 = vld [vmem:[%s1 + $0xc20] sm:$0xf]
    %v544 = vld [vmem:[%s1 + $0xc24] sm:$0xff]
    %v545 = vld [vmem:[%s1 + $0xc2c] sm:$0xf]
    %v546 = vld [vmem:[%s1 + $0xc30] sm:$0xff]
    %v547 = vld [vmem:[%s1 + $0xc38] sm:$0xf]
    %v548 = vld [vmem:[%s1 + $0xc3c] sm:$0xff]
    %v549 = vld [vmem:[%s1 + $0xc44] sm:$0xf]
    %v550 = vld [vmem:[%s1 + $0xc48] sm:$0xff]
    %v551 = vld [vmem:[%s1 + $0xc50] sm:$0xf]
    %v552 = vld [vmem:[%s1 + $0xc54] sm:$0xff]
    %v553 = vld [vmem:[%s1 + $0xc5c] sm:$0xf]
    %v554 = vld [vmem:[%s1 + $0xc60] sm:$0xff]
    %v555 = vld [vmem:[%s1 + $0xc68] sm:$0xf]
    %v556 = vld [vmem:[%s1 + $0xc6c] sm:$0xff]
    %v557 = vld [vmem:[%s1 + $0xc74] sm:$0xf]
    %v558 = vld [vmem:[%s1 + $0xc78] sm:$0xff]
    %v559 = vld [vmem:[%s1 + $0xc80] sm:$0xf]
    %v560 = vld [vmem:[%s1 + $0xc84] sm:$0xff]
    %v561 = vld [vmem:[%s1 + $0xc8c] sm:$0xf]
    %v562 = vld [vmem:[%s1 + $0xc90] sm:$0xff]
    %v563 = vld [vmem:[%s1 + $0xc98] sm:$0xf]
    %v564 = vld [vmem:[%s1 + $0xc9c] sm:$0xff]
    %v565 = vld [vmem:[%s1 + $0xca4] sm:$0xf]
    %v566 = vld [vmem:[%s1 + $0xca8] sm:$0xff]
    %v567 = vld [vmem:[%s1 + $0xcb0] sm:$0xf]
    %v568 = vld [vmem:[%s1 + $0xcb4] sm:$0xff]
    %v569 = vld [vmem:[%s1 + $0xcbc] sm:$0xf]
    %v570 = vld [vmem:[%s1 + $0xcc0] sm:$0xff]
    %v571 = vld [vmem:[%s1 + $0xcc8] sm:$0xf]
    %v572 = vld [vmem:[%s1 + $0xccc] sm:$0xff]
    %v573 = vld [vmem:[%s1 + $0xcd4] sm:$0xf]
    %v574 = vld [vmem:[%s1 + $0xcd8] sm:$0xff]
    %v575 = vld [vmem:[%s1 + $0xce0] sm:$0xf]
    %v576 = vld [vmem:[%s1 + $0xce4] sm:$0xff]
    %v577 = vld [vmem:[%s1 + $0xcec] sm:$0xf]
    %v578 = vld [vmem:[%s1 + $0xcf0] sm:$0xff]
    %v579 = vld [vmem:[%s1 + $0xcf8] sm:$0xf]
    %v580 = vld [vmem:[%s1 + $0xcfc] sm:$0xff]
    %v581 = vld [vmem:[%s1 + $0xd04] sm:$0xf]
    %v582 = vld [vmem:[%s1 + $0xd08] sm:$0xff]
    %v583 = vld [vmem:[%s1 + $0xd10] sm:$0xf]
    %v584 = vld [vmem:[%s1 + $0xd14] sm:$0xff]
    %v585 = vld [vmem:[%s1 + $0xd1c] sm:$0xf]
    %v586 = vld [vmem:[%s1 + $0xd20] sm:$0xff]
    %v587 = vld [vmem:[%s1 + $0xd28] sm:$0xf]
    %v588 = vld [vmem:[%s1 + $0xd2c] sm:$0xff]
    %v589 = vld [vmem:[%s1 + $0xd34] sm:$0xf]
    %v590 = vld [vmem:[%s1 + $0xd38] sm:$0xff]
    %v591 = vld [vmem:[%s1 + $0xd40] sm:$0xf]
    %v592 = vld [vmem:[%s1 + $0xd44] sm:$0xff]
    %v593 = vld [vmem:[%s1 + $0xd4c] sm:$0xf]
    %v594 = vld [vmem:[%s1 + $0xd50] sm:$0xff]
    %v595 = vld [vmem:[%s1 + $0xd58] sm:$0xf]
    %v596 = vld [vmem:[%s1 + $0xd5c] sm:$0xff]
    %v597 = vld [vmem:[%s1 + $0xd64] sm:$0xf]
    %v598 = vld [vmem:[%s1 + $0xd68] sm:$0xff]
    %v599 = vld [vmem:[%s1 + $0xd70] sm:$0xf]
    %v600 = vld [vmem:[%s1 + $0xd74] sm:$0xff]
    %v601 = vld [vmem:[%s1 + $0xd7c] sm:$0xf]
    %v602 = vld [vmem:[%s1 + $0xd80] sm:$0xff]
    %v603 = vld [vmem:[%s1 + $0xd88] sm:$0xf]
    %v604 = vld [vmem:[%s1 + $0xd8c] sm:$0xff]
    %v605 = vld [vmem:[%s1 + $0xd94] sm:$0xf]
    %v606 = vld [vmem:[%s1 + $0xd98] sm:$0xff]
    %v607 = vld [vmem:[%s1 + $0xda0] sm:$0xf]
    %v608 = vld [vmem:[%s1 + $0xda4] sm:$0xff]
    %v609 = vld [vmem:[%s1 + $0xdac] sm:$0xf]
    %v610 = vld [vmem:[%s1 + $0xdb0] sm:$0xff]
    %v611 = vld [vmem:[%s1 + $0xdb8] sm:$0xf]
    %v612 = vld [vmem:[%s1 + $0xdbc] sm:$0xff]
    %v613 = vld [vmem:[%s1 + $0xdc4] sm:$0xf]
    %v614 = vld [vmem:[%s1 + $0xdc8] sm:$0xff]
    %v615 = vld [vmem:[%s1 + $0xdd0] sm:$0xf]
    %v616 = vld [vmem:[%s1 + $0xdd4] sm:$0xff]
    %v617 = vld [vmem:[%s1 + $0xddc] sm:$0xf]
    %v618 = vld [vmem:[%s1 + $0xde0] sm:$0xff]
    %v619 = vld [vmem:[%s1 + $0xde8] sm:$0xf]
    %v620 = vld [vmem:[%s1 + $0xdec] sm:$0xff]
    %v621 = vld [vmem:[%s1 + $0xdf4] sm:$0xf]
    %v622 = vld [vmem:[%s1 + $0xdf8] sm:$0xff]
    %v623 = vld [vmem:[%s1 + $0xe00] sm:$0xf]
    %v624 = vld [vmem:[%s1 + $0xe04] sm:$0xff]
    %v625 = vld [vmem:[%s1 + $0xe0c] sm:$0xf]
    %v626 = vld [vmem:[%s1 + $0xe10] sm:$0xff]
    %v627 = vld [vmem:[%s1 + $0xe18] sm:$0xf]
    %v628 = vld [vmem:[%s1 + $0xe1c] sm:$0xff]
    %v629 = vld [vmem:[%s1 + $0xe24] sm:$0xf]
    %v630 = vld [vmem:[%s1 + $0xe28] sm:$0xff]
    %v631 = vld [vmem:[%s1 + $0xe30] sm:$0xf]
    %v632 = vld [vmem:[%s1 + $0xe34] sm:$0xff]
    %v633 = vld [vmem:[%s1 + $0xe3c] sm:$0xf]
    %v634 = vld [vmem:[%s1 + $0xe40] sm:$0xff]
    %v635 = vld [vmem:[%s1 + $0xe48] sm:$0xf]
    %v636 = vld [vmem:[%s1 + $0xe4c] sm:$0xff]
    %v637 = vld [vmem:[%s1 + $0xe54] sm:$0xf]
    %v638 = vld [vmem:[%s1 + $0xe58] sm:$0xff]
    %v639 = vld [vmem:[%s1 + $0xe60] sm:$0xf]
    %v640 = vld [vmem:[%s1 + $0xe64] sm:$0xff]
    %v641 = vld [vmem:[%s1 + $0xe6c] sm:$0xf]
    %v642 = vld [vmem:[%s1 + $0xe70] sm:$0xff]
    %v643 = vld [vmem:[%s1 + $0xe78] sm:$0xf]
    %v644 = vld [vmem:[%s1 + $0xe7c] sm:$0xff]
    %v645 = vld [vmem:[%s1 + $0xe84] sm:$0xf]
    %v646 = vld [vmem:[%s1 + $0xe88] sm:$0xff]
    %v647 = vld [vmem:[%s1 + $0xe90] sm:$0xf]
    %v648 = vld [vmem:[%s1 + $0xe94] sm:$0xff]
    %v649 = vld [vmem:[%s1 + $0xe9c] sm:$0xf]
    %v650 = vld [vmem:[%s1 + $0xea0] sm:$0xff]
    %v651 = vld [vmem:[%s1 + $0xea8] sm:$0xf]
    %v652 = vld [vmem:[%s1 + $0xeac] sm:$0xff]
    %v653 = vld [vmem:[%s1 + $0xeb4] sm:$0xf]
    %v654 = vld [vmem:[%s1 + $0xeb8] sm:$0xff]
    %v655 = vld [vmem:[%s1 + $0xec0] sm:$0xf]
    %v656 = vld [vmem:[%s1 + $0xec4] sm:$0xff]
    %v657 = vld [vmem:[%s1 + $0xecc] sm:$0xf]
    %v658 = vld [vmem:[%s1 + $0xed0] sm:$0xff]
    %v659 = vld [vmem:[%s1 + $0xed8] sm:$0xf]
    %v660 = vld [vmem:[%s1 + $0xedc] sm:$0xff]
    %v661 = vld [vmem:[%s1 + $0xee4] sm:$0xf]
    %v662 = vld [vmem:[%s1 + $0xee8] sm:$0xff]
    %v663 = vld [vmem:[%s1 + $0xef0] sm:$0xf]
    %v664 = vld [vmem:[%s1 + $0xef4] sm:$0xff]
    %v665 = vld [vmem:[%s1 + $0xefc] sm:$0xf]
    %v666 = vld [vmem:[%s1 + $0xf00] sm:$0xff]
    %v667 = vld [vmem:[%s1 + $0xf08] sm:$0xf]
    %v668 = vld [vmem:[%s1 + $0xf0c] sm:$0xff]
    %v669 = vld [vmem:[%s1 + $0xf14] sm:$0xf]
    %v670 = vld [vmem:[%s1 + $0xf18] sm:$0xff]
    %v671 = vld [vmem:[%s1 + $0xf20] sm:$0xf]
    %v672 = vld [vmem:[%s1 + $0xf24] sm:$0xff]
    %v673 = vld [vmem:[%s1 + $0xf2c] sm:$0xf]
    %v674 = vld [vmem:[%s1 + $0xf30] sm:$0xff]
    %v675 = vld [vmem:[%s1 + $0xf38] sm:$0xf]
    %v676 = vld [vmem:[%s1 + $0xf3c] sm:$0xff]
    %v677 = vld [vmem:[%s1 + $0xf44] sm:$0xf]
    %v678 = vld [vmem:[%s1 + $0xf48] sm:$0xff]
    %v679 = vld [vmem:[%s1 + $0xf50] sm:$0xf]
    %v680 = vld [vmem:[%s1 + $0xf54] sm:$0xff]
    %v681 = vld [vmem:[%s1 + $0xf5c] sm:$0xf]
    %v682 = vld [vmem:[%s1 + $0xf60] sm:$0xff]
    %v683 = vld [vmem:[%s1 + $0xf68] sm:$0xf]
    %v684 = vld [vmem:[%s1 + $0xf6c] sm:$0xff]
    %v685 = vld [vmem:[%s1 + $0xf74] sm:$0xf]
    %v686 = vld [vmem:[%s1 + $0xf78] sm:$0xff]
    %v687 = vld [vmem:[%s1 + $0xf80] sm:$0xf]
    %v688 = vld [vmem:[%s1 + $0xf84] sm:$0xff]
    %v689 = vld [vmem:[%s1 + $0xf8c] sm:$0xf]
    %v690 = vld [vmem:[%s1 + $0xf90] sm:$0xff]
    %v691 = vld [vmem:[%s1 + $0xf98] sm:$0xf]
    %v692 = vld [vmem:[%s1 + $0xf9c] sm:$0xff]
    %v693 = vld [vmem:[%s1 + $0xfa4] sm:$0xf]
    %v694 = vld [vmem:[%s1 + $0xfa8] sm:$0xff]
    %v695 = vld [vmem:[%s1 + $0xfb0] sm:$0xf]
    %v696 = vld [vmem:[%s1 + $0xfb4] sm:$0xff]
    %v697 = vld [vmem:[%s1 + $0xfbc] sm:$0xf]
    %v698 = vld [vmem:[%s1 + $0xfc0] sm:$0xff]
    %v699 = vld [vmem:[%s1 + $0xfc8] sm:$0xf]
    %v700 = vld [vmem:[%s1 + $0xfcc] sm:$0xff]
    %v701 = vld [vmem:[%s1 + $0xfd4] sm:$0xf]
    %v702 = vld [vmem:[%s1 + $0xfd8] sm:$0xff]
    %v703 = vld [vmem:[%s1 + $0xfe0] sm:$0xf]
    %v704 = vld [vmem:[%s1 + $0xfe4] sm:$0xff]
    %v705 = vld [vmem:[%s1 + $0xfec] sm:$0xf]
    %v706 = vld [vmem:[%s1 + $0xff0] sm:$0xff]
    %v707 = vld [vmem:[%s1 + $0xff8] sm:$0xf]
    %v708 = vld [vmem:[%s1 + $0xffc] sm:$0xff]
    %v709 = vld [vmem:[%s1 + $0x1004] sm:$0xf]
    %v710 = vld [vmem:[%s1 + $0x1008] sm:$0xff]
    %v711 = vld [vmem:[%s1 + $0x1010] sm:$0xf]
    %v712 = vld [vmem:[%s1 + $0x1014] sm:$0xff]
    %v713 = vld [vmem:[%s1 + $0x101c] sm:$0xf]
    %v714 = vld [vmem:[%s1 + $0x1020] sm:$0xff]
    %v715 = vld [vmem:[%s1 + $0x1028] sm:$0xf]
    %v716 = vld [vmem:[%s1 + $0x102c] sm:$0xff]
    %v717 = vld [vmem:[%s1 + $0x1034] sm:$0xf]
    %v718 = vld [vmem:[%s1 + $0x1038] sm:$0xff]
    %v719 = vld [vmem:[%s1 + $0x1040] sm:$0xf]
    %v720 = vld [vmem:[%s1 + $0x1044] sm:$0xff]
    %v721 = vld [vmem:[%s1 + $0x104c] sm:$0xf]
    %v722 = vld [vmem:[%s1 + $0x1050] sm:$0xff]
    %v723 = vld [vmem:[%s1 + $0x1058] sm:$0xf]
    %v724 = vld [vmem:[%s1 + $0x105c] sm:$0xff]
    %v725 = vld [vmem:[%s1 + $0x1064] sm:$0xf]
    %v726 = vld [vmem:[%s1 + $0x1068] sm:$0xff]
    %v727 = vld [vmem:[%s1 + $0x1070] sm:$0xf]
    %v728 = vld [vmem:[%s1 + $0x1074] sm:$0xff]
    %v729 = vld [vmem:[%s1 + $0x107c] sm:$0xf]
    %v730 = vld [vmem:[%s1 + $0x1080] sm:$0xff]
    %v731 = vld [vmem:[%s1 + $0x1088] sm:$0xf]
    %v732 = vld [vmem:[%s1 + $0x108c] sm:$0xff]
    %v733 = vld [vmem:[%s1 + $0x1094] sm:$0xf]
    %v734 = vld [vmem:[%s1 + $0x1098] sm:$0xff]
    %v735 = vld [vmem:[%s1 + $0x10a0] sm:$0xf]
    %v736 = vld [vmem:[%s1 + $0x10a4] sm:$0xff]
    %v737 = vld [vmem:[%s1 + $0x10ac] sm:$0xf]
    %v738 = vld [vmem:[%s1 + $0x10b0] sm:$0xff]
    %v739 = vld [vmem:[%s1 + $0x10b8] sm:$0xf]
    %v740 = vld [vmem:[%s1 + $0x10bc] sm:$0xff]
    %v741 = vld [vmem:[%s1 + $0x10c4] sm:$0xf]
    %v742 = vld [vmem:[%s1 + $0x10c8] sm:$0xff]
    %v743 = vld [vmem:[%s1 + $0x10d0] sm:$0xf]
    %v744 = vld [vmem:[%s1 + $0x10d4] sm:$0xff]
    %v745 = vld [vmem:[%s1 + $0x10dc] sm:$0xf]
    %v746 = vld [vmem:[%s1 + $0x10e0] sm:$0xff]
    %v747 = vld [vmem:[%s1 + $0x10e8] sm:$0xf]
    %v748 = vld [vmem:[%s1 + $0x10ec] sm:$0xff]
    %v749 = vld [vmem:[%s1 + $0x10f4] sm:$0xf]
    %v750 = vld [vmem:[%s1 + $0x10f8] sm:$0xff]
    %v751 = vld [vmem:[%s1 + $0x1100] sm:$0xf]
    %v752 = vld [vmem:[%s1 + $0x1104] sm:$0xff]
    %v753 = vld [vmem:[%s1 + $0x110c] sm:$0xf]
    %v754 = vld [vmem:[%s1 + $0x1110] sm:$0xff]
    %v755 = vld [vmem:[%s1 + $0x1118] sm:$0xf]
    %v756 = vld [vmem:[%s1 + $0x111c] sm:$0xff]
    %v757 = vld [vmem:[%s1 + $0x1124] sm:$0xf]
    %v758 = vld [vmem:[%s1 + $0x1128] sm:$0xff]
    %v759 = vld [vmem:[%s1 + $0x1130] sm:$0xf]
    %v760 = vld [vmem:[%s1 + $0x1134] sm:$0xff]
    %v761 = vld [vmem:[%s1 + $0x113c] sm:$0xf]
    %v762 = vld [vmem:[%s1 + $0x1140] sm:$0xff]
    %v763 = vld [vmem:[%s1 + $0x1148] sm:$0xf]
    %v764 = vld [vmem:[%s1 + $0x114c] sm:$0xff]
    %v765 = vld [vmem:[%s1 + $0x1154] sm:$0xf]
    %v766 = vld [vmem:[%s1 + $0x1158] sm:$0xff]
    %v767 = vld [vmem:[%s1 + $0x1160] sm:$0xf]
    %v768 = vld [vmem:[%s1 + $0x1164] sm:$0xff]
    %v769 = vld [vmem:[%s1 + $0x116c] sm:$0xf]
    %v770 = vld [vmem:[%s1 + $0x1170] sm:$0xff]
    %v771 = vld [vmem:[%s1 + $0x1178] sm:$0xf]
    %v772 = vld [vmem:[%s1 + $0x117c] sm:$0xff]
    %v773 = vld [vmem:[%s1 + $0x1184] sm:$0xf]
    %v774 = vld [vmem:[%s1 + $0x1188] sm:$0xff]
    %v775 = vld [vmem:[%s1 + $0x1190] sm:$0xf]
    %v776 = vld [vmem:[%s1 + $0x1194] sm:$0xff]
    %v777 = vld [vmem:[%s1 + $0x119c] sm:$0xf]
    %v778 = vld [vmem:[%s1 + $0x11a0] sm:$0xff]
    %v779 = vld [vmem:[%s1 + $0x11a8] sm:$0xf]
    %v780 = vld [vmem:[%s1 + $0x11ac] sm:$0xff]
    %v781 = vld [vmem:[%s1 + $0x11b4] sm:$0xf]
    %v782 = vld [vmem:[%s1 + $0x11b8] sm:$0xff]
    %v783 = vld [vmem:[%s1 + $0x11c0] sm:$0xf]
    %v784 = vld [vmem:[%s1 + $0x11c4] sm:$0xff]
    %v785 = vld [vmem:[%s1 + $0x11cc] sm:$0xf]
    %v786 = vld [vmem:[%s1 + $0x11d0] sm:$0xff]
    %v787 = vld [vmem:[%s1 + $0x11d8] sm:$0xf]
    %v788 = vld [vmem:[%s1 + $0x11dc] sm:$0xff]
    %v789 = vld [vmem:[%s1 + $0x11e4] sm:$0xf]
    %v790 = vld [vmem:[%s1 + $0x11e8] sm:$0xff]
    %v791 = vld [vmem:[%s1 + $0x11f0] sm:$0xf]
    %v792 = vld [vmem:[%s1 + $0x11f4] sm:$0xff]
    %v793 = vld [vmem:[%s1 + $0x11fc] sm:$0xf]
    %v794 = vld [vmem:[%s1 + $0x1200] sm:$0xff]
    %v795 = vld [vmem:[%s1 + $0x1208] sm:$0xf]
    %v796 = vld [vmem:[%s1 + $0x120c] sm:$0xff]
    %v797 = vld [vmem:[%s1 + $0x1214] sm:$0xf]
    %v798 = vld [vmem:[%s1 + $0x1218] sm:$0xff]
    %v799 = vld [vmem:[%s1 + $0x1220] sm:$0xf]
    %v800 = vld [vmem:[%s1 + $0x1224] sm:$0xff]
    %v801 = vld [vmem:[%s1 + $0x122c] sm:$0xf]
    %v802 = vld [vmem:[%s1 + $0x1230] sm:$0xff]
    %v803 = vld [vmem:[%s1 + $0x1238] sm:$0xf]
    %v804 = vld [vmem:[%s1 + $0x123c] sm:$0xff]
    %v805 = vld [vmem:[%s1 + $0x1244] sm:$0xf]
    %v806 = vld [vmem:[%s1 + $0x1248] sm:$0xff]
    %v807 = vld [vmem:[%s1 + $0x1250] sm:$0xf]
    %v808 = vld [vmem:[%s1 + $0x1254] sm:$0xff]
    %v809 = vld [vmem:[%s1 + $0x125c] sm:$0xf]
    %v810 = vld [vmem:[%s1 + $0x1260] sm:$0xff]
    %v811 = vld [vmem:[%s1 + $0x1268] sm:$0xf]
    %v812 = vld [vmem:[%s1 + $0x126c] sm:$0xff]
    %v813 = vld [vmem:[%s1 + $0x1274] sm:$0xf]
    %v814 = vld [vmem:[%s1 + $0x1278] sm:$0xff]
    %v815 = vld [vmem:[%s1 + $0x1280] sm:$0xf]
    %v816 = vld [vmem:[%s1 + $0x1284] sm:$0xff]
    %v817 = vld [vmem:[%s1 + $0x128c] sm:$0xf]
    %v818 = vld [vmem:[%s1 + $0x1290] sm:$0xff]
    %v819 = vld [vmem:[%s1 + $0x1298] sm:$0xf]
    %v820 = vld [vmem:[%s1 + $0x129c] sm:$0xff]
    %v821 = vld [vmem:[%s1 + $0x12a4] sm:$0xf]
    %v822 = vld [vmem:[%s1 + $0x12a8] sm:$0xff]
    %v823 = vld [vmem:[%s1 + $0x12b0] sm:$0xf]
    %v824 = vld [vmem:[%s1 + $0x12b4] sm:$0xff]
    %v825 = vld [vmem:[%s1 + $0x12bc] sm:$0xf]
    %v826 = vld [vmem:[%s2] sm:$0x7]
    %v828 = vlaneseq
    %v829 = vshrl.u32 %v828, 7
    %v830 = vsub.s32 0, %v829
    %v831 = vrot.slane %v826, %v830
    %v832 = vlaneseq
    %v833 = vshrl.u32 %v832, 7
    %v834 = vsub.s32 1, %v833
    %v835 = vrot.slane %v826, %v834
    %v836 = vlaneseq
    %v837 = vshrl.u32 %v836, 7
    %v838 = vsub.s32 2, %v837
    %v839 = vrot.slane %v826, %v838
    %v847 = vcombine.high %v22, %v22
    %v849 = vunpack.c.l.s4 1966171168
    %v850 = vunpack.c.0.s8 %v849
    %v851 = vlaneseq
    %v852 = vshrl.u32 %v851, 7
    %v853 = vsub.s32 %v850, %v852
    %v854 = vrot.slane %v22, %v853
    %v856 = vunpack.c.l.s4 1966171168
    %v857 = vunpack.c.0.s8 %v856
    %v858 = vlaneseq
    %v859 = vshrl.u32 %v858, 7
    %v860 = vsub.s32 %v857, %v859
    %v861 = vrot.slane %v847, %v860
    %v862 = vcombine.high %v854, %v854
    %v863 = vcombine.high %v861, %v861
    %v865 = vunpack.c.l.s4 1966171168
    %v866 = vunpack.c.0.s8 %v865
    %v867 = vlaneseq
    %v868 = vshrl.u32 %v867, 7
    %v869 = vsub.s32 %v866, %v868
    %v870 = vrot.slane %v854, %v869
    %v872 = vunpack.c.l.s4 1966171168
    %v873 = vunpack.c.0.s8 %v872
    %v874 = vlaneseq
    %v875 = vshrl.u32 %v874, 7
    %v876 = vsub.s32 %v873, %v875
    %v877 = vrot.slane %v861, %v876
    %v879 = vunpack.c.l.s4 1966171168
    %v880 = vunpack.c.0.s8 %v879
    %v881 = vlaneseq
    %v882 = vshrl.u32 %v881, 7
    %v883 = vsub.s32 %v880, %v882
    %v884 = vrot.slane %v862, %v883
    %v886 = vunpack.c.l.s4 1966171168
    %v887 = vunpack.c.0.s8 %v886
    %v888 = vlaneseq
    %v889 = vshrl.u32 %v888, 7
    %v890 = vsub.s32 %v887, %v889
    %v891 = vrot.slane %v863, %v890
    %v892 = vcombine.high %v870, %v870
    %v893 = vcombine.high %v877, %v877
    %v894 = vcombine.high %v884, %v884
    %v895 = vcombine.high %v891, %v891
    %v896 = vcombine.high %v23, %v23
    %v898 = vunpack.c.l.s4 1966171168
    %v899 = vunpack.c.0.s8 %v898
    %v900 = vlaneseq
    %v901 = vshrl.u32 %v900, 7
    %v902 = vsub.s32 %v899, %v901
    %v903 = vrot.slane %v23, %v902
    %v905 = vunpack.c.l.s4 1966171168
    %v906 = vunpack.c.0.s8 %v905
    %v907 = vlaneseq
    %v908 = vshrl.u32 %v907, 7
    %v909 = vsub.s32 %v906, %v908
    %v910 = vrot.slane %v896, %v909
    %v911 = vcombine.high %v903, %v903
    %v912 = vcombine.high %v910, %v910
    %v914 = vunpack.c.l.s4 1966171168
    %v915 = vunpack.c.0.s8 %v914
    %v916 = vlaneseq
    %v917 = vshrl.u32 %v916, 7
    %v918 = vsub.s32 %v915, %v917
    %v919 = vrot.slane %v903, %v918
    %v921 = vunpack.c.l.s4 1966171168
    %v922 = vunpack.c.0.s8 %v921
    %v923 = vlaneseq
    %v924 = vshrl.u32 %v923, 7
    %v925 = vsub.s32 %v922, %v924
    %v926 = vrot.slane %v910, %v925
    %v928 = vunpack.c.l.s4 1966171168
    %v929 = vunpack.c.0.s8 %v928
    %v930 = vlaneseq
    %v931 = vshrl.u32 %v930, 7
    %v932 = vsub.s32 %v929, %v931
    %v933 = vrot.slane %v911, %v932
    %v935 = vunpack.c.l.s4 1966171168
    %v936 = vunpack.c.0.s8 %v935
    %v937 = vlaneseq
    %v938 = vshrl.u32 %v937, 7
    %v939 = vsub.s32 %v936, %v938
    %v940 = vrot.slane %v912, %v939
    %v941 = vcombine.high %v919, %v919
    %v942 = vcombine.high %v926, %v926
    %v943 = vcombine.high %v933, %v933
    %v944 = vcombine.high %v940, %v940
    %v945 = vcombine.high %v24, %v24
    %v947 = vunpack.c.l.s4 1966171168
    %v948 = vunpack.c.0.s8 %v947
    %v949 = vlaneseq
    %v950 = vshrl.u32 %v949, 7
    %v951 = vsub.s32 %v948, %v950
    %v952 = vrot.slane %v24, %v951
    %v954 = vunpack.c.l.s4 1966171168
    %v955 = vunpack.c.0.s8 %v954
    %v956 = vlaneseq
    %v957 = vshrl.u32 %v956, 7
    %v958 = vsub.s32 %v955, %v957
    %v959 = vrot.slane %v945, %v958
    %v960 = vcombine.high %v952, %v952
    %v961 = vcombine.high %v959, %v959
    %v963 = vunpack.c.l.s4 1966171168
    %v964 = vunpack.c.0.s8 %v963
    %v965 = vlaneseq
    %v966 = vshrl.u32 %v965, 7
    %v967 = vsub.s32 %v964, %v966
    %v968 = vrot.slane %v952, %v967
    %v970 = vunpack.c.l.s4 1966171168
    %v971 = vunpack.c.0.s8 %v970
    %v972 = vlaneseq
    %v973 = vshrl.u32 %v972, 7
    %v974 = vsub.s32 %v971, %v973
    %v975 = vrot.slane %v959, %v974
    %v977 = vunpack.c.l.s4 1966171168
    %v978 = vunpack.c.0.s8 %v977
    %v979 = vlaneseq
    %v980 = vshrl.u32 %v979, 7
    %v981 = vsub.s32 %v978, %v980
    %v982 = vrot.slane %v960, %v981
    %v984 = vunpack.c.l.s4 1966171168
    %v985 = vunpack.c.0.s8 %v984
    %v986 = vlaneseq
    %v987 = vshrl.u32 %v986, 7
    %v988 = vsub.s32 %v985, %v987
    %v989 = vrot.slane %v961, %v988
    %v990 = vcombine.high %v968, %v968
    %v991 = vcombine.high %v975, %v975
    %v992 = vcombine.high %v982, %v982
    %v993 = vcombine.high %v989, %v989
    %v995 = vunpack.c.l.s4 1966171168
    %v996 = vunpack.c.0.s8 %v995
    %v997 = vlaneseq
    %v998 = vshrl.u32 %v997, 7
    %v999 = vsub.s32 %v996, %v998
    %v1000 = vrot.slane %v25, %v999
    %v1002 = vunpack.c.l.s4 1966171168
    %v1003 = vunpack.c.0.s8 %v1002
    %v1004 = vlaneseq
    %v1005 = vshrl.u32 %v1004, 7
    %v1006 = vsub.s32 %v1003, %v1005
    %v1007 = vrot.slane %v1000, %v1006
    %v1833 = vunpack.c.l.b16 %v26
    %v1834 = vunpack.c.h.b16 %v26
    %v1835 = vunpack.c.l.b16 %v27
    %v1836 = vunpack.c.l.b16 %v28
    %v1837 = vunpack.c.h.b16 %v28
    %v1838 = vunpack.c.l.b16 %v29
    %v1839 = vunpack.c.l.b16 %v30
    %v1840 = vunpack.c.h.b16 %v30
    %v1841 = vunpack.c.l.b16 %v31
    %v1842 = vunpack.c.l.b16 %v32
    %v1843 = vunpack.c.h.b16 %v32
    %v1844 = vunpack.c.l.b16 %v33
    %v1845 = vunpack.c.l.b16 %v34
    %v1846 = vunpack.c.h.b16 %v34
    %v1847 = vunpack.c.l.b16 %v35
    %v1848 = vunpack.c.l.b16 %v36
    %v1849 = vunpack.c.h.b16 %v36
    %v1850 = vunpack.c.l.b16 %v37
    %v1851 = vunpack.c.l.b16 %v38
    %v1852 = vunpack.c.h.b16 %v38
    %v1853 = vunpack.c.l.b16 %v39
    %v1854 = vunpack.c.l.b16 %v40
    %v1855 = vunpack.c.h.b16 %v40
    %v1856 = vunpack.c.l.b16 %v41
    %v1857 = vunpack.c.l.b16 %v42
    %v1858 = vunpack.c.h.b16 %v42
    %v1859 = vunpack.c.l.b16 %v43
    %v1860 = vunpack.c.l.b16 %v44
    %v1861 = vunpack.c.h.b16 %v44
    %v1862 = vunpack.c.l.b16 %v45
    %v1863 = vunpack.c.l.b16 %v46
    %v1864 = vunpack.c.h.b16 %v46
    %v1865 = vunpack.c.l.b16 %v47
    %v1866 = vunpack.c.l.b16 %v48
    %v1867 = vunpack.c.h.b16 %v48
    %v1868 = vunpack.c.l.b16 %v49
    %v1869 = vunpack.c.l.b16 %v50
    %v1870 = vunpack.c.h.b16 %v50
    %v1871 = vunpack.c.l.b16 %v51
    %v1872 = vunpack.c.l.b16 %v52
    %v1873 = vunpack.c.h.b16 %v52
    %v1874 = vunpack.c.l.b16 %v53
    %v1875 = vunpack.c.l.b16 %v54
    %v1876 = vunpack.c.h.b16 %v54
    %v1877 = vunpack.c.l.b16 %v55
    %v1878 = vunpack.c.l.b16 %v56
    %v1879 = vunpack.c.h.b16 %v56
    %v1880 = vunpack.c.l.b16 %v57
    %v1881 = vunpack.c.l.b16 %v58
    %v1882 = vunpack.c.h.b16 %v58
    %v1883 = vunpack.c.l.b16 %v59
    %v1884 = vunpack.c.l.b16 %v60
    %v1885 = vunpack.c.h.b16 %v60
    %v1886 = vunpack.c.l.b16 %v61
    %v1887 = vunpack.c.l.b16 %v62
    %v1888 = vunpack.c.h.b16 %v62
    %v1889 = vunpack.c.l.b16 %v63
    %v1890 = vunpack.c.l.b16 %v64
    %v1891 = vunpack.c.h.b16 %v64
    %v1892 = vunpack.c.l.b16 %v65
    %v1893 = vunpack.c.l.b16 %v66
    %v1894 = vunpack.c.h.b16 %v66
    %v1895 = vunpack.c.l.b16 %v67
    %v1896 = vunpack.c.l.b16 %v68
    %v1897 = vunpack.c.h.b16 %v68
    %v1898 = vunpack.c.l.b16 %v69
    %v1899 = vunpack.c.l.b16 %v70
    %v1900 = vunpack.c.h.b16 %v70
    %v1901 = vunpack.c.l.b16 %v71
    %v1902 = vunpack.c.l.b16 %v72
    %v1903 = vunpack.c.h.b16 %v72
    %v1904 = vunpack.c.l.b16 %v73
    %v1905 = vunpack.c.l.b16 %v74
    %v1906 = vunpack.c.h.b16 %v74
    %v1907 = vunpack.c.l.b16 %v75
    %v1908 = vunpack.c.l.b16 %v76
    %v1909 = vunpack.c.h.b16 %v76
    %v1910 = vunpack.c.l.b16 %v77
    %v1911 = vunpack.c.l.b16 %v78
    %v1912 = vunpack.c.h.b16 %v78
    %v1913 = vunpack.c.l.b16 %v79
    %v1914 = vunpack.c.l.b16 %v80
    %v1915 = vunpack.c.h.b16 %v80
    %v1916 = vunpack.c.l.b16 %v81
    %v1917 = vunpack.c.l.b16 %v82
    %v1918 = vunpack.c.h.b16 %v82
    %v1919 = vunpack.c.l.b16 %v83
    %v1920 = vunpack.c.l.b16 %v84
    %v1921 = vunpack.c.h.b16 %v84
    %v1922 = vunpack.c.l.b16 %v85
    %v1923 = vunpack.c.l.b16 %v86
    %v1924 = vunpack.c.h.b16 %v86
    %v1925 = vunpack.c.l.b16 %v87
    %v1926 = vunpack.c.l.b16 %v88
    %v1927 = vunpack.c.h.b16 %v88
    %v1928 = vunpack.c.l.b16 %v89
    %v1929 = vunpack.c.l.b16 %v90
    %v1930 = vunpack.c.h.b16 %v90
    %v1931 = vunpack.c.l.b16 %v91
    %v1932 = vunpack.c.l.b16 %v92
    %v1933 = vunpack.c.h.b16 %v92
    %v1934 = vunpack.c.l.b16 %v93
    %v1935 = vunpack.c.l.b16 %v94
    %v1936 = vunpack.c.h.b16 %v94
    %v1937 = vunpack.c.l.b16 %v95
    %v1938 = vunpack.c.l.b16 %v96
    %v1939 = vunpack.c.h.b16 %v96
    %v1940 = vunpack.c.l.b16 %v97
    %v1941 = vunpack.c.l.b16 %v98
    %v1942 = vunpack.c.h.b16 %v98
    %v1943 = vunpack.c.l.b16 %v99
    %v1944 = vunpack.c.l.b16 %v100
    %v1945 = vunpack.c.h.b16 %v100
    %v1946 = vunpack.c.l.b16 %v101
    %v1947 = vunpack.c.l.b16 %v102
    %v1948 = vunpack.c.h.b16 %v102
    %v1949 = vunpack.c.l.b16 %v103
    %v1950 = vunpack.c.l.b16 %v104
    %v1951 = vunpack.c.h.b16 %v104
    %v1952 = vunpack.c.l.b16 %v105
    %v1953 = vunpack.c.l.b16 %v106
    %v1954 = vunpack.c.h.b16 %v106
    %v1955 = vunpack.c.l.b16 %v107
    %v1956 = vunpack.c.l.b16 %v108
    %v1957 = vunpack.c.h.b16 %v108
    %v1958 = vunpack.c.l.b16 %v109
    %v1959 = vunpack.c.l.b16 %v110
    %v1960 = vunpack.c.h.b16 %v110
    %v1961 = vunpack.c.l.b16 %v111
    %v1962 = vunpack.c.l.b16 %v112
    %v1963 = vunpack.c.h.b16 %v112
    %v1964 = vunpack.c.l.b16 %v113
    %v1965 = vunpack.c.l.b16 %v114
    %v1966 = vunpack.c.h.b16 %v114
    %v1967 = vunpack.c.l.b16 %v115
    %v1968 = vunpack.c.l.b16 %v116
    %v1969 = vunpack.c.h.b16 %v116
    %v1970 = vunpack.c.l.b16 %v117
    %v1971 = vunpack.c.l.b16 %v118
    %v1972 = vunpack.c.h.b16 %v118
    %v1973 = vunpack.c.l.b16 %v119
    %v1974 = vunpack.c.l.b16 %v120
    %v1975 = vunpack.c.h.b16 %v120
    %v1976 = vunpack.c.l.b16 %v121
    %v1977 = vunpack.c.l.b16 %v122
    %v1978 = vunpack.c.h.b16 %v122
    %v1979 = vunpack.c.l.b16 %v123
    %v1980 = vunpack.c.l.b16 %v124
    %v1981 = vunpack.c.h.b16 %v124
    %v1982 = vunpack.c.l.b16 %v125
    %v1983 = vunpack.c.l.b16 %v126
    %v1984 = vunpack.c.h.b16 %v126
    %v1985 = vunpack.c.l.b16 %v127
    %v1986 = vunpack.c.l.b16 %v128
    %v1987 = vunpack.c.h.b16 %v128
    %v1988 = vunpack.c.l.b16 %v129
    %v1989 = vunpack.c.l.b16 %v130
    %v1990 = vunpack.c.h.b16 %v130
    %v1991 = vunpack.c.l.b16 %v131
    %v1992 = vunpack.c.l.b16 %v132
    %v1993 = vunpack.c.h.b16 %v132
    %v1994 = vunpack.c.l.b16 %v133
    %v1995 = vunpack.c.l.b16 %v134
    %v1996 = vunpack.c.h.b16 %v134
    %v1997 = vunpack.c.l.b16 %v135
    %v1998 = vunpack.c.l.b16 %v136
    %v1999 = vunpack.c.h.b16 %v136
    %v2000 = vunpack.c.l.b16 %v137
    %v2001 = vunpack.c.l.b16 %v138
    %v2002 = vunpack.c.h.b16 %v138
    %v2003 = vunpack.c.l.b16 %v139
    %v2004 = vunpack.c.l.b16 %v140
    %v2005 = vunpack.c.h.b16 %v140
    %v2006 = vunpack.c.l.b16 %v141
    %v2007 = vunpack.c.l.b16 %v142
    %v2008 = vunpack.c.h.b16 %v142
    %v2009 = vunpack.c.l.b16 %v143
    %v2010 = vunpack.c.l.b16 %v144
    %v2011 = vunpack.c.h.b16 %v144
    %v2012 = vunpack.c.l.b16 %v145
    %v2013 = vunpack.c.l.b16 %v146
    %v2014 = vunpack.c.h.b16 %v146
    %v2015 = vunpack.c.l.b16 %v147
    %v2016 = vunpack.c.l.b16 %v148
    %v2017 = vunpack.c.h.b16 %v148
    %v2018 = vunpack.c.l.b16 %v149
    %v2019 = vunpack.c.l.b16 %v150
    %v2020 = vunpack.c.h.b16 %v150
    %v2021 = vunpack.c.l.b16 %v151
    %v2022 = vunpack.c.l.b16 %v152
    %v2023 = vunpack.c.h.b16 %v152
    %v2024 = vunpack.c.l.b16 %v153
    %v2025 = vunpack.c.l.b16 %v154
    %v2026 = vunpack.c.h.b16 %v154
    %v2027 = vunpack.c.l.b16 %v155
    %v2028 = vunpack.c.l.b16 %v156
    %v2029 = vunpack.c.h.b16 %v156
    %v2030 = vunpack.c.l.b16 %v157
    %v2031 = vunpack.c.l.b16 %v158
    %v2032 = vunpack.c.h.b16 %v158
    %v2033 = vunpack.c.l.b16 %v159
    %v2034 = vunpack.c.l.b16 %v160
    %v2035 = vunpack.c.h.b16 %v160
    %v2036 = vunpack.c.l.b16 %v161
    %v2037 = vunpack.c.l.b16 %v162
    %v2038 = vunpack.c.h.b16 %v162
    %v2039 = vunpack.c.l.b16 %v163
    %v2040 = vunpack.c.l.b16 %v164
    %v2041 = vunpack.c.h.b16 %v164
    %v2042 = vunpack.c.l.b16 %v165
    %v2043 = vunpack.c.l.b16 %v166
    %v2044 = vunpack.c.h.b16 %v166
    %v2045 = vunpack.c.l.b16 %v167
    %v2046 = vunpack.c.l.b16 %v168
    %v2047 = vunpack.c.h.b16 %v168
    %v2048 = vunpack.c.l.b16 %v169
    %v2049 = vunpack.c.l.b16 %v170
    %v2050 = vunpack.c.h.b16 %v170
    %v2051 = vunpack.c.l.b16 %v171
    %v2052 = vunpack.c.l.b16 %v172
    %v2053 = vunpack.c.h.b16 %v172
    %v2054 = vunpack.c.l.b16 %v173
    %v2055 = vunpack.c.l.b16 %v174
    %v2056 = vunpack.c.h.b16 %v174
    %v2057 = vunpack.c.l.b16 %v175
    %v2058 = vunpack.c.l.b16 %v176
    %v2059 = vunpack.c.h.b16 %v176
    %v2060 = vunpack.c.l.b16 %v177
    %v2061 = vunpack.c.l.b16 %v178
    %v2062 = vunpack.c.h.b16 %v178
    %v2063 = vunpack.c.l.b16 %v179
    %v2064 = vunpack.c.l.b16 %v180
    %v2065 = vunpack.c.h.b16 %v180
    %v2066 = vunpack.c.l.b16 %v181
    %v2067 = vunpack.c.l.b16 %v182
    %v2068 = vunpack.c.h.b16 %v182
    %v2069 = vunpack.c.l.b16 %v183
    %v2070 = vunpack.c.l.b16 %v184
    %v2071 = vunpack.c.h.b16 %v184
    %v2072 = vunpack.c.l.b16 %v185
    %v2073 = vunpack.c.l.b16 %v186
    %v2074 = vunpack.c.h.b16 %v186
    %v2075 = vunpack.c.l.b16 %v187
    %v2076 = vunpack.c.l.b16 %v188
    %v2077 = vunpack.c.h.b16 %v188
    %v2078 = vunpack.c.l.b16 %v189
    %v2079 = vunpack.c.l.b16 %v190
    %v2080 = vunpack.c.h.b16 %v190
    %v2081 = vunpack.c.l.b16 %v191
    %v2082 = vunpack.c.l.b16 %v192
    %v2083 = vunpack.c.h.b16 %v192
    %v2084 = vunpack.c.l.b16 %v193
    %v2085 = vunpack.c.l.b16 %v194
    %v2086 = vunpack.c.h.b16 %v194
    %v2087 = vunpack.c.l.b16 %v195
    %v2088 = vunpack.c.l.b16 %v196
    %v2089 = vunpack.c.h.b16 %v196
    %v2090 = vunpack.c.l.b16 %v197
    %v2091 = vunpack.c.l.b16 %v198
    %v2092 = vunpack.c.h.b16 %v198
    %v2093 = vunpack.c.l.b16 %v199
    %v2094 = vunpack.c.l.b16 %v200
    %v2095 = vunpack.c.h.b16 %v200
    %v2096 = vunpack.c.l.b16 %v201
    %v2097 = vunpack.c.l.b16 %v202
    %v2098 = vunpack.c.h.b16 %v202
    %v2099 = vunpack.c.l.b16 %v203
    %v2100 = vunpack.c.l.b16 %v204
    %v2101 = vunpack.c.h.b16 %v204
    %v2102 = vunpack.c.l.b16 %v205
    %v2103 = vunpack.c.l.b16 %v206
    %v2104 = vunpack.c.h.b16 %v206
    %v2105 = vunpack.c.l.b16 %v207
    %v2106 = vunpack.c.l.b16 %v208
    %v2107 = vunpack.c.h.b16 %v208
    %v2108 = vunpack.c.l.b16 %v209
    %v2109 = vunpack.c.l.b16 %v210
    %v2110 = vunpack.c.h.b16 %v210
    %v2111 = vunpack.c.l.b16 %v211
    %v2112 = vunpack.c.l.b16 %v212
    %v2113 = vunpack.c.h.b16 %v212
    %v2114 = vunpack.c.l.b16 %v213
    %v2115 = vunpack.c.l.b16 %v214
    %v2116 = vunpack.c.h.b16 %v214
    %v2117 = vunpack.c.l.b16 %v215
    %v2118 = vunpack.c.l.b16 %v216
    %v2119 = vunpack.c.h.b16 %v216
    %v2120 = vunpack.c.l.b16 %v217
    %v2121 = vunpack.c.l.b16 %v218
    %v2122 = vunpack.c.h.b16 %v218
    %v2123 = vunpack.c.l.b16 %v219
    %v2124 = vunpack.c.l.b16 %v220
    %v2125 = vunpack.c.h.b16 %v220
    %v2126 = vunpack.c.l.b16 %v221
    %v2127 = vunpack.c.l.b16 %v222
    %v2128 = vunpack.c.h.b16 %v222
    %v2129 = vunpack.c.l.b16 %v223
    %v2130 = vunpack.c.l.b16 %v224
    %v2131 = vunpack.c.h.b16 %v224
    %v2132 = vunpack.c.l.b16 %v225
    %v2133 = vunpack.c.l.b16 %v226
    %v2134 = vunpack.c.h.b16 %v226
    %v2135 = vunpack.c.l.b16 %v227
    %v2136 = vunpack.c.l.b16 %v228
    %v2137 = vunpack.c.h.b16 %v228
    %v2138 = vunpack.c.l.b16 %v229
    %v2139 = vunpack.c.l.b16 %v230
    %v2140 = vunpack.c.h.b16 %v230
    %v2141 = vunpack.c.l.b16 %v231
    %v2142 = vunpack.c.l.b16 %v232
    %v2143 = vunpack.c.h.b16 %v232
    %v2144 = vunpack.c.l.b16 %v233
    %v2145 = vunpack.c.l.b16 %v234
    %v2146 = vunpack.c.h.b16 %v234
    %v2147 = vunpack.c.l.b16 %v235
    %v2148 = vunpack.c.l.b16 %v236
    %v2149 = vunpack.c.h.b16 %v236
    %v2150 = vunpack.c.l.b16 %v237
    %v2151 = vunpack.c.l.b16 %v238
    %v2152 = vunpack.c.h.b16 %v238
    %v2153 = vunpack.c.l.b16 %v239
    %v2154 = vunpack.c.l.b16 %v240
    %v2155 = vunpack.c.h.b16 %v240
    %v2156 = vunpack.c.l.b16 %v241
    %v2157 = vunpack.c.l.b16 %v242
    %v2158 = vunpack.c.h.b16 %v242
    %v2159 = vunpack.c.l.b16 %v243
    %v2160 = vunpack.c.l.b16 %v244
    %v2161 = vunpack.c.h.b16 %v244
    %v2162 = vunpack.c.l.b16 %v245
    %v2163 = vunpack.c.l.b16 %v246
    %v2164 = vunpack.c.h.b16 %v246
    %v2165 = vunpack.c.l.b16 %v247
    %v2166 = vunpack.c.l.b16 %v248
    %v2167 = vunpack.c.h.b16 %v248
    %v2168 = vunpack.c.l.b16 %v249
    %v2169 = vunpack.c.l.b16 %v250
    %v2170 = vunpack.c.h.b16 %v250
    %v2171 = vunpack.c.l.b16 %v251
    %v2172 = vunpack.c.l.b16 %v252
    %v2173 = vunpack.c.h.b16 %v252
    %v2174 = vunpack.c.l.b16 %v253
    %v2175 = vunpack.c.l.b16 %v254
    %v2176 = vunpack.c.h.b16 %v254
    %v2177 = vunpack.c.l.b16 %v255
    %v2178 = vunpack.c.l.b16 %v256
    %v2179 = vunpack.c.h.b16 %v256
    %v2180 = vunpack.c.l.b16 %v257
    %v2181 = vunpack.c.l.b16 %v258
    %v2182 = vunpack.c.h.b16 %v258
    %v2183 = vunpack.c.l.b16 %v259
    %v2184 = vunpack.c.l.b16 %v260
    %v2185 = vunpack.c.h.b16 %v260
    %v2186 = vunpack.c.l.b16 %v261
    %v2187 = vunpack.c.l.b16 %v262
    %v2188 = vunpack.c.h.b16 %v262
    %v2189 = vunpack.c.l.b16 %v263
    %v2190 = vunpack.c.l.b16 %v264
    %v2191 = vunpack.c.h.b16 %v264
    %v2192 = vunpack.c.l.b16 %v265
    %v2193 = vunpack.c.l.b16 %v266
    %v2194 = vunpack.c.h.b16 %v266
    %v2195 = vunpack.c.l.b16 %v267
    %v2196 = vunpack.c.l.b16 %v268
    %v2197 = vunpack.c.h.b16 %v268
    %v2198 = vunpack.c.l.b16 %v269
    %v2199 = vunpack.c.l.b16 %v270
    %v2200 = vunpack.c.h.b16 %v270
    %v2201 = vunpack.c.l.b16 %v271
    %v2202 = vunpack.c.l.b16 %v272
    %v2203 = vunpack.c.h.b16 %v272
    %v2204 = vunpack.c.l.b16 %v273
    %v2205 = vunpack.c.l.b16 %v274
    %v2206 = vunpack.c.h.b16 %v274
    %v2207 = vunpack.c.l.b16 %v275
    %v2208 = vunpack.c.l.b16 %v276
    %v2209 = vunpack.c.h.b16 %v276
    %v2210 = vunpack.c.l.b16 %v277
    %v2211 = vunpack.c.l.b16 %v278
    %v2212 = vunpack.c.h.b16 %v278
    %v2213 = vunpack.c.l.b16 %v279
    %v2214 = vunpack.c.l.b16 %v280
    %v2215 = vunpack.c.h.b16 %v280
    %v2216 = vunpack.c.l.b16 %v281
    %v2217 = vunpack.c.l.b16 %v282
    %v2218 = vunpack.c.h.b16 %v282
    %v2219 = vunpack.c.l.b16 %v283
    %v2220 = vunpack.c.l.b16 %v284
    %v2221 = vunpack.c.h.b16 %v284
    %v2222 = vunpack.c.l.b16 %v285
    %v2223 = vunpack.c.l.b16 %v286
    %v2224 = vunpack.c.h.b16 %v286
    %v2225 = vunpack.c.l.b16 %v287
    %v2226 = vunpack.c.l.b16 %v288
    %v2227 = vunpack.c.h.b16 %v288
    %v2228 = vunpack.c.l.b16 %v289
    %v2229 = vunpack.c.l.b16 %v290
    %v2230 = vunpack.c.h.b16 %v290
    %v2231 = vunpack.c.l.b16 %v291
    %v2232 = vunpack.c.l.b16 %v292
    %v2233 = vunpack.c.h.b16 %v292
    %v2234 = vunpack.c.l.b16 %v293
    %v2235 = vunpack.c.l.b16 %v294
    %v2236 = vunpack.c.h.b16 %v294
    %v2237 = vunpack.c.l.b16 %v295
    %v2238 = vunpack.c.l.b16 %v296
    %v2239 = vunpack.c.h.b16 %v296
    %v2240 = vunpack.c.l.b16 %v297
    %v2241 = vunpack.c.l.b16 %v298
    %v2242 = vunpack.c.h.b16 %v298
    %v2243 = vunpack.c.l.b16 %v299
    %v2244 = vunpack.c.l.b16 %v300
    %v2245 = vunpack.c.h.b16 %v300
    %v2246 = vunpack.c.l.b16 %v301
    %v2247 = vunpack.c.l.b16 %v302
    %v2248 = vunpack.c.h.b16 %v302
    %v2249 = vunpack.c.l.b16 %v303
    %v2250 = vunpack.c.l.b16 %v304
    %v2251 = vunpack.c.h.b16 %v304
    %v2252 = vunpack.c.l.b16 %v305
    %v2253 = vunpack.c.l.b16 %v306
    %v2254 = vunpack.c.h.b16 %v306
    %v2255 = vunpack.c.l.b16 %v307
    %v2256 = vunpack.c.l.b16 %v308
    %v2257 = vunpack.c.h.b16 %v308
    %v2258 = vunpack.c.l.b16 %v309
    %v2259 = vunpack.c.l.b16 %v310
    %v2260 = vunpack.c.h.b16 %v310
    %v2261 = vunpack.c.l.b16 %v311
    %v2262 = vunpack.c.l.b16 %v312
    %v2263 = vunpack.c.h.b16 %v312
    %v2264 = vunpack.c.l.b16 %v313
    %v2265 = vunpack.c.l.b16 %v314
    %v2266 = vunpack.c.h.b16 %v314
    %v2267 = vunpack.c.l.b16 %v315
    %v2268 = vunpack.c.l.b16 %v316
    %v2269 = vunpack.c.h.b16 %v316
    %v2270 = vunpack.c.l.b16 %v317
    %v2271 = vunpack.c.l.b16 %v318
    %v2272 = vunpack.c.h.b16 %v318
    %v2273 = vunpack.c.l.b16 %v319
    %v2274 = vunpack.c.l.b16 %v320
    %v2275 = vunpack.c.h.b16 %v320
    %v2276 = vunpack.c.l.b16 %v321
    %v2277 = vunpack.c.l.b16 %v322
    %v2278 = vunpack.c.h.b16 %v322
    %v2279 = vunpack.c.l.b16 %v323
    %v2280 = vunpack.c.l.b16 %v324
    %v2281 = vunpack.c.h.b16 %v324
    %v2282 = vunpack.c.l.b16 %v325
    %v2283 = vunpack.c.l.b16 %v326
    %v2284 = vunpack.c.h.b16 %v326
    %v2285 = vunpack.c.l.b16 %v327
    %v2286 = vunpack.c.l.b16 %v328
    %v2287 = vunpack.c.h.b16 %v328
    %v2288 = vunpack.c.l.b16 %v329
    %v2289 = vunpack.c.l.b16 %v330
    %v2290 = vunpack.c.h.b16 %v330
    %v2291 = vunpack.c.l.b16 %v331
    %v2292 = vunpack.c.l.b16 %v332
    %v2293 = vunpack.c.h.b16 %v332
    %v2294 = vunpack.c.l.b16 %v333
    %v2295 = vunpack.c.l.b16 %v334
    %v2296 = vunpack.c.h.b16 %v334
    %v2297 = vunpack.c.l.b16 %v335
    %v2298 = vunpack.c.l.b16 %v336
    %v2299 = vunpack.c.h.b16 %v336
    %v2300 = vunpack.c.l.b16 %v337
    %v2301 = vunpack.c.l.b16 %v338
    %v2302 = vunpack.c.h.b16 %v338
    %v2303 = vunpack.c.l.b16 %v339
    %v2304 = vunpack.c.l.b16 %v340
    %v2305 = vunpack.c.h.b16 %v340
    %v2306 = vunpack.c.l.b16 %v341
    %v2307 = vunpack.c.l.b16 %v342
    %v2308 = vunpack.c.h.b16 %v342
    %v2309 = vunpack.c.l.b16 %v343
    %v2310 = vunpack.c.l.b16 %v344
    %v2311 = vunpack.c.h.b16 %v344
    %v2312 = vunpack.c.l.b16 %v345
    %v2313 = vunpack.c.l.b16 %v346
    %v2314 = vunpack.c.h.b16 %v346
    %v2315 = vunpack.c.l.b16 %v347
    %v2316 = vunpack.c.l.b16 %v348
    %v2317 = vunpack.c.h.b16 %v348
    %v2318 = vunpack.c.l.b16 %v349
    %v2319 = vunpack.c.l.b16 %v350
    %v2320 = vunpack.c.h.b16 %v350
    %v2321 = vunpack.c.l.b16 %v351
    %v2322 = vunpack.c.l.b16 %v352
    %v2323 = vunpack.c.h.b16 %v352
    %v2324 = vunpack.c.l.b16 %v353
    %v2325 = vunpack.c.l.b16 %v354
    %v2326 = vunpack.c.h.b16 %v354
    %v2327 = vunpack.c.l.b16 %v355
    %v2328 = vunpack.c.l.b16 %v356
    %v2329 = vunpack.c.h.b16 %v356
    %v2330 = vunpack.c.l.b16 %v357
    %v2331 = vunpack.c.l.b16 %v358
    %v2332 = vunpack.c.h.b16 %v358
    %v2333 = vunpack.c.l.b16 %v359
    %v2334 = vunpack.c.l.b16 %v360
    %v2335 = vunpack.c.h.b16 %v360
    %v2336 = vunpack.c.l.b16 %v361
    %v2337 = vunpack.c.l.b16 %v362
    %v2338 = vunpack.c.h.b16 %v362
    %v2339 = vunpack.c.l.b16 %v363
    %v2340 = vunpack.c.l.b16 %v364
    %v2341 = vunpack.c.h.b16 %v364
    %v2342 = vunpack.c.l.b16 %v365
    %v2343 = vunpack.c.l.b16 %v366
    %v2344 = vunpack.c.h.b16 %v366
    %v2345 = vunpack.c.l.b16 %v367
    %v2346 = vunpack.c.l.b16 %v368
    %v2347 = vunpack.c.h.b16 %v368
    %v2348 = vunpack.c.l.b16 %v369
    %v2349 = vunpack.c.l.b16 %v370
    %v2350 = vunpack.c.h.b16 %v370
    %v2351 = vunpack.c.l.b16 %v371
    %v2352 = vunpack.c.l.b16 %v372
    %v2353 = vunpack.c.h.b16 %v372
    %v2354 = vunpack.c.l.b16 %v373
    %v2355 = vunpack.c.l.b16 %v374
    %v2356 = vunpack.c.h.b16 %v374
    %v2357 = vunpack.c.l.b16 %v375
    %v2358 = vunpack.c.l.b16 %v376
    %v2359 = vunpack.c.h.b16 %v376
    %v2360 = vunpack.c.l.b16 %v377
    %v2361 = vunpack.c.l.b16 %v378
    %v2362 = vunpack.c.h.b16 %v378
    %v2363 = vunpack.c.l.b16 %v379
    %v2364 = vunpack.c.l.b16 %v380
    %v2365 = vunpack.c.h.b16 %v380
    %v2366 = vunpack.c.l.b16 %v381
    %v2367 = vunpack.c.l.b16 %v382
    %v2368 = vunpack.c.h.b16 %v382
    %v2369 = vunpack.c.l.b16 %v383
    %v2370 = vunpack.c.l.b16 %v384
    %v2371 = vunpack.c.h.b16 %v384
    %v2372 = vunpack.c.l.b16 %v385
    %v2373 = vunpack.c.l.b16 %v386
    %v2374 = vunpack.c.h.b16 %v386
    %v2375 = vunpack.c.l.b16 %v387
    %v2376 = vunpack.c.l.b16 %v388
    %v2377 = vunpack.c.h.b16 %v388
    %v2378 = vunpack.c.l.b16 %v389
    %v2379 = vunpack.c.l.b16 %v390
    %v2380 = vunpack.c.h.b16 %v390
    %v2381 = vunpack.c.l.b16 %v391
    %v2382 = vunpack.c.l.b16 %v392
    %v2383 = vunpack.c.h.b16 %v392
    %v2384 = vunpack.c.l.b16 %v393
    %v2385 = vunpack.c.l.b16 %v394
    %v2386 = vunpack.c.h.b16 %v394
    %v2387 = vunpack.c.l.b16 %v395
    %v2388 = vunpack.c.l.b16 %v396
    %v2389 = vunpack.c.h.b16 %v396
    %v2390 = vunpack.c.l.b16 %v397
    %v2391 = vunpack.c.l.b16 %v398
    %v2392 = vunpack.c.h.b16 %v398
    %v2393 = vunpack.c.l.b16 %v399
    %v2394 = vunpack.c.l.b16 %v400
    %v2395 = vunpack.c.h.b16 %v400
    %v2396 = vunpack.c.l.b16 %v401
    %v2397 = vunpack.c.l.b16 %v402
    %v2398 = vunpack.c.h.b16 %v402
    %v2399 = vunpack.c.l.b16 %v403
    %v2400 = vunpack.c.l.b16 %v404
    %v2401 = vunpack.c.h.b16 %v404
    %v2402 = vunpack.c.l.b16 %v405
    %v2403 = vunpack.c.l.b16 %v406
    %v2404 = vunpack.c.h.b16 %v406
    %v2405 = vunpack.c.l.b16 %v407
    %v2406 = vunpack.c.l.b16 %v408
    %v2407 = vunpack.c.h.b16 %v408
    %v2408 = vunpack.c.l.b16 %v409
    %v2409 = vunpack.c.l.b16 %v410
    %v2410 = vunpack.c.h.b16 %v410
    %v2411 = vunpack.c.l.b16 %v411
    %v2412 = vunpack.c.l.b16 %v412
    %v2413 = vunpack.c.h.b16 %v412
    %v2414 = vunpack.c.l.b16 %v413
    %v2415 = vunpack.c.l.b16 %v414
    %v2416 = vunpack.c.h.b16 %v414
    %v2417 = vunpack.c.l.b16 %v415
    %v2418 = vunpack.c.l.b16 %v416
    %v2419 = vunpack.c.h.b16 %v416
    %v2420 = vunpack.c.l.b16 %v417
    %v2421 = vunpack.c.l.b16 %v418
    %v2422 = vunpack.c.h.b16 %v418
    %v2423 = vunpack.c.l.b16 %v419
    %v2424 = vunpack.c.l.b16 %v420
    %v2425 = vunpack.c.h.b16 %v420
    %v2426 = vunpack.c.l.b16 %v421
    %v2427 = vunpack.c.l.b16 %v422
    %v2428 = vunpack.c.h.b16 %v422
    %v2429 = vunpack.c.l.b16 %v423
    %v2430 = vunpack.c.l.b16 %v424
    %v2431 = vunpack.c.h.b16 %v424
    %v2432 = vunpack.c.l.b16 %v425
    %v2433 = vunpack.c.l.b16 %v426
    %v2434 = vunpack.c.h.b16 %v426
    %v2435 = vunpack.c.l.b16 %v427
    %v2436 = vunpack.c.l.b16 %v428
    %v2437 = vunpack.c.h.b16 %v428
    %v2438 = vunpack.c.l.b16 %v429
    %v2439 = vunpack.c.l.b16 %v430
    %v2440 = vunpack.c.h.b16 %v430
    %v2441 = vunpack.c.l.b16 %v431
    %v2442 = vunpack.c.l.b16 %v432
    %v2443 = vunpack.c.h.b16 %v432
    %v2444 = vunpack.c.l.b16 %v433
    %v2445 = vunpack.c.l.b16 %v434
    %v2446 = vunpack.c.h.b16 %v434
    %v2447 = vunpack.c.l.b16 %v435
    %v2448 = vunpack.c.l.b16 %v436
    %v2449 = vunpack.c.h.b16 %v436
    %v2450 = vunpack.c.l.b16 %v437
    %v2451 = vunpack.c.l.b16 %v438
    %v2452 = vunpack.c.h.b16 %v438
    %v2453 = vunpack.c.l.b16 %v439
    %v2454 = vunpack.c.l.b16 %v440
    %v2455 = vunpack.c.h.b16 %v440
    %v2456 = vunpack.c.l.b16 %v441
    %v2457 = vunpack.c.l.b16 %v442
    %v2458 = vunpack.c.h.b16 %v442
    %v2459 = vunpack.c.l.b16 %v443
    %v2460 = vunpack.c.l.b16 %v444
    %v2461 = vunpack.c.h.b16 %v444
    %v2462 = vunpack.c.l.b16 %v445
    %v2463 = vunpack.c.l.b16 %v446
    %v2464 = vunpack.c.h.b16 %v446
    %v2465 = vunpack.c.l.b16 %v447
    %v2466 = vunpack.c.l.b16 %v448
    %v2467 = vunpack.c.h.b16 %v448
    %v2468 = vunpack.c.l.b16 %v449
    %v2469 = vunpack.c.l.b16 %v450
    %v2470 = vunpack.c.h.b16 %v450
    %v2471 = vunpack.c.l.b16 %v451
    %v2472 = vunpack.c.l.b16 %v452
    %v2473 = vunpack.c.h.b16 %v452
    %v2474 = vunpack.c.l.b16 %v453
    %v2475 = vunpack.c.l.b16 %v454
    %v2476 = vunpack.c.h.b16 %v454
    %v2477 = vunpack.c.l.b16 %v455
    %v2478 = vunpack.c.l.b16 %v456
    %v2479 = vunpack.c.h.b16 %v456
    %v2480 = vunpack.c.l.b16 %v457
    %v2481 = vunpack.c.l.b16 %v458
    %v2482 = vunpack.c.h.b16 %v458
    %v2483 = vunpack.c.l.b16 %v459
    %v2484 = vunpack.c.l.b16 %v460
    %v2485 = vunpack.c.h.b16 %v460
    %v2486 = vunpack.c.l.b16 %v461
    %v2487 = vunpack.c.l.b16 %v462
    %v2488 = vunpack.c.h.b16 %v462
    %v2489 = vunpack.c.l.b16 %v463
    %v2490 = vunpack.c.l.b16 %v464
    %v2491 = vunpack.c.h.b16 %v464
    %v2492 = vunpack.c.l.b16 %v465
    %v2493 = vunpack.c.l.b16 %v466
    %v2494 = vunpack.c.h.b16 %v466
    %v2495 = vunpack.c.l.b16 %v467
    %v2496 = vunpack.c.l.b16 %v468
    %v2497 = vunpack.c.h.b16 %v468
    %v2498 = vunpack.c.l.b16 %v469
    %v2499 = vunpack.c.l.b16 %v470
    %v2500 = vunpack.c.h.b16 %v470
    %v2501 = vunpack.c.l.b16 %v471
    %v2502 = vunpack.c.l.b16 %v472
    %v2503 = vunpack.c.h.b16 %v472
    %v2504 = vunpack.c.l.b16 %v473
    %v2505 = vunpack.c.l.b16 %v474
    %v2506 = vunpack.c.h.b16 %v474
    %v2507 = vunpack.c.l.b16 %v475
    %v2508 = vunpack.c.l.b16 %v476
    %v2509 = vunpack.c.h.b16 %v476
    %v2510 = vunpack.c.l.b16 %v477
    %v2511 = vunpack.c.l.b16 %v478
    %v2512 = vunpack.c.h.b16 %v478
    %v2513 = vunpack.c.l.b16 %v479
    %v2514 = vunpack.c.l.b16 %v480
    %v2515 = vunpack.c.h.b16 %v480
    %v2516 = vunpack.c.l.b16 %v481
    %v2517 = vunpack.c.l.b16 %v482
    %v2518 = vunpack.c.h.b16 %v482
    %v2519 = vunpack.c.l.b16 %v483
    %v2520 = vunpack.c.l.b16 %v484
    %v2521 = vunpack.c.h.b16 %v484
    %v2522 = vunpack.c.l.b16 %v485
    %v2523 = vunpack.c.l.b16 %v486
    %v2524 = vunpack.c.h.b16 %v486
    %v2525 = vunpack.c.l.b16 %v487
    %v2526 = vunpack.c.l.b16 %v488
    %v2527 = vunpack.c.h.b16 %v488
    %v2528 = vunpack.c.l.b16 %v489
    %v2529 = vunpack.c.l.b16 %v490
    %v2530 = vunpack.c.h.b16 %v490
    %v2531 = vunpack.c.l.b16 %v491
    %v2532 = vunpack.c.l.b16 %v492
    %v2533 = vunpack.c.h.b16 %v492
    %v2534 = vunpack.c.l.b16 %v493
    %v2535 = vunpack.c.l.b16 %v494
    %v2536 = vunpack.c.h.b16 %v494
    %v2537 = vunpack.c.l.b16 %v495
    %v2538 = vunpack.c.l.b16 %v496
    %v2539 = vunpack.c.h.b16 %v496
    %v2540 = vunpack.c.l.b16 %v497
    %v2541 = vunpack.c.l.b16 %v498
    %v2542 = vunpack.c.h.b16 %v498
    %v2543 = vunpack.c.l.b16 %v499
    %v2544 = vunpack.c.l.b16 %v500
    %v2545 = vunpack.c.h.b16 %v500
    %v2546 = vunpack.c.l.b16 %v501
    %v2547 = vunpack.c.l.b16 %v502
    %v2548 = vunpack.c.h.b16 %v502
    %v2549 = vunpack.c.l.b16 %v503
    %v2550 = vunpack.c.l.b16 %v504
    %v2551 = vunpack.c.h.b16 %v504
    %v2552 = vunpack.c.l.b16 %v505
    %v2553 = vunpack.c.l.b16 %v506
    %v2554 = vunpack.c.h.b16 %v506
    %v2555 = vunpack.c.l.b16 %v507
    %v2556 = vunpack.c.l.b16 %v508
    %v2557 = vunpack.c.h.b16 %v508
    %v2558 = vunpack.c.l.b16 %v509
    %v2559 = vunpack.c.l.b16 %v510
    %v2560 = vunpack.c.h.b16 %v510
    %v2561 = vunpack.c.l.b16 %v511
    %v2562 = vunpack.c.l.b16 %v512
    %v2563 = vunpack.c.h.b16 %v512
    %v2564 = vunpack.c.l.b16 %v513
    %v2565 = vunpack.c.l.b16 %v514
    %v2566 = vunpack.c.h.b16 %v514
    %v2567 = vunpack.c.l.b16 %v515
    %v2568 = vunpack.c.l.b16 %v516
    %v2569 = vunpack.c.h.b16 %v516
    %v2570 = vunpack.c.l.b16 %v517
    %v2571 = vunpack.c.l.b16 %v518
    %v2572 = vunpack.c.h.b16 %v518
    %v2573 = vunpack.c.l.b16 %v519
    %v2574 = vunpack.c.l.b16 %v520
    %v2575 = vunpack.c.h.b16 %v520
    %v2576 = vunpack.c.l.b16 %v521
    %v2577 = vunpack.c.l.b16 %v522
    %v2578 = vunpack.c.h.b16 %v522
    %v2579 = vunpack.c.l.b16 %v523
    %v2580 = vunpack.c.l.b16 %v524
    %v2581 = vunpack.c.h.b16 %v524
    %v2582 = vunpack.c.l.b16 %v525
    %v2583 = vunpack.c.l.b16 %v526
    %v2584 = vunpack.c.h.b16 %v526
    %v2585 = vunpack.c.l.b16 %v527
    %v2586 = vunpack.c.l.b16 %v528
    %v2587 = vunpack.c.h.b16 %v528
    %v2588 = vunpack.c.l.b16 %v529
    %v2589 = vunpack.c.l.b16 %v530
    %v2590 = vunpack.c.h.b16 %v530
    %v2591 = vunpack.c.l.b16 %v531
    %v2592 = vunpack.c.l.b16 %v532
    %v2593 = vunpack.c.h.b16 %v532
    %v2594 = vunpack.c.l.b16 %v533
    %v2595 = vunpack.c.l.b16 %v534
    %v2596 = vunpack.c.h.b16 %v534
    %v2597 = vunpack.c.l.b16 %v535
    %v2598 = vunpack.c.l.b16 %v536
    %v2599 = vunpack.c.h.b16 %v536
    %v2600 = vunpack.c.l.b16 %v537
    %v2601 = vunpack.c.l.b16 %v538
    %v2602 = vunpack.c.h.b16 %v538
    %v2603 = vunpack.c.l.b16 %v539
    %v2604 = vunpack.c.l.b16 %v540
    %v2605 = vunpack.c.h.b16 %v540
    %v2606 = vunpack.c.l.b16 %v541
    %v2607 = vunpack.c.l.b16 %v542
    %v2608 = vunpack.c.h.b16 %v542
    %v2609 = vunpack.c.l.b16 %v543
    %v2610 = vunpack.c.l.b16 %v544
    %v2611 = vunpack.c.h.b16 %v544
    %v2612 = vunpack.c.l.b16 %v545
    %v2613 = vunpack.c.l.b16 %v546
    %v2614 = vunpack.c.h.b16 %v546
    %v2615 = vunpack.c.l.b16 %v547
    %v2616 = vunpack.c.l.b16 %v548
    %v2617 = vunpack.c.h.b16 %v548
    %v2618 = vunpack.c.l.b16 %v549
    %v2619 = vunpack.c.l.b16 %v550
    %v2620 = vunpack.c.h.b16 %v550
    %v2621 = vunpack.c.l.b16 %v551
    %v2622 = vunpack.c.l.b16 %v552
    %v2623 = vunpack.c.h.b16 %v552
    %v2624 = vunpack.c.l.b16 %v553
    %v2625 = vunpack.c.l.b16 %v554
    %v2626 = vunpack.c.h.b16 %v554
    %v2627 = vunpack.c.l.b16 %v555
    %v2628 = vunpack.c.l.b16 %v556
    %v2629 = vunpack.c.h.b16 %v556
    %v2630 = vunpack.c.l.b16 %v557
    %v2631 = vunpack.c.l.b16 %v558
    %v2632 = vunpack.c.h.b16 %v558
    %v2633 = vunpack.c.l.b16 %v559
    %v2634 = vunpack.c.l.b16 %v560
    %v2635 = vunpack.c.h.b16 %v560
    %v2636 = vunpack.c.l.b16 %v561
    %v2637 = vunpack.c.l.b16 %v562
    %v2638 = vunpack.c.h.b16 %v562
    %v2639 = vunpack.c.l.b16 %v563
    %v2640 = vunpack.c.l.b16 %v564
    %v2641 = vunpack.c.h.b16 %v564
    %v2642 = vunpack.c.l.b16 %v565
    %v2643 = vunpack.c.l.b16 %v566
    %v2644 = vunpack.c.h.b16 %v566
    %v2645 = vunpack.c.l.b16 %v567
    %v2646 = vunpack.c.l.b16 %v568
    %v2647 = vunpack.c.h.b16 %v568
    %v2648 = vunpack.c.l.b16 %v569
    %v2649 = vunpack.c.l.b16 %v570
    %v2650 = vunpack.c.h.b16 %v570
    %v2651 = vunpack.c.l.b16 %v571
    %v2652 = vunpack.c.l.b16 %v572
    %v2653 = vunpack.c.h.b16 %v572
    %v2654 = vunpack.c.l.b16 %v573
    %v2655 = vunpack.c.l.b16 %v574
    %v2656 = vunpack.c.h.b16 %v574
    %v2657 = vunpack.c.l.b16 %v575
    %v2658 = vunpack.c.l.b16 %v576
    %v2659 = vunpack.c.h.b16 %v576
    %v2660 = vunpack.c.l.b16 %v577
    %v2661 = vunpack.c.l.b16 %v578
    %v2662 = vunpack.c.h.b16 %v578
    %v2663 = vunpack.c.l.b16 %v579
    %v2664 = vunpack.c.l.b16 %v580
    %v2665 = vunpack.c.h.b16 %v580
    %v2666 = vunpack.c.l.b16 %v581
    %v2667 = vunpack.c.l.b16 %v582
    %v2668 = vunpack.c.h.b16 %v582
    %v2669 = vunpack.c.l.b16 %v583
    %v2670 = vunpack.c.l.b16 %v584
    %v2671 = vunpack.c.h.b16 %v584
    %v2672 = vunpack.c.l.b16 %v585
    %v2673 = vunpack.c.l.b16 %v586
    %v2674 = vunpack.c.h.b16 %v586
    %v2675 = vunpack.c.l.b16 %v587
    %v2676 = vunpack.c.l.b16 %v588
    %v2677 = vunpack.c.h.b16 %v588
    %v2678 = vunpack.c.l.b16 %v589
    %v2679 = vunpack.c.l.b16 %v590
    %v2680 = vunpack.c.h.b16 %v590
    %v2681 = vunpack.c.l.b16 %v591
    %v2682 = vunpack.c.l.b16 %v592
    %v2683 = vunpack.c.h.b16 %v592
    %v2684 = vunpack.c.l.b16 %v593
    %v2685 = vunpack.c.l.b16 %v594
    %v2686 = vunpack.c.h.b16 %v594
    %v2687 = vunpack.c.l.b16 %v595
    %v2688 = vunpack.c.l.b16 %v596
    %v2689 = vunpack.c.h.b16 %v596
    %v2690 = vunpack.c.l.b16 %v597
    %v2691 = vunpack.c.l.b16 %v598
    %v2692 = vunpack.c.h.b16 %v598
    %v2693 = vunpack.c.l.b16 %v599
    %v2694 = vunpack.c.l.b16 %v600
    %v2695 = vunpack.c.h.b16 %v600
    %v2696 = vunpack.c.l.b16 %v601
    %v2697 = vunpack.c.l.b16 %v602
    %v2698 = vunpack.c.h.b16 %v602
    %v2699 = vunpack.c.l.b16 %v603
    %v2700 = vunpack.c.l.b16 %v604
    %v2701 = vunpack.c.h.b16 %v604
    %v2702 = vunpack.c.l.b16 %v605
    %v2703 = vunpack.c.l.b16 %v606
    %v2704 = vunpack.c.h.b16 %v606
    %v2705 = vunpack.c.l.b16 %v607
    %v2706 = vunpack.c.l.b16 %v608
    %v2707 = vunpack.c.h.b16 %v608
    %v2708 = vunpack.c.l.b16 %v609
    %v2709 = vunpack.c.l.b16 %v610
    %v2710 = vunpack.c.h.b16 %v610
    %v2711 = vunpack.c.l.b16 %v611
    %v2712 = vunpack.c.l.b16 %v612
    %v2713 = vunpack.c.h.b16 %v612
    %v2714 = vunpack.c.l.b16 %v613
    %v2715 = vunpack.c.l.b16 %v614
    %v2716 = vunpack.c.h.b16 %v614
    %v2717 = vunpack.c.l.b16 %v615
    %v2718 = vunpack.c.l.b16 %v616
    %v2719 = vunpack.c.h.b16 %v616
    %v2720 = vunpack.c.l.b16 %v617
    %v2721 = vunpack.c.l.b16 %v618
    %v2722 = vunpack.c.h.b16 %v618
    %v2723 = vunpack.c.l.b16 %v619
    %v2724 = vunpack.c.l.b16 %v620
    %v2725 = vunpack.c.h.b16 %v620
    %v2726 = vunpack.c.l.b16 %v621
    %v2727 = vunpack.c.l.b16 %v622
    %v2728 = vunpack.c.h.b16 %v622
    %v2729 = vunpack.c.l.b16 %v623
    %v2730 = vunpack.c.l.b16 %v624
    %v2731 = vunpack.c.h.b16 %v624
    %v2732 = vunpack.c.l.b16 %v625
    %v2733 = vunpack.c.l.b16 %v626
    %v2734 = vunpack.c.h.b16 %v626
    %v2735 = vunpack.c.l.b16 %v627
    %v2736 = vunpack.c.l.b16 %v628
    %v2737 = vunpack.c.h.b16 %v628
    %v2738 = vunpack.c.l.b16 %v629
    %v2739 = vunpack.c.l.b16 %v630
    %v2740 = vunpack.c.h.b16 %v630
    %v2741 = vunpack.c.l.b16 %v631
    %v2742 = vunpack.c.l.b16 %v632
    %v2743 = vunpack.c.h.b16 %v632
    %v2744 = vunpack.c.l.b16 %v633
    %v2745 = vunpack.c.l.b16 %v634
    %v2746 = vunpack.c.h.b16 %v634
    %v2747 = vunpack.c.l.b16 %v635
    %v2748 = vunpack.c.l.b16 %v636
    %v2749 = vunpack.c.h.b16 %v636
    %v2750 = vunpack.c.l.b16 %v637
    %v2751 = vunpack.c.l.b16 %v638
    %v2752 = vunpack.c.h.b16 %v638
    %v2753 = vunpack.c.l.b16 %v639
    %v2754 = vunpack.c.l.b16 %v640
    %v2755 = vunpack.c.h.b16 %v640
    %v2756 = vunpack.c.l.b16 %v641
    %v2757 = vunpack.c.l.b16 %v642
    %v2758 = vunpack.c.h.b16 %v642
    %v2759 = vunpack.c.l.b16 %v643
    %v2760 = vunpack.c.l.b16 %v644
    %v2761 = vunpack.c.h.b16 %v644
    %v2762 = vunpack.c.l.b16 %v645
    %v2763 = vunpack.c.l.b16 %v646
    %v2764 = vunpack.c.h.b16 %v646
    %v2765 = vunpack.c.l.b16 %v647
    %v2766 = vunpack.c.l.b16 %v648
    %v2767 = vunpack.c.h.b16 %v648
    %v2768 = vunpack.c.l.b16 %v649
    %v2769 = vunpack.c.l.b16 %v650
    %v2770 = vunpack.c.h.b16 %v650
    %v2771 = vunpack.c.l.b16 %v651
    %v2772 = vunpack.c.l.b16 %v652
    %v2773 = vunpack.c.h.b16 %v652
    %v2774 = vunpack.c.l.b16 %v653
    %v2775 = vunpack.c.l.b16 %v654
    %v2776 = vunpack.c.h.b16 %v654
    %v2777 = vunpack.c.l.b16 %v655
    %v2778 = vunpack.c.l.b16 %v656
    %v2779 = vunpack.c.h.b16 %v656
    %v2780 = vunpack.c.l.b16 %v657
    %v2781 = vunpack.c.l.b16 %v658
    %v2782 = vunpack.c.h.b16 %v658
    %v2783 = vunpack.c.l.b16 %v659
    %v2784 = vunpack.c.l.b16 %v660
    %v2785 = vunpack.c.h.b16 %v660
    %v2786 = vunpack.c.l.b16 %v661
    %v2787 = vunpack.c.l.b16 %v662
    %v2788 = vunpack.c.h.b16 %v662
    %v2789 = vunpack.c.l.b16 %v663
    %v2790 = vunpack.c.l.b16 %v664
    %v2791 = vunpack.c.h.b16 %v664
    %v2792 = vunpack.c.l.b16 %v665
    %v2793 = vunpack.c.l.b16 %v666
    %v2794 = vunpack.c.h.b16 %v666
    %v2795 = vunpack.c.l.b16 %v667
    %v2796 = vunpack.c.l.b16 %v668
    %v2797 = vunpack.c.h.b16 %v668
    %v2798 = vunpack.c.l.b16 %v669
    %v2799 = vunpack.c.l.b16 %v670
    %v2800 = vunpack.c.h.b16 %v670
    %v2801 = vunpack.c.l.b16 %v671
    %v2802 = vunpack.c.l.b16 %v672
    %v2803 = vunpack.c.h.b16 %v672
    %v2804 = vunpack.c.l.b16 %v673
    %v2805 = vunpack.c.l.b16 %v674
    %v2806 = vunpack.c.h.b16 %v674
    %v2807 = vunpack.c.l.b16 %v675
    %v2808 = vunpack.c.l.b16 %v676
    %v2809 = vunpack.c.h.b16 %v676
    %v2810 = vunpack.c.l.b16 %v677
    %v2811 = vunpack.c.l.b16 %v678
    %v2812 = vunpack.c.h.b16 %v678
    %v2813 = vunpack.c.l.b16 %v679
    %v2814 = vunpack.c.l.b16 %v680
    %v2815 = vunpack.c.h.b16 %v680
    %v2816 = vunpack.c.l.b16 %v681
    %v2817 = vunpack.c.l.b16 %v682
    %v2818 = vunpack.c.h.b16 %v682
    %v2819 = vunpack.c.l.b16 %v683
    %v2820 = vunpack.c.l.b16 %v684
    %v2821 = vunpack.c.h.b16 %v684
    %v2822 = vunpack.c.l.b16 %v685
    %v2823 = vunpack.c.l.b16 %v686
    %v2824 = vunpack.c.h.b16 %v686
    %v2825 = vunpack.c.l.b16 %v687
    %v2826 = vunpack.c.l.b16 %v688
    %v2827 = vunpack.c.h.b16 %v688
    %v2828 = vunpack.c.l.b16 %v689
    %v2829 = vunpack.c.l.b16 %v690
    %v2830 = vunpack.c.h.b16 %v690
    %v2831 = vunpack.c.l.b16 %v691
    %v2832 = vunpack.c.l.b16 %v692
    %v2833 = vunpack.c.h.b16 %v692
    %v2834 = vunpack.c.l.b16 %v693
    %v2835 = vunpack.c.l.b16 %v694
    %v2836 = vunpack.c.h.b16 %v694
    %v2837 = vunpack.c.l.b16 %v695
    %v2838 = vunpack.c.l.b16 %v696
    %v2839 = vunpack.c.h.b16 %v696
    %v2840 = vunpack.c.l.b16 %v697
    %v2841 = vunpack.c.l.b16 %v698
    %v2842 = vunpack.c.h.b16 %v698
    %v2843 = vunpack.c.l.b16 %v699
    %v2844 = vunpack.c.l.b16 %v700
    %v2845 = vunpack.c.h.b16 %v700
    %v2846 = vunpack.c.l.b16 %v701
    %v2847 = vunpack.c.l.b16 %v702
    %v2848 = vunpack.c.h.b16 %v702
    %v2849 = vunpack.c.l.b16 %v703
    %v2850 = vunpack.c.l.b16 %v704
    %v2851 = vunpack.c.h.b16 %v704
    %v2852 = vunpack.c.l.b16 %v705
    %v2853 = vunpack.c.l.b16 %v706
    %v2854 = vunpack.c.h.b16 %v706
    %v2855 = vunpack.c.l.b16 %v707
    %v2856 = vunpack.c.l.b16 %v708
    %v2857 = vunpack.c.h.b16 %v708
    %v2858 = vunpack.c.l.b16 %v709
    %v2859 = vunpack.c.l.b16 %v710
    %v2860 = vunpack.c.h.b16 %v710
    %v2861 = vunpack.c.l.b16 %v711
    %v2862 = vunpack.c.l.b16 %v712
    %v2863 = vunpack.c.h.b16 %v712
    %v2864 = vunpack.c.l.b16 %v713
    %v2865 = vunpack.c.l.b16 %v714
    %v2866 = vunpack.c.h.b16 %v714
    %v2867 = vunpack.c.l.b16 %v715
    %v2868 = vunpack.c.l.b16 %v716
    %v2869 = vunpack.c.h.b16 %v716
    %v2870 = vunpack.c.l.b16 %v717
    %v2871 = vunpack.c.l.b16 %v718
    %v2872 = vunpack.c.h.b16 %v718
    %v2873 = vunpack.c.l.b16 %v719
    %v2874 = vunpack.c.l.b16 %v720
    %v2875 = vunpack.c.h.b16 %v720
    %v2876 = vunpack.c.l.b16 %v721
    %v2877 = vunpack.c.l.b16 %v722
    %v2878 = vunpack.c.h.b16 %v722
    %v2879 = vunpack.c.l.b16 %v723
    %v2880 = vunpack.c.l.b16 %v724
    %v2881 = vunpack.c.h.b16 %v724
    %v2882 = vunpack.c.l.b16 %v725
    %v2883 = vunpack.c.l.b16 %v726
    %v2884 = vunpack.c.h.b16 %v726
    %v2885 = vunpack.c.l.b16 %v727
    %v2886 = vunpack.c.l.b16 %v728
    %v2887 = vunpack.c.h.b16 %v728
    %v2888 = vunpack.c.l.b16 %v729
    %v2889 = vunpack.c.l.b16 %v730
    %v2890 = vunpack.c.h.b16 %v730
    %v2891 = vunpack.c.l.b16 %v731
    %v2892 = vunpack.c.l.b16 %v732
    %v2893 = vunpack.c.h.b16 %v732
    %v2894 = vunpack.c.l.b16 %v733
    %v2895 = vunpack.c.l.b16 %v734
    %v2896 = vunpack.c.h.b16 %v734
    %v2897 = vunpack.c.l.b16 %v735
    %v2898 = vunpack.c.l.b16 %v736
    %v2899 = vunpack.c.h.b16 %v736
    %v2900 = vunpack.c.l.b16 %v737
    %v2901 = vunpack.c.l.b16 %v738
    %v2902 = vunpack.c.h.b16 %v738
    %v2903 = vunpack.c.l.b16 %v739
    %v2904 = vunpack.c.l.b16 %v740
    %v2905 = vunpack.c.h.b16 %v740
    %v2906 = vunpack.c.l.b16 %v741
    %v2907 = vunpack.c.l.b16 %v742
    %v2908 = vunpack.c.h.b16 %v742
    %v2909 = vunpack.c.l.b16 %v743
    %v2910 = vunpack.c.l.b16 %v744
    %v2911 = vunpack.c.h.b16 %v744
    %v2912 = vunpack.c.l.b16 %v745
    %v2913 = vunpack.c.l.b16 %v746
    %v2914 = vunpack.c.h.b16 %v746
    %v2915 = vunpack.c.l.b16 %v747
    %v2916 = vunpack.c.l.b16 %v748
    %v2917 = vunpack.c.h.b16 %v748
    %v2918 = vunpack.c.l.b16 %v749
    %v2919 = vunpack.c.l.b16 %v750
    %v2920 = vunpack.c.h.b16 %v750
    %v2921 = vunpack.c.l.b16 %v751
    %v2922 = vunpack.c.l.b16 %v752
    %v2923 = vunpack.c.h.b16 %v752
    %v2924 = vunpack.c.l.b16 %v753
    %v2925 = vunpack.c.l.b16 %v754
    %v2926 = vunpack.c.h.b16 %v754
    %v2927 = vunpack.c.l.b16 %v755
    %v2928 = vunpack.c.l.b16 %v756
    %v2929 = vunpack.c.h.b16 %v756
    %v2930 = vunpack.c.l.b16 %v757
    %v2931 = vunpack.c.l.b16 %v758
    %v2932 = vunpack.c.h.b16 %v758
    %v2933 = vunpack.c.l.b16 %v759
    %v2934 = vunpack.c.l.b16 %v760
    %v2935 = vunpack.c.h.b16 %v760
    %v2936 = vunpack.c.l.b16 %v761
    %v2937 = vunpack.c.l.b16 %v762
    %v2938 = vunpack.c.h.b16 %v762
    %v2939 = vunpack.c.l.b16 %v763
    %v2940 = vunpack.c.l.b16 %v764
    %v2941 = vunpack.c.h.b16 %v764
    %v2942 = vunpack.c.l.b16 %v765
    %v2943 = vunpack.c.l.b16 %v766
    %v2944 = vunpack.c.h.b16 %v766
    %v2945 = vunpack.c.l.b16 %v767
    %v2946 = vunpack.c.l.b16 %v768
    %v2947 = vunpack.c.h.b16 %v768
    %v2948 = vunpack.c.l.b16 %v769
    %v2949 = vunpack.c.l.b16 %v770
    %v2950 = vunpack.c.h.b16 %v770
    %v2951 = vunpack.c.l.b16 %v771
    %v2952 = vunpack.c.l.b16 %v772
    %v2953 = vunpack.c.h.b16 %v772
    %v2954 = vunpack.c.l.b16 %v773
    %v2955 = vunpack.c.l.b16 %v774
    %v2956 = vunpack.c.h.b16 %v774
    %v2957 = vunpack.c.l.b16 %v775
    %v2958 = vunpack.c.l.b16 %v776
    %v2959 = vunpack.c.h.b16 %v776
    %v2960 = vunpack.c.l.b16 %v777
    %v2961 = vunpack.c.l.b16 %v778
    %v2962 = vunpack.c.h.b16 %v778
    %v2963 = vunpack.c.l.b16 %v779
    %v2964 = vunpack.c.l.b16 %v780
    %v2965 = vunpack.c.h.b16 %v780
    %v2966 = vunpack.c.l.b16 %v781
    %v2967 = vunpack.c.l.b16 %v782
    %v2968 = vunpack.c.h.b16 %v782
    %v2969 = vunpack.c.l.b16 %v783
    %v2970 = vunpack.c.l.b16 %v784
    %v2971 = vunpack.c.h.b16 %v784
    %v2972 = vunpack.c.l.b16 %v785
    %v2973 = vunpack.c.l.b16 %v786
    %v2974 = vunpack.c.h.b16 %v786
    %v2975 = vunpack.c.l.b16 %v787
    %v2976 = vunpack.c.l.b16 %v788
    %v2977 = vunpack.c.h.b16 %v788
    %v2978 = vunpack.c.l.b16 %v789
    %v2979 = vunpack.c.l.b16 %v790
    %v2980 = vunpack.c.h.b16 %v790
    %v2981 = vunpack.c.l.b16 %v791
    %v2982 = vunpack.c.l.b16 %v792
    %v2983 = vunpack.c.h.b16 %v792
    %v2984 = vunpack.c.l.b16 %v793
    %v2985 = vunpack.c.l.b16 %v794
    %v2986 = vunpack.c.h.b16 %v794
    %v2987 = vunpack.c.l.b16 %v795
    %v2988 = vunpack.c.l.b16 %v796
    %v2989 = vunpack.c.h.b16 %v796
    %v2990 = vunpack.c.l.b16 %v797
    %v2991 = vunpack.c.l.b16 %v798
    %v2992 = vunpack.c.h.b16 %v798
    %v2993 = vunpack.c.l.b16 %v799
    %v2994 = vunpack.c.l.b16 %v800
    %v2995 = vunpack.c.h.b16 %v800
    %v2996 = vunpack.c.l.b16 %v801
    %v2997 = vunpack.c.l.b16 %v802
    %v2998 = vunpack.c.h.b16 %v802
    %v2999 = vunpack.c.l.b16 %v803
    %v3000 = vunpack.c.l.b16 %v804
    %v3001 = vunpack.c.h.b16 %v804
    %v3002 = vunpack.c.l.b16 %v805
    %v3003 = vunpack.c.l.b16 %v806
    %v3004 = vunpack.c.h.b16 %v806
    %v3005 = vunpack.c.l.b16 %v807
    %v3006 = vunpack.c.l.b16 %v808
    %v3007 = vunpack.c.h.b16 %v808
    %v3008 = vunpack.c.l.b16 %v809
    %v3009 = vunpack.c.l.b16 %v810
    %v3010 = vunpack.c.h.b16 %v810
    %v3011 = vunpack.c.l.b16 %v811
    %v3012 = vunpack.c.l.b16 %v812
    %v3013 = vunpack.c.h.b16 %v812
    %v3014 = vunpack.c.l.b16 %v813
    %v3015 = vunpack.c.l.b16 %v814
    %v3016 = vunpack.c.h.b16 %v814
    %v3017 = vunpack.c.l.b16 %v815
    %v3018 = vunpack.c.l.b16 %v816
    %v3019 = vunpack.c.h.b16 %v816
    %v3020 = vunpack.c.l.b16 %v817
    %v3021 = vunpack.c.l.b16 %v818
    %v3022 = vunpack.c.h.b16 %v818
    %v3023 = vunpack.c.l.b16 %v819
    %v3024 = vunpack.c.l.b16 %v820
    %v3025 = vunpack.c.h.b16 %v820
    %v3026 = vunpack.c.l.b16 %v821
    %v3027 = vunpack.c.l.b16 %v822
    %v3028 = vunpack.c.h.b16 %v822
    %v3029 = vunpack.c.l.b16 %v823
    %v3030 = vunpack.c.l.b16 %v824
    %v3031 = vunpack.c.h.b16 %v824
    %v3032 = vunpack.c.l.b16 %v825
    %v3033 = vpack.c.b16 %v1836, %v1833
    %v3034 = vpack.c.b16 %v1837, %v1834
    %v3035 = vpack.c.b16 %v1838, %v1835
    %v3036 = vpack.c.b16 %v1842, %v1839
    %v3037 = vpack.c.b16 %v1843, %v1840
    %v3038 = vpack.c.b16 %v1844, %v1841
    %v3039 = vpack.c.b16 %v1848, %v1845
    %v3040 = vpack.c.b16 %v1849, %v1846
    %v3041 = vpack.c.b16 %v1850, %v1847
    %v3042 = vpack.c.b16 %v1854, %v1851
    %v3043 = vpack.c.b16 %v1855, %v1852
    %v3044 = vpack.c.b16 %v1856, %v1853
    %v3045 = vpack.c.b16 %v1860, %v1857
    %v3046 = vpack.c.b16 %v1861, %v1858
    %v3047 = vpack.c.b16 %v1862, %v1859
    %v3048 = vpack.c.b16 %v1866, %v1863
    %v3049 = vpack.c.b16 %v1867, %v1864
    %v3050 = vpack.c.b16 %v1868, %v1865
    %v3051 = vpack.c.b16 %v1872, %v1869
    %v3052 = vpack.c.b16 %v1873, %v1870
    %v3053 = vpack.c.b16 %v1874, %v1871
    %v3054 = vpack.c.b16 %v1878, %v1875
    %v3055 = vpack.c.b16 %v1879, %v1876
    %v3056 = vpack.c.b16 %v1880, %v1877
    %v3057 = vpack.c.b16 %v1884, %v1881
    %v3058 = vpack.c.b16 %v1885, %v1882
    %v3059 = vpack.c.b16 %v1886, %v1883
    %v3060 = vpack.c.b16 %v1890, %v1887
    %v3061 = vpack.c.b16 %v1891, %v1888
    %v3062 = vpack.c.b16 %v1892, %v1889
    %v3063 = vpack.c.b16 %v1896, %v1893
    %v3064 = vpack.c.b16 %v1897, %v1894
    %v3065 = vpack.c.b16 %v1898, %v1895
    %v3066 = vpack.c.b16 %v1902, %v1899
    %v3067 = vpack.c.b16 %v1903, %v1900
    %v3068 = vpack.c.b16 %v1904, %v1901
    %v3069 = vpack.c.b16 %v1908, %v1905
    %v3070 = vpack.c.b16 %v1909, %v1906
    %v3071 = vpack.c.b16 %v1910, %v1907
    %v3072 = vpack.c.b16 %v1914, %v1911
    %v3073 = vpack.c.b16 %v1915, %v1912
    %v3074 = vpack.c.b16 %v1916, %v1913
    %v3075 = vpack.c.b16 %v1920, %v1917
    %v3076 = vpack.c.b16 %v1921, %v1918
    %v3077 = vpack.c.b16 %v1922, %v1919
    %v3078 = vpack.c.b16 %v1926, %v1923
    %v3079 = vpack.c.b16 %v1927, %v1924
    %v3080 = vpack.c.b16 %v1928, %v1925
    %v3081 = vpack.c.b16 %v1932, %v1929
    %v3082 = vpack.c.b16 %v1933, %v1930
    %v3083 = vpack.c.b16 %v1934, %v1931
    %v3084 = vpack.c.b16 %v1938, %v1935
    %v3085 = vpack.c.b16 %v1939, %v1936
    %v3086 = vpack.c.b16 %v1940, %v1937
    %v3087 = vpack.c.b16 %v1944, %v1941
    %v3088 = vpack.c.b16 %v1945, %v1942
    %v3089 = vpack.c.b16 %v1946, %v1943
    %v3090 = vpack.c.b16 %v1950, %v1947
    %v3091 = vpack.c.b16 %v1951, %v1948
    %v3092 = vpack.c.b16 %v1952, %v1949
    %v3093 = vpack.c.b16 %v1956, %v1953
    %v3094 = vpack.c.b16 %v1957, %v1954
    %v3095 = vpack.c.b16 %v1958, %v1955
    %v3096 = vpack.c.b16 %v1962, %v1959
    %v3097 = vpack.c.b16 %v1963, %v1960
    %v3098 = vpack.c.b16 %v1964, %v1961
    %v3099 = vpack.c.b16 %v1968, %v1965
    %v3100 = vpack.c.b16 %v1969, %v1966
    %v3101 = vpack.c.b16 %v1970, %v1967
    %v3102 = vpack.c.b16 %v1974, %v1971
    %v3103 = vpack.c.b16 %v1975, %v1972
    %v3104 = vpack.c.b16 %v1976, %v1973
    %v3105 = vpack.c.b16 %v1980, %v1977
    %v3106 = vpack.c.b16 %v1981, %v1978
    %v3107 = vpack.c.b16 %v1982, %v1979
    %v3108 = vpack.c.b16 %v1986, %v1983
    %v3109 = vpack.c.b16 %v1987, %v1984
    %v3110 = vpack.c.b16 %v1988, %v1985
    %v3111 = vpack.c.b16 %v1992, %v1989
    %v3112 = vpack.c.b16 %v1993, %v1990
    %v3113 = vpack.c.b16 %v1994, %v1991
    %v3114 = vpack.c.b16 %v1998, %v1995
    %v3115 = vpack.c.b16 %v1999, %v1996
    %v3116 = vpack.c.b16 %v2000, %v1997
    %v3117 = vpack.c.b16 %v2004, %v2001
    %v3118 = vpack.c.b16 %v2005, %v2002
    %v3119 = vpack.c.b16 %v2006, %v2003
    %v3120 = vpack.c.b16 %v2010, %v2007
    %v3121 = vpack.c.b16 %v2011, %v2008
    %v3122 = vpack.c.b16 %v2012, %v2009
    %v3123 = vpack.c.b16 %v2016, %v2013
    %v3124 = vpack.c.b16 %v2017, %v2014
    %v3125 = vpack.c.b16 %v2018, %v2015
    %v3126 = vpack.c.b16 %v2022, %v2019
    %v3127 = vpack.c.b16 %v2023, %v2020
    %v3128 = vpack.c.b16 %v2024, %v2021
    %v3129 = vpack.c.b16 %v2028, %v2025
    %v3130 = vpack.c.b16 %v2029, %v2026
    %v3131 = vpack.c.b16 %v2030, %v2027
    %v3132 = vpack.c.b16 %v2034, %v2031
    %v3133 = vpack.c.b16 %v2035, %v2032
    %v3134 = vpack.c.b16 %v2036, %v2033
    %v3135 = vpack.c.b16 %v2040, %v2037
    %v3136 = vpack.c.b16 %v2041, %v2038
    %v3137 = vpack.c.b16 %v2042, %v2039
    %v3138 = vpack.c.b16 %v2046, %v2043
    %v3139 = vpack.c.b16 %v2047, %v2044
    %v3140 = vpack.c.b16 %v2048, %v2045
    %v3141 = vpack.c.b16 %v2052, %v2049
    %v3142 = vpack.c.b16 %v2053, %v2050
    %v3143 = vpack.c.b16 %v2054, %v2051
    %v3144 = vpack.c.b16 %v2058, %v2055
    %v3145 = vpack.c.b16 %v2059, %v2056
    %v3146 = vpack.c.b16 %v2060, %v2057
    %v3147 = vpack.c.b16 %v2064, %v2061
    %v3148 = vpack.c.b16 %v2065, %v2062
    %v3149 = vpack.c.b16 %v2066, %v2063
    %v3150 = vpack.c.b16 %v2070, %v2067
    %v3151 = vpack.c.b16 %v2071, %v2068
    %v3152 = vpack.c.b16 %v2072, %v2069
    %v3153 = vpack.c.b16 %v2076, %v2073
    %v3154 = vpack.c.b16 %v2077, %v2074
    %v3155 = vpack.c.b16 %v2078, %v2075
    %v3156 = vpack.c.b16 %v2082, %v2079
    %v3157 = vpack.c.b16 %v2083, %v2080
    %v3158 = vpack.c.b16 %v2084, %v2081
    %v3159 = vpack.c.b16 %v2088, %v2085
    %v3160 = vpack.c.b16 %v2089, %v2086
    %v3161 = vpack.c.b16 %v2090, %v2087
    %v3162 = vpack.c.b16 %v2094, %v2091
    %v3163 = vpack.c.b16 %v2095, %v2092
    %v3164 = vpack.c.b16 %v2096, %v2093
    %v3165 = vpack.c.b16 %v2100, %v2097
    %v3166 = vpack.c.b16 %v2101, %v2098
    %v3167 = vpack.c.b16 %v2102, %v2099
    %v3168 = vpack.c.b16 %v2106, %v2103
    %v3169 = vpack.c.b16 %v2107, %v2104
    %v3170 = vpack.c.b16 %v2108, %v2105
    %v3171 = vpack.c.b16 %v2112, %v2109
    %v3172 = vpack.c.b16 %v2113, %v2110
    %v3173 = vpack.c.b16 %v2114, %v2111
    %v3174 = vpack.c.b16 %v2118, %v2115
    %v3175 = vpack.c.b16 %v2119, %v2116
    %v3176 = vpack.c.b16 %v2120, %v2117
    %v3177 = vpack.c.b16 %v2124, %v2121
    %v3178 = vpack.c.b16 %v2125, %v2122
    %v3179 = vpack.c.b16 %v2126, %v2123
    %v3180 = vpack.c.b16 %v2130, %v2127
    %v3181 = vpack.c.b16 %v2131, %v2128
    %v3182 = vpack.c.b16 %v2132, %v2129
    %v3183 = vpack.c.b16 %v2136, %v2133
    %v3184 = vpack.c.b16 %v2137, %v2134
    %v3185 = vpack.c.b16 %v2138, %v2135
    %v3186 = vpack.c.b16 %v2142, %v2139
    %v3187 = vpack.c.b16 %v2143, %v2140
    %v3188 = vpack.c.b16 %v2144, %v2141
    %v3189 = vpack.c.b16 %v2148, %v2145
    %v3190 = vpack.c.b16 %v2149, %v2146
    %v3191 = vpack.c.b16 %v2150, %v2147
    %v3192 = vpack.c.b16 %v2154, %v2151
    %v3193 = vpack.c.b16 %v2155, %v2152
    %v3194 = vpack.c.b16 %v2156, %v2153
    %v3195 = vpack.c.b16 %v2160, %v2157
    %v3196 = vpack.c.b16 %v2161, %v2158
    %v3197 = vpack.c.b16 %v2162, %v2159
    %v3198 = vpack.c.b16 %v2166, %v2163
    %v3199 = vpack.c.b16 %v2167, %v2164
    %v3200 = vpack.c.b16 %v2168, %v2165
    %v3201 = vpack.c.b16 %v2172, %v2169
    %v3202 = vpack.c.b16 %v2173, %v2170
    %v3203 = vpack.c.b16 %v2174, %v2171
    %v3204 = vpack.c.b16 %v2178, %v2175
    %v3205 = vpack.c.b16 %v2179, %v2176
    %v3206 = vpack.c.b16 %v2180, %v2177
    %v3207 = vpack.c.b16 %v2184, %v2181
    %v3208 = vpack.c.b16 %v2185, %v2182
    %v3209 = vpack.c.b16 %v2186, %v2183
    %v3210 = vpack.c.b16 %v2190, %v2187
    %v3211 = vpack.c.b16 %v2191, %v2188
    %v3212 = vpack.c.b16 %v2192, %v2189
    %v3213 = vpack.c.b16 %v2196, %v2193
    %v3214 = vpack.c.b16 %v2197, %v2194
    %v3215 = vpack.c.b16 %v2198, %v2195
    %v3216 = vpack.c.b16 %v2202, %v2199
    %v3217 = vpack.c.b16 %v2203, %v2200
    %v3218 = vpack.c.b16 %v2204, %v2201
    %v3219 = vpack.c.b16 %v2208, %v2205
    %v3220 = vpack.c.b16 %v2209, %v2206
    %v3221 = vpack.c.b16 %v2210, %v2207
    %v3222 = vpack.c.b16 %v2214, %v2211
    %v3223 = vpack.c.b16 %v2215, %v2212
    %v3224 = vpack.c.b16 %v2216, %v2213
    %v3225 = vpack.c.b16 %v2220, %v2217
    %v3226 = vpack.c.b16 %v2221, %v2218
    %v3227 = vpack.c.b16 %v2222, %v2219
    %v3228 = vpack.c.b16 %v2226, %v2223
    %v3229 = vpack.c.b16 %v2227, %v2224
    %v3230 = vpack.c.b16 %v2228, %v2225
    %v3231 = vpack.c.b16 %v2232, %v2229
    %v3232 = vpack.c.b16 %v2233, %v2230
    %v3233 = vpack.c.b16 %v2234, %v2231
    %v3234 = vpack.c.b16 %v2238, %v2235
    %v3235 = vpack.c.b16 %v2239, %v2236
    %v3236 = vpack.c.b16 %v2240, %v2237
    %v3237 = vpack.c.b16 %v2244, %v2241
    %v3238 = vpack.c.b16 %v2245, %v2242
    %v3239 = vpack.c.b16 %v2246, %v2243
    %v3240 = vpack.c.b16 %v2250, %v2247
    %v3241 = vpack.c.b16 %v2251, %v2248
    %v3242 = vpack.c.b16 %v2252, %v2249
    %v3243 = vpack.c.b16 %v2256, %v2253
    %v3244 = vpack.c.b16 %v2257, %v2254
    %v3245 = vpack.c.b16 %v2258, %v2255
    %v3246 = vpack.c.b16 %v2262, %v2259
    %v3247 = vpack.c.b16 %v2263, %v2260
    %v3248 = vpack.c.b16 %v2264, %v2261
    %v3249 = vpack.c.b16 %v2268, %v2265
    %v3250 = vpack.c.b16 %v2269, %v2266
    %v3251 = vpack.c.b16 %v2270, %v2267
    %v3252 = vpack.c.b16 %v2274, %v2271
    %v3253 = vpack.c.b16 %v2275, %v2272
    %v3254 = vpack.c.b16 %v2276, %v2273
    %v3255 = vpack.c.b16 %v2280, %v2277
    %v3256 = vpack.c.b16 %v2281, %v2278
    %v3257 = vpack.c.b16 %v2282, %v2279
    %v3258 = vpack.c.b16 %v2286, %v2283
    %v3259 = vpack.c.b16 %v2287, %v2284
    %v3260 = vpack.c.b16 %v2288, %v2285
    %v3261 = vpack.c.b16 %v2292, %v2289
    %v3262 = vpack.c.b16 %v2293, %v2290
    %v3263 = vpack.c.b16 %v2294, %v2291
    %v3264 = vpack.c.b16 %v2298, %v2295
    %v3265 = vpack.c.b16 %v2299, %v2296
    %v3266 = vpack.c.b16 %v2300, %v2297
    %v3267 = vpack.c.b16 %v2304, %v2301
    %v3268 = vpack.c.b16 %v2305, %v2302
    %v3269 = vpack.c.b16 %v2306, %v2303
    %v3270 = vpack.c.b16 %v2310, %v2307
    %v3271 = vpack.c.b16 %v2311, %v2308
    %v3272 = vpack.c.b16 %v2312, %v2309
    %v3273 = vpack.c.b16 %v2316, %v2313
    %v3274 = vpack.c.b16 %v2317, %v2314
    %v3275 = vpack.c.b16 %v2318, %v2315
    %v3276 = vpack.c.b16 %v2322, %v2319
    %v3277 = vpack.c.b16 %v2323, %v2320
    %v3278 = vpack.c.b16 %v2324, %v2321
    %v3279 = vpack.c.b16 %v2328, %v2325
    %v3280 = vpack.c.b16 %v2329, %v2326
    %v3281 = vpack.c.b16 %v2330, %v2327
    %v3282 = vpack.c.b16 %v2334, %v2331
    %v3283 = vpack.c.b16 %v2335, %v2332
    %v3284 = vpack.c.b16 %v2336, %v2333
    %v3285 = vpack.c.b16 %v2340, %v2337
    %v3286 = vpack.c.b16 %v2341, %v2338
    %v3287 = vpack.c.b16 %v2342, %v2339
    %v3288 = vpack.c.b16 %v2346, %v2343
    %v3289 = vpack.c.b16 %v2347, %v2344
    %v3290 = vpack.c.b16 %v2348, %v2345
    %v3291 = vpack.c.b16 %v2352, %v2349
    %v3292 = vpack.c.b16 %v2353, %v2350
    %v3293 = vpack.c.b16 %v2354, %v2351
    %v3294 = vpack.c.b16 %v2358, %v2355
    %v3295 = vpack.c.b16 %v2359, %v2356
    %v3296 = vpack.c.b16 %v2360, %v2357
    %v3297 = vpack.c.b16 %v2364, %v2361
    %v3298 = vpack.c.b16 %v2365, %v2362
    %v3299 = vpack.c.b16 %v2366, %v2363
    %v3300 = vpack.c.b16 %v2370, %v2367
    %v3301 = vpack.c.b16 %v2371, %v2368
    %v3302 = vpack.c.b16 %v2372, %v2369
    %v3303 = vpack.c.b16 %v2376, %v2373
    %v3304 = vpack.c.b16 %v2377, %v2374
    %v3305 = vpack.c.b16 %v2378, %v2375
    %v3306 = vpack.c.b16 %v2382, %v2379
    %v3307 = vpack.c.b16 %v2383, %v2380
    %v3308 = vpack.c.b16 %v2384, %v2381
    %v3309 = vpack.c.b16 %v2388, %v2385
    %v3310 = vpack.c.b16 %v2389, %v2386
    %v3311 = vpack.c.b16 %v2390, %v2387
    %v3312 = vpack.c.b16 %v2394, %v2391
    %v3313 = vpack.c.b16 %v2395, %v2392
    %v3314 = vpack.c.b16 %v2396, %v2393
    %v3315 = vpack.c.b16 %v2400, %v2397
    %v3316 = vpack.c.b16 %v2401, %v2398
    %v3317 = vpack.c.b16 %v2402, %v2399
    %v3318 = vpack.c.b16 %v2406, %v2403
    %v3319 = vpack.c.b16 %v2407, %v2404
    %v3320 = vpack.c.b16 %v2408, %v2405
    %v3321 = vpack.c.b16 %v2412, %v2409
    %v3322 = vpack.c.b16 %v2413, %v2410
    %v3323 = vpack.c.b16 %v2414, %v2411
    %v3324 = vpack.c.b16 %v2418, %v2415
    %v3325 = vpack.c.b16 %v2419, %v2416
    %v3326 = vpack.c.b16 %v2420, %v2417
    %v3327 = vpack.c.b16 %v2424, %v2421
    %v3328 = vpack.c.b16 %v2425, %v2422
    %v3329 = vpack.c.b16 %v2426, %v2423
    %v3330 = vpack.c.b16 %v2430, %v2427
    %v3331 = vpack.c.b16 %v2431, %v2428
    %v3332 = vpack.c.b16 %v2432, %v2429
    %v3333 = vpack.c.b16 %v2436, %v2433
    %v3334 = vpack.c.b16 %v2437, %v2434
    %v3335 = vpack.c.b16 %v2438, %v2435
    %v3336 = vpack.c.b16 %v2442, %v2439
    %v3337 = vpack.c.b16 %v2443, %v2440
    %v3338 = vpack.c.b16 %v2444, %v2441
    %v3339 = vpack.c.b16 %v2448, %v2445
    %v3340 = vpack.c.b16 %v2449, %v2446
    %v3341 = vpack.c.b16 %v2450, %v2447
    %v3342 = vpack.c.b16 %v2454, %v2451
    %v3343 = vpack.c.b16 %v2455, %v2452
    %v3344 = vpack.c.b16 %v2456, %v2453
    %v3345 = vpack.c.b16 %v2460, %v2457
    %v3346 = vpack.c.b16 %v2461, %v2458
    %v3347 = vpack.c.b16 %v2462, %v2459
    %v3348 = vpack.c.b16 %v2466, %v2463
    %v3349 = vpack.c.b16 %v2467, %v2464
    %v3350 = vpack.c.b16 %v2468, %v2465
    %v3351 = vpack.c.b16 %v2472, %v2469
    %v3352 = vpack.c.b16 %v2473, %v2470
    %v3353 = vpack.c.b16 %v2474, %v2471
    %v3354 = vpack.c.b16 %v2478, %v2475
    %v3355 = vpack.c.b16 %v2479, %v2476
    %v3356 = vpack.c.b16 %v2480, %v2477
    %v3357 = vpack.c.b16 %v2484, %v2481
    %v3358 = vpack.c.b16 %v2485, %v2482
    %v3359 = vpack.c.b16 %v2486, %v2483
    %v3360 = vpack.c.b16 %v2490, %v2487
    %v3361 = vpack.c.b16 %v2491, %v2488
    %v3362 = vpack.c.b16 %v2492, %v2489
    %v3363 = vpack.c.b16 %v2496, %v2493
    %v3364 = vpack.c.b16 %v2497, %v2494
    %v3365 = vpack.c.b16 %v2498, %v2495
    %v3366 = vpack.c.b16 %v2502, %v2499
    %v3367 = vpack.c.b16 %v2503, %v2500
    %v3368 = vpack.c.b16 %v2504, %v2501
    %v3369 = vpack.c.b16 %v2508, %v2505
    %v3370 = vpack.c.b16 %v2509, %v2506
    %v3371 = vpack.c.b16 %v2510, %v2507
    %v3372 = vpack.c.b16 %v2514, %v2511
    %v3373 = vpack.c.b16 %v2515, %v2512
    %v3374 = vpack.c.b16 %v2516, %v2513
    %v3375 = vpack.c.b16 %v2520, %v2517
    %v3376 = vpack.c.b16 %v2521, %v2518
    %v3377 = vpack.c.b16 %v2522, %v2519
    %v3378 = vpack.c.b16 %v2526, %v2523
    %v3379 = vpack.c.b16 %v2527, %v2524
    %v3380 = vpack.c.b16 %v2528, %v2525
    %v3381 = vpack.c.b16 %v2532, %v2529
    %v3382 = vpack.c.b16 %v2533, %v2530
    %v3383 = vpack.c.b16 %v2534, %v2531
    %v3384 = vpack.c.b16 %v2538, %v2535
    %v3385 = vpack.c.b16 %v2539, %v2536
    %v3386 = vpack.c.b16 %v2540, %v2537
    %v3387 = vpack.c.b16 %v2544, %v2541
    %v3388 = vpack.c.b16 %v2545, %v2542
    %v3389 = vpack.c.b16 %v2546, %v2543
    %v3390 = vpack.c.b16 %v2550, %v2547
    %v3391 = vpack.c.b16 %v2551, %v2548
    %v3392 = vpack.c.b16 %v2552, %v2549
    %v3393 = vpack.c.b16 %v2556, %v2553
    %v3394 = vpack.c.b16 %v2557, %v2554
    %v3395 = vpack.c.b16 %v2558, %v2555
    %v3396 = vpack.c.b16 %v2562, %v2559
    %v3397 = vpack.c.b16 %v2563, %v2560
    %v3398 = vpack.c.b16 %v2564, %v2561
    %v3399 = vpack.c.b16 %v2568, %v2565
    %v3400 = vpack.c.b16 %v2569, %v2566
    %v3401 = vpack.c.b16 %v2570, %v2567
    %v3402 = vpack.c.b16 %v2574, %v2571
    %v3403 = vpack.c.b16 %v2575, %v2572
    %v3404 = vpack.c.b16 %v2576, %v2573
    %v3405 = vpack.c.b16 %v2580, %v2577
    %v3406 = vpack.c.b16 %v2581, %v2578
    %v3407 = vpack.c.b16 %v2582, %v2579
    %v3408 = vpack.c.b16 %v2586, %v2583
    %v3409 = vpack.c.b16 %v2587, %v2584
    %v3410 = vpack.c.b16 %v2588, %v2585
    %v3411 = vpack.c.b16 %v2592, %v2589
    %v3412 = vpack.c.b16 %v2593, %v2590
    %v3413 = vpack.c.b16 %v2594, %v2591
    %v3414 = vpack.c.b16 %v2598, %v2595
    %v3415 = vpack.c.b16 %v2599, %v2596
    %v3416 = vpack.c.b16 %v2600, %v2597
    %v3417 = vpack.c.b16 %v2604, %v2601
    %v3418 = vpack.c.b16 %v2605, %v2602
    %v3419 = vpack.c.b16 %v2606, %v2603
    %v3420 = vpack.c.b16 %v2610, %v2607
    %v3421 = vpack.c.b16 %v2611, %v2608
    %v3422 = vpack.c.b16 %v2612, %v2609
    %v3423 = vpack.c.b16 %v2616, %v2613
    %v3424 = vpack.c.b16 %v2617, %v2614
    %v3425 = vpack.c.b16 %v2618, %v2615
    %v3426 = vpack.c.b16 %v2622, %v2619
    %v3427 = vpack.c.b16 %v2623, %v2620
    %v3428 = vpack.c.b16 %v2624, %v2621
    %v3429 = vpack.c.b16 %v2628, %v2625
    %v3430 = vpack.c.b16 %v2629, %v2626
    %v3431 = vpack.c.b16 %v2630, %v2627
    %v3432 = vpack.c.b16 %v2634, %v2631
    %v3433 = vpack.c.b16 %v2635, %v2632
    %v3434 = vpack.c.b16 %v2636, %v2633
    %v3435 = vpack.c.b16 %v2640, %v2637
    %v3436 = vpack.c.b16 %v2641, %v2638
    %v3437 = vpack.c.b16 %v2642, %v2639
    %v3438 = vpack.c.b16 %v2646, %v2643
    %v3439 = vpack.c.b16 %v2647, %v2644
    %v3440 = vpack.c.b16 %v2648, %v2645
    %v3441 = vpack.c.b16 %v2652, %v2649
    %v3442 = vpack.c.b16 %v2653, %v2650
    %v3443 = vpack.c.b16 %v2654, %v2651
    %v3444 = vpack.c.b16 %v2658, %v2655
    %v3445 = vpack.c.b16 %v2659, %v2656
    %v3446 = vpack.c.b16 %v2660, %v2657
    %v3447 = vpack.c.b16 %v2664, %v2661
    %v3448 = vpack.c.b16 %v2665, %v2662
    %v3449 = vpack.c.b16 %v2666, %v2663
    %v3450 = vpack.c.b16 %v2670, %v2667
    %v3451 = vpack.c.b16 %v2671, %v2668
    %v3452 = vpack.c.b16 %v2672, %v2669
    %v3453 = vpack.c.b16 %v2676, %v2673
    %v3454 = vpack.c.b16 %v2677, %v2674
    %v3455 = vpack.c.b16 %v2678, %v2675
    %v3456 = vpack.c.b16 %v2682, %v2679
    %v3457 = vpack.c.b16 %v2683, %v2680
    %v3458 = vpack.c.b16 %v2684, %v2681
    %v3459 = vpack.c.b16 %v2688, %v2685
    %v3460 = vpack.c.b16 %v2689, %v2686
    %v3461 = vpack.c.b16 %v2690, %v2687
    %v3462 = vpack.c.b16 %v2694, %v2691
    %v3463 = vpack.c.b16 %v2695, %v2692
    %v3464 = vpack.c.b16 %v2696, %v2693
    %v3465 = vpack.c.b16 %v2700, %v2697
    %v3466 = vpack.c.b16 %v2701, %v2698
    %v3467 = vpack.c.b16 %v2702, %v2699
    %v3468 = vpack.c.b16 %v2706, %v2703
    %v3469 = vpack.c.b16 %v2707, %v2704
    %v3470 = vpack.c.b16 %v2708, %v2705
    %v3471 = vpack.c.b16 %v2712, %v2709
    %v3472 = vpack.c.b16 %v2713, %v2710
    %v3473 = vpack.c.b16 %v2714, %v2711
    %v3474 = vpack.c.b16 %v2718, %v2715
    %v3475 = vpack.c.b16 %v2719, %v2716
    %v3476 = vpack.c.b16 %v2720, %v2717
    %v3477 = vpack.c.b16 %v2724, %v2721
    %v3478 = vpack.c.b16 %v2725, %v2722
    %v3479 = vpack.c.b16 %v2726, %v2723
    %v3480 = vpack.c.b16 %v2730, %v2727
    %v3481 = vpack.c.b16 %v2731, %v2728
    %v3482 = vpack.c.b16 %v2732, %v2729
    %v3483 = vpack.c.b16 %v2736, %v2733
    %v3484 = vpack.c.b16 %v2737, %v2734
    %v3485 = vpack.c.b16 %v2738, %v2735
    %v3486 = vpack.c.b16 %v2742, %v2739
    %v3487 = vpack.c.b16 %v2743, %v2740
    %v3488 = vpack.c.b16 %v2744, %v2741
    %v3489 = vpack.c.b16 %v2748, %v2745
    %v3490 = vpack.c.b16 %v2749, %v2746
    %v3491 = vpack.c.b16 %v2750, %v2747
    %v3492 = vpack.c.b16 %v2754, %v2751
    %v3493 = vpack.c.b16 %v2755, %v2752
    %v3494 = vpack.c.b16 %v2756, %v2753
    %v3495 = vpack.c.b16 %v2760, %v2757
    %v3496 = vpack.c.b16 %v2761, %v2758
    %v3497 = vpack.c.b16 %v2762, %v2759
    %v3498 = vpack.c.b16 %v2766, %v2763
    %v3499 = vpack.c.b16 %v2767, %v2764
    %v3500 = vpack.c.b16 %v2768, %v2765
    %v3501 = vpack.c.b16 %v2772, %v2769
    %v3502 = vpack.c.b16 %v2773, %v2770
    %v3503 = vpack.c.b16 %v2774, %v2771
    %v3504 = vpack.c.b16 %v2778, %v2775
    %v3505 = vpack.c.b16 %v2779, %v2776
    %v3506 = vpack.c.b16 %v2780, %v2777
    %v3507 = vpack.c.b16 %v2784, %v2781
    %v3508 = vpack.c.b16 %v2785, %v2782
    %v3509 = vpack.c.b16 %v2786, %v2783
    %v3510 = vpack.c.b16 %v2790, %v2787
    %v3511 = vpack.c.b16 %v2791, %v2788
    %v3512 = vpack.c.b16 %v2792, %v2789
    %v3513 = vpack.c.b16 %v2796, %v2793
    %v3514 = vpack.c.b16 %v2797, %v2794
    %v3515 = vpack.c.b16 %v2798, %v2795
    %v3516 = vpack.c.b16 %v2802, %v2799
    %v3517 = vpack.c.b16 %v2803, %v2800
    %v3518 = vpack.c.b16 %v2804, %v2801
    %v3519 = vpack.c.b16 %v2808, %v2805
    %v3520 = vpack.c.b16 %v2809, %v2806
    %v3521 = vpack.c.b16 %v2810, %v2807
    %v3522 = vpack.c.b16 %v2814, %v2811
    %v3523 = vpack.c.b16 %v2815, %v2812
    %v3524 = vpack.c.b16 %v2816, %v2813
    %v3525 = vpack.c.b16 %v2820, %v2817
    %v3526 = vpack.c.b16 %v2821, %v2818
    %v3527 = vpack.c.b16 %v2822, %v2819
    %v3528 = vpack.c.b16 %v2826, %v2823
    %v3529 = vpack.c.b16 %v2827, %v2824
    %v3530 = vpack.c.b16 %v2828, %v2825
    %v3531 = vpack.c.b16 %v2832, %v2829
    %v3532 = vpack.c.b16 %v2833, %v2830
    %v3533 = vpack.c.b16 %v2834, %v2831
    %v3534 = vpack.c.b16 %v2838, %v2835
    %v3535 = vpack.c.b16 %v2839, %v2836
    %v3536 = vpack.c.b16 %v2840, %v2837
    %v3537 = vpack.c.b16 %v2844, %v2841
    %v3538 = vpack.c.b16 %v2845, %v2842
    %v3539 = vpack.c.b16 %v2846, %v2843
    %v3540 = vpack.c.b16 %v2850, %v2847
    %v3541 = vpack.c.b16 %v2851, %v2848
    %v3542 = vpack.c.b16 %v2852, %v2849
    %v3543 = vpack.c.b16 %v2856, %v2853
    %v3544 = vpack.c.b16 %v2857, %v2854
    %v3545 = vpack.c.b16 %v2858, %v2855
    %v3546 = vpack.c.b16 %v2862, %v2859
    %v3547 = vpack.c.b16 %v2863, %v2860
    %v3548 = vpack.c.b16 %v2864, %v2861
    %v3549 = vpack.c.b16 %v2868, %v2865
    %v3550 = vpack.c.b16 %v2869, %v2866
    %v3551 = vpack.c.b16 %v2870, %v2867
    %v3552 = vpack.c.b16 %v2874, %v2871
    %v3553 = vpack.c.b16 %v2875, %v2872
    %v3554 = vpack.c.b16 %v2876, %v2873
    %v3555 = vpack.c.b16 %v2880, %v2877
    %v3556 = vpack.c.b16 %v2881, %v2878
    %v3557 = vpack.c.b16 %v2882, %v2879
    %v3558 = vpack.c.b16 %v2886, %v2883
    %v3559 = vpack.c.b16 %v2887, %v2884
    %v3560 = vpack.c.b16 %v2888, %v2885
    %v3561 = vpack.c.b16 %v2892, %v2889
    %v3562 = vpack.c.b16 %v2893, %v2890
    %v3563 = vpack.c.b16 %v2894, %v2891
    %v3564 = vpack.c.b16 %v2898, %v2895
    %v3565 = vpack.c.b16 %v2899, %v2896
    %v3566 = vpack.c.b16 %v2900, %v2897
    %v3567 = vpack.c.b16 %v2904, %v2901
    %v3568 = vpack.c.b16 %v2905, %v2902
    %v3569 = vpack.c.b16 %v2906, %v2903
    %v3570 = vpack.c.b16 %v2910, %v2907
    %v3571 = vpack.c.b16 %v2911, %v2908
    %v3572 = vpack.c.b16 %v2912, %v2909
    %v3573 = vpack.c.b16 %v2916, %v2913
    %v3574 = vpack.c.b16 %v2917, %v2914
    %v3575 = vpack.c.b16 %v2918, %v2915
    %v3576 = vpack.c.b16 %v2922, %v2919
    %v3577 = vpack.c.b16 %v2923, %v2920
    %v3578 = vpack.c.b16 %v2924, %v2921
    %v3579 = vpack.c.b16 %v2928, %v2925
    %v3580 = vpack.c.b16 %v2929, %v2926
    %v3581 = vpack.c.b16 %v2930, %v2927
    %v3582 = vpack.c.b16 %v2934, %v2931
    %v3583 = vpack.c.b16 %v2935, %v2932
    %v3584 = vpack.c.b16 %v2936, %v2933
    %v3585 = vpack.c.b16 %v2940, %v2937
    %v3586 = vpack.c.b16 %v2941, %v2938
    %v3587 = vpack.c.b16 %v2942, %v2939
    %v3588 = vpack.c.b16 %v2946, %v2943
    %v3589 = vpack.c.b16 %v2947, %v2944
    %v3590 = vpack.c.b16 %v2948, %v2945
    %v3591 = vpack.c.b16 %v2952, %v2949
    %v3592 = vpack.c.b16 %v2953, %v2950
    %v3593 = vpack.c.b16 %v2954, %v2951
    %v3594 = vpack.c.b16 %v2958, %v2955
    %v3595 = vpack.c.b16 %v2959, %v2956
    %v3596 = vpack.c.b16 %v2960, %v2957
    %v3597 = vpack.c.b16 %v2964, %v2961
    %v3598 = vpack.c.b16 %v2965, %v2962
    %v3599 = vpack.c.b16 %v2966, %v2963
    %v3600 = vpack.c.b16 %v2970, %v2967
    %v3601 = vpack.c.b16 %v2971, %v2968
    %v3602 = vpack.c.b16 %v2972, %v2969
    %v3603 = vpack.c.b16 %v2976, %v2973
    %v3604 = vpack.c.b16 %v2977, %v2974
    %v3605 = vpack.c.b16 %v2978, %v2975
    %v3606 = vpack.c.b16 %v2982, %v2979
    %v3607 = vpack.c.b16 %v2983, %v2980
    %v3608 = vpack.c.b16 %v2984, %v2981
    %v3609 = vpack.c.b16 %v2988, %v2985
    %v3610 = vpack.c.b16 %v2989, %v2986
    %v3611 = vpack.c.b16 %v2990, %v2987
    %v3612 = vpack.c.b16 %v2994, %v2991
    %v3613 = vpack.c.b16 %v2995, %v2992
    %v3614 = vpack.c.b16 %v2996, %v2993
    %v3615 = vpack.c.b16 %v3000, %v2997
    %v3616 = vpack.c.b16 %v3001, %v2998
    %v3617 = vpack.c.b16 %v3002, %v2999
    %v3618 = vpack.c.b16 %v3006, %v3003
    %v3619 = vpack.c.b16 %v3007, %v3004
    %v3620 = vpack.c.b16 %v3008, %v3005
    %v3621 = vpack.c.b16 %v3012, %v3009
    %v3622 = vpack.c.b16 %v3013, %v3010
    %v3623 = vpack.c.b16 %v3014, %v3011
    %v3624 = vpack.c.b16 %v3018, %v3015
    %v3625 = vpack.c.b16 %v3019, %v3016
    %v3626 = vpack.c.b16 %v3020, %v3017
    %v3627 = vpack.c.b16 %v3024, %v3021
    %v3628 = vpack.c.b16 %v3025, %v3022
    %v3629 = vpack.c.b16 %v3026, %v3023
    %v3630 = vpack.c.b16 %v3030, %v3027
    %v3631 = vpack.c.b16 %v3031, %v3028
    %v3632 = vpack.c.b16 %v3032, %v3029
    %4233 = vmatprep.subr.bf16.mxu0 %v3034
    %4234 = vmatpush1.bf16.msra.mxu0 %v3033
    %4235 = vmatprep.subr.bf16.mxu0 %v3037
    %4236 = vmatpush1.bf16.msra.mxu0 %v3036
    %4237 = vmatprep.subr.bf16.mxu0 %v3040
    %4238 = vmatpush1.bf16.msra.mxu0 %v3039
    %4239 = vmatprep.subr.bf16.mxu0 %v3043
    %4240 = vmatpush1.bf16.msra.mxu0 %v3042
    %4241 = vmatprep.subr.bf16.mxu0 %v3046
    %4242 = vmatpush1.bf16.msra.mxu0 %v3045
    %4243 = vmatprep.subr.bf16.mxu0 %v3049
    %4244 = vmatpush1.bf16.msra.mxu0 %v3048
    %4245 = vmatprep.subr.bf16.mxu0 %v3052
    %4246 = vmatpush1.bf16.msra.mxu0 %v3051
    %4247 = vmatprep.subr.bf16.mxu0 %v3055
    %4248 = vmatpush1.bf16.msra.mxu0 %v3054
    %4249 = vmatprep.subr.bf16.mxu0 %v3058
    %4250 = vmatpush1.bf16.msra.mxu0 %v3057
    %4251 = vmatprep.subr.bf16.mxu0 %v3061
    %4252 = vmatpush1.bf16.msra.mxu0 %v3060
    %4253 = vmatprep.subr.bf16.mxu0 %v3064
    %4254 = vmatpush1.bf16.msra.mxu0 %v3063
    %4255 = vmatprep.subr.bf16.mxu0 %v3067
    %4256 = vmatpush1.bf16.msra.mxu0 %v3066
    %4257 = vmatprep.subr.bf16.mxu0 %v3070
    %4258 = vmatpush1.bf16.msra.mxu0 %v3069
    %4259 = vmatprep.subr.bf16.mxu0 %v3073
    %4260 = vmatpush1.bf16.msra.mxu0 %v3072
    %4261 = vmatprep.subr.bf16.mxu0 %v3076
    %4262 = vmatpush1.bf16.msra.mxu0 %v3075
    %4263 = vmatprep.subr.bf16.mxu0 %v3079
    %4264 = vmatpush1.bf16.msra.mxu0 %v3078
    %4265 = vmatprep.mubr.bf16.mxu0 %v884
    %4266 = vmatmul.mubr.bf16.gmra.mrb[0].mxu0 %v870
    %v4267 = vpop.f32.mrb[0].mxu0
    %v4268 = vadd.f32 %v831, %v4267
    %v4269 = vpop.f32.mrb[0].mxu0
    %v4270 = vadd.f32 %v835, %v4269
    %v4271 = vpop.f32.mrb[0].mxu0
    %v4272 = vpop.f32.mrb[0].mxu0
    %4273 = vdwg.mxu0
    %4274 = vmatprep.subr.bf16.mxu0 %v3082
    %4275 = vmatpush1.bf16.msra.mxu0 %v3081
    %4276 = vmatprep.subr.bf16.mxu0 %v3085
    %4277 = vmatpush1.bf16.msra.mxu0 %v3084
    %4278 = vmatprep.subr.bf16.mxu0 %v3088
    %4279 = vmatpush1.bf16.msra.mxu0 %v3087
    %4280 = vmatprep.subr.bf16.mxu0 %v3091
    %4281 = vmatpush1.bf16.msra.mxu0 %v3090
    %4282 = vmatprep.subr.bf16.mxu0 %v3094
    %4283 = vmatpush1.bf16.msra.mxu0 %v3093
    %4284 = vmatprep.subr.bf16.mxu0 %v3097
    %4285 = vmatpush1.bf16.msra.mxu0 %v3096
    %4286 = vmatprep.subr.bf16.mxu0 %v3100
    %4287 = vmatpush1.bf16.msra.mxu0 %v3099
    %4288 = vmatprep.subr.bf16.mxu0 %v3103
    %4289 = vmatpush1.bf16.msra.mxu0 %v3102
    %4290 = vmatprep.subr.bf16.mxu0 %v3106
    %4291 = vmatpush1.bf16.msra.mxu0 %v3105
    %4292 = vmatprep.subr.bf16.mxu0 %v3109
    %4293 = vmatpush1.bf16.msra.mxu0 %v3108
    %4294 = vmatprep.subr.bf16.mxu0 %v3112
    %4295 = vmatpush1.bf16.msra.mxu0 %v3111
    %4296 = vmatprep.subr.bf16.mxu0 %v3115
    %4297 = vmatpush1.bf16.msra.mxu0 %v3114
    %4298 = vmatprep.subr.bf16.mxu0 %v3118
    %4299 = vmatpush1.bf16.msra.mxu0 %v3117
    %4300 = vmatprep.subr.bf16.mxu0 %v3121
    %4301 = vmatpush1.bf16.msra.mxu0 %v3120
    %4302 = vmatprep.subr.bf16.mxu0 %v3124
    %4303 = vmatpush1.bf16.msra.mxu0 %v3123
    %4304 = vmatprep.subr.bf16.mxu0 %v3127
    %4305 = vmatpush1.bf16.msra.mxu0 %v3126
    %4306 = vmatprep.mubr.bf16.mxu0 %v894
    %4307 = vmatmul.mubr.bf16.gmra.mrb[0].mxu0 %v892
    %v4308 = vpop.f32.mrb[0].mxu0
    %v4309 = vadd.f32 %v4268, %v4308
    %v4310 = vpop.f32.mrb[0].mxu0
    %v4311 = vadd.f32 %v4270, %v4310
    %v4312 = vpop.f32.mrb[0].mxu0
    %v4313 = vpop.f32.mrb[0].mxu0
    %4314 = vdwg.mxu0
    %4315 = vmatprep.subr.bf16.mxu0 %v3130
    %4316 = vmatpush1.bf16.msra.mxu0 %v3129
    %4317 = vmatprep.subr.bf16.mxu0 %v3133
    %4318 = vmatpush1.bf16.msra.mxu0 %v3132
    %4319 = vmatprep.subr.bf16.mxu0 %v3136
    %4320 = vmatpush1.bf16.msra.mxu0 %v3135
    %4321 = vmatprep.subr.bf16.mxu0 %v3139
    %4322 = vmatpush1.bf16.msra.mxu0 %v3138
    %4323 = vmatprep.subr.bf16.mxu0 %v3142
    %4324 = vmatpush1.bf16.msra.mxu0 %v3141
    %4325 = vmatprep.subr.bf16.mxu0 %v3145
    %4326 = vmatpush1.bf16.msra.mxu0 %v3144
    %4327 = vmatprep.subr.bf16.mxu0 %v3148
    %4328 = vmatpush1.bf16.msra.mxu0 %v3147
    %4329 = vmatprep.subr.bf16.mxu0 %v3151
    %4330 = vmatpush1.bf16.msra.mxu0 %v3150
    %4331 = vmatprep.subr.bf16.mxu0 %v3154
    %4332 = vmatpush1.bf16.msra.mxu0 %v3153
    %4333 = vmatprep.subr.bf16.mxu0 %v3157
    %4334 = vmatpush1.bf16.msra.mxu0 %v3156
    %4335 = vmatprep.subr.bf16.mxu0 %v3160
    %4336 = vmatpush1.bf16.msra.mxu0 %v3159
    %4337 = vmatprep.subr.bf16.mxu0 %v3163
    %4338 = vmatpush1.bf16.msra.mxu0 %v3162
    %4339 = vmatprep.subr.bf16.mxu0 %v3166
    %4340 = vmatpush1.bf16.msra.mxu0 %v3165
    %4341 = vmatprep.subr.bf16.mxu0 %v3169
    %4342 = vmatpush1.bf16.msra.mxu0 %v3168
    %4343 = vmatprep.subr.bf16.mxu0 %v3172
    %4344 = vmatpush1.bf16.msra.mxu0 %v3171
    %4345 = vmatprep.subr.bf16.mxu0 %v3175
    %4346 = vmatpush1.bf16.msra.mxu0 %v3174
    %4347 = vmatprep.mubr.bf16.mxu0 %v891
    %4348 = vmatmul.mubr.bf16.gmra.mrb[0].mxu0 %v877
    %v4349 = vpop.f32.mrb[0].mxu0
    %v4350 = vadd.f32 %v4309, %v4349
    %v4351 = vpop.f32.mrb[0].mxu0
    %v4352 = vadd.f32 %v4311, %v4351
    %v4353 = vpop.f32.mrb[0].mxu0
    %v4354 = vpop.f32.mrb[0].mxu0
    %4355 = vdwg.mxu0
    %4356 = vmatprep.subr.bf16.mxu0 %v3178
    %4357 = vmatpush1.bf16.msra.mxu0 %v3177
    %4358 = vmatprep.subr.bf16.mxu0 %v3181
    %4359 = vmatpush1.bf16.msra.mxu0 %v3180
    %4360 = vmatprep.subr.bf16.mxu0 %v3184
    %4361 = vmatpush1.bf16.msra.mxu0 %v3183
    %4362 = vmatprep.subr.bf16.mxu0 %v3187
    %4363 = vmatpush1.bf16.msra.mxu0 %v3186
    %4364 = vmatprep.subr.bf16.mxu0 %v3190
    %4365 = vmatpush1.bf16.msra.mxu0 %v3189
    %4366 = vmatprep.subr.bf16.mxu0 %v3193
    %4367 = vmatpush1.bf16.msra.mxu0 %v3192
    %4368 = vmatprep.subr.bf16.mxu0 %v3196
    %4369 = vmatpush1.bf16.msra.mxu0 %v3195
    %4370 = vmatprep.subr.bf16.mxu0 %v3199
    %4371 = vmatpush1.bf16.msra.mxu0 %v3198
    %4372 = vmatprep.subr.bf16.mxu0 %v3202
    %4373 = vmatpush1.bf16.msra.mxu0 %v3201
    %4374 = vmatprep.subr.bf16.mxu0 %v3205
    %4375 = vmatpush1.bf16.msra.mxu0 %v3204
    %4376 = vmatprep.subr.bf16.mxu0 %v3208
    %4377 = vmatpush1.bf16.msra.mxu0 %v3207
    %4378 = vmatprep.subr.bf16.mxu0 %v3211
    %4379 = vmatpush1.bf16.msra.mxu0 %v3210
    %4380 = vmatprep.subr.bf16.mxu0 %v3214
    %4381 = vmatpush1.bf16.msra.mxu0 %v3213
    %4382 = vmatprep.subr.bf16.mxu0 %v3217
    %4383 = vmatpush1.bf16.msra.mxu0 %v3216
    %4384 = vmatprep.subr.bf16.mxu0 %v3220
    %4385 = vmatpush1.bf16.msra.mxu0 %v3219
    %4386 = vmatprep.subr.bf16.mxu0 %v3223
    %4387 = vmatpush1.bf16.msra.mxu0 %v3222
    %4388 = vmatprep.mubr.bf16.mxu0 %v895
    %4389 = vmatmul.mubr.bf16.gmra.mrb[0].mxu0 %v893
    %v4390 = vpop.f32.mrb[0].mxu0
    %v4391 = vadd.f32 %v4350, %v4390
    %v4392 = vpop.f32.mrb[0].mxu0
    %v4393 = vadd.f32 %v4352, %v4392
    %v4394 = vpop.f32.mrb[0].mxu0
    %v4395 = vpop.f32.mrb[0].mxu0
    %4396 = vdwg.mxu0
    %4397 = vmatprep.subr.bf16.mxu0 %v3226
    %4398 = vmatpush1.bf16.msra.mxu0 %v3225
    %4399 = vmatprep.subr.bf16.mxu0 %v3229
    %4400 = vmatpush1.bf16.msra.mxu0 %v3228
    %4401 = vmatprep.subr.bf16.mxu0 %v3232
    %4402 = vmatpush1.bf16.msra.mxu0 %v3231
    %4403 = vmatprep.subr.bf16.mxu0 %v3235
    %4404 = vmatpush1.bf16.msra.mxu0 %v3234
    %4405 = vmatprep.subr.bf16.mxu0 %v3238
    %4406 = vmatpush1.bf16.msra.mxu0 %v3237
    %4407 = vmatprep.subr.bf16.mxu0 %v3241
    %4408 = vmatpush1.bf16.msra.mxu0 %v3240
    %4409 = vmatprep.subr.bf16.mxu0 %v3244
    %4410 = vmatpush1.bf16.msra.mxu0 %v3243
    %4411 = vmatprep.subr.bf16.mxu0 %v3247
    %4412 = vmatpush1.bf16.msra.mxu0 %v3246
    %4413 = vmatprep.subr.bf16.mxu0 %v3250
    %4414 = vmatpush1.bf16.msra.mxu0 %v3249
    %4415 = vmatprep.subr.bf16.mxu0 %v3253
    %4416 = vmatpush1.bf16.msra.mxu0 %v3252
    %4417 = vmatprep.subr.bf16.mxu0 %v3256
    %4418 = vmatpush1.bf16.msra.mxu0 %v3255
    %4419 = vmatprep.subr.bf16.mxu0 %v3259
    %4420 = vmatpush1.bf16.msra.mxu0 %v3258
    %4421 = vmatprep.subr.bf16.mxu0 %v3262
    %4422 = vmatpush1.bf16.msra.mxu0 %v3261
    %4423 = vmatprep.subr.bf16.mxu0 %v3265
    %4424 = vmatpush1.bf16.msra.mxu0 %v3264
    %4425 = vmatprep.subr.bf16.mxu0 %v3268
    %4426 = vmatpush1.bf16.msra.mxu0 %v3267
    %4427 = vmatprep.subr.bf16.mxu0 %v3271
    %4428 = vmatpush1.bf16.msra.mxu0 %v3270
    %4429 = vmatprep.mubr.bf16.mxu0 %v933
    %4430 = vmatmul.mubr.bf16.gmra.mrb[0].mxu0 %v919
    %v4431 = vpop.f32.mrb[0].mxu0
    %v4432 = vadd.f32 %v4391, %v4431
    %v4433 = vpop.f32.mrb[0].mxu0
    %v4434 = vadd.f32 %v4393, %v4433
    %v4435 = vpop.f32.mrb[0].mxu0
    %v4436 = vpop.f32.mrb[0].mxu0
    %4437 = vdwg.mxu0
    %4438 = vmatprep.subr.bf16.mxu0 %v3274
    %4439 = vmatpush1.bf16.msra.mxu0 %v3273
    %4440 = vmatprep.subr.bf16.mxu0 %v3277
    %4441 = vmatpush1.bf16.msra.mxu0 %v3276
    %4442 = vmatprep.subr.bf16.mxu0 %v3280
    %4443 = vmatpush1.bf16.msra.mxu0 %v3279
    %4444 = vmatprep.subr.bf16.mxu0 %v3283
    %4445 = vmatpush1.bf16.msra.mxu0 %v3282
    %4446 = vmatprep.subr.bf16.mxu0 %v3286
    %4447 = vmatpush1.bf16.msra.mxu0 %v3285
    %4448 = vmatprep.subr.bf16.mxu0 %v3289
    %4449 = vmatpush1.bf16.msra.mxu0 %v3288
    %4450 = vmatprep.subr.bf16.mxu0 %v3292
    %4451 = vmatpush1.bf16.msra.mxu0 %v3291
    %4452 = vmatprep.subr.bf16.mxu0 %v3295
    %4453 = vmatpush1.bf16.msra.mxu0 %v3294
    %4454 = vmatprep.subr.bf16.mxu0 %v3298
    %4455 = vmatpush1.bf16.msra.mxu0 %v3297
    %4456 = vmatprep.subr.bf16.mxu0 %v3301
    %4457 = vmatpush1.bf16.msra.mxu0 %v3300
    %4458 = vmatprep.subr.bf16.mxu0 %v3304
    %4459 = vmatpush1.bf16.msra.mxu0 %v3303
    %4460 = vmatprep.subr.bf16.mxu0 %v3307
    %4461 = vmatpush1.bf16.msra.mxu0 %v3306
    %4462 = vmatprep.subr.bf16.mxu0 %v3310
    %4463 = vmatpush1.bf16.msra.mxu0 %v3309
    %4464 = vmatprep.subr.bf16.mxu0 %v3313
    %4465 = vmatpush1.bf16.msra.mxu0 %v3312
    %4466 = vmatprep.subr.bf16.mxu0 %v3316
    %4467 = vmatpush1.bf16.msra.mxu0 %v3315
    %4468 = vmatprep.subr.bf16.mxu0 %v3319
    %4469 = vmatpush1.bf16.msra.mxu0 %v3318
    %4470 = vmatprep.mubr.bf16.mxu0 %v943
    %4471 = vmatmul.mubr.bf16.gmra.mrb[0].mxu0 %v941
    %v4472 = vpop.f32.mrb[0].mxu0
    %v4473 = vadd.f32 %v4432, %v4472
    %v4474 = vpop.f32.mrb[0].mxu0
    %v4475 = vadd.f32 %v4434, %v4474
    %v4476 = vpop.f32.mrb[0].mxu0
    %v4477 = vpop.f32.mrb[0].mxu0
    %4478 = vdwg.mxu0
    %4479 = vmatprep.subr.bf16.mxu0 %v3322
    %4480 = vmatpush1.bf16.msra.mxu0 %v3321
    %4481 = vmatprep.subr.bf16.mxu0 %v3325
    %4482 = vmatpush1.bf16.msra.mxu0 %v3324
    %4483 = vmatprep.subr.bf16.mxu0 %v3328
    %4484 = vmatpush1.bf16.msra.mxu0 %v3327
    %4485 = vmatprep.subr.bf16.mxu0 %v3331
    %4486 = vmatpush1.bf16.msra.mxu0 %v3330
    %4487 = vmatprep.subr.bf16.mxu0 %v3334
    %4488 = vmatpush1.bf16.msra.mxu0 %v3333
    %4489 = vmatprep.subr.bf16.mxu0 %v3337
    %4490 = vmatpush1.bf16.msra.mxu0 %v3336
    %4491 = vmatprep.subr.bf16.mxu0 %v3340
    %4492 = vmatpush1.bf16.msra.mxu0 %v3339
    %4493 = vmatprep.subr.bf16.mxu0 %v3343
    %4494 = vmatpush1.bf16.msra.mxu0 %v3342
    %4495 = vmatprep.subr.bf16.mxu0 %v3346
    %4496 = vmatpush1.bf16.msra.mxu0 %v3345
    %4497 = vmatprep.subr.bf16.mxu0 %v3349
    %4498 = vmatpush1.bf16.msra.mxu0 %v3348
    %4499 = vmatprep.subr.bf16.mxu0 %v3352
    %4500 = vmatpush1.bf16.msra.mxu0 %v3351
    %4501 = vmatprep.subr.bf16.mxu0 %v3355
    %4502 = vmatpush1.bf16.msra.mxu0 %v3354
    %4503 = vmatprep.subr.bf16.mxu0 %v3358
    %4504 = vmatpush1.bf16.msra.mxu0 %v3357
    %4505 = vmatprep.subr.bf16.mxu0 %v3361
    %4506 = vmatpush1.bf16.msra.mxu0 %v3360
    %4507 = vmatprep.subr.bf16.mxu0 %v3364
    %4508 = vmatpush1.bf16.msra.mxu0 %v3363
    %4509 = vmatprep.subr.bf16.mxu0 %v3367
    %4510 = vmatpush1.bf16.msra.mxu0 %v3366
    %4511 = vmatprep.mubr.bf16.mxu0 %v940
    %4512 = vmatmul.mubr.bf16.gmra.mrb[0].mxu0 %v926
    %v4513 = vpop.f32.mrb[0].mxu0
    %v4514 = vadd.f32 %v4473, %v4513
    %v4515 = vpop.f32.mrb[0].mxu0
    %v4516 = vadd.f32 %v4475, %v4515
    %v4517 = vpop.f32.mrb[0].mxu0
    %v4518 = vpop.f32.mrb[0].mxu0
    %4519 = vdwg.mxu0
    %4520 = vmatprep.subr.bf16.mxu0 %v3370
    %4521 = vmatpush1.bf16.msra.mxu0 %v3369
    %4522 = vmatprep.subr.bf16.mxu0 %v3373
    %4523 = vmatpush1.bf16.msra.mxu0 %v3372
    %4524 = vmatprep.subr.bf16.mxu0 %v3376
    %4525 = vmatpush1.bf16.msra.mxu0 %v3375
    %4526 = vmatprep.subr.bf16.mxu0 %v3379
    %4527 = vmatpush1.bf16.msra.mxu0 %v3378
    %4528 = vmatprep.subr.bf16.mxu0 %v3382
    %4529 = vmatpush1.bf16.msra.mxu0 %v3381
    %4530 = vmatprep.subr.bf16.mxu0 %v3385
    %4531 = vmatpush1.bf16.msra.mxu0 %v3384
    %4532 = vmatprep.subr.bf16.mxu0 %v3388
    %4533 = vmatpush1.bf16.msra.mxu0 %v3387
    %4534 = vmatprep.subr.bf16.mxu0 %v3391
    %4535 = vmatpush1.bf16.msra.mxu0 %v3390
    %4536 = vmatprep.subr.bf16.mxu0 %v3394
    %4537 = vmatpush1.bf16.msra.mxu0 %v3393
    %4538 = vmatprep.subr.bf16.mxu0 %v3397
    %4539 = vmatpush1.bf16.msra.mxu0 %v3396
    %4540 = vmatprep.subr.bf16.mxu0 %v3400
    %4541 = vmatpush1.bf16.msra.mxu0 %v3399
    %4542 = vmatprep.subr.bf16.mxu0 %v3403
    %4543 = vmatpush1.bf16.msra.mxu0 %v3402
    %4544 = vmatprep.subr.bf16.mxu0 %v3406
    %4545 = vmatpush1.bf16.msra.mxu0 %v3405
    %4546 = vmatprep.subr.bf16.mxu0 %v3409
    %4547 = vmatpush1.bf16.msra.mxu0 %v3408
    %4548 = vmatprep.subr.bf16.mxu0 %v3412
    %4549 = vmatpush1.bf16.msra.mxu0 %v3411
    %4550 = vmatprep.subr.bf16.mxu0 %v3415
    %4551 = vmatpush1.bf16.msra.mxu0 %v3414
    %4552 = vmatprep.mubr.bf16.mxu0 %v944
    %4553 = vmatmul.mubr.bf16.gmra.mrb[0].mxu0 %v942
    %v4554 = vpop.f32.mrb[0].mxu0
    %v4555 = vadd.f32 %v4514, %v4554
    %v4556 = vpop.f32.mrb[0].mxu0
    %v4557 = vadd.f32 %v4516, %v4556
    %v4558 = vpop.f32.mrb[0].mxu0
    %v4559 = vpop.f32.mrb[0].mxu0
    %4560 = vdwg.mxu0
    %4561 = vmatprep.subr.bf16.mxu0 %v3418
    %4562 = vmatpush1.bf16.msra.mxu0 %v3417
    %4563 = vmatprep.subr.bf16.mxu0 %v3421
    %4564 = vmatpush1.bf16.msra.mxu0 %v3420
    %4565 = vmatprep.subr.bf16.mxu0 %v3424
    %4566 = vmatpush1.bf16.msra.mxu0 %v3423
    %4567 = vmatprep.subr.bf16.mxu0 %v3427
    %4568 = vmatpush1.bf16.msra.mxu0 %v3426
    %4569 = vmatprep.subr.bf16.mxu0 %v3430
    %4570 = vmatpush1.bf16.msra.mxu0 %v3429
    %4571 = vmatprep.subr.bf16.mxu0 %v3433
    %4572 = vmatpush1.bf16.msra.mxu0 %v3432
    %4573 = vmatprep.subr.bf16.mxu0 %v3436
    %4574 = vmatpush1.bf16.msra.mxu0 %v3435
    %4575 = vmatprep.subr.bf16.mxu0 %v3439
    %4576 = vmatpush1.bf16.msra.mxu0 %v3438
    %4577 = vmatprep.subr.bf16.mxu0 %v3442
    %4578 = vmatpush1.bf16.msra.mxu0 %v3441
    %4579 = vmatprep.subr.bf16.mxu0 %v3445
    %4580 = vmatpush1.bf16.msra.mxu0 %v3444
    %4581 = vmatprep.subr.bf16.mxu0 %v3448
    %4582 = vmatpush1.bf16.msra.mxu0 %v3447
    %4583 = vmatprep.subr.bf16.mxu0 %v3451
    %4584 = vmatpush1.bf16.msra.mxu0 %v3450
    %4585 = vmatprep.subr.bf16.mxu0 %v3454
    %4586 = vmatpush1.bf16.msra.mxu0 %v3453
    %4587 = vmatprep.subr.bf16.mxu0 %v3457
    %4588 = vmatpush1.bf16.msra.mxu0 %v3456
    %4589 = vmatprep.subr.bf16.mxu0 %v3460
    %4590 = vmatpush1.bf16.msra.mxu0 %v3459
    %4591 = vmatprep.subr.bf16.mxu0 %v3463
    %4592 = vmatpush1.bf16.msra.mxu0 %v3462
    %4593 = vmatprep.mubr.bf16.mxu0 %v982
    %4594 = vmatmul.mubr.bf16.gmra.mrb[0].mxu0 %v968
    %v4595 = vpop.f32.mrb[0].mxu0
    %v4596 = vadd.f32 %v4555, %v4595
    %v4597 = vpop.f32.mrb[0].mxu0
    %v4598 = vadd.f32 %v4557, %v4597
    %v4599 = vpop.f32.mrb[0].mxu0
    %v4600 = vpop.f32.mrb[0].mxu0
    %4601 = vdwg.mxu0
    %4602 = vmatprep.subr.bf16.mxu0 %v3466
    %4603 = vmatpush1.bf16.msra.mxu0 %v3465
    %4604 = vmatprep.subr.bf16.mxu0 %v3469
    %4605 = vmatpush1.bf16.msra.mxu0 %v3468
    %4606 = vmatprep.subr.bf16.mxu0 %v3472
    %4607 = vmatpush1.bf16.msra.mxu0 %v3471
    %4608 = vmatprep.subr.bf16.mxu0 %v3475
    %4609 = vmatpush1.bf16.msra.mxu0 %v3474
    %4610 = vmatprep.subr.bf16.mxu0 %v3478
    %4611 = vmatpush1.bf16.msra.mxu0 %v3477
    %4612 = vmatprep.subr.bf16.mxu0 %v3481
    %4613 = vmatpush1.bf16.msra.mxu0 %v3480
    %4614 = vmatprep.subr.bf16.mxu0 %v3484
    %4615 = vmatpush1.bf16.msra.mxu0 %v3483
    %4616 = vmatprep.subr.bf16.mxu0 %v3487
    %4617 = vmatpush1.bf16.msra.mxu0 %v3486
    %4618 = vmatprep.subr.bf16.mxu0 %v3490
    %4619 = vmatpush1.bf16.msra.mxu0 %v3489
    %4620 = vmatprep.subr.bf16.mxu0 %v3493
    %4621 = vmatpush1.bf16.msra.mxu0 %v3492
    %4622 = vmatprep.subr.bf16.mxu0 %v3496
    %4623 = vmatpush1.bf16.msra.mxu0 %v3495
    %4624 = vmatprep.subr.bf16.mxu0 %v3499
    %4625 = vmatpush1.bf16.msra.mxu0 %v3498
    %4626 = vmatprep.subr.bf16.mxu0 %v3502
    %4627 = vmatpush1.bf16.msra.mxu0 %v3501
    %4628 = vmatprep.subr.bf16.mxu0 %v3505
    %4629 = vmatpush1.bf16.msra.mxu0 %v3504
    %4630 = vmatprep.subr.bf16.mxu0 %v3508
    %4631 = vmatpush1.bf16.msra.mxu0 %v3507
    %4632 = vmatprep.subr.bf16.mxu0 %v3511
    %4633 = vmatpush1.bf16.msra.mxu0 %v3510
    %4634 = vmatprep.mubr.bf16.mxu0 %v992
    %4635 = vmatmul.mubr.bf16.gmra.mrb[0].mxu0 %v990
    %v4636 = vpop.f32.mrb[0].mxu0
    %v4637 = vadd.f32 %v4596, %v4636
    %v4638 = vpop.f32.mrb[0].mxu0
    %v4639 = vadd.f32 %v4598, %v4638
    %v4640 = vpop.f32.mrb[0].mxu0
    %v4641 = vpop.f32.mrb[0].mxu0
    %4642 = vdwg.mxu0
    %4643 = vmatprep.subr.bf16.mxu0 %v3514
    %4644 = vmatpush1.bf16.msra.mxu0 %v3513
    %4645 = vmatprep.subr.bf16.mxu0 %v3517
    %4646 = vmatpush1.bf16.msra.mxu0 %v3516
    %4647 = vmatprep.subr.bf16.mxu0 %v3520
    %4648 = vmatpush1.bf16.msra.mxu0 %v3519
    %4649 = vmatprep.subr.bf16.mxu0 %v3523
    %4650 = vmatpush1.bf16.msra.mxu0 %v3522
    %4651 = vmatprep.subr.bf16.mxu0 %v3526
    %4652 = vmatpush1.bf16.msra.mxu0 %v3525
    %4653 = vmatprep.subr.bf16.mxu0 %v3529
    %4654 = vmatpush1.bf16.msra.mxu0 %v3528
    %4655 = vmatprep.subr.bf16.mxu0 %v3532
    %4656 = vmatpush1.bf16.msra.mxu0 %v3531
    %4657 = vmatprep.subr.bf16.mxu0 %v3535
    %4658 = vmatpush1.bf16.msra.mxu0 %v3534
    %4659 = vmatprep.subr.bf16.mxu0 %v3538
    %4660 = vmatpush1.bf16.msra.mxu0 %v3537
    %4661 = vmatprep.subr.bf16.mxu0 %v3541
    %4662 = vmatpush1.bf16.msra.mxu0 %v3540
    %4663 = vmatprep.subr.bf16.mxu0 %v3544
    %4664 = vmatpush1.bf16.msra.mxu0 %v3543
    %4665 = vmatprep.subr.bf16.mxu0 %v3547
    %4666 = vmatpush1.bf16.msra.mxu0 %v3546
    %4667 = vmatprep.subr.bf16.mxu0 %v3550
    %4668 = vmatpush1.bf16.msra.mxu0 %v3549
    %4669 = vmatprep.subr.bf16.mxu0 %v3553
    %4670 = vmatpush1.bf16.msra.mxu0 %v3552
    %4671 = vmatprep.subr.bf16.mxu0 %v3556
    %4672 = vmatpush1.bf16.msra.mxu0 %v3555
    %4673 = vmatprep.subr.bf16.mxu0 %v3559
    %4674 = vmatpush1.bf16.msra.mxu0 %v3558
    %4675 = vmatprep.mubr.bf16.mxu0 %v989
    %4676 = vmatmul.mubr.bf16.gmra.mrb[0].mxu0 %v975
    %v4677 = vpop.f32.mrb[0].mxu0
    %v4678 = vadd.f32 %v4637, %v4677
    %v4679 = vpop.f32.mrb[0].mxu0
    %v4680 = vadd.f32 %v4639, %v4679
    %v4681 = vpop.f32.mrb[0].mxu0
    %v4682 = vpop.f32.mrb[0].mxu0
    %4683 = vdwg.mxu0
    %4684 = vmatprep.subr.bf16.mxu0 %v3562
    %4685 = vmatpush1.bf16.msra.mxu0 %v3561
    %4686 = vmatprep.subr.bf16.mxu0 %v3565
    %4687 = vmatpush1.bf16.msra.mxu0 %v3564
    %4688 = vmatprep.subr.bf16.mxu0 %v3568
    %4689 = vmatpush1.bf16.msra.mxu0 %v3567
    %4690 = vmatprep.subr.bf16.mxu0 %v3571
    %4691 = vmatpush1.bf16.msra.mxu0 %v3570
    %4692 = vmatprep.subr.bf16.mxu0 %v3574
    %4693 = vmatpush1.bf16.msra.mxu0 %v3573
    %4694 = vmatprep.subr.bf16.mxu0 %v3577
    %4695 = vmatpush1.bf16.msra.mxu0 %v3576
    %4696 = vmatprep.subr.bf16.mxu0 %v3580
    %4697 = vmatpush1.bf16.msra.mxu0 %v3579
    %4698 = vmatprep.subr.bf16.mxu0 %v3583
    %4699 = vmatpush1.bf16.msra.mxu0 %v3582
    %4700 = vmatprep.subr.bf16.mxu0 %v3586
    %4701 = vmatpush1.bf16.msra.mxu0 %v3585
    %4702 = vmatprep.subr.bf16.mxu0 %v3589
    %4703 = vmatpush1.bf16.msra.mxu0 %v3588
    %4704 = vmatprep.subr.bf16.mxu0 %v3592
    %4705 = vmatpush1.bf16.msra.mxu0 %v3591
    %4706 = vmatprep.subr.bf16.mxu0 %v3595
    %4707 = vmatpush1.bf16.msra.mxu0 %v3594
    %4708 = vmatprep.subr.bf16.mxu0 %v3598
    %4709 = vmatpush1.bf16.msra.mxu0 %v3597
    %4710 = vmatprep.subr.bf16.mxu0 %v3601
    %4711 = vmatpush1.bf16.msra.mxu0 %v3600
    %4712 = vmatprep.subr.bf16.mxu0 %v3604
    %4713 = vmatpush1.bf16.msra.mxu0 %v3603
    %4714 = vmatprep.subr.bf16.mxu0 %v3607
    %4715 = vmatpush1.bf16.msra.mxu0 %v3606
    %4716 = vmatprep.mubr.bf16.mxu0 %v993
    %4717 = vmatmul.mubr.bf16.gmra.mrb[0].mxu0 %v991
    %v4718 = vpop.f32.mrb[0].mxu0
    %v4719 = vadd.f32 %v4678, %v4718
    %v4720 = vpop.f32.mrb[0].mxu0
    %v4721 = vadd.f32 %v4680, %v4720
    %v4722 = vpop.f32.mrb[0].mxu0
    %v4723 = vpop.f32.mrb[0].mxu0
    %4724 = vdwg.mxu0
    %4725 = vmatprep.subr.bf16.mxu0 %v3610
    %4726 = vmatpush1.bf16.msra.mxu0 %v3609
    %4727 = vmatprep.subr.bf16.mxu0 %v3613
    %4728 = vmatpush1.bf16.msra.mxu0 %v3612
    %4729 = vmatprep.subr.bf16.mxu0 %v3616
    %4730 = vmatpush1.bf16.msra.mxu0 %v3615
    %4731 = vmatprep.subr.bf16.mxu0 %v3619
    %4732 = vmatpush1.bf16.msra.mxu0 %v3618
    %4733 = vmatprep.subr.bf16.mxu0 %v3622
    %4734 = vmatpush1.bf16.msra.mxu0 %v3621
    %4735 = vmatprep.subr.bf16.mxu0 %v3625
    %4736 = vmatpush1.bf16.msra.mxu0 %v3624
    %4737 = vmatprep.subr.bf16.mxu0 %v3628
    %4738 = vmatpush1.bf16.msra.mxu0 %v3627
    %4739 = vmatprep.subr.bf16.mxu0 %v3631
    %4740 = vmatpush1.bf16.msra.mxu0 %v3630
    %4741 = vmatprep.subr.bf16.mxu0 0
    %4742 = vmatpush1.bf16.msra.mxu0 0
    %4743 = vmatprep.subr.bf16.mxu0 0
    %4744 = vmatpush1.bf16.msra.mxu0 0
    %4745 = vmatprep.subr.bf16.mxu0 0
    %4746 = vmatpush1.bf16.msra.mxu0 0
    %4747 = vmatprep.subr.bf16.mxu0 0
    %4748 = vmatpush1.bf16.msra.mxu0 0
    %4749 = vmatprep.subr.bf16.mxu0 0
    %4750 = vmatpush1.bf16.msra.mxu0 0
    %4751 = vmatprep.subr.bf16.mxu0 0
    %4752 = vmatpush1.bf16.msra.mxu0 0
    %4753 = vmatprep.subr.bf16.mxu0 0
    %4754 = vmatpush1.bf16.msra.mxu0 0
    %4755 = vmatprep.subr.bf16.mxu0 0
    %4756 = vmatpush1.bf16.msra.mxu0 0
    %4757 = vmatprep.mubr.bf16.mxu0 0
    %4758 = vmatmul.mubr.bf16.gmra.mrb[0].mxu0 %v1007
    %v4759 = vpop.f32.mrb[0].mxu0
    %v4760 = vadd.f32 %v4719, %v4759
    %v4761 = vpop.f32.mrb[0].mxu0
    %v4762 = vadd.f32 %v4721, %v4761
    %v4763 = vpop.f32.mrb[0].mxu0
    %v4764 = vpop.f32.mrb[0].mxu0
    %4765 = vdwg.mxu0
    %4766 = vmatprep.subr.bf16.mxu0 0
    %4767 = vmatpush1.bf16.msra.mxu0 %v3035
    %4768 = vmatprep.subr.bf16.mxu0 0
    %4769 = vmatpush1.bf16.msra.mxu0 %v3038
    %4770 = vmatprep.subr.bf16.mxu0 0
    %4771 = vmatpush1.bf16.msra.mxu0 %v3041
    %4772 = vmatprep.subr.bf16.mxu0 0
    %4773 = vmatpush1.bf16.msra.mxu0 %v3044
    %4774 = vmatprep.subr.bf16.mxu0 0
    %4775 = vmatpush1.bf16.msra.mxu0 %v3047
    %4776 = vmatprep.subr.bf16.mxu0 0
    %4777 = vmatpush1.bf16.msra.mxu0 %v3050
    %4778 = vmatprep.subr.bf16.mxu0 0
    %4779 = vmatpush1.bf16.msra.mxu0 %v3053
    %4780 = vmatprep.subr.bf16.mxu0 0
    %4781 = vmatpush1.bf16.msra.mxu0 %v3056
    %4782 = vmatprep.subr.bf16.mxu0 0
    %4783 = vmatpush1.bf16.msra.mxu0 %v3059
    %4784 = vmatprep.subr.bf16.mxu0 0
    %4785 = vmatpush1.bf16.msra.mxu0 %v3062
    %4786 = vmatprep.subr.bf16.mxu0 0
    %4787 = vmatpush1.bf16.msra.mxu0 %v3065
    %4788 = vmatprep.subr.bf16.mxu0 0
    %4789 = vmatpush1.bf16.msra.mxu0 %v3068
    %4790 = vmatprep.subr.bf16.mxu0 0
    %4791 = vmatpush1.bf16.msra.mxu0 %v3071
    %4792 = vmatprep.subr.bf16.mxu0 0
    %4793 = vmatpush1.bf16.msra.mxu0 %v3074
    %4794 = vmatprep.subr.bf16.mxu0 0
    %4795 = vmatpush1.bf16.msra.mxu0 %v3077
    %4796 = vmatprep.subr.bf16.mxu0 0
    %4797 = vmatpush1.bf16.msra.mxu0 %v3080
    %4798 = vmatprep.mubr.bf16.mxu0 %v884
    %4799 = vmatmul.mubr.bf16.gmra.mrb[0].mxu0 %v870
    %v4800 = vpop.f32.mrb[0].mxu0
    %v4801 = vadd.f32 %v839, %v4800
    %v4802 = vpop.f32.mrb[0].mxu0
    %v4803 = vpop.f32.mrb[0].mxu0
    %v4804 = vpop.f32.mrb[0].mxu0
    %4805 = vdwg.mxu0
    %4806 = vmatprep.subr.bf16.mxu0 0
    %4807 = vmatpush1.bf16.msra.mxu0 %v3083
    %4808 = vmatprep.subr.bf16.mxu0 0
    %4809 = vmatpush1.bf16.msra.mxu0 %v3086
    %4810 = vmatprep.subr.bf16.mxu0 0
    %4811 = vmatpush1.bf16.msra.mxu0 %v3089
    %4812 = vmatprep.subr.bf16.mxu0 0
    %4813 = vmatpush1.bf16.msra.mxu0 %v3092
    %4814 = vmatprep.subr.bf16.mxu0 0
    %4815 = vmatpush1.bf16.msra.mxu0 %v3095
    %4816 = vmatprep.subr.bf16.mxu0 0
    %4817 = vmatpush1.bf16.msra.mxu0 %v3098
    %4818 = vmatprep.subr.bf16.mxu0 0
    %4819 = vmatpush1.bf16.msra.mxu0 %v3101
    %4820 = vmatprep.subr.bf16.mxu0 0
    %4821 = vmatpush1.bf16.msra.mxu0 %v3104
    %4822 = vmatprep.subr.bf16.mxu0 0
    %4823 = vmatpush1.bf16.msra.mxu0 %v3107
    %4824 = vmatprep.subr.bf16.mxu0 0
    %4825 = vmatpush1.bf16.msra.mxu0 %v3110
    %4826 = vmatprep.subr.bf16.mxu0 0
    %4827 = vmatpush1.bf16.msra.mxu0 %v3113
    %4828 = vmatprep.subr.bf16.mxu0 0
    %4829 = vmatpush1.bf16.msra.mxu0 %v3116
    %4830 = vmatprep.subr.bf16.mxu0 0
    %4831 = vmatpush1.bf16.msra.mxu0 %v3119
    %4832 = vmatprep.subr.bf16.mxu0 0
    %4833 = vmatpush1.bf16.msra.mxu0 %v3122
    %4834 = vmatprep.subr.bf16.mxu0 0
    %4835 = vmatpush1.bf16.msra.mxu0 %v3125
    %4836 = vmatprep.subr.bf16.mxu0 0
    %4837 = vmatpush1.bf16.msra.mxu0 %v3128
    %4838 = vmatprep.mubr.bf16.mxu0 %v894
    %4839 = vmatmul.mubr.bf16.gmra.mrb[0].mxu0 %v892
    %v4840 = vpop.f32.mrb[0].mxu0
    %v4841 = vadd.f32 %v4801, %v4840
    %v4842 = vpop.f32.mrb[0].mxu0
    %v4843 = vpop.f32.mrb[0].mxu0
    %v4844 = vpop.f32.mrb[0].mxu0
    %4845 = vdwg.mxu0
    %4846 = vmatprep.subr.bf16.mxu0 0
    %4847 = vmatpush1.bf16.msra.mxu0 %v3131
    %4848 = vmatprep.subr.bf16.mxu0 0
    %4849 = vmatpush1.bf16.msra.mxu0 %v3134
    %4850 = vmatprep.subr.bf16.mxu0 0
    %4851 = vmatpush1.bf16.msra.mxu0 %v3137
    %4852 = vmatprep.subr.bf16.mxu0 0
    %4853 = vmatpush1.bf16.msra.mxu0 %v3140
    %4854 = vmatprep.subr.bf16.mxu0 0
    %4855 = vmatpush1.bf16.msra.mxu0 %v3143
    %4856 = vmatprep.subr.bf16.mxu0 0
    %4857 = vmatpush1.bf16.msra.mxu0 %v3146
    %4858 = vmatprep.subr.bf16.mxu0 0
    %4859 = vmatpush1.bf16.msra.mxu0 %v3149
    %4860 = vmatprep.subr.bf16.mxu0 0
    %4861 = vmatpush1.bf16.msra.mxu0 %v3152
    %4862 = vmatprep.subr.bf16.mxu0 0
    %4863 = vmatpush1.bf16.msra.mxu0 %v3155
    %4864 = vmatprep.subr.bf16.mxu0 0
    %4865 = vmatpush1.bf16.msra.mxu0 %v3158
    %4866 = vmatprep.subr.bf16.mxu0 0
    %4867 = vmatpush1.bf16.msra.mxu0 %v3161
    %4868 = vmatprep.subr.bf16.mxu0 0
    %4869 = vmatpush1.bf16.msra.mxu0 %v3164
    %4870 = vmatprep.subr.bf16.mxu0 0
    %4871 = vmatpush1.bf16.msra.mxu0 %v3167
    %4872 = vmatprep.subr.bf16.mxu0 0
    %4873 = vmatpush1.bf16.msra.mxu0 %v3170
    %4874 = vmatprep.subr.bf16.mxu0 0
    %4875 = vmatpush1.bf16.msra.mxu0 %v3173
    %4876 = vmatprep.subr.bf16.mxu0 0
    %4877 = vmatpush1.bf16.msra.mxu0 %v3176
    %4878 = vmatprep.mubr.bf16.mxu0 %v891
    %4879 = vmatmul.mubr.bf16.gmra.mrb[0].mxu0 %v877
    %v4880 = vpop.f32.mrb[0].mxu0
    %v4881 = vadd.f32 %v4841, %v4880
    %v4882 = vpop.f32.mrb[0].mxu0
    %v4883 = vpop.f32.mrb[0].mxu0
    %v4884 = vpop.f32.mrb[0].mxu0
    %4885 = vdwg.mxu0
    %4886 = vmatprep.subr.bf16.mxu0 0
    %4887 = vmatpush1.bf16.msra.mxu0 %v3179
    %4888 = vmatprep.subr.bf16.mxu0 0
    %4889 = vmatpush1.bf16.msra.mxu0 %v3182
    %4890 = vmatprep.subr.bf16.mxu0 0
    %4891 = vmatpush1.bf16.msra.mxu0 %v3185
    %4892 = vmatprep.subr.bf16.mxu0 0
    %4893 = vmatpush1.bf16.msra.mxu0 %v3188
    %4894 = vmatprep.subr.bf16.mxu0 0
    %4895 = vmatpush1.bf16.msra.mxu0 %v3191
    %4896 = vmatprep.subr.bf16.mxu0 0
    %4897 = vmatpush1.bf16.msra.mxu0 %v3194
    %4898 = vmatprep.subr.bf16.mxu0 0
    %4899 = vmatpush1.bf16.msra.mxu0 %v3197
    %4900 = vmatprep.subr.bf16.mxu0 0
    %4901 = vmatpush1.bf16.msra.mxu0 %v3200
    %4902 = vmatprep.subr.bf16.mxu0 0
    %4903 = vmatpush1.bf16.msra.mxu0 %v3203
    %4904 = vmatprep.subr.bf16.mxu0 0
    %4905 = vmatpush1.bf16.msra.mxu0 %v3206
    %4906 = vmatprep.subr.bf16.mxu0 0
    %4907 = vmatpush1.bf16.msra.mxu0 %v3209
    %4908 = vmatprep.subr.bf16.mxu0 0
    %4909 = vmatpush1.bf16.msra.mxu0 %v3212
    %4910 = vmatprep.subr.bf16.mxu0 0
    %4911 = vmatpush1.bf16.msra.mxu0 %v3215
    %4912 = vmatprep.subr.bf16.mxu0 0
    %4913 = vmatpush1.bf16.msra.mxu0 %v3218
    %4914 = vmatprep.subr.bf16.mxu0 0
    %4915 = vmatpush1.bf16.msra.mxu0 %v3221
    %4916 = vmatprep.subr.bf16.mxu0 0
    %4917 = vmatpush1.bf16.msra.mxu0 %v3224
    %4918 = vmatprep.mubr.bf16.mxu0 %v895
    %4919 = vmatmul.mubr.bf16.gmra.mrb[0].mxu0 %v893
    %v4920 = vpop.f32.mrb[0].mxu0
    %v4921 = vadd.f32 %v4881, %v4920
    %v4922 = vpop.f32.mrb[0].mxu0
    %v4923 = vpop.f32.mrb[0].mxu0
    %v4924 = vpop.f32.mrb[0].mxu0
    %4925 = vdwg.mxu0
    %4926 = vmatprep.subr.bf16.mxu0 0
    %4927 = vmatpush1.bf16.msra.mxu0 %v3227
    %4928 = vmatprep.subr.bf16.mxu0 0
    %4929 = vmatpush1.bf16.msra.mxu0 %v3230
    %4930 = vmatprep.subr.bf16.mxu0 0
    %4931 = vmatpush1.bf16.msra.mxu0 %v3233
    %4932 = vmatprep.subr.bf16.mxu0 0
    %4933 = vmatpush1.bf16.msra.mxu0 %v3236
    %4934 = vmatprep.subr.bf16.mxu0 0
    %4935 = vmatpush1.bf16.msra.mxu0 %v3239
    %4936 = vmatprep.subr.bf16.mxu0 0
    %4937 = vmatpush1.bf16.msra.mxu0 %v3242
    %4938 = vmatprep.subr.bf16.mxu0 0
    %4939 = vmatpush1.bf16.msra.mxu0 %v3245
    %4940 = vmatprep.subr.bf16.mxu0 0
    %4941 = vmatpush1.bf16.msra.mxu0 %v3248
    %4942 = vmatprep.subr.bf16.mxu0 0
    %4943 = vmatpush1.bf16.msra.mxu0 %v3251
    %4944 = vmatprep.subr.bf16.mxu0 0
    %4945 = vmatpush1.bf16.msra.mxu0 %v3254
    %4946 = vmatprep.subr.bf16.mxu0 0
    %4947 = vmatpush1.bf16.msra.mxu0 %v3257
    %4948 = vmatprep.subr.bf16.mxu0 0
    %4949 = vmatpush1.bf16.msra.mxu0 %v3260
    %4950 = vmatprep.subr.bf16.mxu0 0
    %4951 = vmatpush1.bf16.msra.mxu0 %v3263
    %4952 = vmatprep.subr.bf16.mxu0 0
    %4953 = vmatpush1.bf16.msra.mxu0 %v3266
    %4954 = vmatprep.subr.bf16.mxu0 0
    %4955 = vmatpush1.bf16.msra.mxu0 %v3269
    %4956 = vmatprep.subr.bf16.mxu0 0
    %4957 = vmatpush1.bf16.msra.mxu0 %v3272
    %4958 = vmatprep.mubr.bf16.mxu0 %v933
    %4959 = vmatmul.mubr.bf16.gmra.mrb[0].mxu0 %v919
    %v4960 = vpop.f32.mrb[0].mxu0
    %v4961 = vadd.f32 %v4921, %v4960
    %v4962 = vpop.f32.mrb[0].mxu0
    %v4963 = vpop.f32.mrb[0].mxu0
    %v4964 = vpop.f32.mrb[0].mxu0
    %4965 = vdwg.mxu0
    %4966 = vmatprep.subr.bf16.mxu0 0
    %4967 = vmatpush1.bf16.msra.mxu0 %v3275
    %4968 = vmatprep.subr.bf16.mxu0 0
    %4969 = vmatpush1.bf16.msra.mxu0 %v3278
    %4970 = vmatprep.subr.bf16.mxu0 0
    %4971 = vmatpush1.bf16.msra.mxu0 %v3281
    %4972 = vmatprep.subr.bf16.mxu0 0
    %4973 = vmatpush1.bf16.msra.mxu0 %v3284
    %4974 = vmatprep.subr.bf16.mxu0 0
    %4975 = vmatpush1.bf16.msra.mxu0 %v3287
    %4976 = vmatprep.subr.bf16.mxu0 0
    %4977 = vmatpush1.bf16.msra.mxu0 %v3290
    %4978 = vmatprep.subr.bf16.mxu0 0
    %4979 = vmatpush1.bf16.msra.mxu0 %v3293
    %4980 = vmatprep.subr.bf16.mxu0 0
    %4981 = vmatpush1.bf16.msra.mxu0 %v3296
    %4982 = vmatprep.subr.bf16.mxu0 0
    %4983 = vmatpush1.bf16.msra.mxu0 %v3299
    %4984 = vmatprep.subr.bf16.mxu0 0
    %4985 = vmatpush1.bf16.msra.mxu0 %v3302
    %4986 = vmatprep.subr.bf16.mxu0 0
    %4987 = vmatpush1.bf16.msra.mxu0 %v3305
    %4988 = vmatprep.subr.bf16.mxu0 0
    %4989 = vmatpush1.bf16.msra.mxu0 %v3308
    %4990 = vmatprep.subr.bf16.mxu0 0
    %4991 = vmatpush1.bf16.msra.mxu0 %v3311
    %4992 = vmatprep.subr.bf16.mxu0 0
    %4993 = vmatpush1.bf16.msra.mxu0 %v3314
    %4994 = vmatprep.subr.bf16.mxu0 0
    %4995 = vmatpush1.bf16.msra.mxu0 %v3317
    %4996 = vmatprep.subr.bf16.mxu0 0
    %4997 = vmatpush1.bf16.msra.mxu0 %v3320
    %4998 = vmatprep.mubr.bf16.mxu0 %v943
    %4999 = vmatmul.mubr.bf16.gmra.mrb[0].mxu0 %v941
    %v5000 = vpop.f32.mrb[0].mxu0
    %v5001 = vadd.f32 %v4961, %v5000
    %v5002 = vpop.f32.mrb[0].mxu0
    %v5003 = vpop.f32.mrb[0].mxu0
    %v5004 = vpop.f32.mrb[0].mxu0
    %5005 = vdwg.mxu0
    %5006 = vmatprep.subr.bf16.mxu0 0
    %5007 = vmatpush1.bf16.msra.mxu0 %v3323
    %5008 = vmatprep.subr.bf16.mxu0 0
    %5009 = vmatpush1.bf16.msra.mxu0 %v3326
    %5010 = vmatprep.subr.bf16.mxu0 0
    %5011 = vmatpush1.bf16.msra.mxu0 %v3329
    %5012 = vmatprep.subr.bf16.mxu0 0
    %5013 = vmatpush1.bf16.msra.mxu0 %v3332
    %5014 = vmatprep.subr.bf16.mxu0 0
    %5015 = vmatpush1.bf16.msra.mxu0 %v3335
    %5016 = vmatprep.subr.bf16.mxu0 0
    %5017 = vmatpush1.bf16.msra.mxu0 %v3338
    %5018 = vmatprep.subr.bf16.mxu0 0
    %5019 = vmatpush1.bf16.msra.mxu0 %v3341
    %5020 = vmatprep.subr.bf16.mxu0 0
    %5021 = vmatpush1.bf16.msra.mxu0 %v3344
    %5022 = vmatprep.subr.bf16.mxu0 0
    %5023 = vmatpush1.bf16.msra.mxu0 %v3347
    %5024 = vmatprep.subr.bf16.mxu0 0
    %5025 = vmatpush1.bf16.msra.mxu0 %v3350
    %5026 = vmatprep.subr.bf16.mxu0 0
    %5027 = vmatpush1.bf16.msra.mxu0 %v3353
    %5028 = vmatprep.subr.bf16.mxu0 0
    %5029 = vmatpush1.bf16.msra.mxu0 %v3356
    %5030 = vmatprep.subr.bf16.mxu0 0
    %5031 = vmatpush1.bf16.msra.mxu0 %v3359
    %5032 = vmatprep.subr.bf16.mxu0 0
    %5033 = vmatpush1.bf16.msra.mxu0 %v3362
    %5034 = vmatprep.subr.bf16.mxu0 0
    %5035 = vmatpush1.bf16.msra.mxu0 %v3365
    %5036 = vmatprep.subr.bf16.mxu0 0
    %5037 = vmatpush1.bf16.msra.mxu0 %v3368
    %5038 = vmatprep.mubr.bf16.mxu0 %v940
    %5039 = vmatmul.mubr.bf16.gmra.mrb[0].mxu0 %v926
    %v5040 = vpop.f32.mrb[0].mxu0
    %v5041 = vadd.f32 %v5001, %v5040
    %v5042 = vpop.f32.mrb[0].mxu0
    %v5043 = vpop.f32.mrb[0].mxu0
    %v5044 = vpop.f32.mrb[0].mxu0
    %5045 = vdwg.mxu0
    %5046 = vmatprep.subr.bf16.mxu0 0
    %5047 = vmatpush1.bf16.msra.mxu0 %v3371
    %5048 = vmatprep.subr.bf16.mxu0 0
    %5049 = vmatpush1.bf16.msra.mxu0 %v3374
    %5050 = vmatprep.subr.bf16.mxu0 0
    %5051 = vmatpush1.bf16.msra.mxu0 %v3377
    %5052 = vmatprep.subr.bf16.mxu0 0
    %5053 = vmatpush1.bf16.msra.mxu0 %v3380
    %5054 = vmatprep.subr.bf16.mxu0 0
    %5055 = vmatpush1.bf16.msra.mxu0 %v3383
    %5056 = vmatprep.subr.bf16.mxu0 0
    %5057 = vmatpush1.bf16.msra.mxu0 %v3386
    %5058 = vmatprep.subr.bf16.mxu0 0
    %5059 = vmatpush1.bf16.msra.mxu0 %v3389
    %5060 = vmatprep.subr.bf16.mxu0 0
    %5061 = vmatpush1.bf16.msra.mxu0 %v3392
    %5062 = vmatprep.subr.bf16.mxu0 0
    %5063 = vmatpush1.bf16.msra.mxu0 %v3395
    %5064 = vmatprep.subr.bf16.mxu0 0
    %5065 = vmatpush1.bf16.msra.mxu0 %v3398
    %5066 = vmatprep.subr.bf16.mxu0 0
    %5067 = vmatpush1.bf16.msra.mxu0 %v3401
    %5068 = vmatprep.subr.bf16.mxu0 0
    %5069 = vmatpush1.bf16.msra.mxu0 %v3404
    %5070 = vmatprep.subr.bf16.mxu0 0
    %5071 = vmatpush1.bf16.msra.mxu0 %v3407
    %5072 = vmatprep.subr.bf16.mxu0 0
    %5073 = vmatpush1.bf16.msra.mxu0 %v3410
    %5074 = vmatprep.subr.bf16.mxu0 0
    %5075 = vmatpush1.bf16.msra.mxu0 %v3413
    %5076 = vmatprep.subr.bf16.mxu0 0
    %5077 = vmatpush1.bf16.msra.mxu0 %v3416
    %5078 = vmatprep.mubr.bf16.mxu0 %v944
    %5079 = vmatmul.mubr.bf16.gmra.mrb[0].mxu0 %v942
    %v5080 = vpop.f32.mrb[0].mxu0
    %v5081 = vadd.f32 %v5041, %v5080
    %v5082 = vpop.f32.mrb[0].mxu0
    %v5083 = vpop.f32.mrb[0].mxu0
    %v5084 = vpop.f32.mrb[0].mxu0
    %5085 = vdwg.mxu0
    %5086 = vmatprep.subr.bf16.mxu0 0
    %5087 = vmatpush1.bf16.msra.mxu0 %v3419
    %5088 = vmatprep.subr.bf16.mxu0 0
    %5089 = vmatpush1.bf16.msra.mxu0 %v3422
    %5090 = vmatprep.subr.bf16.mxu0 0
    %5091 = vmatpush1.bf16.msra.mxu0 %v3425
    %5092 = vmatprep.subr.bf16.mxu0 0
    %5093 = vmatpush1.bf16.msra.mxu0 %v3428
    %5094 = vmatprep.subr.bf16.mxu0 0
    %5095 = vmatpush1.bf16.msra.mxu0 %v3431
    %5096 = vmatprep.subr.bf16.mxu0 0
    %5097 = vmatpush1.bf16.msra.mxu0 %v3434
    %5098 = vmatprep.subr.bf16.mxu0 0
    %5099 = vmatpush1.bf16.msra.mxu0 %v3437
    %5100 = vmatprep.subr.bf16.mxu0 0
    %5101 = vmatpush1.bf16.msra.mxu0 %v3440
    %5102 = vmatprep.subr.bf16.mxu0 0
    %5103 = vmatpush1.bf16.msra.mxu0 %v3443
    %5104 = vmatprep.subr.bf16.mxu0 0
    %5105 = vmatpush1.bf16.msra.mxu0 %v3446
    %5106 = vmatprep.subr.bf16.mxu0 0
    %5107 = vmatpush1.bf16.msra.mxu0 %v3449
    %5108 = vmatprep.subr.bf16.mxu0 0
    %5109 = vmatpush1.bf16.msra.mxu0 %v3452
    %5110 = vmatprep.subr.bf16.mxu0 0
    %5111 = vmatpush1.bf16.msra.mxu0 %v3455
    %5112 = vmatprep.subr.bf16.mxu0 0
    %5113 = vmatpush1.bf16.msra.mxu0 %v3458
    %5114 = vmatprep.subr.bf16.mxu0 0
    %5115 = vmatpush1.bf16.msra.mxu0 %v3461
    %5116 = vmatprep.subr.bf16.mxu0 0
    %5117 = vmatpush1.bf16.msra.mxu0 %v3464
    %5118 = vmatprep.mubr.bf16.mxu0 %v982
    %5119 = vmatmul.mubr.bf16.gmra.mrb[0].mxu0 %v968
    %v5120 = vpop.f32.mrb[0].mxu0
    %v5121 = vadd.f32 %v5081, %v5120
    %v5122 = vpop.f32.mrb[0].mxu0
    %v5123 = vpop.f32.mrb[0].mxu0
    %v5124 = vpop.f32.mrb[0].mxu0
    %5125 = vdwg.mxu0
    %5126 = vmatprep.subr.bf16.mxu0 0
    %5127 = vmatpush1.bf16.msra.mxu0 %v3467
    %5128 = vmatprep.subr.bf16.mxu0 0
    %5129 = vmatpush1.bf16.msra.mxu0 %v3470
    %5130 = vmatprep.subr.bf16.mxu0 0
    %5131 = vmatpush1.bf16.msra.mxu0 %v3473
    %5132 = vmatprep.subr.bf16.mxu0 0
    %5133 = vmatpush1.bf16.msra.mxu0 %v3476
    %5134 = vmatprep.subr.bf16.mxu0 0
    %5135 = vmatpush1.bf16.msra.mxu0 %v3479
    %5136 = vmatprep.subr.bf16.mxu0 0
    %5137 = vmatpush1.bf16.msra.mxu0 %v3482
    %5138 = vmatprep.subr.bf16.mxu0 0
    %5139 = vmatpush1.bf16.msra.mxu0 %v3485
    %5140 = vmatprep.subr.bf16.mxu0 0
    %5141 = vmatpush1.bf16.msra.mxu0 %v3488
    %5142 = vmatprep.subr.bf16.mxu0 0
    %5143 = vmatpush1.bf16.msra.mxu0 %v3491
    %5144 = vmatprep.subr.bf16.mxu0 0
    %5145 = vmatpush1.bf16.msra.mxu0 %v3494
    %5146 = vmatprep.subr.bf16.mxu0 0
    %5147 = vmatpush1.bf16.msra.mxu0 %v3497
    %5148 = vmatprep.subr.bf16.mxu0 0
    %5149 = vmatpush1.bf16.msra.mxu0 %v3500
    %5150 = vmatprep.subr.bf16.mxu0 0
    %5151 = vmatpush1.bf16.msra.mxu0 %v3503
    %5152 = vmatprep.subr.bf16.mxu0 0
    %5153 = vmatpush1.bf16.msra.mxu0 %v3506
    %5154 = vmatprep.subr.bf16.mxu0 0
    %5155 = vmatpush1.bf16.msra.mxu0 %v3509
    %5156 = vmatprep.subr.bf16.mxu0 0
    %5157 = vmatpush1.bf16.msra.mxu0 %v3512
    %5158 = vmatprep.mubr.bf16.mxu0 %v992
    %5159 = vmatmul.mubr.bf16.gmra.mrb[0].mxu0 %v990
    %v5160 = vpop.f32.mrb[0].mxu0
    %v5161 = vadd.f32 %v5121, %v5160
    %v5162 = vpop.f32.mrb[0].mxu0
    %v5163 = vpop.f32.mrb[0].mxu0
    %v5164 = vpop.f32.mrb[0].mxu0
    %5165 = vdwg.mxu0
    %5166 = vmatprep.subr.bf16.mxu0 0
    %5167 = vmatpush1.bf16.msra.mxu0 %v3515
    %5168 = vmatprep.subr.bf16.mxu0 0
    %5169 = vmatpush1.bf16.msra.mxu0 %v3518
    %5170 = vmatprep.subr.bf16.mxu0 0
    %5171 = vmatpush1.bf16.msra.mxu0 %v3521
    %5172 = vmatprep.subr.bf16.mxu0 0
    %5173 = vmatpush1.bf16.msra.mxu0 %v3524
    %5174 = vmatprep.subr.bf16.mxu0 0
    %5175 = vmatpush1.bf16.msra.mxu0 %v3527
    %5176 = vmatprep.subr.bf16.mxu0 0
    %5177 = vmatpush1.bf16.msra.mxu0 %v3530
    %5178 = vmatprep.subr.bf16.mxu0 0
    %5179 = vmatpush1.bf16.msra.mxu0 %v3533
    %5180 = vmatprep.subr.bf16.mxu0 0
    %5181 = vmatpush1.bf16.msra.mxu0 %v3536
    %5182 = vmatprep.subr.bf16.mxu0 0
    %5183 = vmatpush1.bf16.msra.mxu0 %v3539
    %5184 = vmatprep.subr.bf16.mxu0 0
    %5185 = vmatpush1.bf16.msra.mxu0 %v3542
    %5186 = vmatprep.subr.bf16.mxu0 0
    %5187 = vmatpush1.bf16.msra.mxu0 %v3545
    %5188 = vmatprep.subr.bf16.mxu0 0
    %5189 = vmatpush1.bf16.msra.mxu0 %v3548
    %5190 = vmatprep.subr.bf16.mxu0 0
    %5191 = vmatpush1.bf16.msra.mxu0 %v3551
    %5192 = vmatprep.subr.bf16.mxu0 0
    %5193 = vmatpush1.bf16.msra.mxu0 %v3554
    %5194 = vmatprep.subr.bf16.mxu0 0
    %5195 = vmatpush1.bf16.msra.mxu0 %v3557
    %5196 = vmatprep.subr.bf16.mxu0 0
    %5197 = vmatpush1.bf16.msra.mxu0 %v3560
    %5198 = vmatprep.mubr.bf16.mxu0 %v989
    %5199 = vmatmul.mubr.bf16.gmra.mrb[0].mxu0 %v975
    %v5200 = vpop.f32.mrb[0].mxu0
    %v5201 = vadd.f32 %v5161, %v5200
    %v5202 = vpop.f32.mrb[0].mxu0
    %v5203 = vpop.f32.mrb[0].mxu0
    %v5204 = vpop.f32.mrb[0].mxu0
    %5205 = vdwg.mxu0
    %5206 = vmatprep.subr.bf16.mxu0 0
    %5207 = vmatpush1.bf16.msra.mxu0 %v3563
    %5208 = vmatprep.subr.bf16.mxu0 0
    %5209 = vmatpush1.bf16.msra.mxu0 %v3566
    %5210 = vmatprep.subr.bf16.mxu0 0
    %5211 = vmatpush1.bf16.msra.mxu0 %v3569
    %5212 = vmatprep.subr.bf16.mxu0 0
    %5213 = vmatpush1.bf16.msra.mxu0 %v3572
    %5214 = vmatprep.subr.bf16.mxu0 0
    %5215 = vmatpush1.bf16.msra.mxu0 %v3575
    %5216 = vmatprep.subr.bf16.mxu0 0
    %5217 = vmatpush1.bf16.msra.mxu0 %v3578
    %5218 = vmatprep.subr.bf16.mxu0 0
    %5219 = vmatpush1.bf16.msra.mxu0 %v3581
    %5220 = vmatprep.subr.bf16.mxu0 0
    %5221 = vmatpush1.bf16.msra.mxu0 %v3584
    %5222 = vmatprep.subr.bf16.mxu0 0
    %5223 = vmatpush1.bf16.msra.mxu0 %v3587
    %5224 = vmatprep.subr.bf16.mxu0 0
    %5225 = vmatpush1.bf16.msra.mxu0 %v3590
    %5226 = vmatprep.subr.bf16.mxu0 0
    %5227 = vmatpush1.bf16.msra.mxu0 %v3593
    %5228 = vmatprep.subr.bf16.mxu0 0
    %5229 = vmatpush1.bf16.msra.mxu0 %v3596
    %5230 = vmatprep.subr.bf16.mxu0 0
    %5231 = vmatpush1.bf16.msra.mxu0 %v3599
    %5232 = vmatprep.subr.bf16.mxu0 0
    %5233 = vmatpush1.bf16.msra.mxu0 %v3602
    %5234 = vmatprep.subr.bf16.mxu0 0
    %5235 = vmatpush1.bf16.msra.mxu0 %v3605
    %5236 = vmatprep.subr.bf16.mxu0 0
    %5237 = vmatpush1.bf16.msra.mxu0 %v3608
    %5238 = vmatprep.mubr.bf16.mxu0 %v993
    %5239 = vmatmul.mubr.bf16.gmra.mrb[0].mxu0 %v991
    %v5240 = vpop.f32.mrb[0].mxu0
    %v5241 = vadd.f32 %v5201, %v5240
    %v5242 = vpop.f32.mrb[0].mxu0
    %v5243 = vpop.f32.mrb[0].mxu0
    %v5244 = vpop.f32.mrb[0].mxu0
    %5245 = vdwg.mxu0
    %5246 = vmatprep.subr.bf16.mxu0 0
    %5247 = vmatpush1.bf16.msra.mxu0 %v3611
    %5248 = vmatprep.subr.bf16.mxu0 0
    %5249 = vmatpush1.bf16.msra.mxu0 %v3614
    %5250 = vmatprep.subr.bf16.mxu0 0
    %5251 = vmatpush1.bf16.msra.mxu0 %v3617
    %5252 = vmatprep.subr.bf16.mxu0 0
    %5253 = vmatpush1.bf16.msra.mxu0 %v3620
    %5254 = vmatprep.subr.bf16.mxu0 0
    %5255 = vmatpush1.bf16.msra.mxu0 %v3623
    %5256 = vmatprep.subr.bf16.mxu0 0
    %5257 = vmatpush1.bf16.msra.mxu0 %v3626
    %5258 = vmatprep.subr.bf16.mxu0 0
    %5259 = vmatpush1.bf16.msra.mxu0 %v3629
    %5260 = vmatprep.subr.bf16.mxu0 0
    %5261 = vmatpush1.bf16.msra.mxu0 %v3632
    %5262 = vmatprep.subr.bf16.mxu0 0
    %5263 = vmatpush1.bf16.msra.mxu0 0
    %5264 = vmatprep.subr.bf16.mxu0 0
    %5265 = vmatpush1.bf16.msra.mxu0 0
    %5266 = vmatprep.subr.bf16.mxu0 0
    %5267 = vmatpush1.bf16.msra.mxu0 0
    %5268 = vmatprep.subr.bf16.mxu0 0
    %5269 = vmatpush1.bf16.msra.mxu0 0
    %5270 = vmatprep.subr.bf16.mxu0 0
    %5271 = vmatpush1.bf16.msra.mxu0 0
    %5272 = vmatprep.subr.bf16.mxu0 0
    %5273 = vmatpush1.bf16.msra.mxu0 0
    %5274 = vmatprep.subr.bf16.mxu0 0
    %5275 = vmatpush1.bf16.msra.mxu0 0
    %5276 = vmatprep.subr.bf16.mxu0 0
    %5277 = vmatpush1.bf16.msra.mxu0 0
    %5278 = vmatprep.mubr.bf16.mxu0 0
    %5279 = vmatmul.mubr.bf16.gmra.mrb[0].mxu0 %v1007
    %v5280 = vpop.f32.mrb[0].mxu0
    %v5281 = vadd.f32 %v5241, %v5280
    %v5282 = vpop.f32.mrb[0].mxu0
    %v5283 = vpop.f32.mrb[0].mxu0
    %v5284 = vpop.f32.mrb[0].mxu0
    %5285 = vdwg.mxu0
    %v5286 = vmax.f32 %v4760, 0.0
    %v5287 = vmax.f32 %v4762, 0.0
    %v5288 = vmax.f32 %v5281, 0.0
    %v5289 = vpack.c.bf16 %v5286, %v5286
    %v5290 = vpack.c.bf16 %v5287, %v5287
    %v5291 = vpack.c.bf16 %v5288, %v5288
    %v5292 = vld [vmem:[%s3] sm:$0xf]
    %v5293 = vld [vmem:[%s3 + $0x4] sm:$0xf]
    %v5294 = vld [vmem:[%s3 + $0x8] sm:$0xf]
    %v5295 = vld [vmem:[%s3 + $0xc] sm:$0xf]
    %v5296 = vld [vmem:[%s3 + $0x10] sm:$0xf]
    %v5297 = vld [vmem:[%s3 + $0x14] sm:$0xf]
    %v5298 = vld [vmem:[%s3 + $0x18] sm:$0xf]
    %v5299 = vld [vmem:[%s3 + $0x1c] sm:$0xf]
    %v5300 = vld [vmem:[%s3 + $0x20] sm:$0xf]
    %v5301 = vld [vmem:[%s3 + $0x24] sm:$0xf]
    %v5302 = vld [vmem:[%s3 + $0x28] sm:$0xf]
    %v5303 = vld [vmem:[%s3 + $0x2c] sm:$0xf]
    %v5304 = vld [vmem:[%s3 + $0x30] sm:$0xf]
    %v5305 = vld [vmem:[%s3 + $0x34] sm:$0xf]
    %v5306 = vld [vmem:[%s3 + $0x38] sm:$0xf]
    %v5307 = vld [vmem:[%s3 + $0x3c] sm:$0xf]
    %v5308 = vld [vmem:[%s3 + $0x40] sm:$0xf]
    %v5309 = vld [vmem:[%s3 + $0x44] sm:$0xf]
    %v5310 = vld [vmem:[%s3 + $0x48] sm:$0xf]
    %v5311 = vld [vmem:[%s3 + $0x4c] sm:$0xf]
    %v5312 = vld [vmem:[%s3 + $0x50] sm:$0xf]
    %v5313 = vld [vmem:[%s3 + $0x54] sm:$0xf]
    %v5314 = vld [vmem:[%s3 + $0x58] sm:$0xf]
    %v5315 = vld [vmem:[%s3 + $0x5c] sm:$0xf]
    %v5316 = vld [vmem:[%s3 + $0x60] sm:$0xf]
    %v5317 = vld [vmem:[%s3 + $0x64] sm:$0xf]
    %v5318 = vld [vmem:[%s3 + $0x68] sm:$0xf]
    %v5319 = vld [vmem:[%s3 + $0x6c] sm:$0xf]
    %v5320 = vld [vmem:[%s3 + $0x70] sm:$0xf]
    %v5321 = vld [vmem:[%s3 + $0x74] sm:$0xf]
    %v5322 = vld [vmem:[%s3 + $0x78] sm:$0xf]
    %v5323 = vld [vmem:[%s3 + $0x7c] sm:$0xf]
    %v5324 = vld [vmem:[%s3 + $0x80] sm:$0xf]
    %v5325 = vld [vmem:[%s3 + $0x84] sm:$0xf]
    %v5326 = vld [vmem:[%s3 + $0x88] sm:$0xf]
    %v5327 = vld [vmem:[%s3 + $0x8c] sm:$0xf]
    %v5328 = vld [vmem:[%s3 + $0x90] sm:$0xf]
    %v5329 = vld [vmem:[%s3 + $0x94] sm:$0xf]
    %v5330 = vld [vmem:[%s3 + $0x98] sm:$0xf]
    %v5331 = vld [vmem:[%s3 + $0x9c] sm:$0xf]
    %v5332 = vld [vmem:[%s3 + $0xa0] sm:$0xf]
    %v5333 = vld [vmem:[%s3 + $0xa4] sm:$0xf]
    %v5334 = vld [vmem:[%s3 + $0xa8] sm:$0xf]
    %v5335 = vld [vmem:[%s3 + $0xac] sm:$0xf]
    %v5336 = vld [vmem:[%s3 + $0xb0] sm:$0xf]
    %v5337 = vld [vmem:[%s3 + $0xb4] sm:$0xf]
    %v5338 = vld [vmem:[%s3 + $0xb8] sm:$0xf]
    %v5339 = vld [vmem:[%s3 + $0xbc] sm:$0xf]
    %v5340 = vld [vmem:[%s4] sm:$0x1]
    %v5342 = vlaneseq
    %v5343 = vshrl.u32 %v5342, 7
    %v5344 = vsub.s32 0, %v5343
    %v5345 = vrot.slane %v5340, %v5344
    %v5395 = vunpack.c.l.b16 %v5292
    %v5396 = vunpack.c.l.b16 %v5293
    %v5397 = vunpack.c.l.b16 %v5294
    %v5398 = vunpack.c.l.b16 %v5295
    %v5399 = vunpack.c.l.b16 %v5296
    %v5400 = vunpack.c.l.b16 %v5297
    %v5401 = vunpack.c.l.b16 %v5298
    %v5402 = vunpack.c.l.b16 %v5299
    %v5403 = vunpack.c.l.b16 %v5300
    %v5404 = vunpack.c.l.b16 %v5301
    %v5405 = vunpack.c.l.b16 %v5302
    %v5406 = vunpack.c.l.b16 %v5303
    %v5407 = vunpack.c.l.b16 %v5304
    %v5408 = vunpack.c.l.b16 %v5305
    %v5409 = vunpack.c.l.b16 %v5306
    %v5410 = vunpack.c.l.b16 %v5307
    %v5411 = vunpack.c.l.b16 %v5308
    %v5412 = vunpack.c.l.b16 %v5309
    %v5413 = vunpack.c.l.b16 %v5310
    %v5414 = vunpack.c.l.b16 %v5311
    %v5415 = vunpack.c.l.b16 %v5312
    %v5416 = vunpack.c.l.b16 %v5313
    %v5417 = vunpack.c.l.b16 %v5314
    %v5418 = vunpack.c.l.b16 %v5315
    %v5419 = vunpack.c.l.b16 %v5316
    %v5420 = vunpack.c.l.b16 %v5317
    %v5421 = vunpack.c.l.b16 %v5318
    %v5422 = vunpack.c.l.b16 %v5319
    %v5423 = vunpack.c.l.b16 %v5320
    %v5424 = vunpack.c.l.b16 %v5321
    %v5425 = vunpack.c.l.b16 %v5322
    %v5426 = vunpack.c.l.b16 %v5323
    %v5427 = vunpack.c.l.b16 %v5324
    %v5428 = vunpack.c.l.b16 %v5325
    %v5429 = vunpack.c.l.b16 %v5326
    %v5430 = vunpack.c.l.b16 %v5327
    %v5431 = vunpack.c.l.b16 %v5328
    %v5432 = vunpack.c.l.b16 %v5329
    %v5433 = vunpack.c.l.b16 %v5330
    %v5434 = vunpack.c.l.b16 %v5331
    %v5435 = vunpack.c.l.b16 %v5332
    %v5436 = vunpack.c.l.b16 %v5333
    %v5437 = vunpack.c.l.b16 %v5334
    %v5438 = vunpack.c.l.b16 %v5335
    %v5439 = vunpack.c.l.b16 %v5336
    %v5440 = vunpack.c.l.b16 %v5337
    %v5441 = vunpack.c.l.b16 %v5338
    %v5442 = vunpack.c.l.b16 %v5339
    %v5443 = vpack.c.b16 %v5396, %v5395
    %v5444 = vpack.c.b16 %v5398, %v5397
    %v5445 = vpack.c.b16 %v5400, %v5399
    %v5446 = vpack.c.b16 %v5402, %v5401
    %v5447 = vpack.c.b16 %v5404, %v5403
    %v5448 = vpack.c.b16 %v5406, %v5405
    %v5449 = vpack.c.b16 %v5408, %v5407
    %v5450 = vpack.c.b16 %v5410, %v5409
    %v5451 = vpack.c.b16 %v5412, %v5411
    %v5452 = vpack.c.b16 %v5414, %v5413
    %v5453 = vpack.c.b16 %v5416, %v5415
    %v5454 = vpack.c.b16 %v5418, %v5417
    %v5455 = vpack.c.b16 %v5420, %v5419
    %v5456 = vpack.c.b16 %v5422, %v5421
    %v5457 = vpack.c.b16 %v5424, %v5423
    %v5458 = vpack.c.b16 %v5426, %v5425
    %v5459 = vpack.c.b16 %v5428, %v5427
    %v5460 = vpack.c.b16 %v5430, %v5429
    %v5461 = vpack.c.b16 %v5432, %v5431
    %v5462 = vpack.c.b16 %v5434, %v5433
    %v5463 = vpack.c.b16 %v5436, %v5435
    %v5464 = vpack.c.b16 %v5438, %v5437
    %v5465 = vpack.c.b16 %v5440, %v5439
    %v5466 = vpack.c.b16 %v5442, %v5441
    %5491 = vmatprep.subr.bf16.mxu0 0
    %5492 = vmatpush1.bf16.msra.mxu0 %v5443
    %5493 = vmatprep.subr.bf16.mxu0 0
    %5494 = vmatpush1.bf16.msra.mxu0 %v5444
    %5495 = vmatprep.subr.bf16.mxu0 0
    %5496 = vmatpush1.bf16.msra.mxu0 %v5445
    %5497 = vmatprep.subr.bf16.mxu0 0
    %5498 = vmatpush1.bf16.msra.mxu0 %v5446
    %5499 = vmatprep.subr.bf16.mxu0 0
    %5500 = vmatpush1.bf16.msra.mxu0 %v5447
    %5501 = vmatprep.subr.bf16.mxu0 0
    %5502 = vmatpush1.bf16.msra.mxu0 %v5448
    %5503 = vmatprep.subr.bf16.mxu0 0
    %5504 = vmatpush1.bf16.msra.mxu0 %v5449
    %5505 = vmatprep.subr.bf16.mxu0 0
    %5506 = vmatpush1.bf16.msra.mxu0 %v5450
    %5507 = vmatprep.subr.bf16.mxu0 0
    %5508 = vmatpush1.bf16.msra.mxu0 %v5451
    %5509 = vmatprep.subr.bf16.mxu0 0
    %5510 = vmatpush1.bf16.msra.mxu0 %v5452
    %5511 = vmatprep.subr.bf16.mxu0 0
    %5512 = vmatpush1.bf16.msra.mxu0 %v5453
    %5513 = vmatprep.subr.bf16.mxu0 0
    %5514 = vmatpush1.bf16.msra.mxu0 %v5454
    %5515 = vmatprep.subr.bf16.mxu0 0
    %5516 = vmatpush1.bf16.msra.mxu0 %v5455
    %5517 = vmatprep.subr.bf16.mxu0 0
    %5518 = vmatpush1.bf16.msra.mxu0 %v5456
    %5519 = vmatprep.subr.bf16.mxu0 0
    %5520 = vmatpush1.bf16.msra.mxu0 %v5457
    %5521 = vmatprep.subr.bf16.mxu0 0
    %5522 = vmatpush1.bf16.msra.mxu0 %v5458
    %5523 = vmatprep.mubr.bf16.mxu0 %v5290
    %5524 = vmatmul.mubr.bf16.gmra.mrb[0].mxu0 %v5289
    %v5525 = vpop.f32.mrb[0].mxu0
    %v5526 = vadd.f32 %v5345, %v5525
    %v5527 = vpop.f32.mrb[0].mxu0
    %v5528 = vpop.f32.mrb[0].mxu0
    %v5529 = vpop.f32.mrb[0].mxu0
    %5530 = vdwg.mxu0
    %5531 = vmatprep.subr.bf16.mxu0 0
    %5532 = vmatpush1.bf16.msra.mxu0 %v5459
    %5533 = vmatprep.subr.bf16.mxu0 0
    %5534 = vmatpush1.bf16.msra.mxu0 %v5460
    %5535 = vmatprep.subr.bf16.mxu0 0
    %5536 = vmatpush1.bf16.msra.mxu0 %v5461
    %5537 = vmatprep.subr.bf16.mxu0 0
    %5538 = vmatpush1.bf16.msra.mxu0 %v5462
    %5539 = vmatprep.subr.bf16.mxu0 0
    %5540 = vmatpush1.bf16.msra.mxu0 %v5463
    %5541 = vmatprep.subr.bf16.mxu0 0
    %5542 = vmatpush1.bf16.msra.mxu0 %v5464
    %5543 = vmatprep.subr.bf16.mxu0 0
    %5544 = vmatpush1.bf16.msra.mxu0 %v5465
    %5545 = vmatprep.subr.bf16.mxu0 0
    %5546 = vmatpush1.bf16.msra.mxu0 %v5466
    %5547 = vmatprep.subr.bf16.mxu0 0
    %5548 = vmatpush1.bf16.msra.mxu0 0
    %5549 = vmatprep.subr.bf16.mxu0 0
    %5550 = vmatpush1.bf16.msra.mxu0 0
    %5551 = vmatprep.subr.bf16.mxu0 0
    %5552 = vmatpush1.bf16.msra.mxu0 0
    %5553 = vmatprep.subr.bf16.mxu0 0
    %5554 = vmatpush1.bf16.msra.mxu0 0
    %5555 = vmatprep.subr.bf16.mxu0 0
    %5556 = vmatpush1.bf16.msra.mxu0 0
    %5557 = vmatprep.subr.bf16.mxu0 0
    %5558 = vmatpush1.bf16.msra.mxu0 0
    %5559 = vmatprep.subr.bf16.mxu0 0
    %5560 = vmatpush1.bf16.msra.mxu0 0
    %5561 = vmatprep.subr.bf16.mxu0 0
    %5562 = vmatpush1.bf16.msra.mxu0 0
    %5563 = vmatprep.mubr.bf16.mxu0 0
    %5564 = vmatmul.mubr.bf16.gmra.mrb[0].mxu0 %v5291
    %v5565 = vpop.f32.mrb[0].mxu0
    %v5566 = vadd.f32 %v5526, %v5565
    %v5567 = vpop.f32.mrb[0].mxu0
    %v5568 = vpop.f32.mrb[0].mxu0
    %v5569 = vpop.f32.mrb[0].mxu0
    %5570 = vdwg.mxu0
    %5571 = vst [vmem:[#allocation2] sm:$0x3] %v5566
    // Predicated region
    $region22: #{lenet5_tt2_forward.5} parent=1 // pred_check
      _
    $region23: #{lenet5_tt2_forward.5} parent=1 // pred_check_branch
      %5573 = sbr.rel (0) target = $region25
    $region24: #{lenet5_tt2_forward.5} parent=1 // pred_region
      %s5575 = ssub.s32 32, 32
      %5576 = vsyncadd [#allocation3], %s5575
      %s5578 = sshll.u32 [#allocation2], 4
      %s5579 = int_to_ptr.vmem [resolvable:$true] %s5578
      %5581 = dma.vmem_to_hbm [thread:$0]  %s5579, 32, %s5, [#allocation3]
    $region25: #{lenet5_tt2_forward.5} parent=1 // pred_fallthru
      _
    // Predicated region
    $region26: #{lenet5_tt2_forward.5} parent=1 // pred_check
      _
    $region27: #{lenet5_tt2_forward.5} parent=1 // pred_check_branch
      %5583 = sbr.rel (0) target = $region29
    $region28: #{lenet5_tt2_forward.5} parent=1 // pred_region
      %5584 = dma.done [#allocation3], 32
    $region29: #{lenet5_tt2_forward.5} parent=1 // pred_fallthru
      _
    %5585 = vsyncpa [#allocation3], 1

// kernel: lenet5_tt2_forward.4
$region0: #{lenet5_tt2_forward.4}
  #allocation0 [shape = 'u32[]', space=smem, size = 0x4, offset = 0x4, fixed_abs, tag = 'smem constant byte address 0x4 - core index']
  #allocation1 [shape = 'u32[144,128]{1,0:T(1,128)}', space=vmem, size = 0x12000, scoped, tag = 'internal scratch']
  %s0 = inlined_call_operand.vmem [shape: bf16[2,4,25,3200], index: 0, kind: input, shape index: {}]
  %s1 = inlined_call_operand.vmem [shape: bf16[3200,128], index: 1, kind: input, shape index: {}]
  %s2 = inlined_call_operand.vmem [shape: f32[1,128], index: 2, kind: input, shape index: {}]
  %s3 = inlined_call_operand.vmem [shape: bf16[2,25,128], index: 3, kind: output, shape index: {}]
  %s4 = sld [smem:[#allocation0]]
  $region45: #{lenet5_tt2_forward.4} parent=0
    _
  %s6 = ssub.s32 1, %s4
  %s7 = scalar_select 0, %s6, %s4
  loop: start=0, step=1, limit=4
  $region2: #{lenet5_tt2_forward.4} parent=0 // loop_pre_header
    _
  $region3: #{lenet5_tt2_forward.4} parent=0 // loop_header
    %s9 = sphi 0, %s13
    %p10 = scmp.ge.s32.totalorder %s9, 4
    %s19 = sphi 0, %s21
    %s22 = sphi 0, %s19
    %s23 = sphi 0, %s22
    %s39 = sphi 0, %s23
    %s43 = sphi 0, %s43
    %s45 = sphi 0, %s43
    %s46 = sphi 0, %s45
    %s60 = sphi 0, %s46
    %s64 = sphi 0, %s64
    %s66 = sphi 0, %s64
    %s67 = sphi 0, %s66
    %s81 = sphi 0, %s67
    %s87 = sphi 0, %s89
    %s90 = sphi 0, %s87
    %s91 = sphi 0, %s90
    %s107 = sphi 0, %s91
  $region4: #{lenet5_tt2_forward.4} parent=0 // loop_header_branch
    %12 = sbr.rel (%p10) target = $region8
  $region5: #{lenet5_tt2_forward.4} parent=0 // loop_body
    %s14 = ssub.s32 %s9, 1
    %s15 = ssub.s32 %s9, 2
    %s16 = sadd.s32 %s9, 1
    %s17 = ssub.s32 %s9, %s16
    %p18 = scmp.eq.s32.totalorder %s17, 0
    %s20 = sadd.s32 %s19, 1
    %s21 = scalar_select %p18, %s19, %s20
    %p24 = pneg %p18
    %p25 = scmp.eq.s32.totalorder %s9, 1
    %p26 = por %p24, %p25
    %p27 = scmp.ne.s32.totalorder %s19, %s22
    %p28 = scmp.eq.s32.totalorder %s9, 0
    %p29 = por %p27, %p28
    %p30 = scmp.ne.s32.totalorder %s19, %s22
    %p31 = scmp.eq.s32.totalorder %s14, 1
    %p32 = por %p30, %p31
    %p33 = scmp.ne.s32.totalorder %s22, %s23
    %p34 = scmp.eq.s32.totalorder %s14, 0
    %p35 = por %p33, %p34
    %p36 = scmp.ne.s32.totalorder %s22, %s23
    %p37 = scmp.eq.s32.totalorder %s15, 1
    %p38 = por %p36, %p37
    %p40 = scmp.ne.s32.totalorder %s23, %s39
    %p41 = scmp.eq.s32.totalorder %s15, 0
    %p42 = por %p40, %p41
    %s44 = sadd.s32 %s43, 1
    %p47 = scmp.eq.s32.totalorder %s9, 1
    %p48 = scmp.ne.s32.totalorder %s43, %s45
    %p49 = scmp.eq.s32.totalorder %s9, 0
    %p50 = por %p48, %p49
    %p51 = scmp.ne.s32.totalorder %s43, %s45
    %p52 = scmp.eq.s32.totalorder %s14, 1
    %p53 = por %p51, %p52
    %p54 = scmp.ne.s32.totalorder %s45, %s46
    %p55 = scmp.eq.s32.totalorder %s14, 0
    %p56 = por %p54, %p55
    %p57 = scmp.ne.s32.totalorder %s45, %s46
    %p58 = scmp.eq.s32.totalorder %s15, 1
    %p59 = por %p57, %p58
    %p61 = scmp.ne.s32.totalorder %s46, %s60
    %p62 = scmp.eq.s32.totalorder %s15, 0
    %p63 = por %p61, %p62
    %s65 = sadd.s32 %s64, 1
    %p68 = scmp.eq.s32.totalorder %s9, 1
    %p69 = scmp.ne.s32.totalorder %s64, %s66
    %p70 = scmp.eq.s32.totalorder %s9, 0
    %p71 = por %p69, %p70
    %p72 = scmp.ne.s32.totalorder %s64, %s66
    %p73 = scmp.eq.s32.totalorder %s14, 1
    %p74 = por %p72, %p73
    %p75 = scmp.ne.s32.totalorder %s66, %s67
    %p76 = scmp.eq.s32.totalorder %s14, 0
    %p77 = por %p75, %p76
    %p78 = scmp.ne.s32.totalorder %s66, %s67
    %p79 = scmp.eq.s32.totalorder %s15, 1
    %p80 = por %p78, %p79
    %p82 = scmp.ne.s32.totalorder %s67, %s81
    %p83 = scmp.eq.s32.totalorder %s15, 0
    %p84 = por %p82, %p83
    %s85 = ssub.s32 %s9, %s16
    %p86 = scmp.eq.s32.totalorder %s85, 0
    %s88 = sadd.s32 %s87, 1
    %s89 = scalar_select %p86, %s87, %s88
    %p92 = pneg %p86
    %p93 = scmp.eq.s32.totalorder %s9, 1
    %p94 = por %p92, %p93
    %p95 = scmp.ne.s32.totalorder %s87, %s90
    %p96 = scmp.eq.s32.totalorder %s9, 0
    %p97 = por %p95, %p96
    %p98 = scmp.ne.s32.totalorder %s87, %s90
    %p99 = scmp.eq.s32.totalorder %s14, 1
    %p100 = por %p98, %p99
    %p101 = scmp.ne.s32.totalorder %s90, %s91
    %p102 = scmp.eq.s32.totalorder %s14, 0
    %p103 = por %p101, %p102
    %p104 = scmp.ne.s32.totalorder %s90, %s91
    %p105 = scmp.eq.s32.totalorder %s15, 1
    %p106 = por %p104, %p105
    %p108 = scmp.ne.s32.totalorder %s91, %s107
    %p109 = scmp.eq.s32.totalorder %s15, 0
    %p110 = por %p108, %p109
    %p111 = scmp.le.s32.totalorder 1, %s9
    %p112 = scmp.lt.s32.totalorder %s9, 3
    %p113 = pnand %p111, %p112
    %p114 = pneg %p113
    // Predicated region
    $region9: #{lenet5_tt2_forward.4} parent=5 // pred_check
      _
    $region10: #{lenet5_tt2_forward.4} parent=5 // pred_check_branch
      %116 = sbr.rel (%p113) target = $region12
    $region11: #{lenet5_tt2_forward.4} parent=5 // pred_region
      %s117 = ssub.s32 %s9, 1
      // Predicated region
      $region13: #{lenet5_tt2_forward.4} parent=11 // pred_check
        %p118 = pneg %p56
      $region14: #{lenet5_tt2_forward.4} parent=11 // pred_check_branch
        %120 = sbr.rel (%p118) target = $region16
      $region15: #{lenet5_tt2_forward.4} parent=11 // pred_region
        _
      $region16: #{lenet5_tt2_forward.4} parent=11 // pred_fallthru
        _
      // Predicated region
      $region17: #{lenet5_tt2_forward.4} parent=11 // pred_check
        %p121 = pneg %p77
      $region18: #{lenet5_tt2_forward.4} parent=11 // pred_check_branch
        %123 = sbr.rel (%p121) target = $region20
      $region19: #{lenet5_tt2_forward.4} parent=11 // pred_region
        _
      $region20: #{lenet5_tt2_forward.4} parent=11 // pred_fallthru
        _
    $region12: #{lenet5_tt2_forward.4} parent=5 // pred_fallthru
      _
    %p124 = scmp.lt.s32.totalorder %s9, 2
    // Predicated region
    $region21: #{lenet5_tt2_forward.4} parent=5 // pred_check
      %p125 = pneg %p124
    $region22: #{lenet5_tt2_forward.4} parent=5 // pred_check_branch
      %127 = sbr.rel (%p125) target = $region24
    $region23: #{lenet5_tt2_forward.4} parent=5 // pred_region
      // Predicated region
      $region25: #{lenet5_tt2_forward.4} parent=23 // pred_check
        %p128 = pneg %p29
      $region26: #{lenet5_tt2_forward.4} parent=23 // pred_check_branch
        %130 = sbr.rel (%p128) target = $region28
      $region27: #{lenet5_tt2_forward.4} parent=23 // pred_region
        %p131 = scmp.lt.s32.totalorder %s9, 1
        %s132 = scalar_select %p131, %s9, 1
        %s133 = smul.addr %s132, 400
        %s134 = smul.addr %s133, 4
        %s135 = scalar_lea.vmem %s0, %s134
      $region28: #{lenet5_tt2_forward.4} parent=23 // pred_fallthru
        _
    $region24: #{lenet5_tt2_forward.4} parent=5 // pred_fallthru
      _
    %p136 = scmp.le.s32.totalorder 1, %s9
    %p137 = scmp.lt.s32.totalorder %s9, 3
    %p138 = pnand %p136, %p137
    %p139 = pneg %p138
    // Predicated region
    $region29: #{lenet5_tt2_forward.4} parent=5 // pred_check
      _
    $region30: #{lenet5_tt2_forward.4} parent=5 // pred_check_branch
      %141 = sbr.rel (%p138) target = $region32
    $region31: #{lenet5_tt2_forward.4} parent=5 // pred_region
      %s142 = ssub.s32 %s9, 1
      %p143 = scmp.lt.s32.totalorder %s14, 1
      %s144 = scalar_select %p143, %s14, 1
      %s145 = smul.addr %s144, 400
      %s146 = smul.addr %s145, 4
      %s147 = scalar_lea.vmem %s0, %s146
      %p148 = pneg %p35
      %p149 = pneg %p32
      %p150 = pneg %p56
      %p151 = pneg %p53
      %p152 = pneg %p77
      %p153 = pneg %p74
      %p154 = pneg %p103
      %p155 = pneg %p100
      %p156 = scmp.lt.s32.totalorder %s14, 1
      %s157 = scalar_select %p156, %s14, 1
      %s158 = smul.addr %s157, 4
      %s159 = smul.addr %s158, 4
      %s160 = scalar_lea.vmem %s3, %s159
      %p161 = scmp.lt.s32.totalorder %s14, 1
      %s162 = scalar_select %p161, %s14, 1
      %s163 = smul.addr %s162, 400
      %s164 = smul.addr %s163, 4
      %s165 = scalar_lea.vmem %s0, %s164
      %p166 = scmp.lt.s32.totalorder %s14, 1
      %s167 = scalar_select %p166, %s14, 1
      %s168 = smul.addr %s167, 4
      %s169 = smul.addr %s168, 4
      %s170 = scalar_lea.vmem %s3, %s169
      %v172 = vld [vmem:[%s1] sm:$0xf]
      %v173 = vld [vmem:[%s1 + $0x4] sm:$0xf]
      %v174 = vld [vmem:[%s1 + $0x8] sm:$0xf]
      %v175 = vld [vmem:[%s1 + $0xc] sm:$0xf]
      %v176 = vld [vmem:[%s1 + $0x10] sm:$0xf]
      %v177 = vld [vmem:[%s1 + $0x14] sm:$0xf]
      %v178 = vld [vmem:[%s1 + $0x18] sm:$0xf]
      %v179 = vld [vmem:[%s1 + $0x1c] sm:$0xf]
      %v180 = vld [vmem:[%s1 + $0x20] sm:$0xf]
      %v181 = vld [vmem:[%s1 + $0x24] sm:$0xf]
      %v182 = vld [vmem:[%s1 + $0x28] sm:$0xf]
      %v183 = vld [vmem:[%s1 + $0x2c] sm:$0xf]
      %v184 = vld [vmem:[%s1 + $0x30] sm:$0xf]
      %v185 = vld [vmem:[%s1 + $0x34] sm:$0xf]
      %v186 = vld [vmem:[%s1 + $0x38] sm:$0xf]
      %v187 = vld [vmem:[%s1 + $0x3c] sm:$0xf]
      %v188 = vld [vmem:[%s1 + $0x40] sm:$0xf]
      %v189 = vld [vmem:[%s1 + $0x44] sm:$0xf]
      %v190 = vld [vmem:[%s1 + $0x48] sm:$0xf]
      %v191 = vld [vmem:[%s1 + $0x4c] sm:$0xf]
      %v192 = vld [vmem:[%s1 + $0x50] sm:$0xf]
      %v193 = vld [vmem:[%s1 + $0x54] sm:$0xf]
      %v194 = vld [vmem:[%s1 + $0x58] sm:$0xf]
      %v195 = vld [vmem:[%s1 + $0x5c] sm:$0xf]
      %v196 = vld [vmem:[%s1 + $0x60] sm:$0xf]
      %v197 = vld [vmem:[%s1 + $0x64] sm:$0xf]
      %v198 = vld [vmem:[%s1 + $0x68] sm:$0xf]
      %v199 = vld [vmem:[%s1 + $0x6c] sm:$0xf]
      %v200 = vld [vmem:[%s1 + $0x70] sm:$0xf]
      %v201 = vld [vmem:[%s1 + $0x74] sm:$0xf]
      %v202 = vld [vmem:[%s1 + $0x78] sm:$0xf]
      %v203 = vld [vmem:[%s1 + $0x7c] sm:$0xf]
      %v204 = vld [vmem:[%s1 + $0x80] sm:$0xf]
      %v205 = vld [vmem:[%s1 + $0x84] sm:$0xf]
      %v206 = vld [vmem:[%s1 + $0x88] sm:$0xf]
      %v207 = vld [vmem:[%s1 + $0x8c] sm:$0xf]
      %v208 = vld [vmem:[%s1 + $0x90] sm:$0xf]
      %v209 = vld [vmem:[%s1 + $0x94] sm:$0xf]
      %v210 = vld [vmem:[%s1 + $0x98] sm:$0xf]
      %v211 = vld [vmem:[%s1 + $0x9c] sm:$0xf]
      %v212 = vld [vmem:[%s1 + $0xa0] sm:$0xf]
      %v213 = vld [vmem:[%s1 + $0xa4] sm:$0xf]
      %v214 = vld [vmem:[%s1 + $0xa8] sm:$0xf]
      %v215 = vld [vmem:[%s1 + $0xac] sm:$0xf]
      %v216 = vld [vmem:[%s1 + $0xb0] sm:$0xf]
      %v217 = vld [vmem:[%s1 + $0xb4] sm:$0xf]
      %v218 = vld [vmem:[%s1 + $0xb8] sm:$0xf]
      %v219 = vld [vmem:[%s1 + $0xbc] sm:$0xf]
      %v220 = vld [vmem:[%s1 + $0xc0] sm:$0xf]
      %v221 = vld [vmem:[%s1 + $0xc4] sm:$0xf]
      %v222 = vld [vmem:[%s1 + $0xc8] sm:$0xf]
      %v223 = vld [vmem:[%s1 + $0xcc] sm:$0xf]
      %v224 = vld [vmem:[%s1 + $0xd0] sm:$0xf]
      %v225 = vld [vmem:[%s1 + $0xd4] sm:$0xf]
      %v226 = vld [vmem:[%s1 + $0xd8] sm:$0xf]
      %v227 = vld [vmem:[%s1 + $0xdc] sm:$0xf]
      %v228 = vld [vmem:[%s1 + $0xe0] sm:$0xf]
      %v229 = vld [vmem:[%s1 + $0xe4] sm:$0xf]
      %v230 = vld [vmem:[%s1 + $0xe8] sm:$0xf]
      %v231 = vld [vmem:[%s1 + $0xec] sm:$0xf]
      %v232 = vld [vmem:[%s1 + $0xf0] sm:$0xf]
      %v233 = vld [vmem:[%s1 + $0xf4] sm:$0xf]
      %v234 = vld [vmem:[%s1 + $0xf8] sm:$0xf]
      %v235 = vld [vmem:[%s1 + $0xfc] sm:$0xf]
      %v236 = vld [vmem:[%s1 + $0x100] sm:$0xf]
      %v237 = vld [vmem:[%s1 + $0x104] sm:$0xf]
      %v238 = vld [vmem:[%s1 + $0x108] sm:$0xf]
      %v239 = vld [vmem:[%s1 + $0x10c] sm:$0xf]
      %v240 = vld [vmem:[%s1 + $0x110] sm:$0xf]
      %v241 = vld [vmem:[%s1 + $0x114] sm:$0xf]
      %v242 = vld [vmem:[%s1 + $0x118] sm:$0xf]
      %v243 = vld [vmem:[%s1 + $0x11c] sm:$0xf]
      %v244 = vld [vmem:[%s1 + $0x120] sm:$0xf]
      %v245 = vld [vmem:[%s1 + $0x124] sm:$0xf]
      %v246 = vld [vmem:[%s1 + $0x128] sm:$0xf]
      %v247 = vld [vmem:[%s1 + $0x12c] sm:$0xf]
      %v248 = vld [vmem:[%s1 + $0x130] sm:$0xf]
      %v249 = vld [vmem:[%s1 + $0x134] sm:$0xf]
      %v250 = vld [vmem:[%s1 + $0x138] sm:$0xf]
      %v251 = vld [vmem:[%s1 + $0x13c] sm:$0xf]
      %v252 = vld [vmem:[%s1 + $0x140] sm:$0xf]
      %v253 = vld [vmem:[%s1 + $0x144] sm:$0xf]
      %v254 = vld [vmem:[%s1 + $0x148] sm:$0xf]
      %v255 = vld [vmem:[%s1 + $0x14c] sm:$0xf]
      %v256 = vld [vmem:[%s1 + $0x150] sm:$0xf]
      %v257 = vld [vmem:[%s1 + $0x154] sm:$0xf]
      %v258 = vld [vmem:[%s1 + $0x158] sm:$0xf]
      %v259 = vld [vmem:[%s1 + $0x15c] sm:$0xf]
      %v260 = vld [vmem:[%s1 + $0x160] sm:$0xf]
      %v261 = vld [vmem:[%s1 + $0x164] sm:$0xf]
      %v262 = vld [vmem:[%s1 + $0x168] sm:$0xf]
      %v263 = vld [vmem:[%s1 + $0x16c] sm:$0xf]
      %v264 = vld [vmem:[%s1 + $0x170] sm:$0xf]
      %v265 = vld [vmem:[%s1 + $0x174] sm:$0xf]
      %v266 = vld [vmem:[%s1 + $0x178] sm:$0xf]
      %v267 = vld [vmem:[%s1 + $0x17c] sm:$0xf]
      %v268 = vld [vmem:[%s1 + $0x180] sm:$0xf]
      %v269 = vld [vmem:[%s1 + $0x184] sm:$0xf]
      %v270 = vld [vmem:[%s1 + $0x188] sm:$0xf]
      %v271 = vld [vmem:[%s1 + $0x18c] sm:$0xf]
      %v272 = vld [vmem:[%s1 + $0x190] sm:$0xf]
      %v273 = vld [vmem:[%s1 + $0x194] sm:$0xf]
      %v274 = vld [vmem:[%s1 + $0x198] sm:$0xf]
      %v275 = vld [vmem:[%s1 + $0x19c] sm:$0xf]
      %v276 = vld [vmem:[%s1 + $0x1a0] sm:$0xf]
      %v277 = vld [vmem:[%s1 + $0x1a4] sm:$0xf]
      %v278 = vld [vmem:[%s1 + $0x1a8] sm:$0xf]
      %v279 = vld [vmem:[%s1 + $0x1ac] sm:$0xf]
      %v280 = vld [vmem:[%s1 + $0x1b0] sm:$0xf]
      %v281 = vld [vmem:[%s1 + $0x1b4] sm:$0xf]
      %v282 = vld [vmem:[%s1 + $0x1b8] sm:$0xf]
      %v283 = vld [vmem:[%s1 + $0x1bc] sm:$0xf]
      %v284 = vld [vmem:[%s1 + $0x1c0] sm:$0xf]
      %v285 = vld [vmem:[%s1 + $0x1c4] sm:$0xf]
      %v286 = vld [vmem:[%s1 + $0x1c8] sm:$0xf]
      %v287 = vld [vmem:[%s1 + $0x1cc] sm:$0xf]
      %v288 = vld [vmem:[%s1 + $0x1d0] sm:$0xf]
      %v289 = vld [vmem:[%s1 + $0x1d4] sm:$0xf]
      %v290 = vld [vmem:[%s1 + $0x1d8] sm:$0xf]
      %v291 = vld [vmem:[%s1 + $0x1dc] sm:$0xf]
      %v292 = vld [vmem:[%s1 + $0x1e0] sm:$0xf]
      %v293 = vld [vmem:[%s1 + $0x1e4] sm:$0xf]
      %v294 = vld [vmem:[%s1 + $0x1e8] sm:$0xf]
      %v295 = vld [vmem:[%s1 + $0x1ec] sm:$0xf]
      %v296 = vld [vmem:[%s1 + $0x1f0] sm:$0xf]
      %v297 = vld [vmem:[%s1 + $0x1f4] sm:$0xf]
      %v298 = vld [vmem:[%s1 + $0x1f8] sm:$0xf]
      %v299 = vld [vmem:[%s1 + $0x1fc] sm:$0xf]
      %v300 = vld [vmem:[%s1 + $0x200] sm:$0xf]
      %v301 = vld [vmem:[%s1 + $0x204] sm:$0xf]
      %v302 = vld [vmem:[%s1 + $0x208] sm:$0xf]
      %v303 = vld [vmem:[%s1 + $0x20c] sm:$0xf]
      %v304 = vld [vmem:[%s1 + $0x210] sm:$0xf]
      %v305 = vld [vmem:[%s1 + $0x214] sm:$0xf]
      %v306 = vld [vmem:[%s1 + $0x218] sm:$0xf]
      %v307 = vld [vmem:[%s1 + $0x21c] sm:$0xf]
      %v308 = vld [vmem:[%s1 + $0x220] sm:$0xf]
      %v309 = vld [vmem:[%s1 + $0x224] sm:$0xf]
      %v310 = vld [vmem:[%s1 + $0x228] sm:$0xf]
      %v311 = vld [vmem:[%s1 + $0x22c] sm:$0xf]
      %v312 = vld [vmem:[%s1 + $0x230] sm:$0xf]
      %v313 = vld [vmem:[%s1 + $0x234] sm:$0xf]
      %v314 = vld [vmem:[%s1 + $0x238] sm:$0xf]
      %v315 = vld [vmem:[%s1 + $0x23c] sm:$0xf]
      %v316 = vld [vmem:[%s1 + $0x240] sm:$0xf]
      %v317 = vld [vmem:[%s1 + $0x244] sm:$0xf]
      %v318 = vld [vmem:[%s1 + $0x248] sm:$0xf]
      %v319 = vld [vmem:[%s1 + $0x24c] sm:$0xf]
      %v320 = vld [vmem:[%s1 + $0x250] sm:$0xf]
      %v321 = vld [vmem:[%s1 + $0x254] sm:$0xf]
      %v322 = vld [vmem:[%s1 + $0x258] sm:$0xf]
      %v323 = vld [vmem:[%s1 + $0x25c] sm:$0xf]
      %v324 = vld [vmem:[%s1 + $0x260] sm:$0xf]
      %v325 = vld [vmem:[%s1 + $0x264] sm:$0xf]
      %v326 = vld [vmem:[%s1 + $0x268] sm:$0xf]
      %v327 = vld [vmem:[%s1 + $0x26c] sm:$0xf]
      %v328 = vld [vmem:[%s1 + $0x270] sm:$0xf]
      %v329 = vld [vmem:[%s1 + $0x274] sm:$0xf]
      %v330 = vld [vmem:[%s1 + $0x278] sm:$0xf]
      %v331 = vld [vmem:[%s1 + $0x27c] sm:$0xf]
      %v332 = vld [vmem:[%s1 + $0x280] sm:$0xf]
      %v333 = vld [vmem:[%s1 + $0x284] sm:$0xf]
      %v334 = vld [vmem:[%s1 + $0x288] sm:$0xf]
      %v335 = vld [vmem:[%s1 + $0x28c] sm:$0xf]
      %v336 = vld [vmem:[%s1 + $0x290] sm:$0xf]
      %v337 = vld [vmem:[%s1 + $0x294] sm:$0xf]
      %v338 = vld [vmem:[%s1 + $0x298] sm:$0xf]
      %v339 = vld [vmem:[%s1 + $0x29c] sm:$0xf]
      %v340 = vld [vmem:[%s1 + $0x2a0] sm:$0xf]
      %v341 = vld [vmem:[%s1 + $0x2a4] sm:$0xf]
      %v342 = vld [vmem:[%s1 + $0x2a8] sm:$0xf]
      %v343 = vld [vmem:[%s1 + $0x2ac] sm:$0xf]
      %v344 = vld [vmem:[%s1 + $0x2b0] sm:$0xf]
      %v345 = vld [vmem:[%s1 + $0x2b4] sm:$0xf]
      %v346 = vld [vmem:[%s1 + $0x2b8] sm:$0xf]
      %v347 = vld [vmem:[%s1 + $0x2bc] sm:$0xf]
      %v348 = vld [vmem:[%s1 + $0x2c0] sm:$0xf]
      %v349 = vld [vmem:[%s1 + $0x2c4] sm:$0xf]
      %v350 = vld [vmem:[%s1 + $0x2c8] sm:$0xf]
      %v351 = vld [vmem:[%s1 + $0x2cc] sm:$0xf]
      %v352 = vld [vmem:[%s1 + $0x2d0] sm:$0xf]
      %v353 = vld [vmem:[%s1 + $0x2d4] sm:$0xf]
      %v354 = vld [vmem:[%s1 + $0x2d8] sm:$0xf]
      %v355 = vld [vmem:[%s1 + $0x2dc] sm:$0xf]
      %v356 = vld [vmem:[%s1 + $0x2e0] sm:$0xf]
      %v357 = vld [vmem:[%s1 + $0x2e4] sm:$0xf]
      %v358 = vld [vmem:[%s1 + $0x2e8] sm:$0xf]
      %v359 = vld [vmem:[%s1 + $0x2ec] sm:$0xf]
      %v360 = vld [vmem:[%s1 + $0x2f0] sm:$0xf]
      %v361 = vld [vmem:[%s1 + $0x2f4] sm:$0xf]
      %v362 = vld [vmem:[%s1 + $0x2f8] sm:$0xf]
      %v363 = vld [vmem:[%s1 + $0x2fc] sm:$0xf]
      %v364 = vld [vmem:[%s1 + $0x300] sm:$0xf]
      %v365 = vld [vmem:[%s1 + $0x304] sm:$0xf]
      %v366 = vld [vmem:[%s1 + $0x308] sm:$0xf]
      %v367 = vld [vmem:[%s1 + $0x30c] sm:$0xf]
      %v368 = vld [vmem:[%s1 + $0x310] sm:$0xf]
      %v369 = vld [vmem:[%s1 + $0x314] sm:$0xf]
      %v370 = vld [vmem:[%s1 + $0x318] sm:$0xf]
      %v371 = vld [vmem:[%s1 + $0x31c] sm:$0xf]
      %v372 = vld [vmem:[%s1 + $0x320] sm:$0xf]
      %v373 = vld [vmem:[%s1 + $0x324] sm:$0xf]
      %v374 = vld [vmem:[%s1 + $0x328] sm:$0xf]
      %v375 = vld [vmem:[%s1 + $0x32c] sm:$0xf]
      %v376 = vld [vmem:[%s1 + $0x330] sm:$0xf]
      %v377 = vld [vmem:[%s1 + $0x334] sm:$0xf]
      %v378 = vld [vmem:[%s1 + $0x338] sm:$0xf]
      %v379 = vld [vmem:[%s1 + $0x33c] sm:$0xf]
      %v380 = vld [vmem:[%s1 + $0x340] sm:$0xf]
      %v381 = vld [vmem:[%s1 + $0x344] sm:$0xf]
      %v382 = vld [vmem:[%s1 + $0x348] sm:$0xf]
      %v383 = vld [vmem:[%s1 + $0x34c] sm:$0xf]
      %v384 = vld [vmem:[%s1 + $0x350] sm:$0xf]
      %v385 = vld [vmem:[%s1 + $0x354] sm:$0xf]
      %v386 = vld [vmem:[%s1 + $0x358] sm:$0xf]
      %v387 = vld [vmem:[%s1 + $0x35c] sm:$0xf]
      %v388 = vld [vmem:[%s1 + $0x360] sm:$0xf]
      %v389 = vld [vmem:[%s1 + $0x364] sm:$0xf]
      %v390 = vld [vmem:[%s1 + $0x368] sm:$0xf]
      %v391 = vld [vmem:[%s1 + $0x36c] sm:$0xf]
      %v392 = vld [vmem:[%s1 + $0x370] sm:$0xf]
      %v393 = vld [vmem:[%s1 + $0x374] sm:$0xf]
      %v394 = vld [vmem:[%s1 + $0x378] sm:$0xf]
      %v395 = vld [vmem:[%s1 + $0x37c] sm:$0xf]
      %v396 = vld [vmem:[%s1 + $0x380] sm:$0xf]
      %v397 = vld [vmem:[%s1 + $0x384] sm:$0xf]
      %v398 = vld [vmem:[%s1 + $0x388] sm:$0xf]
      %v399 = vld [vmem:[%s1 + $0x38c] sm:$0xf]
      %v400 = vld [vmem:[%s1 + $0x390] sm:$0xf]
      %v401 = vld [vmem:[%s1 + $0x394] sm:$0xf]
      %v402 = vld [vmem:[%s1 + $0x398] sm:$0xf]
      %v403 = vld [vmem:[%s1 + $0x39c] sm:$0xf]
      %v404 = vld [vmem:[%s1 + $0x3a0] sm:$0xf]
      %v405 = vld [vmem:[%s1 + $0x3a4] sm:$0xf]
      %v406 = vld [vmem:[%s1 + $0x3a8] sm:$0xf]
      %v407 = vld [vmem:[%s1 + $0x3ac] sm:$0xf]
      %v408 = vld [vmem:[%s1 + $0x3b0] sm:$0xf]
      %v409 = vld [vmem:[%s1 + $0x3b4] sm:$0xf]
      %v410 = vld [vmem:[%s1 + $0x3b8] sm:$0xf]
      %v411 = vld [vmem:[%s1 + $0x3bc] sm:$0xf]
      %v412 = vld [vmem:[%s1 + $0x3c0] sm:$0xf]
      %v413 = vld [vmem:[%s1 + $0x3c4] sm:$0xf]
      %v414 = vld [vmem:[%s1 + $0x3c8] sm:$0xf]
      %v415 = vld [vmem:[%s1 + $0x3cc] sm:$0xf]
      %v416 = vld [vmem:[%s1 + $0x3d0] sm:$0xf]
      %v417 = vld [vmem:[%s1 + $0x3d4] sm:$0xf]
      %v418 = vld [vmem:[%s1 + $0x3d8] sm:$0xf]
      %v419 = vld [vmem:[%s1 + $0x3dc] sm:$0xf]
      %v420 = vld [vmem:[%s1 + $0x3e0] sm:$0xf]
      %v421 = vld [vmem:[%s1 + $0x3e4] sm:$0xf]
      %v422 = vld [vmem:[%s1 + $0x3e8] sm:$0xf]
      %v423 = vld [vmem:[%s1 + $0x3ec] sm:$0xf]
      %v424 = vld [vmem:[%s1 + $0x3f0] sm:$0xf]
      %v425 = vld [vmem:[%s1 + $0x3f4] sm:$0xf]
      %v426 = vld [vmem:[%s1 + $0x3f8] sm:$0xf]
      %v427 = vld [vmem:[%s1 + $0x3fc] sm:$0xf]
      %v428 = vld [vmem:[%s1 + $0x400] sm:$0xf]
      %v429 = vld [vmem:[%s1 + $0x404] sm:$0xf]
      %v430 = vld [vmem:[%s1 + $0x408] sm:$0xf]
      %v431 = vld [vmem:[%s1 + $0x40c] sm:$0xf]
      %v432 = vld [vmem:[%s1 + $0x410] sm:$0xf]
      %v433 = vld [vmem:[%s1 + $0x414] sm:$0xf]
      %v434 = vld [vmem:[%s1 + $0x418] sm:$0xf]
      %v435 = vld [vmem:[%s1 + $0x41c] sm:$0xf]
      %v436 = vld [vmem:[%s1 + $0x420] sm:$0xf]
      %v437 = vld [vmem:[%s1 + $0x424] sm:$0xf]
      %v438 = vld [vmem:[%s1 + $0x428] sm:$0xf]
      %v439 = vld [vmem:[%s1 + $0x42c] sm:$0xf]
      %v440 = vld [vmem:[%s1 + $0x430] sm:$0xf]
      %v441 = vld [vmem:[%s1 + $0x434] sm:$0xf]
      %v442 = vld [vmem:[%s1 + $0x438] sm:$0xf]
      %v443 = vld [vmem:[%s1 + $0x43c] sm:$0xf]
      %v444 = vld [vmem:[%s1 + $0x440] sm:$0xf]
      %v445 = vld [vmem:[%s1 + $0x444] sm:$0xf]
      %v446 = vld [vmem:[%s1 + $0x448] sm:$0xf]
      %v447 = vld [vmem:[%s1 + $0x44c] sm:$0xf]
      %v448 = vld [vmem:[%s1 + $0x450] sm:$0xf]
      %v449 = vld [vmem:[%s1 + $0x454] sm:$0xf]
      %v450 = vld [vmem:[%s1 + $0x458] sm:$0xf]
      %v451 = vld [vmem:[%s1 + $0x45c] sm:$0xf]
      %v452 = vld [vmem:[%s1 + $0x460] sm:$0xf]
      %v453 = vld [vmem:[%s1 + $0x464] sm:$0xf]
      %v454 = vld [vmem:[%s1 + $0x468] sm:$0xf]
      %v455 = vld [vmem:[%s1 + $0x46c] sm:$0xf]
      %v456 = vld [vmem:[%s1 + $0x470] sm:$0xf]
      %v457 = vld [vmem:[%s1 + $0x474] sm:$0xf]
      %v458 = vld [vmem:[%s1 + $0x478] sm:$0xf]
      %v459 = vld [vmem:[%s1 + $0x47c] sm:$0xf]
      %v460 = vld [vmem:[%s1 + $0x480] sm:$0xf]
      %v461 = vld [vmem:[%s1 + $0x484] sm:$0xf]
      %v462 = vld [vmem:[%s1 + $0x488] sm:$0xf]
      %v463 = vld [vmem:[%s1 + $0x48c] sm:$0xf]
      %v464 = vld [vmem:[%s1 + $0x490] sm:$0xf]
      %v465 = vld [vmem:[%s1 + $0x494] sm:$0xf]
      %v466 = vld [vmem:[%s1 + $0x498] sm:$0xf]
      %v467 = vld [vmem:[%s1 + $0x49c] sm:$0xf]
      %v468 = vld [vmem:[%s1 + $0x4a0] sm:$0xf]
      %v469 = vld [vmem:[%s1 + $0x4a4] sm:$0xf]
      %v470 = vld [vmem:[%s1 + $0x4a8] sm:$0xf]
      %v471 = vld [vmem:[%s1 + $0x4ac] sm:$0xf]
      %v472 = vld [vmem:[%s1 + $0x4b0] sm:$0xf]
      %v473 = vld [vmem:[%s1 + $0x4b4] sm:$0xf]
      %v474 = vld [vmem:[%s1 + $0x4b8] sm:$0xf]
      %v475 = vld [vmem:[%s1 + $0x4bc] sm:$0xf]
      %v476 = vld [vmem:[%s1 + $0x4c0] sm:$0xf]
      %v477 = vld [vmem:[%s1 + $0x4c4] sm:$0xf]
      %v478 = vld [vmem:[%s1 + $0x4c8] sm:$0xf]
      %v479 = vld [vmem:[%s1 + $0x4cc] sm:$0xf]
      %v480 = vld [vmem:[%s1 + $0x4d0] sm:$0xf]
      %v481 = vld [vmem:[%s1 + $0x4d4] sm:$0xf]
      %v482 = vld [vmem:[%s1 + $0x4d8] sm:$0xf]
      %v483 = vld [vmem:[%s1 + $0x4dc] sm:$0xf]
      %v484 = vld [vmem:[%s1 + $0x4e0] sm:$0xf]
      %v485 = vld [vmem:[%s1 + $0x4e4] sm:$0xf]
      %v486 = vld [vmem:[%s1 + $0x4e8] sm:$0xf]
      %v487 = vld [vmem:[%s1 + $0x4ec] sm:$0xf]
      %v488 = vld [vmem:[%s1 + $0x4f0] sm:$0xf]
      %v489 = vld [vmem:[%s1 + $0x4f4] sm:$0xf]
      %v490 = vld [vmem:[%s1 + $0x4f8] sm:$0xf]
      %v491 = vld [vmem:[%s1 + $0x4fc] sm:$0xf]
      %v492 = vld [vmem:[%s1 + $0x500] sm:$0xf]
      %v493 = vld [vmem:[%s1 + $0x504] sm:$0xf]
      %v494 = vld [vmem:[%s1 + $0x508] sm:$0xf]
      %v495 = vld [vmem:[%s1 + $0x50c] sm:$0xf]
      %v496 = vld [vmem:[%s1 + $0x510] sm:$0xf]
      %v497 = vld [vmem:[%s1 + $0x514] sm:$0xf]
      %v498 = vld [vmem:[%s1 + $0x518] sm:$0xf]
      %v499 = vld [vmem:[%s1 + $0x51c] sm:$0xf]
      %v500 = vld [vmem:[%s1 + $0x520] sm:$0xf]
      %v501 = vld [vmem:[%s1 + $0x524] sm:$0xf]
      %v502 = vld [vmem:[%s1 + $0x528] sm:$0xf]
      %v503 = vld [vmem:[%s1 + $0x52c] sm:$0xf]
      %v504 = vld [vmem:[%s1 + $0x530] sm:$0xf]
      %v505 = vld [vmem:[%s1 + $0x534] sm:$0xf]
      %v506 = vld [vmem:[%s1 + $0x538] sm:$0xf]
      %v507 = vld [vmem:[%s1 + $0x53c] sm:$0xf]
      %v508 = vld [vmem:[%s1 + $0x540] sm:$0xf]
      %v509 = vld [vmem:[%s1 + $0x544] sm:$0xf]
      %v510 = vld [vmem:[%s1 + $0x548] sm:$0xf]
      %v511 = vld [vmem:[%s1 + $0x54c] sm:$0xf]
      %v512 = vld [vmem:[%s1 + $0x550] sm:$0xf]
      %v513 = vld [vmem:[%s1 + $0x554] sm:$0xf]
      %v514 = vld [vmem:[%s1 + $0x558] sm:$0xf]
      %v515 = vld [vmem:[%s1 + $0x55c] sm:$0xf]
      %v516 = vld [vmem:[%s1 + $0x560] sm:$0xf]
      %v517 = vld [vmem:[%s1 + $0x564] sm:$0xf]
      %v518 = vld [vmem:[%s1 + $0x568] sm:$0xf]
      %v519 = vld [vmem:[%s1 + $0x56c] sm:$0xf]
      %v520 = vld [vmem:[%s1 + $0x570] sm:$0xf]
      %v521 = vld [vmem:[%s1 + $0x574] sm:$0xf]
      %v522 = vld [vmem:[%s1 + $0x578] sm:$0xf]
      %v523 = vld [vmem:[%s1 + $0x57c] sm:$0xf]
      %v524 = vld [vmem:[%s1 + $0x580] sm:$0xf]
      %v525 = vld [vmem:[%s1 + $0x584] sm:$0xf]
      %v526 = vld [vmem:[%s1 + $0x588] sm:$0xf]
      %v527 = vld [vmem:[%s1 + $0x58c] sm:$0xf]
      %v528 = vld [vmem:[%s1 + $0x590] sm:$0xf]
      %v529 = vld [vmem:[%s1 + $0x594] sm:$0xf]
      %v530 = vld [vmem:[%s1 + $0x598] sm:$0xf]
      %v531 = vld [vmem:[%s1 + $0x59c] sm:$0xf]
      %v532 = vld [vmem:[%s1 + $0x5a0] sm:$0xf]
      %v533 = vld [vmem:[%s1 + $0x5a4] sm:$0xf]
      %v534 = vld [vmem:[%s1 + $0x5a8] sm:$0xf]
      %v535 = vld [vmem:[%s1 + $0x5ac] sm:$0xf]
      %v536 = vld [vmem:[%s1 + $0x5b0] sm:$0xf]
      %v537 = vld [vmem:[%s1 + $0x5b4] sm:$0xf]
      %v538 = vld [vmem:[%s1 + $0x5b8] sm:$0xf]
      %v539 = vld [vmem:[%s1 + $0x5bc] sm:$0xf]
      %v540 = vld [vmem:[%s1 + $0x5c0] sm:$0xf]
      %v541 = vld [vmem:[%s1 + $0x5c4] sm:$0xf]
      %v542 = vld [vmem:[%s1 + $0x5c8] sm:$0xf]
      %v543 = vld [vmem:[%s1 + $0x5cc] sm:$0xf]
      %v544 = vld [vmem:[%s1 + $0x5d0] sm:$0xf]
      %v545 = vld [vmem:[%s1 + $0x5d4] sm:$0xf]
      %v546 = vld [vmem:[%s1 + $0x5d8] sm:$0xf]
      %v547 = vld [vmem:[%s1 + $0x5dc] sm:$0xf]
      %v548 = vld [vmem:[%s1 + $0x5e0] sm:$0xf]
      %v549 = vld [vmem:[%s1 + $0x5e4] sm:$0xf]
      %v550 = vld [vmem:[%s1 + $0x5e8] sm:$0xf]
      %v551 = vld [vmem:[%s1 + $0x5ec] sm:$0xf]
      %v552 = vld [vmem:[%s1 + $0x5f0] sm:$0xf]
      %v553 = vld [vmem:[%s1 + $0x5f4] sm:$0xf]
      %v554 = vld [vmem:[%s1 + $0x5f8] sm:$0xf]
      %v555 = vld [vmem:[%s1 + $0x5fc] sm:$0xf]
      %v556 = vld [vmem:[%s1 + $0x600] sm:$0xf]
      %v557 = vld [vmem:[%s1 + $0x604] sm:$0xf]
      %v558 = vld [vmem:[%s1 + $0x608] sm:$0xf]
      %v559 = vld [vmem:[%s1 + $0x60c] sm:$0xf]
      %v560 = vld [vmem:[%s1 + $0x610] sm:$0xf]
      %v561 = vld [vmem:[%s1 + $0x614] sm:$0xf]
      %v562 = vld [vmem:[%s1 + $0x618] sm:$0xf]
      %v563 = vld [vmem:[%s1 + $0x61c] sm:$0xf]
      %v564 = vld [vmem:[%s1 + $0x620] sm:$0xf]
      %v565 = vld [vmem:[%s1 + $0x624] sm:$0xf]
      %v566 = vld [vmem:[%s1 + $0x628] sm:$0xf]
      %v567 = vld [vmem:[%s1 + $0x62c] sm:$0xf]
      %v568 = vld [vmem:[%s1 + $0x630] sm:$0xf]
      %v569 = vld [vmem:[%s1 + $0x634] sm:$0xf]
      %v570 = vld [vmem:[%s1 + $0x638] sm:$0xf]
      %v571 = vld [vmem:[%s1 + $0x63c] sm:$0xf]
      %v572 = vld [vmem:[%s165] sm:$0xff]
      %v573 = vld [vmem:[%s165 + $0x8] sm:$0xff]
      %v574 = vld [vmem:[%s165 + $0x10] sm:$0xff]
      %v575 = vld [vmem:[%s165 + $0x18] sm:$0xff]
      %v576 = vld [vmem:[%s165 + $0x20] sm:$0xff]
      %v577 = vld [vmem:[%s165 + $0x28] sm:$0xff]
      %v578 = vld [vmem:[%s165 + $0x30] sm:$0xff]
      %v579 = vld [vmem:[%s165 + $0x38] sm:$0xff]
      %v580 = vld [vmem:[%s165 + $0x40] sm:$0xff]
      %v581 = vld [vmem:[%s165 + $0x48] sm:$0xff]
      %v582 = vld [vmem:[%s165 + $0x50] sm:$0xff]
      %v583 = vld [vmem:[%s165 + $0x58] sm:$0xff]
      %v584 = vld [vmem:[%s165 + $0x60] sm:$0xf]
      %v585 = vld [vmem:[%s165 + $0x64] sm:$0xff]
      %v586 = vld [vmem:[%s165 + $0x6c] sm:$0xff]
      %v587 = vld [vmem:[%s165 + $0x74] sm:$0xff]
      %v588 = vld [vmem:[%s165 + $0x7c] sm:$0xff]
      %v589 = vld [vmem:[%s165 + $0x84] sm:$0xff]
      %v590 = vld [vmem:[%s165 + $0x8c] sm:$0xff]
      %v591 = vld [vmem:[%s165 + $0x94] sm:$0xff]
      %v592 = vld [vmem:[%s165 + $0x9c] sm:$0xff]
      %v593 = vld [vmem:[%s165 + $0xa4] sm:$0xff]
      %v594 = vld [vmem:[%s165 + $0xac] sm:$0xff]
      %v595 = vld [vmem:[%s165 + $0xb4] sm:$0xff]
      %v596 = vld [vmem:[%s165 + $0xbc] sm:$0xff]
      %v597 = vld [vmem:[%s165 + $0xc4] sm:$0xf]
      %v598 = vld [vmem:[%s165 + $0xc8] sm:$0xff]
      %v599 = vld [vmem:[%s165 + $0xd0] sm:$0xff]
      %v600 = vld [vmem:[%s165 + $0xd8] sm:$0xff]
      %v601 = vld [vmem:[%s165 + $0xe0] sm:$0xff]
      %v602 = vld [vmem:[%s165 + $0xe8] sm:$0xff]
      %v603 = vld [vmem:[%s165 + $0xf0] sm:$0xff]
      %v604 = vld [vmem:[%s165 + $0xf8] sm:$0xff]
      %v605 = vld [vmem:[%s165 + $0x100] sm:$0xff]
      %v606 = vld [vmem:[%s165 + $0x108] sm:$0xff]
      %v607 = vld [vmem:[%s165 + $0x110] sm:$0xff]
      %v608 = vld [vmem:[%s165 + $0x118] sm:$0xff]
      %v609 = vld [vmem:[%s165 + $0x120] sm:$0xff]
      %v610 = vld [vmem:[%s165 + $0x128] sm:$0xf]
      %v611 = vld [vmem:[%s165 + $0x12c] sm:$0x11]
      %v612 = vld [vmem:[%s165 + $0x134] sm:$0x11]
      %v613 = vld [vmem:[%s165 + $0x13c] sm:$0x11]
      %v614 = vld [vmem:[%s165 + $0x144] sm:$0x11]
      %v615 = vld [vmem:[%s165 + $0x14c] sm:$0x11]
      %v616 = vld [vmem:[%s165 + $0x154] sm:$0x11]
      %v617 = vld [vmem:[%s165 + $0x15c] sm:$0x11]
      %v618 = vld [vmem:[%s165 + $0x164] sm:$0x11]
      %v619 = vld [vmem:[%s165 + $0x16c] sm:$0x11]
      %v620 = vld [vmem:[%s165 + $0x174] sm:$0x11]
      %v621 = vld [vmem:[%s165 + $0x17c] sm:$0x11]
      %v622 = vld [vmem:[%s165 + $0x184] sm:$0x11]
      %v623 = vld [vmem:[%s165 + $0x18c] sm:$0x1]
      %v676 = vunpack.c.l.b16 %v572
      %v677 = vunpack.c.h.b16 %v572
      %v678 = vunpack.c.l.b16 %v573
      %v679 = vunpack.c.h.b16 %v573
      %v680 = vunpack.c.l.b16 %v574
      %v681 = vunpack.c.h.b16 %v574
      %v682 = vunpack.c.l.b16 %v575
      %v683 = vunpack.c.h.b16 %v575
      %v684 = vunpack.c.l.b16 %v576
      %v685 = vunpack.c.h.b16 %v576
      %v686 = vunpack.c.l.b16 %v577
      %v687 = vunpack.c.h.b16 %v577
      %v688 = vunpack.c.l.b16 %v578
      %v689 = vunpack.c.h.b16 %v578
      %v690 = vunpack.c.l.b16 %v579
      %v691 = vunpack.c.h.b16 %v579
      %v692 = vunpack.c.l.b16 %v580
      %v693 = vunpack.c.h.b16 %v580
      %v694 = vunpack.c.l.b16 %v581
      %v695 = vunpack.c.h.b16 %v581
      %v696 = vunpack.c.l.b16 %v582
      %v697 = vunpack.c.h.b16 %v582
      %v698 = vunpack.c.l.b16 %v583
      %v699 = vunpack.c.h.b16 %v583
      %v700 = vunpack.c.l.b16 %v584
      %v701 = vunpack.c.l.b16 %v585
      %v702 = vunpack.c.h.b16 %v585
      %v703 = vunpack.c.l.b16 %v586
      %v704 = vunpack.c.h.b16 %v586
      %v705 = vunpack.c.l.b16 %v587
      %v706 = vunpack.c.h.b16 %v587
      %v707 = vunpack.c.l.b16 %v588
      %v708 = vunpack.c.h.b16 %v588
      %v709 = vunpack.c.l.b16 %v589
      %v710 = vunpack.c.h.b16 %v589
      %v711 = vunpack.c.l.b16 %v590
      %v712 = vunpack.c.h.b16 %v590
      %v713 = vunpack.c.l.b16 %v591
      %v714 = vunpack.c.h.b16 %v591
      %v715 = vunpack.c.l.b16 %v592
      %v716 = vunpack.c.h.b16 %v592
      %v717 = vunpack.c.l.b16 %v593
      %v718 = vunpack.c.h.b16 %v593
      %v719 = vunpack.c.l.b16 %v594
      %v720 = vunpack.c.h.b16 %v594
      %v721 = vunpack.c.l.b16 %v595
      %v722 = vunpack.c.h.b16 %v595
      %v723 = vunpack.c.l.b16 %v596
      %v724 = vunpack.c.h.b16 %v596
      %v725 = vunpack.c.l.b16 %v597
      %v726 = vunpack.c.l.b16 %v598
      %v727 = vunpack.c.h.b16 %v598
      %v728 = vunpack.c.l.b16 %v599
      %v729 = vunpack.c.h.b16 %v599
      %v730 = vunpack.c.l.b16 %v600
      %v731 = vunpack.c.h.b16 %v600
      %v732 = vunpack.c.l.b16 %v601
      %v733 = vunpack.c.h.b16 %v601
      %v734 = vunpack.c.l.b16 %v602
      %v735 = vunpack.c.h.b16 %v602
      %v736 = vunpack.c.l.b16 %v603
      %v737 = vunpack.c.h.b16 %v603
      %v738 = vunpack.c.l.b16 %v604
      %v739 = vunpack.c.h.b16 %v604
      %v740 = vunpack.c.l.b16 %v605
      %v741 = vunpack.c.h.b16 %v605
      %v742 = vunpack.c.l.b16 %v606
      %v743 = vunpack.c.h.b16 %v606
      %v744 = vunpack.c.l.b16 %v607
      %v745 = vunpack.c.h.b16 %v607
      %v746 = vunpack.c.l.b16 %v608
      %v747 = vunpack.c.h.b16 %v608
      %v748 = vunpack.c.l.b16 %v609
      %v749 = vunpack.c.h.b16 %v609
      %v750 = vunpack.c.l.b16 %v610
      %v751 = vunpack.c.l.b16 %v611
      %v752 = vunpack.c.h.b16 %v611
      %v753 = vunpack.c.l.b16 %v612
      %v754 = vunpack.c.h.b16 %v612
      %v755 = vunpack.c.l.b16 %v613
      %v756 = vunpack.c.h.b16 %v613
      %v757 = vunpack.c.l.b16 %v614
      %v758 = vunpack.c.h.b16 %v614
      %v759 = vunpack.c.l.b16 %v615
      %v760 = vunpack.c.h.b16 %v615
      %v761 = vunpack.c.l.b16 %v616
      %v762 = vunpack.c.h.b16 %v616
      %v763 = vunpack.c.l.b16 %v617
      %v764 = vunpack.c.h.b16 %v617
      %v765 = vunpack.c.l.b16 %v618
      %v766 = vunpack.c.h.b16 %v618
      %v767 = vunpack.c.l.b16 %v619
      %v768 = vunpack.c.h.b16 %v619
      %v769 = vunpack.c.l.b16 %v620
      %v770 = vunpack.c.h.b16 %v620
      %v771 = vunpack.c.l.b16 %v621
      %v772 = vunpack.c.h.b16 %v621
      %v773 = vunpack.c.l.b16 %v622
      %v774 = vunpack.c.h.b16 %v622
      %v775 = vunpack.c.l.b16 %v623
      %v776 = vpack.c.b16 %v701, %v676
      %v777 = vpack.c.b16 %v702, %v677
      %v778 = vpack.c.b16 %v703, %v678
      %v779 = vpack.c.b16 %v704, %v679
      %v780 = vpack.c.b16 %v705, %v680
      %v781 = vpack.c.b16 %v706, %v681
      %v782 = vpack.c.b16 %v707, %v682
      %v783 = vpack.c.b16 %v708, %v683
      %v784 = vpack.c.b16 %v709, %v684
      %v785 = vpack.c.b16 %v710, %v685
      %v786 = vpack.c.b16 %v711, %v686
      %v787 = vpack.c.b16 %v712, %v687
      %v788 = vpack.c.b16 %v713, %v688
      %v789 = vpack.c.b16 %v714, %v689
      %v790 = vpack.c.b16 %v715, %v690
      %v791 = vpack.c.b16 %v716, %v691
      %v792 = vpack.c.b16 %v717, %v692
      %v793 = vpack.c.b16 %v718, %v693
      %v794 = vpack.c.b16 %v719, %v694
      %v795 = vpack.c.b16 %v720, %v695
      %v796 = vpack.c.b16 %v721, %v696
      %v797 = vpack.c.b16 %v722, %v697
      %v798 = vpack.c.b16 %v723, %v698
      %v799 = vpack.c.b16 %v724, %v699
      %v800 = vpack.c.b16 %v725, %v700
      %v801 = vpack.c.b16 %v751, %v726
      %v802 = vpack.c.b16 %v752, %v727
      %v803 = vpack.c.b16 %v753, %v728
      %v804 = vpack.c.b16 %v754, %v729
      %v805 = vpack.c.b16 %v755, %v730
      %v806 = vpack.c.b16 %v756, %v731
      %v807 = vpack.c.b16 %v757, %v732
      %v808 = vpack.c.b16 %v758, %v733
      %v809 = vpack.c.b16 %v759, %v734
      %v810 = vpack.c.b16 %v760, %v735
      %v811 = vpack.c.b16 %v761, %v736
      %v812 = vpack.c.b16 %v762, %v737
      %v813 = vpack.c.b16 %v763, %v738
      %v814 = vpack.c.b16 %v764, %v739
      %v815 = vpack.c.b16 %v765, %v740
      %v816 = vpack.c.b16 %v766, %v741
      %v817 = vpack.c.b16 %v767, %v742
      %v818 = vpack.c.b16 %v768, %v743
      %v819 = vpack.c.b16 %v769, %v744
      %v820 = vpack.c.b16 %v770, %v745
      %v821 = vpack.c.b16 %v771, %v746
      %v822 = vpack.c.b16 %v772, %v747
      %v823 = vpack.c.b16 %v773, %v748
      %v824 = vpack.c.b16 %v774, %v749
      %v825 = vpack.c.b16 %v775, %v750
      %v1276 = vunpack.c.l.b16 %v172
      %v1277 = vunpack.c.l.b16 %v173
      %v1278 = vunpack.c.l.b16 %v174
      %v1279 = vunpack.c.l.b16 %v175
      %v1280 = vunpack.c.l.b16 %v176
      %v1281 = vunpack.c.l.b16 %v177
      %v1282 = vunpack.c.l.b16 %v178
      %v1283 = vunpack.c.l.b16 %v179
      %v1284 = vunpack.c.l.b16 %v180
      %v1285 = vunpack.c.l.b16 %v181
      %v1286 = vunpack.c.l.b16 %v182
      %v1287 = vunpack.c.l.b16 %v183
      %v1288 = vunpack.c.l.b16 %v184
      %v1289 = vunpack.c.l.b16 %v185
      %v1290 = vunpack.c.l.b16 %v186
      %v1291 = vunpack.c.l.b16 %v187
      %v1292 = vunpack.c.l.b16 %v188
      %v1293 = vunpack.c.l.b16 %v189
      %v1294 = vunpack.c.l.b16 %v190
      %v1295 = vunpack.c.l.b16 %v191
      %v1296 = vunpack.c.l.b16 %v192
      %v1297 = vunpack.c.l.b16 %v193
      %v1298 = vunpack.c.l.b16 %v194
      %v1299 = vunpack.c.l.b16 %v195
      %v1300 = vunpack.c.l.b16 %v196
      %v1301 = vunpack.c.l.b16 %v197
      %v1302 = vunpack.c.l.b16 %v198
      %v1303 = vunpack.c.l.b16 %v199
      %v1304 = vunpack.c.l.b16 %v200
      %v1305 = vunpack.c.l.b16 %v201
      %v1306 = vunpack.c.l.b16 %v202
      %v1307 = vunpack.c.l.b16 %v203
      %v1308 = vunpack.c.l.b16 %v204
      %v1309 = vunpack.c.l.b16 %v205
      %v1310 = vunpack.c.l.b16 %v206
      %v1311 = vunpack.c.l.b16 %v207
      %v1312 = vunpack.c.l.b16 %v208
      %v1313 = vunpack.c.l.b16 %v209
      %v1314 = vunpack.c.l.b16 %v210
      %v1315 = vunpack.c.l.b16 %v211
      %v1316 = vunpack.c.l.b16 %v212
      %v1317 = vunpack.c.l.b16 %v213
      %v1318 = vunpack.c.l.b16 %v214
      %v1319 = vunpack.c.l.b16 %v215
      %v1320 = vunpack.c.l.b16 %v216
      %v1321 = vunpack.c.l.b16 %v217
      %v1322 = vunpack.c.l.b16 %v218
      %v1323 = vunpack.c.l.b16 %v219
      %v1324 = vunpack.c.l.b16 %v220
      %v1325 = vunpack.c.l.b16 %v221
      %v1326 = vunpack.c.l.b16 %v222
      %v1327 = vunpack.c.l.b16 %v223
      %v1328 = vunpack.c.l.b16 %v224
      %v1329 = vunpack.c.l.b16 %v225
      %v1330 = vunpack.c.l.b16 %v226
      %v1331 = vunpack.c.l.b16 %v227
      %v1332 = vunpack.c.l.b16 %v228
      %v1333 = vunpack.c.l.b16 %v229
      %v1334 = vunpack.c.l.b16 %v230
      %v1335 = vunpack.c.l.b16 %v231
      %v1336 = vunpack.c.l.b16 %v232
      %v1337 = vunpack.c.l.b16 %v233
      %v1338 = vunpack.c.l.b16 %v234
      %v1339 = vunpack.c.l.b16 %v235
      %v1340 = vunpack.c.l.b16 %v236
      %v1341 = vunpack.c.l.b16 %v237
      %v1342 = vunpack.c.l.b16 %v238
      %v1343 = vunpack.c.l.b16 %v239
      %v1344 = vunpack.c.l.b16 %v240
      %v1345 = vunpack.c.l.b16 %v241
      %v1346 = vunpack.c.l.b16 %v242
      %v1347 = vunpack.c.l.b16 %v243
      %v1348 = vunpack.c.l.b16 %v244
      %v1349 = vunpack.c.l.b16 %v245
      %v1350 = vunpack.c.l.b16 %v246
      %v1351 = vunpack.c.l.b16 %v247
      %v1352 = vunpack.c.l.b16 %v248
      %v1353 = vunpack.c.l.b16 %v249
      %v1354 = vunpack.c.l.b16 %v250
      %v1355 = vunpack.c.l.b16 %v251
      %v1356 = vunpack.c.l.b16 %v252
      %v1357 = vunpack.c.l.b16 %v253
      %v1358 = vunpack.c.l.b16 %v254
      %v1359 = vunpack.c.l.b16 %v255
      %v1360 = vunpack.c.l.b16 %v256
      %v1361 = vunpack.c.l.b16 %v257
      %v1362 = vunpack.c.l.b16 %v258
      %v1363 = vunpack.c.l.b16 %v259
      %v1364 = vunpack.c.l.b16 %v260
      %v1365 = vunpack.c.l.b16 %v261
      %v1366 = vunpack.c.l.b16 %v262
      %v1367 = vunpack.c.l.b16 %v263
      %v1368 = vunpack.c.l.b16 %v264
      %v1369 = vunpack.c.l.b16 %v265
      %v1370 = vunpack.c.l.b16 %v266
      %v1371 = vunpack.c.l.b16 %v267
      %v1372 = vunpack.c.l.b16 %v268
      %v1373 = vunpack.c.l.b16 %v269
      %v1374 = vunpack.c.l.b16 %v270
      %v1375 = vunpack.c.l.b16 %v271
      %v1376 = vunpack.c.l.b16 %v272
      %v1377 = vunpack.c.l.b16 %v273
      %v1378 = vunpack.c.l.b16 %v274
      %v1379 = vunpack.c.l.b16 %v275
      %v1380 = vunpack.c.l.b16 %v276
      %v1381 = vunpack.c.l.b16 %v277
      %v1382 = vunpack.c.l.b16 %v278
      %v1383 = vunpack.c.l.b16 %v279
      %v1384 = vunpack.c.l.b16 %v280
      %v1385 = vunpack.c.l.b16 %v281
      %v1386 = vunpack.c.l.b16 %v282
      %v1387 = vunpack.c.l.b16 %v283
      %v1388 = vunpack.c.l.b16 %v284
      %v1389 = vunpack.c.l.b16 %v285
      %v1390 = vunpack.c.l.b16 %v286
      %v1391 = vunpack.c.l.b16 %v287
      %v1392 = vunpack.c.l.b16 %v288
      %v1393 = vunpack.c.l.b16 %v289
      %v1394 = vunpack.c.l.b16 %v290
      %v1395 = vunpack.c.l.b16 %v291
      %v1396 = vunpack.c.l.b16 %v292
      %v1397 = vunpack.c.l.b16 %v293
      %v1398 = vunpack.c.l.b16 %v294
      %v1399 = vunpack.c.l.b16 %v295
      %v1400 = vunpack.c.l.b16 %v296
      %v1401 = vunpack.c.l.b16 %v297
      %v1402 = vunpack.c.l.b16 %v298
      %v1403 = vunpack.c.l.b16 %v299
      %v1404 = vunpack.c.l.b16 %v300
      %v1405 = vunpack.c.l.b16 %v301
      %v1406 = vunpack.c.l.b16 %v302
      %v1407 = vunpack.c.l.b16 %v303
      %v1408 = vunpack.c.l.b16 %v304
      %v1409 = vunpack.c.l.b16 %v305
      %v1410 = vunpack.c.l.b16 %v306
      %v1411 = vunpack.c.l.b16 %v307
      %v1412 = vunpack.c.l.b16 %v308
      %v1413 = vunpack.c.l.b16 %v309
      %v1414 = vunpack.c.l.b16 %v310
      %v1415 = vunpack.c.l.b16 %v311
      %v1416 = vunpack.c.l.b16 %v312
      %v1417 = vunpack.c.l.b16 %v313
      %v1418 = vunpack.c.l.b16 %v314
      %v1419 = vunpack.c.l.b16 %v315
      %v1420 = vunpack.c.l.b16 %v316
      %v1421 = vunpack.c.l.b16 %v317
      %v1422 = vunpack.c.l.b16 %v318
      %v1423 = vunpack.c.l.b16 %v319
      %v1424 = vunpack.c.l.b16 %v320
      %v1425 = vunpack.c.l.b16 %v321
      %v1426 = vunpack.c.l.b16 %v322
      %v1427 = vunpack.c.l.b16 %v323
      %v1428 = vunpack.c.l.b16 %v324
      %v1429 = vunpack.c.l.b16 %v325
      %v1430 = vunpack.c.l.b16 %v326
      %v1431 = vunpack.c.l.b16 %v327
      %v1432 = vunpack.c.l.b16 %v328
      %v1433 = vunpack.c.l.b16 %v329
      %v1434 = vunpack.c.l.b16 %v330
      %v1435 = vunpack.c.l.b16 %v331
      %v1436 = vunpack.c.l.b16 %v332
      %v1437 = vunpack.c.l.b16 %v333
      %v1438 = vunpack.c.l.b16 %v334
      %v1439 = vunpack.c.l.b16 %v335
      %v1440 = vunpack.c.l.b16 %v336
      %v1441 = vunpack.c.l.b16 %v337
      %v1442 = vunpack.c.l.b16 %v338
      %v1443 = vunpack.c.l.b16 %v339
      %v1444 = vunpack.c.l.b16 %v340
      %v1445 = vunpack.c.l.b16 %v341
      %v1446 = vunpack.c.l.b16 %v342
      %v1447 = vunpack.c.l.b16 %v343
      %v1448 = vunpack.c.l.b16 %v344
      %v1449 = vunpack.c.l.b16 %v345
      %v1450 = vunpack.c.l.b16 %v346
      %v1451 = vunpack.c.l.b16 %v347
      %v1452 = vunpack.c.l.b16 %v348
      %v1453 = vunpack.c.l.b16 %v349
      %v1454 = vunpack.c.l.b16 %v350
      %v1455 = vunpack.c.l.b16 %v351
      %v1456 = vunpack.c.l.b16 %v352
      %v1457 = vunpack.c.l.b16 %v353
      %v1458 = vunpack.c.l.b16 %v354
      %v1459 = vunpack.c.l.b16 %v355
      %v1460 = vunpack.c.l.b16 %v356
      %v1461 = vunpack.c.l.b16 %v357
      %v1462 = vunpack.c.l.b16 %v358
      %v1463 = vunpack.c.l.b16 %v359
      %v1464 = vunpack.c.l.b16 %v360
      %v1465 = vunpack.c.l.b16 %v361
      %v1466 = vunpack.c.l.b16 %v362
      %v1467 = vunpack.c.l.b16 %v363
      %v1468 = vunpack.c.l.b16 %v364
      %v1469 = vunpack.c.l.b16 %v365
      %v1470 = vunpack.c.l.b16 %v366
      %v1471 = vunpack.c.l.b16 %v367
      %v1472 = vunpack.c.l.b16 %v368
      %v1473 = vunpack.c.l.b16 %v369
      %v1474 = vunpack.c.l.b16 %v370
      %v1475 = vunpack.c.l.b16 %v371
      %v1476 = vunpack.c.l.b16 %v372
      %v1477 = vunpack.c.l.b16 %v373
      %v1478 = vunpack.c.l.b16 %v374
      %v1479 = vunpack.c.l.b16 %v375
      %v1480 = vunpack.c.l.b16 %v376
      %v1481 = vunpack.c.l.b16 %v377
      %v1482 = vunpack.c.l.b16 %v378
      %v1483 = vunpack.c.l.b16 %v379
      %v1484 = vunpack.c.l.b16 %v380
      %v1485 = vunpack.c.l.b16 %v381
      %v1486 = vunpack.c.l.b16 %v382
      %v1487 = vunpack.c.l.b16 %v383
      %v1488 = vunpack.c.l.b16 %v384
      %v1489 = vunpack.c.l.b16 %v385
      %v1490 = vunpack.c.l.b16 %v386
      %v1491 = vunpack.c.l.b16 %v387
      %v1492 = vunpack.c.l.b16 %v388
      %v1493 = vunpack.c.l.b16 %v389
      %v1494 = vunpack.c.l.b16 %v390
      %v1495 = vunpack.c.l.b16 %v391
      %v1496 = vunpack.c.l.b16 %v392
      %v1497 = vunpack.c.l.b16 %v393
      %v1498 = vunpack.c.l.b16 %v394
      %v1499 = vunpack.c.l.b16 %v395
      %v1500 = vunpack.c.l.b16 %v396
      %v1501 = vunpack.c.l.b16 %v397
      %v1502 = vunpack.c.l.b16 %v398
      %v1503 = vunpack.c.l.b16 %v399
      %v1504 = vunpack.c.l.b16 %v400
      %v1505 = vunpack.c.l.b16 %v401
      %v1506 = vunpack.c.l.b16 %v402
      %v1507 = vunpack.c.l.b16 %v403
      %v1508 = vunpack.c.l.b16 %v404
      %v1509 = vunpack.c.l.b16 %v405
      %v1510 = vunpack.c.l.b16 %v406
      %v1511 = vunpack.c.l.b16 %v407
      %v1512 = vunpack.c.l.b16 %v408
      %v1513 = vunpack.c.l.b16 %v409
      %v1514 = vunpack.c.l.b16 %v410
      %v1515 = vunpack.c.l.b16 %v411
      %v1516 = vunpack.c.l.b16 %v412
      %v1517 = vunpack.c.l.b16 %v413
      %v1518 = vunpack.c.l.b16 %v414
      %v1519 = vunpack.c.l.b16 %v415
      %v1520 = vunpack.c.l.b16 %v416
      %v1521 = vunpack.c.l.b16 %v417
      %v1522 = vunpack.c.l.b16 %v418
      %v1523 = vunpack.c.l.b16 %v419
      %v1524 = vunpack.c.l.b16 %v420
      %v1525 = vunpack.c.l.b16 %v421
      %v1526 = vunpack.c.l.b16 %v422
      %v1527 = vunpack.c.l.b16 %v423
      %v1528 = vunpack.c.l.b16 %v424
      %v1529 = vunpack.c.l.b16 %v425
      %v1530 = vunpack.c.l.b16 %v426
      %v1531 = vunpack.c.l.b16 %v427
      %v1532 = vunpack.c.l.b16 %v428
      %v1533 = vunpack.c.l.b16 %v429
      %v1534 = vunpack.c.l.b16 %v430
      %v1535 = vunpack.c.l.b16 %v431
      %v1536 = vunpack.c.l.b16 %v432
      %v1537 = vunpack.c.l.b16 %v433
      %v1538 = vunpack.c.l.b16 %v434
      %v1539 = vunpack.c.l.b16 %v435
      %v1540 = vunpack.c.l.b16 %v436
      %v1541 = vunpack.c.l.b16 %v437
      %v1542 = vunpack.c.l.b16 %v438
      %v1543 = vunpack.c.l.b16 %v439
      %v1544 = vunpack.c.l.b16 %v440
      %v1545 = vunpack.c.l.b16 %v441
      %v1546 = vunpack.c.l.b16 %v442
      %v1547 = vunpack.c.l.b16 %v443
      %v1548 = vunpack.c.l.b16 %v444
      %v1549 = vunpack.c.l.b16 %v445
      %v1550 = vunpack.c.l.b16 %v446
      %v1551 = vunpack.c.l.b16 %v447
      %v1552 = vunpack.c.l.b16 %v448
      %v1553 = vunpack.c.l.b16 %v449
      %v1554 = vunpack.c.l.b16 %v450
      %v1555 = vunpack.c.l.b16 %v451
      %v1556 = vunpack.c.l.b16 %v452
      %v1557 = vunpack.c.l.b16 %v453
      %v1558 = vunpack.c.l.b16 %v454
      %v1559 = vunpack.c.l.b16 %v455
      %v1560 = vunpack.c.l.b16 %v456
      %v1561 = vunpack.c.l.b16 %v457
      %v1562 = vunpack.c.l.b16 %v458
      %v1563 = vunpack.c.l.b16 %v459
      %v1564 = vunpack.c.l.b16 %v460
      %v1565 = vunpack.c.l.b16 %v461
      %v1566 = vunpack.c.l.b16 %v462
      %v1567 = vunpack.c.l.b16 %v463
      %v1568 = vunpack.c.l.b16 %v464
      %v1569 = vunpack.c.l.b16 %v465
      %v1570 = vunpack.c.l.b16 %v466
      %v1571 = vunpack.c.l.b16 %v467
      %v1572 = vunpack.c.l.b16 %v468
      %v1573 = vunpack.c.l.b16 %v469
      %v1574 = vunpack.c.l.b16 %v470
      %v1575 = vunpack.c.l.b16 %v471
      %v1576 = vunpack.c.l.b16 %v472
      %v1577 = vunpack.c.l.b16 %v473
      %v1578 = vunpack.c.l.b16 %v474
      %v1579 = vunpack.c.l.b16 %v475
      %v1580 = vunpack.c.l.b16 %v476
      %v1581 = vunpack.c.l.b16 %v477
      %v1582 = vunpack.c.l.b16 %v478
      %v1583 = vunpack.c.l.b16 %v479
      %v1584 = vunpack.c.l.b16 %v480
      %v1585 = vunpack.c.l.b16 %v481
      %v1586 = vunpack.c.l.b16 %v482
      %v1587 = vunpack.c.l.b16 %v483
      %v1588 = vunpack.c.l.b16 %v484
      %v1589 = vunpack.c.l.b16 %v485
      %v1590 = vunpack.c.l.b16 %v486
      %v1591 = vunpack.c.l.b16 %v487
      %v1592 = vunpack.c.l.b16 %v488
      %v1593 = vunpack.c.l.b16 %v489
      %v1594 = vunpack.c.l.b16 %v490
      %v1595 = vunpack.c.l.b16 %v491
      %v1596 = vunpack.c.l.b16 %v492
      %v1597 = vunpack.c.l.b16 %v493
      %v1598 = vunpack.c.l.b16 %v494
      %v1599 = vunpack.c.l.b16 %v495
      %v1600 = vunpack.c.l.b16 %v496
      %v1601 = vunpack.c.l.b16 %v497
      %v1602 = vunpack.c.l.b16 %v498
      %v1603 = vunpack.c.l.b16 %v499
      %v1604 = vunpack.c.l.b16 %v500
      %v1605 = vunpack.c.l.b16 %v501
      %v1606 = vunpack.c.l.b16 %v502
      %v1607 = vunpack.c.l.b16 %v503
      %v1608 = vunpack.c.l.b16 %v504
      %v1609 = vunpack.c.l.b16 %v505
      %v1610 = vunpack.c.l.b16 %v506
      %v1611 = vunpack.c.l.b16 %v507
      %v1612 = vunpack.c.l.b16 %v508
      %v1613 = vunpack.c.l.b16 %v509
      %v1614 = vunpack.c.l.b16 %v510
      %v1615 = vunpack.c.l.b16 %v511
      %v1616 = vunpack.c.l.b16 %v512
      %v1617 = vunpack.c.l.b16 %v513
      %v1618 = vunpack.c.l.b16 %v514
      %v1619 = vunpack.c.l.b16 %v515
      %v1620 = vunpack.c.l.b16 %v516
      %v1621 = vunpack.c.l.b16 %v517
      %v1622 = vunpack.c.l.b16 %v518
      %v1623 = vunpack.c.l.b16 %v519
      %v1624 = vunpack.c.l.b16 %v520
      %v1625 = vunpack.c.l.b16 %v521
      %v1626 = vunpack.c.l.b16 %v522
      %v1627 = vunpack.c.l.b16 %v523
      %v1628 = vunpack.c.l.b16 %v524
      %v1629 = vunpack.c.l.b16 %v525
      %v1630 = vunpack.c.l.b16 %v526
      %v1631 = vunpack.c.l.b16 %v527
      %v1632 = vunpack.c.l.b16 %v528
      %v1633 = vunpack.c.l.b16 %v529
      %v1634 = vunpack.c.l.b16 %v530
      %v1635 = vunpack.c.l.b16 %v531
      %v1636 = vunpack.c.l.b16 %v532
      %v1637 = vunpack.c.l.b16 %v533
      %v1638 = vunpack.c.l.b16 %v534
      %v1639 = vunpack.c.l.b16 %v535
      %v1640 = vunpack.c.l.b16 %v536
      %v1641 = vunpack.c.l.b16 %v537
      %v1642 = vunpack.c.l.b16 %v538
      %v1643 = vunpack.c.l.b16 %v539
      %v1644 = vunpack.c.l.b16 %v540
      %v1645 = vunpack.c.l.b16 %v541
      %v1646 = vunpack.c.l.b16 %v542
      %v1647 = vunpack.c.l.b16 %v543
      %v1648 = vunpack.c.l.b16 %v544
      %v1649 = vunpack.c.l.b16 %v545
      %v1650 = vunpack.c.l.b16 %v546
      %v1651 = vunpack.c.l.b16 %v547
      %v1652 = vunpack.c.l.b16 %v548
      %v1653 = vunpack.c.l.b16 %v549
      %v1654 = vunpack.c.l.b16 %v550
      %v1655 = vunpack.c.l.b16 %v551
      %v1656 = vunpack.c.l.b16 %v552
      %v1657 = vunpack.c.l.b16 %v553
      %v1658 = vunpack.c.l.b16 %v554
      %v1659 = vunpack.c.l.b16 %v555
      %v1660 = vunpack.c.l.b16 %v556
      %v1661 = vunpack.c.l.b16 %v557
      %v1662 = vunpack.c.l.b16 %v558
      %v1663 = vunpack.c.l.b16 %v559
      %v1664 = vunpack.c.l.b16 %v560
      %v1665 = vunpack.c.l.b16 %v561
      %v1666 = vunpack.c.l.b16 %v562
      %v1667 = vunpack.c.l.b16 %v563
      %v1668 = vunpack.c.l.b16 %v564
      %v1669 = vunpack.c.l.b16 %v565
      %v1670 = vunpack.c.l.b16 %v566
      %v1671 = vunpack.c.l.b16 %v567
      %v1672 = vunpack.c.l.b16 %v568
      %v1673 = vunpack.c.l.b16 %v569
      %v1674 = vunpack.c.l.b16 %v570
      %v1675 = vunpack.c.l.b16 %v571
      %v1676 = vpack.c.b16 %v1277, %v1276
      %v1677 = vpack.c.b16 %v1279, %v1278
      %v1678 = vpack.c.b16 %v1281, %v1280
      %v1679 = vpack.c.b16 %v1283, %v1282
      %v1680 = vpack.c.b16 %v1285, %v1284
      %v1681 = vpack.c.b16 %v1287, %v1286
      %v1682 = vpack.c.b16 %v1289, %v1288
      %v1683 = vpack.c.b16 %v1291, %v1290
      %v1684 = vpack.c.b16 %v1293, %v1292
      %v1685 = vpack.c.b16 %v1295, %v1294
      %v1686 = vpack.c.b16 %v1297, %v1296
      %v1687 = vpack.c.b16 %v1299, %v1298
      %v1688 = vpack.c.b16 %v1301, %v1300
      %v1689 = vpack.c.b16 %v1303, %v1302
      %v1690 = vpack.c.b16 %v1305, %v1304
      %v1691 = vpack.c.b16 %v1307, %v1306
      %v1692 = vpack.c.b16 %v1309, %v1308
      %v1693 = vpack.c.b16 %v1311, %v1310
      %v1694 = vpack.c.b16 %v1313, %v1312
      %v1695 = vpack.c.b16 %v1315, %v1314
      %v1696 = vpack.c.b16 %v1317, %v1316
      %v1697 = vpack.c.b16 %v1319, %v1318
      %v1698 = vpack.c.b16 %v1321, %v1320
      %v1699 = vpack.c.b16 %v1323, %v1322
      %v1700 = vpack.c.b16 %v1325, %v1324
      %v1701 = vpack.c.b16 %v1327, %v1326
      %v1702 = vpack.c.b16 %v1329, %v1328
      %v1703 = vpack.c.b16 %v1331, %v1330
      %v1704 = vpack.c.b16 %v1333, %v1332
      %v1705 = vpack.c.b16 %v1335, %v1334
      %v1706 = vpack.c.b16 %v1337, %v1336
      %v1707 = vpack.c.b16 %v1339, %v1338
      %v1708 = vpack.c.b16 %v1341, %v1340
      %v1709 = vpack.c.b16 %v1343, %v1342
      %v1710 = vpack.c.b16 %v1345, %v1344
      %v1711 = vpack.c.b16 %v1347, %v1346
      %v1712 = vpack.c.b16 %v1349, %v1348
      %v1713 = vpack.c.b16 %v1351, %v1350
      %v1714 = vpack.c.b16 %v1353, %v1352
      %v1715 = vpack.c.b16 %v1355, %v1354
      %v1716 = vpack.c.b16 %v1357, %v1356
      %v1717 = vpack.c.b16 %v1359, %v1358
      %v1718 = vpack.c.b16 %v1361, %v1360
      %v1719 = vpack.c.b16 %v1363, %v1362
      %v1720 = vpack.c.b16 %v1365, %v1364
      %v1721 = vpack.c.b16 %v1367, %v1366
      %v1722 = vpack.c.b16 %v1369, %v1368
      %v1723 = vpack.c.b16 %v1371, %v1370
      %v1724 = vpack.c.b16 %v1373, %v1372
      %v1725 = vpack.c.b16 %v1375, %v1374
      %v1726 = vpack.c.b16 %v1377, %v1376
      %v1727 = vpack.c.b16 %v1379, %v1378
      %v1728 = vpack.c.b16 %v1381, %v1380
      %v1729 = vpack.c.b16 %v1383, %v1382
      %v1730 = vpack.c.b16 %v1385, %v1384
      %v1731 = vpack.c.b16 %v1387, %v1386
      %v1732 = vpack.c.b16 %v1389, %v1388
      %v1733 = vpack.c.b16 %v1391, %v1390
      %v1734 = vpack.c.b16 %v1393, %v1392
      %v1735 = vpack.c.b16 %v1395, %v1394
      %v1736 = vpack.c.b16 %v1397, %v1396
      %v1737 = vpack.c.b16 %v1399, %v1398
      %v1738 = vpack.c.b16 %v1401, %v1400
      %v1739 = vpack.c.b16 %v1403, %v1402
      %v1740 = vpack.c.b16 %v1405, %v1404
      %v1741 = vpack.c.b16 %v1407, %v1406
      %v1742 = vpack.c.b16 %v1409, %v1408
      %v1743 = vpack.c.b16 %v1411, %v1410
      %v1744 = vpack.c.b16 %v1413, %v1412
      %v1745 = vpack.c.b16 %v1415, %v1414
      %v1746 = vpack.c.b16 %v1417, %v1416
      %v1747 = vpack.c.b16 %v1419, %v1418
      %v1748 = vpack.c.b16 %v1421, %v1420
      %v1749 = vpack.c.b16 %v1423, %v1422
      %v1750 = vpack.c.b16 %v1425, %v1424
      %v1751 = vpack.c.b16 %v1427, %v1426
      %v1752 = vpack.c.b16 %v1429, %v1428
      %v1753 = vpack.c.b16 %v1431, %v1430
      %v1754 = vpack.c.b16 %v1433, %v1432
      %v1755 = vpack.c.b16 %v1435, %v1434
      %v1756 = vpack.c.b16 %v1437, %v1436
      %v1757 = vpack.c.b16 %v1439, %v1438
      %v1758 = vpack.c.b16 %v1441, %v1440
      %v1759 = vpack.c.b16 %v1443, %v1442
      %v1760 = vpack.c.b16 %v1445, %v1444
      %v1761 = vpack.c.b16 %v1447, %v1446
      %v1762 = vpack.c.b16 %v1449, %v1448
      %v1763 = vpack.c.b16 %v1451, %v1450
      %v1764 = vpack.c.b16 %v1453, %v1452
      %v1765 = vpack.c.b16 %v1455, %v1454
      %v1766 = vpack.c.b16 %v1457, %v1456
      %v1767 = vpack.c.b16 %v1459, %v1458
      %v1768 = vpack.c.b16 %v1461, %v1460
      %v1769 = vpack.c.b16 %v1463, %v1462
      %v1770 = vpack.c.b16 %v1465, %v1464
      %v1771 = vpack.c.b16 %v1467, %v1466
      %v1772 = vpack.c.b16 %v1469, %v1468
      %v1773 = vpack.c.b16 %v1471, %v1470
      %v1774 = vpack.c.b16 %v1473, %v1472
      %v1775 = vpack.c.b16 %v1475, %v1474
      %v1776 = vpack.c.b16 %v1477, %v1476
      %v1777 = vpack.c.b16 %v1479, %v1478
      %v1778 = vpack.c.b16 %v1481, %v1480
      %v1779 = vpack.c.b16 %v1483, %v1482
      %v1780 = vpack.c.b16 %v1485, %v1484
      %v1781 = vpack.c.b16 %v1487, %v1486
      %v1782 = vpack.c.b16 %v1489, %v1488
      %v1783 = vpack.c.b16 %v1491, %v1490
      %v1784 = vpack.c.b16 %v1493, %v1492
      %v1785 = vpack.c.b16 %v1495, %v1494
      %v1786 = vpack.c.b16 %v1497, %v1496
      %v1787 = vpack.c.b16 %v1499, %v1498
      %v1788 = vpack.c.b16 %v1501, %v1500
      %v1789 = vpack.c.b16 %v1503, %v1502
      %v1790 = vpack.c.b16 %v1505, %v1504
      %v1791 = vpack.c.b16 %v1507, %v1506
      %v1792 = vpack.c.b16 %v1509, %v1508
      %v1793 = vpack.c.b16 %v1511, %v1510
      %v1794 = vpack.c.b16 %v1513, %v1512
      %v1795 = vpack.c.b16 %v1515, %v1514
      %v1796 = vpack.c.b16 %v1517, %v1516
      %v1797 = vpack.c.b16 %v1519, %v1518
      %v1798 = vpack.c.b16 %v1521, %v1520
      %v1799 = vpack.c.b16 %v1523, %v1522
      %v1800 = vpack.c.b16 %v1525, %v1524
      %v1801 = vpack.c.b16 %v1527, %v1526
      %v1802 = vpack.c.b16 %v1529, %v1528
      %v1803 = vpack.c.b16 %v1531, %v1530
      %v1804 = vpack.c.b16 %v1533, %v1532
      %v1805 = vpack.c.b16 %v1535, %v1534
      %v1806 = vpack.c.b16 %v1537, %v1536
      %v1807 = vpack.c.b16 %v1539, %v1538
      %v1808 = vpack.c.b16 %v1541, %v1540
      %v1809 = vpack.c.b16 %v1543, %v1542
      %v1810 = vpack.c.b16 %v1545, %v1544
      %v1811 = vpack.c.b16 %v1547, %v1546
      %v1812 = vpack.c.b16 %v1549, %v1548
      %v1813 = vpack.c.b16 %v1551, %v1550
      %v1814 = vpack.c.b16 %v1553, %v1552
      %v1815 = vpack.c.b16 %v1555, %v1554
      %v1816 = vpack.c.b16 %v1557, %v1556
      %v1817 = vpack.c.b16 %v1559, %v1558
      %v1818 = vpack.c.b16 %v1561, %v1560
      %v1819 = vpack.c.b16 %v1563, %v1562
      %v1820 = vpack.c.b16 %v1565, %v1564
      %v1821 = vpack.c.b16 %v1567, %v1566
      %v1822 = vpack.c.b16 %v1569, %v1568
      %v1823 = vpack.c.b16 %v1571, %v1570
      %v1824 = vpack.c.b16 %v1573, %v1572
      %v1825 = vpack.c.b16 %v1575, %v1574
      %v1826 = vpack.c.b16 %v1577, %v1576
      %v1827 = vpack.c.b16 %v1579, %v1578
      %v1828 = vpack.c.b16 %v1581, %v1580
      %v1829 = vpack.c.b16 %v1583, %v1582
      %v1830 = vpack.c.b16 %v1585, %v1584
      %v1831 = vpack.c.b16 %v1587, %v1586
      %v1832 = vpack.c.b16 %v1589, %v1588
      %v1833 = vpack.c.b16 %v1591, %v1590
      %v1834 = vpack.c.b16 %v1593, %v1592
      %v1835 = vpack.c.b16 %v1595, %v1594
      %v1836 = vpack.c.b16 %v1597, %v1596
      %v1837 = vpack.c.b16 %v1599, %v1598
      %v1838 = vpack.c.b16 %v1601, %v1600
      %v1839 = vpack.c.b16 %v1603, %v1602
      %v1840 = vpack.c.b16 %v1605, %v1604
      %v1841 = vpack.c.b16 %v1607, %v1606
      %v1842 = vpack.c.b16 %v1609, %v1608
      %v1843 = vpack.c.b16 %v1611, %v1610
      %v1844 = vpack.c.b16 %v1613, %v1612
      %v1845 = vpack.c.b16 %v1615, %v1614
      %v1846 = vpack.c.b16 %v1617, %v1616
      %v1847 = vpack.c.b16 %v1619, %v1618
      %v1848 = vpack.c.b16 %v1621, %v1620
      %v1849 = vpack.c.b16 %v1623, %v1622
      %v1850 = vpack.c.b16 %v1625, %v1624
      %v1851 = vpack.c.b16 %v1627, %v1626
      %v1852 = vpack.c.b16 %v1629, %v1628
      %v1853 = vpack.c.b16 %v1631, %v1630
      %v1854 = vpack.c.b16 %v1633, %v1632
      %v1855 = vpack.c.b16 %v1635, %v1634
      %v1856 = vpack.c.b16 %v1637, %v1636
      %v1857 = vpack.c.b16 %v1639, %v1638
      %v1858 = vpack.c.b16 %v1641, %v1640
      %v1859 = vpack.c.b16 %v1643, %v1642
      %v1860 = vpack.c.b16 %v1645, %v1644
      %v1861 = vpack.c.b16 %v1647, %v1646
      %v1862 = vpack.c.b16 %v1649, %v1648
      %v1863 = vpack.c.b16 %v1651, %v1650
      %v1864 = vpack.c.b16 %v1653, %v1652
      %v1865 = vpack.c.b16 %v1655, %v1654
      %v1866 = vpack.c.b16 %v1657, %v1656
      %v1867 = vpack.c.b16 %v1659, %v1658
      %v1868 = vpack.c.b16 %v1661, %v1660
      %v1869 = vpack.c.b16 %v1663, %v1662
      %v1870 = vpack.c.b16 %v1665, %v1664
      %v1871 = vpack.c.b16 %v1667, %v1666
      %v1872 = vpack.c.b16 %v1669, %v1668
      %v1873 = vpack.c.b16 %v1671, %v1670
      %v1874 = vpack.c.b16 %v1673, %v1672
      %v1875 = vpack.c.b16 %v1675, %v1674
      %2076 = vmatprep.subr.bf16.mxu0 0
      %2077 = vmatpush1.bf16.msra.mxu0 %v1676
      %2078 = vmatprep.subr.bf16.mxu0 0
      %2079 = vmatpush1.bf16.msra.mxu0 %v1677
      %2080 = vmatprep.subr.bf16.mxu0 0
      %2081 = vmatpush1.bf16.msra.mxu0 %v1678
      %2082 = vmatprep.subr.bf16.mxu0 0
      %2083 = vmatpush1.bf16.msra.mxu0 %v1679
      %2084 = vmatprep.subr.bf16.mxu0 0
      %2085 = vmatpush1.bf16.msra.mxu0 %v1680
      %2086 = vmatprep.subr.bf16.mxu0 0
      %2087 = vmatpush1.bf16.msra.mxu0 %v1681
      %2088 = vmatprep.subr.bf16.mxu0 0
      %2089 = vmatpush1.bf16.msra.mxu0 %v1682
      %2090 = vmatprep.subr.bf16.mxu0 0
      %2091 = vmatpush1.bf16.msra.mxu0 %v1683
      %2092 = vmatprep.subr.bf16.mxu0 0
      %2093 = vmatpush1.bf16.msra.mxu0 %v1684
      %2094 = vmatprep.subr.bf16.mxu0 0
      %2095 = vmatpush1.bf16.msra.mxu0 %v1685
      %2096 = vmatprep.subr.bf16.mxu0 0
      %2097 = vmatpush1.bf16.msra.mxu0 %v1686
      %2098 = vmatprep.subr.bf16.mxu0 0
      %2099 = vmatpush1.bf16.msra.mxu0 %v1687
      %2100 = vmatprep.subr.bf16.mxu0 0
      %2101 = vmatpush1.bf16.msra.mxu0 %v1688
      %2102 = vmatprep.subr.bf16.mxu0 0
      %2103 = vmatpush1.bf16.msra.mxu0 %v1689
      %2104 = vmatprep.subr.bf16.mxu0 0
      %2105 = vmatpush1.bf16.msra.mxu0 %v1690
      %2106 = vmatprep.subr.bf16.mxu0 0
      %2107 = vmatpush1.bf16.msra.mxu0 %v1691
      %2108 = vmatprep.mubr.bf16.mxu0 %v777
      %2109 = vmatmul.mubr.bf16.gmra.mrb[0].mxu0 %v776
      %v2110 = vpop.f32.mrb[0].mxu0
      %v2111 = vadd.f32 0.0, %v2110
      %v2112 = vpop.f32.mrb[0].mxu0
      %v2113 = vpop.f32.mrb[0].mxu0
      %v2114 = vadd.f32 0.0, %v2113
      %v2115 = vpop.f32.mrb[0].mxu0
      %2116 = vmatprep.mubr.bf16.mxu0 %v802
      %2117 = vmatmul.mubr.bf16.gmra.mrb[0].mxu0 %v801
      %v2118 = vpop.f32.mrb[0].mxu0
      %v2119 = vadd.f32 0.0, %v2118
      %v2120 = vpop.f32.mrb[0].mxu0
      %v2121 = vpop.f32.mrb[0].mxu0
      %v2122 = vadd.f32 0.0, %v2121
      %v2123 = vpop.f32.mrb[0].mxu0
      %2124 = vdwg.mxu0
      %2125 = vmatprep.subr.bf16.mxu0 0
      %2126 = vmatpush1.bf16.msra.mxu0 %v1692
      %2127 = vmatprep.subr.bf16.mxu0 0
      %2128 = vmatpush1.bf16.msra.mxu0 %v1693
      %2129 = vmatprep.subr.bf16.mxu0 0
      %2130 = vmatpush1.bf16.msra.mxu0 %v1694
      %2131 = vmatprep.subr.bf16.mxu0 0
      %2132 = vmatpush1.bf16.msra.mxu0 %v1695
      %2133 = vmatprep.subr.bf16.mxu0 0
      %2134 = vmatpush1.bf16.msra.mxu0 %v1696
      %2135 = vmatprep.subr.bf16.mxu0 0
      %2136 = vmatpush1.bf16.msra.mxu0 %v1697
      %2137 = vmatprep.subr.bf16.mxu0 0
      %2138 = vmatpush1.bf16.msra.mxu0 %v1698
      %2139 = vmatprep.subr.bf16.mxu0 0
      %2140 = vmatpush1.bf16.msra.mxu0 %v1699
      %2141 = vmatprep.subr.bf16.mxu0 0
      %2142 = vmatpush1.bf16.msra.mxu0 %v1700
      %2143 = vmatprep.subr.bf16.mxu0 0
      %2144 = vmatpush1.bf16.msra.mxu0 %v1701
      %2145 = vmatprep.subr.bf16.mxu0 0
      %2146 = vmatpush1.bf16.msra.mxu0 %v1702
      %2147 = vmatprep.subr.bf16.mxu0 0
      %2148 = vmatpush1.bf16.msra.mxu0 %v1703
      %2149 = vmatprep.subr.bf16.mxu0 0
      %2150 = vmatpush1.bf16.msra.mxu0 %v1704
      %2151 = vmatprep.subr.bf16.mxu0 0
      %2152 = vmatpush1.bf16.msra.mxu0 %v1705
      %2153 = vmatprep.subr.bf16.mxu0 0
      %2154 = vmatpush1.bf16.msra.mxu0 %v1706
      %2155 = vmatprep.subr.bf16.mxu0 0
      %2156 = vmatpush1.bf16.msra.mxu0 %v1707
      %2157 = vmatprep.mubr.bf16.mxu0 %v779
      %2158 = vmatmul.mubr.bf16.gmra.mrb[0].mxu0 %v778
      %v2159 = vpop.f32.mrb[0].mxu0
      %v2160 = vadd.f32 %v2111, %v2159
      %v2161 = vpop.f32.mrb[0].mxu0
      %v2162 = vpop.f32.mrb[0].mxu0
      %v2163 = vadd.f32 %v2114, %v2162
      %v2164 = vpop.f32.mrb[0].mxu0
      %2165 = vmatprep.mubr.bf16.mxu0 %v804
      %2166 = vmatmul.mubr.bf16.gmra.mrb[0].mxu0 %v803
      %v2167 = vpop.f32.mrb[0].mxu0
      %v2168 = vadd.f32 %v2119, %v2167
      %v2169 = vpop.f32.mrb[0].mxu0
      %v2170 = vpop.f32.mrb[0].mxu0
      %v2171 = vadd.f32 %v2122, %v2170
      %v2172 = vpop.f32.mrb[0].mxu0
      %2173 = vdwg.mxu0
      %2174 = vmatprep.subr.bf16.mxu0 0
      %2175 = vmatpush1.bf16.msra.mxu0 %v1708
      %2176 = vmatprep.subr.bf16.mxu0 0
      %2177 = vmatpush1.bf16.msra.mxu0 %v1709
      %2178 = vmatprep.subr.bf16.mxu0 0
      %2179 = vmatpush1.bf16.msra.mxu0 %v1710
      %2180 = vmatprep.subr.bf16.mxu0 0
      %2181 = vmatpush1.bf16.msra.mxu0 %v1711
      %2182 = vmatprep.subr.bf16.mxu0 0
      %2183 = vmatpush1.bf16.msra.mxu0 %v1712
      %2184 = vmatprep.subr.bf16.mxu0 0
      %2185 = vmatpush1.bf16.msra.mxu0 %v1713
      %2186 = vmatprep.subr.bf16.mxu0 0
      %2187 = vmatpush1.bf16.msra.mxu0 %v1714
      %2188 = vmatprep.subr.bf16.mxu0 0
      %2189 = vmatpush1.bf16.msra.mxu0 %v1715
      %2190 = vmatprep.subr.bf16.mxu0 0
      %2191 = vmatpush1.bf16.msra.mxu0 %v1716
      %2192 = vmatprep.subr.bf16.mxu0 0
      %2193 = vmatpush1.bf16.msra.mxu0 %v1717
      %2194 = vmatprep.subr.bf16.mxu0 0
      %2195 = vmatpush1.bf16.msra.mxu0 %v1718
      %2196 = vmatprep.subr.bf16.mxu0 0
      %2197 = vmatpush1.bf16.msra.mxu0 %v1719
      %2198 = vmatprep.subr.bf16.mxu0 0
      %2199 = vmatpush1.bf16.msra.mxu0 %v1720
      %2200 = vmatprep.subr.bf16.mxu0 0
      %2201 = vmatpush1.bf16.msra.mxu0 %v1721
      %2202 = vmatprep.subr.bf16.mxu0 0
      %2203 = vmatpush1.bf16.msra.mxu0 %v1722
      %2204 = vmatprep.subr.bf16.mxu0 0
      %2205 = vmatpush1.bf16.msra.mxu0 %v1723
      %2206 = vmatprep.mubr.bf16.mxu0 %v781
      %2207 = vmatmul.mubr.bf16.gmra.mrb[0].mxu0 %v780
      %v2208 = vpop.f32.mrb[0].mxu0
      %v2209 = vadd.f32 %v2160, %v2208
      %v2210 = vpop.f32.mrb[0].mxu0
      %v2211 = vpop.f32.mrb[0].mxu0
      %v2212 = vadd.f32 %v2163, %v2211
      %v2213 = vpop.f32.mrb[0].mxu0
      %2214 = vmatprep.mubr.bf16.mxu0 %v806
      %2215 = vmatmul.mubr.bf16.gmra.mrb[0].mxu0 %v805
      %v2216 = vpop.f32.mrb[0].mxu0
      %v2217 = vadd.f32 %v2168, %v2216
      %v2218 = vpop.f32.mrb[0].mxu0
      %v2219 = vpop.f32.mrb[0].mxu0
      %v2220 = vadd.f32 %v2171, %v2219
      %v2221 = vpop.f32.mrb[0].mxu0
      %2222 = vdwg.mxu0
      %2223 = vmatprep.subr.bf16.mxu0 0
      %2224 = vmatpush1.bf16.msra.mxu0 %v1724
      %2225 = vmatprep.subr.bf16.mxu0 0
      %2226 = vmatpush1.bf16.msra.mxu0 %v1725
      %2227 = vmatprep.subr.bf16.mxu0 0
      %2228 = vmatpush1.bf16.msra.mxu0 %v1726
      %2229 = vmatprep.subr.bf16.mxu0 0
      %2230 = vmatpush1.bf16.msra.mxu0 %v1727
      %2231 = vmatprep.subr.bf16.mxu0 0
      %2232 = vmatpush1.bf16.msra.mxu0 %v1728
      %2233 = vmatprep.subr.bf16.mxu0 0
      %2234 = vmatpush1.bf16.msra.mxu0 %v1729
      %2235 = vmatprep.subr.bf16.mxu0 0
      %2236 = vmatpush1.bf16.msra.mxu0 %v1730
      %2237 = vmatprep.subr.bf16.mxu0 0
      %2238 = vmatpush1.bf16.msra.mxu0 %v1731
      %2239 = vmatprep.subr.bf16.mxu0 0
      %2240 = vmatpush1.bf16.msra.mxu0 %v1732
      %2241 = vmatprep.subr.bf16.mxu0 0
      %2242 = vmatpush1.bf16.msra.mxu0 %v1733
      %2243 = vmatprep.subr.bf16.mxu0 0
      %2244 = vmatpush1.bf16.msra.mxu0 %v1734
      %2245 = vmatprep.subr.bf16.mxu0 0
      %2246 = vmatpush1.bf16.msra.mxu0 %v1735
      %2247 = vmatprep.subr.bf16.mxu0 0
      %2248 = vmatpush1.bf16.msra.mxu0 %v1736
      %2249 = vmatprep.subr.bf16.mxu0 0
      %2250 = vmatpush1.bf16.msra.mxu0 %v1737
      %2251 = vmatprep.subr.bf16.mxu0 0
      %2252 = vmatpush1.bf16.msra.mxu0 %v1738
      %2253 = vmatprep.subr.bf16.mxu0 0
      %2254 = vmatpush1.bf16.msra.mxu0 %v1739
      %2255 = vmatprep.mubr.bf16.mxu0 %v783
      %2256 = vmatmul.mubr.bf16.gmra.mrb[0].mxu0 %v782
      %v2257 = vpop.f32.mrb[0].mxu0
      %v2258 = vadd.f32 %v2209, %v2257
      %v2259 = vpop.f32.mrb[0].mxu0
      %v2260 = vpop.f32.mrb[0].mxu0
      %v2261 = vadd.f32 %v2212, %v2260
      %v2262 = vpop.f32.mrb[0].mxu0
      %2263 = vmatprep.mubr.bf16.mxu0 %v808
      %2264 = vmatmul.mubr.bf16.gmra.mrb[0].mxu0 %v807
      %v2265 = vpop.f32.mrb[0].mxu0
      %v2266 = vadd.f32 %v2217, %v2265
      %v2267 = vpop.f32.mrb[0].mxu0
      %v2268 = vpop.f32.mrb[0].mxu0
      %v2269 = vadd.f32 %v2220, %v2268
      %v2270 = vpop.f32.mrb[0].mxu0
      %2271 = vdwg.mxu0
      %2272 = vmatprep.subr.bf16.mxu0 0
      %2273 = vmatpush1.bf16.msra.mxu0 %v1740
      %2274 = vmatprep.subr.bf16.mxu0 0
      %2275 = vmatpush1.bf16.msra.mxu0 %v1741
      %2276 = vmatprep.subr.bf16.mxu0 0
      %2277 = vmatpush1.bf16.msra.mxu0 %v1742
      %2278 = vmatprep.subr.bf16.mxu0 0
      %2279 = vmatpush1.bf16.msra.mxu0 %v1743
      %2280 = vmatprep.subr.bf16.mxu0 0
      %2281 = vmatpush1.bf16.msra.mxu0 %v1744
      %2282 = vmatprep.subr.bf16.mxu0 0
      %2283 = vmatpush1.bf16.msra.mxu0 %v1745
      %2284 = vmatprep.subr.bf16.mxu0 0
      %2285 = vmatpush1.bf16.msra.mxu0 %v1746
      %2286 = vmatprep.subr.bf16.mxu0 0
      %2287 = vmatpush1.bf16.msra.mxu0 %v1747
      %2288 = vmatprep.subr.bf16.mxu0 0
      %2289 = vmatpush1.bf16.msra.mxu0 %v1748
      %2290 = vmatprep.subr.bf16.mxu0 0
      %2291 = vmatpush1.bf16.msra.mxu0 %v1749
      %2292 = vmatprep.subr.bf16.mxu0 0
      %2293 = vmatpush1.bf16.msra.mxu0 %v1750
      %2294 = vmatprep.subr.bf16.mxu0 0
      %2295 = vmatpush1.bf16.msra.mxu0 %v1751
      %2296 = vmatprep.subr.bf16.mxu0 0
      %2297 = vmatpush1.bf16.msra.mxu0 %v1752
      %2298 = vmatprep.subr.bf16.mxu0 0
      %2299 = vmatpush1.bf16.msra.mxu0 %v1753
      %2300 = vmatprep.subr.bf16.mxu0 0
      %2301 = vmatpush1.bf16.msra.mxu0 %v1754
      %2302 = vmatprep.subr.bf16.mxu0 0
      %2303 = vmatpush1.bf16.msra.mxu0 %v1755
      %2304 = vmatprep.mubr.bf16.mxu0 %v785
      %2305 = vmatmul.mubr.bf16.gmra.mrb[0].mxu0 %v784
      %v2306 = vpop.f32.mrb[0].mxu0
      %v2307 = vadd.f32 %v2258, %v2306
      %v2308 = vpop.f32.mrb[0].mxu0
      %v2309 = vpop.f32.mrb[0].mxu0
      %v2310 = vadd.f32 %v2261, %v2309
      %v2311 = vpop.f32.mrb[0].mxu0
      %2312 = vmatprep.mubr.bf16.mxu0 %v810
      %2313 = vmatmul.mubr.bf16.gmra.mrb[0].mxu0 %v809
      %v2314 = vpop.f32.mrb[0].mxu0
      %v2315 = vadd.f32 %v2266, %v2314
      %v2316 = vpop.f32.mrb[0].mxu0
      %v2317 = vpop.f32.mrb[0].mxu0
      %v2318 = vadd.f32 %v2269, %v2317
      %v2319 = vpop.f32.mrb[0].mxu0
      %2320 = vdwg.mxu0
      %2321 = vmatprep.subr.bf16.mxu0 0
      %2322 = vmatpush1.bf16.msra.mxu0 %v1756
      %2323 = vmatprep.subr.bf16.mxu0 0
      %2324 = vmatpush1.bf16.msra.mxu0 %v1757
      %2325 = vmatprep.subr.bf16.mxu0 0
      %2326 = vmatpush1.bf16.msra.mxu0 %v1758
      %2327 = vmatprep.subr.bf16.mxu0 0
      %2328 = vmatpush1.bf16.msra.mxu0 %v1759
      %2329 = vmatprep.subr.bf16.mxu0 0
      %2330 = vmatpush1.bf16.msra.mxu0 %v1760
      %2331 = vmatprep.subr.bf16.mxu0 0
      %2332 = vmatpush1.bf16.msra.mxu0 %v1761
      %2333 = vmatprep.subr.bf16.mxu0 0
      %2334 = vmatpush1.bf16.msra.mxu0 %v1762
      %2335 = vmatprep.subr.bf16.mxu0 0
      %2336 = vmatpush1.bf16.msra.mxu0 %v1763
      %2337 = vmatprep.subr.bf16.mxu0 0
      %2338 = vmatpush1.bf16.msra.mxu0 %v1764
      %2339 = vmatprep.subr.bf16.mxu0 0
      %2340 = vmatpush1.bf16.msra.mxu0 %v1765
      %2341 = vmatprep.subr.bf16.mxu0 0
      %2342 = vmatpush1.bf16.msra.mxu0 %v1766
      %2343 = vmatprep.subr.bf16.mxu0 0
      %2344 = vmatpush1.bf16.msra.mxu0 %v1767
      %2345 = vmatprep.subr.bf16.mxu0 0
      %2346 = vmatpush1.bf16.msra.mxu0 %v1768
      %2347 = vmatprep.subr.bf16.mxu0 0
      %2348 = vmatpush1.bf16.msra.mxu0 %v1769
      %2349 = vmatprep.subr.bf16.mxu0 0
      %2350 = vmatpush1.bf16.msra.mxu0 %v1770
      %2351 = vmatprep.subr.bf16.mxu0 0
      %2352 = vmatpush1.bf16.msra.mxu0 %v1771
      %2353 = vmatprep.mubr.bf16.mxu0 %v787
      %2354 = vmatmul.mubr.bf16.gmra.mrb[0].mxu0 %v786
      %v2355 = vpop.f32.mrb[0].mxu0
      %v2356 = vadd.f32 %v2307, %v2355
      %v2357 = vpop.f32.mrb[0].mxu0
      %v2358 = vpop.f32.mrb[0].mxu0
      %v2359 = vadd.f32 %v2310, %v2358
      %v2360 = vpop.f32.mrb[0].mxu0
      %2361 = vmatprep.mubr.bf16.mxu0 %v812
      %2362 = vmatmul.mubr.bf16.gmra.mrb[0].mxu0 %v811
      %v2363 = vpop.f32.mrb[0].mxu0
      %v2364 = vadd.f32 %v2315, %v2363
      %v2365 = vpop.f32.mrb[0].mxu0
      %v2366 = vpop.f32.mrb[0].mxu0
      %v2367 = vadd.f32 %v2318, %v2366
      %v2368 = vpop.f32.mrb[0].mxu0
      %2369 = vdwg.mxu0
      %2370 = vmatprep.subr.bf16.mxu0 0
      %2371 = vmatpush1.bf16.msra.mxu0 %v1772
      %2372 = vmatprep.subr.bf16.mxu0 0
      %2373 = vmatpush1.bf16.msra.mxu0 %v1773
      %2374 = vmatprep.subr.bf16.mxu0 0
      %2375 = vmatpush1.bf16.msra.mxu0 %v1774
      %2376 = vmatprep.subr.bf16.mxu0 0
      %2377 = vmatpush1.bf16.msra.mxu0 %v1775
      %2378 = vmatprep.subr.bf16.mxu0 0
      %2379 = vmatpush1.bf16.msra.mxu0 %v1776
      %2380 = vmatprep.subr.bf16.mxu0 0
      %2381 = vmatpush1.bf16.msra.mxu0 %v1777
      %2382 = vmatprep.subr.bf16.mxu0 0
      %2383 = vmatpush1.bf16.msra.mxu0 %v1778
      %2384 = vmatprep.subr.bf16.mxu0 0
      %2385 = vmatpush1.bf16.msra.mxu0 %v1779
      %2386 = vmatprep.subr.bf16.mxu0 0
      %2387 = vmatpush1.bf16.msra.mxu0 %v1780
      %2388 = vmatprep.subr.bf16.mxu0 0
      %2389 = vmatpush1.bf16.msra.mxu0 %v1781
      %2390 = vmatprep.subr.bf16.mxu0 0
      %2391 = vmatpush1.bf16.msra.mxu0 %v1782
      %2392 = vmatprep.subr.bf16.mxu0 0
      %2393 = vmatpush1.bf16.msra.mxu0 %v1783
      %2394 = vmatprep.subr.bf16.mxu0 0
      %2395 = vmatpush1.bf16.msra.mxu0 %v1784
      %2396 = vmatprep.subr.bf16.mxu0 0
      %2397 = vmatpush1.bf16.msra.mxu0 %v1785
      %2398 = vmatprep.subr.bf16.mxu0 0
      %2399 = vmatpush1.bf16.msra.mxu0 %v1786
      %2400 = vmatprep.subr.bf16.mxu0 0
      %2401 = vmatpush1.bf16.msra.mxu0 %v1787
      %2402 = vmatprep.mubr.bf16.mxu0 %v789
      %2403 = vmatmul.mubr.bf16.gmra.mrb[0].mxu0 %v788
      %v2404 = vpop.f32.mrb[0].mxu0
      %v2405 = vadd.f32 %v2356, %v2404
      %v2406 = vpop.f32.mrb[0].mxu0
      %v2407 = vpop.f32.mrb[0].mxu0
      %v2408 = vadd.f32 %v2359, %v2407
      %v2409 = vpop.f32.mrb[0].mxu0
      %2410 = vmatprep.mubr.bf16.mxu0 %v814
      %2411 = vmatmul.mubr.bf16.gmra.mrb[0].mxu0 %v813
      %v2412 = vpop.f32.mrb[0].mxu0
      %v2413 = vadd.f32 %v2364, %v2412
      %v2414 = vpop.f32.mrb[0].mxu0
      %v2415 = vpop.f32.mrb[0].mxu0
      %v2416 = vadd.f32 %v2367, %v2415
      %v2417 = vpop.f32.mrb[0].mxu0
      %2418 = vdwg.mxu0
      %2419 = vmatprep.subr.bf16.mxu0 0
      %2420 = vmatpush1.bf16.msra.mxu0 %v1788
      %2421 = vmatprep.subr.bf16.mxu0 0
      %2422 = vmatpush1.bf16.msra.mxu0 %v1789
      %2423 = vmatprep.subr.bf16.mxu0 0
      %2424 = vmatpush1.bf16.msra.mxu0 %v1790
      %2425 = vmatprep.subr.bf16.mxu0 0
      %2426 = vmatpush1.bf16.msra.mxu0 %v1791
      %2427 = vmatprep.subr.bf16.mxu0 0
      %2428 = vmatpush1.bf16.msra.mxu0 %v1792
      %2429 = vmatprep.subr.bf16.mxu0 0
      %2430 = vmatpush1.bf16.msra.mxu0 %v1793
      %2431 = vmatprep.subr.bf16.mxu0 0
      %2432 = vmatpush1.bf16.msra.mxu0 %v1794
      %2433 = vmatprep.subr.bf16.mxu0 0
      %2434 = vmatpush1.bf16.msra.mxu0 %v1795
      %2435 = vmatprep.subr.bf16.mxu0 0
      %2436 = vmatpush1.bf16.msra.mxu0 %v1796
      %2437 = vmatprep.subr.bf16.mxu0 0
      %2438 = vmatpush1.bf16.msra.mxu0 %v1797
      %2439 = vmatprep.subr.bf16.mxu0 0
      %2440 = vmatpush1.bf16.msra.mxu0 %v1798
      %2441 = vmatprep.subr.bf16.mxu0 0
      %2442 = vmatpush1.bf16.msra.mxu0 %v1799
      %2443 = vmatprep.subr.bf16.mxu0 0
      %2444 = vmatpush1.bf16.msra.mxu0 %v1800
      %2445 = vmatprep.subr.bf16.mxu0 0
      %2446 = vmatpush1.bf16.msra.mxu0 %v1801
      %2447 = vmatprep.subr.bf16.mxu0 0
      %2448 = vmatpush1.bf16.msra.mxu0 %v1802
      %2449 = vmatprep.subr.bf16.mxu0 0
      %2450 = vmatpush1.bf16.msra.mxu0 %v1803
      %2451 = vmatprep.mubr.bf16.mxu0 %v791
      %2452 = vmatmul.mubr.bf16.gmra.mrb[0].mxu0 %v790
      %v2453 = vpop.f32.mrb[0].mxu0
      %v2454 = vadd.f32 %v2405, %v2453
      %v2455 = vpop.f32.mrb[0].mxu0
      %v2456 = vpop.f32.mrb[0].mxu0
      %v2457 = vadd.f32 %v2408, %v2456
      %v2458 = vpop.f32.mrb[0].mxu0
      %2459 = vmatprep.mubr.bf16.mxu0 %v816
      %2460 = vmatmul.mubr.bf16.gmra.mrb[0].mxu0 %v815
      %v2461 = vpop.f32.mrb[0].mxu0
      %v2462 = vadd.f32 %v2413, %v2461
      %v2463 = vpop.f32.mrb[0].mxu0
      %v2464 = vpop.f32.mrb[0].mxu0
      %v2465 = vadd.f32 %v2416, %v2464
      %v2466 = vpop.f32.mrb[0].mxu0
      %2467 = vdwg.mxu0
      %2468 = vmatprep.subr.bf16.mxu0 0
      %2469 = vmatpush1.bf16.msra.mxu0 %v1804
      %2470 = vmatprep.subr.bf16.mxu0 0
      %2471 = vmatpush1.bf16.msra.mxu0 %v1805
      %2472 = vmatprep.subr.bf16.mxu0 0
      %2473 = vmatpush1.bf16.msra.mxu0 %v1806
      %2474 = vmatprep.subr.bf16.mxu0 0
      %2475 = vmatpush1.bf16.msra.mxu0 %v1807
      %2476 = vmatprep.subr.bf16.mxu0 0
      %2477 = vmatpush1.bf16.msra.mxu0 %v1808
      %2478 = vmatprep.subr.bf16.mxu0 0
      %2479 = vmatpush1.bf16.msra.mxu0 %v1809
      %2480 = vmatprep.subr.bf16.mxu0 0
      %2481 = vmatpush1.bf16.msra.mxu0 %v1810
      %2482 = vmatprep.subr.bf16.mxu0 0
      %2483 = vmatpush1.bf16.msra.mxu0 %v1811
      %2484 = vmatprep.subr.bf16.mxu0 0
      %2485 = vmatpush1.bf16.msra.mxu0 %v1812
      %2486 = vmatprep.subr.bf16.mxu0 0
      %2487 = vmatpush1.bf16.msra.mxu0 %v1813
      %2488 = vmatprep.subr.bf16.mxu0 0
      %2489 = vmatpush1.bf16.msra.mxu0 %v1814
      %2490 = vmatprep.subr.bf16.mxu0 0
      %2491 = vmatpush1.bf16.msra.mxu0 %v1815
      %2492 = vmatprep.subr.bf16.mxu0 0
      %2493 = vmatpush1.bf16.msra.mxu0 %v1816
      %2494 = vmatprep.subr.bf16.mxu0 0
      %2495 = vmatpush1.bf16.msra.mxu0 %v1817
      %2496 = vmatprep.subr.bf16.mxu0 0
      %2497 = vmatpush1.bf16.msra.mxu0 %v1818
      %2498 = vmatprep.subr.bf16.mxu0 0
      %2499 = vmatpush1.bf16.msra.mxu0 %v1819
      %2500 = vmatprep.mubr.bf16.mxu0 %v793
      %2501 = vmatmul.mubr.bf16.gmra.mrb[0].mxu0 %v792
      %v2502 = vpop.f32.mrb[0].mxu0
      %v2503 = vadd.f32 %v2454, %v2502
      %v2504 = vpop.f32.mrb[0].mxu0
      %v2505 = vpop.f32.mrb[0].mxu0
      %v2506 = vadd.f32 %v2457, %v2505
      %v2507 = vpop.f32.mrb[0].mxu0
      %2508 = vmatprep.mubr.bf16.mxu0 %v818
      %2509 = vmatmul.mubr.bf16.gmra.mrb[0].mxu0 %v817
      %v2510 = vpop.f32.mrb[0].mxu0
      %v2511 = vadd.f32 %v2462, %v2510
      %v2512 = vpop.f32.mrb[0].mxu0
      %v2513 = vpop.f32.mrb[0].mxu0
      %v2514 = vadd.f32 %v2465, %v2513
      %v2515 = vpop.f32.mrb[0].mxu0
      %2516 = vdwg.mxu0
      %2517 = vmatprep.subr.bf16.mxu0 0
      %2518 = vmatpush1.bf16.msra.mxu0 %v1820
      %2519 = vmatprep.subr.bf16.mxu0 0
      %2520 = vmatpush1.bf16.msra.mxu0 %v1821
      %2521 = vmatprep.subr.bf16.mxu0 0
      %2522 = vmatpush1.bf16.msra.mxu0 %v1822
      %2523 = vmatprep.subr.bf16.mxu0 0
      %2524 = vmatpush1.bf16.msra.mxu0 %v1823
      %2525 = vmatprep.subr.bf16.mxu0 0
      %2526 = vmatpush1.bf16.msra.mxu0 %v1824
      %2527 = vmatprep.subr.bf16.mxu0 0
      %2528 = vmatpush1.bf16.msra.mxu0 %v1825
      %2529 = vmatprep.subr.bf16.mxu0 0
      %2530 = vmatpush1.bf16.msra.mxu0 %v1826
      %2531 = vmatprep.subr.bf16.mxu0 0
      %2532 = vmatpush1.bf16.msra.mxu0 %v1827
      %2533 = vmatprep.subr.bf16.mxu0 0
      %2534 = vmatpush1.bf16.msra.mxu0 %v1828
      %2535 = vmatprep.subr.bf16.mxu0 0
      %2536 = vmatpush1.bf16.msra.mxu0 %v1829
      %2537 = vmatprep.subr.bf16.mxu0 0
      %2538 = vmatpush1.bf16.msra.mxu0 %v1830
      %2539 = vmatprep.subr.bf16.mxu0 0
      %2540 = vmatpush1.bf16.msra.mxu0 %v1831
      %2541 = vmatprep.subr.bf16.mxu0 0
      %2542 = vmatpush1.bf16.msra.mxu0 %v1832
      %2543 = vmatprep.subr.bf16.mxu0 0
      %2544 = vmatpush1.bf16.msra.mxu0 %v1833
      %2545 = vmatprep.subr.bf16.mxu0 0
      %2546 = vmatpush1.bf16.msra.mxu0 %v1834
      %2547 = vmatprep.subr.bf16.mxu0 0
      %2548 = vmatpush1.bf16.msra.mxu0 %v1835
      %2549 = vmatprep.mubr.bf16.mxu0 %v795
      %2550 = vmatmul.mubr.bf16.gmra.mrb[0].mxu0 %v794
      %v2551 = vpop.f32.mrb[0].mxu0
      %v2552 = vadd.f32 %v2503, %v2551
      %v2553 = vpop.f32.mrb[0].mxu0
      %v2554 = vpop.f32.mrb[0].mxu0
      %v2555 = vadd.f32 %v2506, %v2554
      %v2556 = vpop.f32.mrb[0].mxu0
      %2557 = vmatprep.mubr.bf16.mxu0 %v820
      %2558 = vmatmul.mubr.bf16.gmra.mrb[0].mxu0 %v819
      %v2559 = vpop.f32.mrb[0].mxu0
      %v2560 = vadd.f32 %v2511, %v2559
      %v2561 = vpop.f32.mrb[0].mxu0
      %v2562 = vpop.f32.mrb[0].mxu0
      %v2563 = vadd.f32 %v2514, %v2562
      %v2564 = vpop.f32.mrb[0].mxu0
      %2565 = vdwg.mxu0
      %2566 = vmatprep.subr.bf16.mxu0 0
      %2567 = vmatpush1.bf16.msra.mxu0 %v1836
      %2568 = vmatprep.subr.bf16.mxu0 0
      %2569 = vmatpush1.bf16.msra.mxu0 %v1837
      %2570 = vmatprep.subr.bf16.mxu0 0
      %2571 = vmatpush1.bf16.msra.mxu0 %v1838
      %2572 = vmatprep.subr.bf16.mxu0 0
      %2573 = vmatpush1.bf16.msra.mxu0 %v1839
      %2574 = vmatprep.subr.bf16.mxu0 0
      %2575 = vmatpush1.bf16.msra.mxu0 %v1840
      %2576 = vmatprep.subr.bf16.mxu0 0
      %2577 = vmatpush1.bf16.msra.mxu0 %v1841
      %2578 = vmatprep.subr.bf16.mxu0 0
      %2579 = vmatpush1.bf16.msra.mxu0 %v1842
      %2580 = vmatprep.subr.bf16.mxu0 0
      %2581 = vmatpush1.bf16.msra.mxu0 %v1843
      %2582 = vmatprep.subr.bf16.mxu0 0
      %2583 = vmatpush1.bf16.msra.mxu0 %v1844
      %2584 = vmatprep.subr.bf16.mxu0 0
      %2585 = vmatpush1.bf16.msra.mxu0 %v1845
      %2586 = vmatprep.subr.bf16.mxu0 0
      %2587 = vmatpush1.bf16.msra.mxu0 %v1846
      %2588 = vmatprep.subr.bf16.mxu0 0
      %2589 = vmatpush1.bf16.msra.mxu0 %v1847
      %2590 = vmatprep.subr.bf16.mxu0 0
      %2591 = vmatpush1.bf16.msra.mxu0 %v1848
      %2592 = vmatprep.subr.bf16.mxu0 0
      %2593 = vmatpush1.bf16.msra.mxu0 %v1849
      %2594 = vmatprep.subr.bf16.mxu0 0
      %2595 = vmatpush1.bf16.msra.mxu0 %v1850
      %2596 = vmatprep.subr.bf16.mxu0 0
      %2597 = vmatpush1.bf16.msra.mxu0 %v1851
      %2598 = vmatprep.mubr.bf16.mxu0 %v797
      %2599 = vmatmul.mubr.bf16.gmra.mrb[0].mxu0 %v796
      %v2600 = vpop.f32.mrb[0].mxu0
      %v2601 = vadd.f32 %v2552, %v2600
      %v2602 = vpop.f32.mrb[0].mxu0
      %v2603 = vpop.f32.mrb[0].mxu0
      %v2604 = vadd.f32 %v2555, %v2603
      %v2605 = vpop.f32.mrb[0].mxu0
      %2606 = vmatprep.mubr.bf16.mxu0 %v822
      %2607 = vmatmul.mubr.bf16.gmra.mrb[0].mxu0 %v821
      %v2608 = vpop.f32.mrb[0].mxu0
      %v2609 = vadd.f32 %v2560, %v2608
      %v2610 = vpop.f32.mrb[0].mxu0
      %v2611 = vpop.f32.mrb[0].mxu0
      %v2612 = vadd.f32 %v2563, %v2611
      %v2613 = vpop.f32.mrb[0].mxu0
      %2614 = vdwg.mxu0
      %2615 = vmatprep.subr.bf16.mxu0 0
      %2616 = vmatpush1.bf16.msra.mxu0 %v1852
      %2617 = vmatprep.subr.bf16.mxu0 0
      %2618 = vmatpush1.bf16.msra.mxu0 %v1853
      %2619 = vmatprep.subr.bf16.mxu0 0
      %2620 = vmatpush1.bf16.msra.mxu0 %v1854
      %2621 = vmatprep.subr.bf16.mxu0 0
      %2622 = vmatpush1.bf16.msra.mxu0 %v1855
      %2623 = vmatprep.subr.bf16.mxu0 0
      %2624 = vmatpush1.bf16.msra.mxu0 %v1856
      %2625 = vmatprep.subr.bf16.mxu0 0
      %2626 = vmatpush1.bf16.msra.mxu0 %v1857
      %2627 = vmatprep.subr.bf16.mxu0 0
      %2628 = vmatpush1.bf16.msra.mxu0 %v1858
      %2629 = vmatprep.subr.bf16.mxu0 0
      %2630 = vmatpush1.bf16.msra.mxu0 %v1859
      %2631 = vmatprep.subr.bf16.mxu0 0
      %2632 = vmatpush1.bf16.msra.mxu0 %v1860
      %2633 = vmatprep.subr.bf16.mxu0 0
      %2634 = vmatpush1.bf16.msra.mxu0 %v1861
      %2635 = vmatprep.subr.bf16.mxu0 0
      %2636 = vmatpush1.bf16.msra.mxu0 %v1862
      %2637 = vmatprep.subr.bf16.mxu0 0
      %2638 = vmatpush1.bf16.msra.mxu0 %v1863
      %2639 = vmatprep.subr.bf16.mxu0 0
      %2640 = vmatpush1.bf16.msra.mxu0 %v1864
      %2641 = vmatprep.subr.bf16.mxu0 0
      %2642 = vmatpush1.bf16.msra.mxu0 %v1865
      %2643 = vmatprep.subr.bf16.mxu0 0
      %2644 = vmatpush1.bf16.msra.mxu0 %v1866
      %2645 = vmatprep.subr.bf16.mxu0 0
      %2646 = vmatpush1.bf16.msra.mxu0 %v1867
      %2647 = vmatprep.mubr.bf16.mxu0 %v799
      %2648 = vmatmul.mubr.bf16.gmra.mrb[0].mxu0 %v798
      %v2649 = vpop.f32.mrb[0].mxu0
      %v2650 = vadd.f32 %v2601, %v2649
      %v2651 = vpop.f32.mrb[0].mxu0
      %v2652 = vpop.f32.mrb[0].mxu0
      %v2653 = vadd.f32 %v2604, %v2652
      %v2654 = vpop.f32.mrb[0].mxu0
      %2655 = vmatprep.mubr.bf16.mxu0 %v824
      %2656 = vmatmul.mubr.bf16.gmra.mrb[0].mxu0 %v823
      %v2657 = vpop.f32.mrb[0].mxu0
      %v2658 = vadd.f32 %v2609, %v2657
      %v2659 = vpop.f32.mrb[0].mxu0
      %v2660 = vpop.f32.mrb[0].mxu0
      %v2661 = vadd.f32 %v2612, %v2660
      %v2662 = vpop.f32.mrb[0].mxu0
      %2663 = vdwg.mxu0
      %2664 = vmatprep.subr.bf16.mxu0 0
      %2665 = vmatpush1.bf16.msra.mxu0 %v1868
      %2666 = vmatprep.subr.bf16.mxu0 0
      %2667 = vmatpush1.bf16.msra.mxu0 %v1869
      %2668 = vmatprep.subr.bf16.mxu0 0
      %2669 = vmatpush1.bf16.msra.mxu0 %v1870
      %2670 = vmatprep.subr.bf16.mxu0 0
      %2671 = vmatpush1.bf16.msra.mxu0 %v1871
      %2672 = vmatprep.subr.bf16.mxu0 0
      %2673 = vmatpush1.bf16.msra.mxu0 %v1872
      %2674 = vmatprep.subr.bf16.mxu0 0
      %2675 = vmatpush1.bf16.msra.mxu0 %v1873
      %2676 = vmatprep.subr.bf16.mxu0 0
      %2677 = vmatpush1.bf16.msra.mxu0 %v1874
      %2678 = vmatprep.subr.bf16.mxu0 0
      %2679 = vmatpush1.bf16.msra.mxu0 %v1875
      %2680 = vmatprep.subr.bf16.mxu0 0
      %2681 = vmatpush1.bf16.msra.mxu0 0
      %2682 = vmatprep.subr.bf16.mxu0 0
      %2683 = vmatpush1.bf16.msra.mxu0 0
      %2684 = vmatprep.subr.bf16.mxu0 0
      %2685 = vmatpush1.bf16.msra.mxu0 0
      %2686 = vmatprep.subr.bf16.mxu0 0
      %2687 = vmatpush1.bf16.msra.mxu0 0
      %2688 = vmatprep.subr.bf16.mxu0 0
      %2689 = vmatpush1.bf16.msra.mxu0 0
      %2690 = vmatprep.subr.bf16.mxu0 0
      %2691 = vmatpush1.bf16.msra.mxu0 0
      %2692 = vmatprep.subr.bf16.mxu0 0
      %2693 = vmatpush1.bf16.msra.mxu0 0
      %2694 = vmatprep.subr.bf16.mxu0 0
      %2695 = vmatpush1.bf16.msra.mxu0 0
      %2696 = vmatprep.mubr.bf16.mxu0 0
      %2697 = vmatmul.mubr.bf16.gmra.mrb[0].mxu0 %v800
      %v2698 = vpop.f32.mrb[0].mxu0
      %v2699 = vadd.f32 %v2650, %v2698
      %v2700 = vpop.f32.mrb[0].mxu0
      %v2701 = vpop.f32.mrb[0].mxu0
      %v2702 = vadd.f32 %v2653, %v2701
      %v2703 = vpop.f32.mrb[0].mxu0
      %2704 = vmatprep.mubr.bf16.mxu0 0
      %2705 = vmatmul.mubr.bf16.gmra.mrb[0].mxu0 %v825
      %v2706 = vpop.f32.mrb[0].mxu0
      %v2707 = vadd.f32 %v2658, %v2706
      %v2708 = vpop.f32.mrb[0].mxu0
      %v2709 = vpop.f32.mrb[0].mxu0
      %v2710 = vadd.f32 %v2661, %v2709
      %v2711 = vpop.f32.mrb[0].mxu0
      %2712 = vdwg.mxu0
      %s2713 = scalar_lea.vmem %s165, 400
      %v2714 = vld [vmem:[%s2713] sm:$0xff]
      %v2715 = vld [vmem:[%s2713 + $0x8] sm:$0xff]
      %v2716 = vld [vmem:[%s2713 + $0x10] sm:$0xff]
      %v2717 = vld [vmem:[%s2713 + $0x18] sm:$0xff]
      %v2718 = vld [vmem:[%s2713 + $0x20] sm:$0xff]
      %v2719 = vld [vmem:[%s2713 + $0x28] sm:$0xff]
      %v2720 = vld [vmem:[%s2713 + $0x30] sm:$0xff]
      %v2721 = vld [vmem:[%s2713 + $0x38] sm:$0xff]
      %v2722 = vld [vmem:[%s2713 + $0x40] sm:$0xff]
      %v2723 = vld [vmem:[%s2713 + $0x48] sm:$0xff]
      %v2724 = vld [vmem:[%s2713 + $0x50] sm:$0xff]
      %v2725 = vld [vmem:[%s2713 + $0x58] sm:$0xff]
      %v2726 = vld [vmem:[%s2713 + $0x60] sm:$0xf]
      %v2727 = vld [vmem:[%s2713 + $0x64] sm:$0xff]
      %v2728 = vld [vmem:[%s2713 + $0x6c] sm:$0xff]
      %v2729 = vld [vmem:[%s2713 + $0x74] sm:$0xff]
      %v2730 = vld [vmem:[%s2713 + $0x7c] sm:$0xff]
      %v2731 = vld [vmem:[%s2713 + $0x84] sm:$0xff]
      %v2732 = vld [vmem:[%s2713 + $0x8c] sm:$0xff]
      %v2733 = vld [vmem:[%s2713 + $0x94] sm:$0xff]
      %v2734 = vld [vmem:[%s2713 + $0x9c] sm:$0xff]
      %v2735 = vld [vmem:[%s2713 + $0xa4] sm:$0xff]
      %v2736 = vld [vmem:[%s2713 + $0xac] sm:$0xff]
      %v2737 = vld [vmem:[%s2713 + $0xb4] sm:$0xff]
      %v2738 = vld [vmem:[%s2713 + $0xbc] sm:$0xff]
      %v2739 = vld [vmem:[%s2713 + $0xc4] sm:$0xf]
      %v2740 = vld [vmem:[%s2713 + $0xc8] sm:$0xff]
      %v2741 = vld [vmem:[%s2713 + $0xd0] sm:$0xff]
      %v2742 = vld [vmem:[%s2713 + $0xd8] sm:$0xff]
      %v2743 = vld [vmem:[%s2713 + $0xe0] sm:$0xff]
      %v2744 = vld [vmem:[%s2713 + $0xe8] sm:$0xff]
      %v2745 = vld [vmem:[%s2713 + $0xf0] sm:$0xff]
      %v2746 = vld [vmem:[%s2713 + $0xf8] sm:$0xff]
      %v2747 = vld [vmem:[%s2713 + $0x100] sm:$0xff]
      %v2748 = vld [vmem:[%s2713 + $0x108] sm:$0xff]
      %v2749 = vld [vmem:[%s2713 + $0x110] sm:$0xff]
      %v2750 = vld [vmem:[%s2713 + $0x118] sm:$0xff]
      %v2751 = vld [vmem:[%s2713 + $0x120] sm:$0xff]
      %v2752 = vld [vmem:[%s2713 + $0x128] sm:$0xf]
      %v2753 = vld [vmem:[%s2713 + $0x12c] sm:$0x11]
      %v2754 = vld [vmem:[%s2713 + $0x134] sm:$0x11]
      %v2755 = vld [vmem:[%s2713 + $0x13c] sm:$0x11]
      %v2756 = vld [vmem:[%s2713 + $0x144] sm:$0x11]
      %v2757 = vld [vmem:[%s2713 + $0x14c] sm:$0x11]
      %v2758 = vld [vmem:[%s2713 + $0x154] sm:$0x11]
      %v2759 = vld [vmem:[%s2713 + $0x15c] sm:$0x11]
      %v2760 = vld [vmem:[%s2713 + $0x164] sm:$0x11]
      %v2761 = vld [vmem:[%s2713 + $0x16c] sm:$0x11]
      %v2762 = vld [vmem:[%s2713 + $0x174] sm:$0x11]
      %v2763 = vld [vmem:[%s2713 + $0x17c] sm:$0x11]
      %v2764 = vld [vmem:[%s2713 + $0x184] sm:$0x11]
      %v2765 = vld [vmem:[%s2713 + $0x18c] sm:$0x1]
      %v2818 = vunpack.c.l.b16 %v2714
      %v2819 = vunpack.c.h.b16 %v2714
      %v2820 = vunpack.c.l.b16 %v2715
      %v2821 = vunpack.c.h.b16 %v2715
      %v2822 = vunpack.c.l.b16 %v2716
      %v2823 = vunpack.c.h.b16 %v2716
      %v2824 = vunpack.c.l.b16 %v2717
      %v2825 = vunpack.c.h.b16 %v2717
      %v2826 = vunpack.c.l.b16 %v2718
      %v2827 = vunpack.c.h.b16 %v2718
      %v2828 = vunpack.c.l.b16 %v2719
      %v2829 = vunpack.c.h.b16 %v2719
      %v2830 = vunpack.c.l.b16 %v2720
      %v2831 = vunpack.c.h.b16 %v2720
      %v2832 = vunpack.c.l.b16 %v2721
      %v2833 = vunpack.c.h.b16 %v2721
      %v2834 = vunpack.c.l.b16 %v2722
      %v2835 = vunpack.c.h.b16 %v2722
      %v2836 = vunpack.c.l.b16 %v2723
      %v2837 = vunpack.c.h.b16 %v2723
      %v2838 = vunpack.c.l.b16 %v2724
      %v2839 = vunpack.c.h.b16 %v2724
      %v2840 = vunpack.c.l.b16 %v2725
      %v2841 = vunpack.c.h.b16 %v2725
      %v2842 = vunpack.c.l.b16 %v2726
      %v2843 = vunpack.c.l.b16 %v2727
      %v2844 = vunpack.c.h.b16 %v2727
      %v2845 = vunpack.c.l.b16 %v2728
      %v2846 = vunpack.c.h.b16 %v2728
      %v2847 = vunpack.c.l.b16 %v2729
      %v2848 = vunpack.c.h.b16 %v2729
      %v2849 = vunpack.c.l.b16 %v2730
      %v2850 = vunpack.c.h.b16 %v2730
      %v2851 = vunpack.c.l.b16 %v2731
      %v2852 = vunpack.c.h.b16 %v2731
      %v2853 = vunpack.c.l.b16 %v2732
      %v2854 = vunpack.c.h.b16 %v2732
      %v2855 = vunpack.c.l.b16 %v2733
      %v2856 = vunpack.c.h.b16 %v2733
      %v2857 = vunpack.c.l.b16 %v2734
      %v2858 = vunpack.c.h.b16 %v2734
      %v2859 = vunpack.c.l.b16 %v2735
      %v2860 = vunpack.c.h.b16 %v2735
      %v2861 = vunpack.c.l.b16 %v2736
      %v2862 = vunpack.c.h.b16 %v2736
      %v2863 = vunpack.c.l.b16 %v2737
      %v2864 = vunpack.c.h.b16 %v2737
      %v2865 = vunpack.c.l.b16 %v2738
      %v2866 = vunpack.c.h.b16 %v2738
      %v2867 = vunpack.c.l.b16 %v2739
      %v2868 = vunpack.c.l.b16 %v2740
      %v2869 = vunpack.c.h.b16 %v2740
      %v2870 = vunpack.c.l.b16 %v2741
      %v2871 = vunpack.c.h.b16 %v2741
      %v2872 = vunpack.c.l.b16 %v2742
      %v2873 = vunpack.c.h.b16 %v2742
      %v2874 = vunpack.c.l.b16 %v2743
      %v2875 = vunpack.c.h.b16 %v2743
      %v2876 = vunpack.c.l.b16 %v2744
      %v2877 = vunpack.c.h.b16 %v2744
      %v2878 = vunpack.c.l.b16 %v2745
      %v2879 = vunpack.c.h.b16 %v2745
      %v2880 = vunpack.c.l.b16 %v2746
      %v2881 = vunpack.c.h.b16 %v2746
      %v2882 = vunpack.c.l.b16 %v2747
      %v2883 = vunpack.c.h.b16 %v2747
      %v2884 = vunpack.c.l.b16 %v2748
      %v2885 = vunpack.c.h.b16 %v2748
      %v2886 = vunpack.c.l.b16 %v2749
      %v2887 = vunpack.c.h.b16 %v2749
      %v2888 = vunpack.c.l.b16 %v2750
      %v2889 = vunpack.c.h.b16 %v2750
      %v2890 = vunpack.c.l.b16 %v2751
      %v2891 = vunpack.c.h.b16 %v2751
      %v2892 = vunpack.c.l.b16 %v2752
      %v2893 = vunpack.c.l.b16 %v2753
      %v2894 = vunpack.c.h.b16 %v2753
      %v2895 = vunpack.c.l.b16 %v2754
      %v2896 = vunpack.c.h.b16 %v2754
      %v2897 = vunpack.c.l.b16 %v2755
      %v2898 = vunpack.c.h.b16 %v2755
      %v2899 = vunpack.c.l.b16 %v2756
      %v2900 = vunpack.c.h.b16 %v2756
      %v2901 = vunpack.c.l.b16 %v2757
      %v2902 = vunpack.c.h.b16 %v2757
      %v2903 = vunpack.c.l.b16 %v2758
      %v2904 = vunpack.c.h.b16 %v2758
      %v2905 = vunpack.c.l.b16 %v2759
      %v2906 = vunpack.c.h.b16 %v2759
      %v2907 = vunpack.c.l.b16 %v2760
      %v2908 = vunpack.c.h.b16 %v2760
      %v2909 = vunpack.c.l.b16 %v2761
      %v2910 = vunpack.c.h.b16 %v2761
      %v2911 = vunpack.c.l.b16 %v2762
      %v2912 = vunpack.c.h.b16 %v2762
      %v2913 = vunpack.c.l.b16 %v2763
      %v2914 = vunpack.c.h.b16 %v2763
      %v2915 = vunpack.c.l.b16 %v2764
      %v2916 = vunpack.c.h.b16 %v2764
      %v2917 = vunpack.c.l.b16 %v2765
      %v2918 = vpack.c.b16 %v2843, %v2818
      %v2919 = vpack.c.b16 %v2844, %v2819
      %v2920 = vpack.c.b16 %v2845, %v2820
      %v2921 = vpack.c.b16 %v2846, %v2821
      %v2922 = vpack.c.b16 %v2847, %v2822
      %v2923 = vpack.c.b16 %v2848, %v2823
      %v2924 = vpack.c.b16 %v2849, %v2824
      %v2925 = vpack.c.b16 %v2850, %v2825
      %v2926 = vpack.c.b16 %v2851, %v2826
      %v2927 = vpack.c.b16 %v2852, %v2827
      %v2928 = vpack.c.b16 %v2853, %v2828
      %v2929 = vpack.c.b16 %v2854, %v2829
      %v2930 = vpack.c.b16 %v2855, %v2830
      %v2931 = vpack.c.b16 %v2856, %v2831
      %v2932 = vpack.c.b16 %v2857, %v2832
      %v2933 = vpack.c.b16 %v2858, %v2833
      %v2934 = vpack.c.b16 %v2859, %v2834
      %v2935 = vpack.c.b16 %v2860, %v2835
      %v2936 = vpack.c.b16 %v2861, %v2836
      %v2937 = vpack.c.b16 %v2862, %v2837
      %v2938 = vpack.c.b16 %v2863, %v2838
      %v2939 = vpack.c.b16 %v2864, %v2839
      %v2940 = vpack.c.b16 %v2865, %v2840
      %v2941 = vpack.c.b16 %v2866, %v2841
      %v2942 = vpack.c.b16 %v2867, %v2842
      %v2943 = vpack.c.b16 %v2893, %v2868
      %v2944 = vpack.c.b16 %v2894, %v2869
      %v2945 = vpack.c.b16 %v2895, %v2870
      %v2946 = vpack.c.b16 %v2896, %v2871
      %v2947 = vpack.c.b16 %v2897, %v2872
      %v2948 = vpack.c.b16 %v2898, %v2873
      %v2949 = vpack.c.b16 %v2899, %v2874
      %v2950 = vpack.c.b16 %v2900, %v2875
      %v2951 = vpack.c.b16 %v2901, %v2876
      %v2952 = vpack.c.b16 %v2902, %v2877
      %v2953 = vpack.c.b16 %v2903, %v2878
      %v2954 = vpack.c.b16 %v2904, %v2879
      %v2955 = vpack.c.b16 %v2905, %v2880
      %v2956 = vpack.c.b16 %v2906, %v2881
      %v2957 = vpack.c.b16 %v2907, %v2882
      %v2958 = vpack.c.b16 %v2908, %v2883
      %v2959 = vpack.c.b16 %v2909, %v2884
      %v2960 = vpack.c.b16 %v2910, %v2885
      %v2961 = vpack.c.b16 %v2911, %v2886
      %v2962 = vpack.c.b16 %v2912, %v2887
      %v2963 = vpack.c.b16 %v2913, %v2888
      %v2964 = vpack.c.b16 %v2914, %v2889
      %v2965 = vpack.c.b16 %v2915, %v2890
      %v2966 = vpack.c.b16 %v2916, %v2891
      %v2967 = vpack.c.b16 %v2917, %v2892
      %3018 = vmatprep.subr.bf16.mxu0 0
      %3019 = vmatpush1.bf16.msra.mxu0 %v1676
      %3020 = vmatprep.subr.bf16.mxu0 0
      %3021 = vmatpush1.bf16.msra.mxu0 %v1677
      %3022 = vmatprep.subr.bf16.mxu0 0
      %3023 = vmatpush1.bf16.msra.mxu0 %v1678
      %3024 = vmatprep.subr.bf16.mxu0 0
      %3025 = vmatpush1.bf16.msra.mxu0 %v1679
      %3026 = vmatprep.subr.bf16.mxu0 0
      %3027 = vmatpush1.bf16.msra.mxu0 %v1680
      %3028 = vmatprep.subr.bf16.mxu0 0
      %3029 = vmatpush1.bf16.msra.mxu0 %v1681
      %3030 = vmatprep.subr.bf16.mxu0 0
      %3031 = vmatpush1.bf16.msra.mxu0 %v1682
      %3032 = vmatprep.subr.bf16.mxu0 0
      %3033 = vmatpush1.bf16.msra.mxu0 %v1683
      %3034 = vmatprep.subr.bf16.mxu0 0
      %3035 = vmatpush1.bf16.msra.mxu0 %v1684
      %3036 = vmatprep.subr.bf16.mxu0 0
      %3037 = vmatpush1.bf16.msra.mxu0 %v1685
      %3038 = vmatprep.subr.bf16.mxu0 0
      %3039 = vmatpush1.bf16.msra.mxu0 %v1686
      %3040 = vmatprep.subr.bf16.mxu0 0
      %3041 = vmatpush1.bf16.msra.mxu0 %v1687
      %3042 = vmatprep.subr.bf16.mxu0 0
      %3043 = vmatpush1.bf16.msra.mxu0 %v1688
      %3044 = vmatprep.subr.bf16.mxu0 0
      %3045 = vmatpush1.bf16.msra.mxu0 %v1689
      %3046 = vmatprep.subr.bf16.mxu0 0
      %3047 = vmatpush1.bf16.msra.mxu0 %v1690
      %3048 = vmatprep.subr.bf16.mxu0 0
      %3049 = vmatpush1.bf16.msra.mxu0 %v1691
      %3050 = vmatprep.mubr.bf16.mxu0 %v2919
      %3051 = vmatmul.mubr.bf16.gmra.mrb[0].mxu0 %v2918
      %v3052 = vpop.f32.mrb[0].mxu0
      %v3053 = vadd.f32 0.0, %v3052
      %v3054 = vpop.f32.mrb[0].mxu0
      %v3055 = vpop.f32.mrb[0].mxu0
      %v3056 = vadd.f32 0.0, %v3055
      %v3057 = vpop.f32.mrb[0].mxu0
      %3058 = vmatprep.mubr.bf16.mxu0 %v2944
      %3059 = vmatmul.mubr.bf16.gmra.mrb[0].mxu0 %v2943
      %v3060 = vpop.f32.mrb[0].mxu0
      %v3061 = vadd.f32 0.0, %v3060
      %v3062 = vpop.f32.mrb[0].mxu0
      %v3063 = vpop.f32.mrb[0].mxu0
      %v3064 = vadd.f32 0.0, %v3063
      %v3065 = vpop.f32.mrb[0].mxu0
      %3066 = vdwg.mxu0
      %3067 = vmatprep.subr.bf16.mxu0 0
      %3068 = vmatpush1.bf16.msra.mxu0 %v1692
      %3069 = vmatprep.subr.bf16.mxu0 0
      %3070 = vmatpush1.bf16.msra.mxu0 %v1693
      %3071 = vmatprep.subr.bf16.mxu0 0
      %3072 = vmatpush1.bf16.msra.mxu0 %v1694
      %3073 = vmatprep.subr.bf16.mxu0 0
      %3074 = vmatpush1.bf16.msra.mxu0 %v1695
      %3075 = vmatprep.subr.bf16.mxu0 0
      %3076 = vmatpush1.bf16.msra.mxu0 %v1696
      %3077 = vmatprep.subr.bf16.mxu0 0
      %3078 = vmatpush1.bf16.msra.mxu0 %v1697
      %3079 = vmatprep.subr.bf16.mxu0 0
      %3080 = vmatpush1.bf16.msra.mxu0 %v1698
      %3081 = vmatprep.subr.bf16.mxu0 0
      %3082 = vmatpush1.bf16.msra.mxu0 %v1699
      %3083 = vmatprep.subr.bf16.mxu0 0
      %3084 = vmatpush1.bf16.msra.mxu0 %v1700
      %3085 = vmatprep.subr.bf16.mxu0 0
      %3086 = vmatpush1.bf16.msra.mxu0 %v1701
      %3087 = vmatprep.subr.bf16.mxu0 0
      %3088 = vmatpush1.bf16.msra.mxu0 %v1702
      %3089 = vmatprep.subr.bf16.mxu0 0
      %3090 = vmatpush1.bf16.msra.mxu0 %v1703
      %3091 = vmatprep.subr.bf16.mxu0 0
      %3092 = vmatpush1.bf16.msra.mxu0 %v1704
      %3093 = vmatprep.subr.bf16.mxu0 0
      %3094 = vmatpush1.bf16.msra.mxu0 %v1705
      %3095 = vmatprep.subr.bf16.mxu0 0
      %3096 = vmatpush1.bf16.msra.mxu0 %v1706
      %3097 = vmatprep.subr.bf16.mxu0 0
      %3098 = vmatpush1.bf16.msra.mxu0 %v1707
      %3099 = vmatprep.mubr.bf16.mxu0 %v2921
      %3100 = vmatmul.mubr.bf16.gmra.mrb[0].mxu0 %v2920
      %v3101 = vpop.f32.mrb[0].mxu0
      %v3102 = vadd.f32 %v3053, %v3101
      %v3103 = vpop.f32.mrb[0].mxu0
      %v3104 = vpop.f32.mrb[0].mxu0
      %v3105 = vadd.f32 %v3056, %v3104
      %v3106 = vpop.f32.mrb[0].mxu0
      %3107 = vmatprep.mubr.bf16.mxu0 %v2946
      %3108 = vmatmul.mubr.bf16.gmra.mrb[0].mxu0 %v2945
      %v3109 = vpop.f32.mrb[0].mxu0
      %v3110 = vadd.f32 %v3061, %v3109
      %v3111 = vpop.f32.mrb[0].mxu0
      %v3112 = vpop.f32.mrb[0].mxu0
      %v3113 = vadd.f32 %v3064, %v3112
      %v3114 = vpop.f32.mrb[0].mxu0
      %3115 = vdwg.mxu0
      %3116 = vmatprep.subr.bf16.mxu0 0
      %3117 = vmatpush1.bf16.msra.mxu0 %v1708
      %3118 = vmatprep.subr.bf16.mxu0 0
      %3119 = vmatpush1.bf16.msra.mxu0 %v1709
      %3120 = vmatprep.subr.bf16.mxu0 0
      %3121 = vmatpush1.bf16.msra.mxu0 %v1710
      %3122 = vmatprep.subr.bf16.mxu0 0
      %3123 = vmatpush1.bf16.msra.mxu0 %v1711
      %3124 = vmatprep.subr.bf16.mxu0 0
      %3125 = vmatpush1.bf16.msra.mxu0 %v1712
      %3126 = vmatprep.subr.bf16.mxu0 0
      %3127 = vmatpush1.bf16.msra.mxu0 %v1713
      %3128 = vmatprep.subr.bf16.mxu0 0
      %3129 = vmatpush1.bf16.msra.mxu0 %v1714
      %3130 = vmatprep.subr.bf16.mxu0 0
      %3131 = vmatpush1.bf16.msra.mxu0 %v1715
      %3132 = vmatprep.subr.bf16.mxu0 0
      %3133 = vmatpush1.bf16.msra.mxu0 %v1716
      %3134 = vmatprep.subr.bf16.mxu0 0
      %3135 = vmatpush1.bf16.msra.mxu0 %v1717
      %3136 = vmatprep.subr.bf16.mxu0 0
      %3137 = vmatpush1.bf16.msra.mxu0 %v1718
      %3138 = vmatprep.subr.bf16.mxu0 0
      %3139 = vmatpush1.bf16.msra.mxu0 %v1719
      %3140 = vmatprep.subr.bf16.mxu0 0
      %3141 = vmatpush1.bf16.msra.mxu0 %v1720
      %3142 = vmatprep.subr.bf16.mxu0 0
      %3143 = vmatpush1.bf16.msra.mxu0 %v1721
      %3144 = vmatprep.subr.bf16.mxu0 0
      %3145 = vmatpush1.bf16.msra.mxu0 %v1722
      %3146 = vmatprep.subr.bf16.mxu0 0
      %3147 = vmatpush1.bf16.msra.mxu0 %v1723
      %3148 = vmatprep.mubr.bf16.mxu0 %v2923
      %3149 = vmatmul.mubr.bf16.gmra.mrb[0].mxu0 %v2922
      %v3150 = vpop.f32.mrb[0].mxu0
      %v3151 = vadd.f32 %v3102, %v3150
      %v3152 = vpop.f32.mrb[0].mxu0
      %v3153 = vpop.f32.mrb[0].mxu0
      %v3154 = vadd.f32 %v3105, %v3153
      %v3155 = vpop.f32.mrb[0].mxu0
      %3156 = vmatprep.mubr.bf16.mxu0 %v2948
      %3157 = vmatmul.mubr.bf16.gmra.mrb[0].mxu0 %v2947
      %v3158 = vpop.f32.mrb[0].mxu0
      %v3159 = vadd.f32 %v3110, %v3158
      %v3160 = vpop.f32.mrb[0].mxu0
      %v3161 = vpop.f32.mrb[0].mxu0
      %v3162 = vadd.f32 %v3113, %v3161
      %v3163 = vpop.f32.mrb[0].mxu0
      %3164 = vdwg.mxu0
      %3165 = vmatprep.subr.bf16.mxu0 0
      %3166 = vmatpush1.bf16.msra.mxu0 %v1724
      %3167 = vmatprep.subr.bf16.mxu0 0
      %3168 = vmatpush1.bf16.msra.mxu0 %v1725
      %3169 = vmatprep.subr.bf16.mxu0 0
      %3170 = vmatpush1.bf16.msra.mxu0 %v1726
      %3171 = vmatprep.subr.bf16.mxu0 0
      %3172 = vmatpush1.bf16.msra.mxu0 %v1727
      %3173 = vmatprep.subr.bf16.mxu0 0
      %3174 = vmatpush1.bf16.msra.mxu0 %v1728
      %3175 = vmatprep.subr.bf16.mxu0 0
      %3176 = vmatpush1.bf16.msra.mxu0 %v1729
      %3177 = vmatprep.subr.bf16.mxu0 0
      %3178 = vmatpush1.bf16.msra.mxu0 %v1730
      %3179 = vmatprep.subr.bf16.mxu0 0
      %3180 = vmatpush1.bf16.msra.mxu0 %v1731
      %3181 = vmatprep.subr.bf16.mxu0 0
      %3182 = vmatpush1.bf16.msra.mxu0 %v1732
      %3183 = vmatprep.subr.bf16.mxu0 0
      %3184 = vmatpush1.bf16.msra.mxu0 %v1733
      %3185 = vmatprep.subr.bf16.mxu0 0
      %3186 = vmatpush1.bf16.msra.mxu0 %v1734
      %3187 = vmatprep.subr.bf16.mxu0 0
      %3188 = vmatpush1.bf16.msra.mxu0 %v1735
      %3189 = vmatprep.subr.bf16.mxu0 0
      %3190 = vmatpush1.bf16.msra.mxu0 %v1736
      %3191 = vmatprep.subr.bf16.mxu0 0
      %3192 = vmatpush1.bf16.msra.mxu0 %v1737
      %3193 = vmatprep.subr.bf16.mxu0 0
      %3194 = vmatpush1.bf16.msra.mxu0 %v1738
      %3195 = vmatprep.subr.bf16.mxu0 0
      %3196 = vmatpush1.bf16.msra.mxu0 %v1739
      %3197 = vmatprep.mubr.bf16.mxu0 %v2925
      %3198 = vmatmul.mubr.bf16.gmra.mrb[0].mxu0 %v2924
      %v3199 = vpop.f32.mrb[0].mxu0
      %v3200 = vadd.f32 %v3151, %v3199
      %v3201 = vpop.f32.mrb[0].mxu0
      %v3202 = vpop.f32.mrb[0].mxu0
      %v3203 = vadd.f32 %v3154, %v3202
      %v3204 = vpop.f32.mrb[0].mxu0
      %3205 = vmatprep.mubr.bf16.mxu0 %v2950
      %3206 = vmatmul.mubr.bf16.gmra.mrb[0].mxu0 %v2949
      %v3207 = vpop.f32.mrb[0].mxu0
      %v3208 = vadd.f32 %v3159, %v3207
      %v3209 = vpop.f32.mrb[0].mxu0
      %v3210 = vpop.f32.mrb[0].mxu0
      %v3211 = vadd.f32 %v3162, %v3210
      %v3212 = vpop.f32.mrb[0].mxu0
      %3213 = vdwg.mxu0
      %3214 = vmatprep.subr.bf16.mxu0 0
      %3215 = vmatpush1.bf16.msra.mxu0 %v1740
      %3216 = vmatprep.subr.bf16.mxu0 0
      %3217 = vmatpush1.bf16.msra.mxu0 %v1741
      %3218 = vmatprep.subr.bf16.mxu0 0
      %3219 = vmatpush1.bf16.msra.mxu0 %v1742
      %3220 = vmatprep.subr.bf16.mxu0 0
      %3221 = vmatpush1.bf16.msra.mxu0 %v1743
      %3222 = vmatprep.subr.bf16.mxu0 0
      %3223 = vmatpush1.bf16.msra.mxu0 %v1744
      %3224 = vmatprep.subr.bf16.mxu0 0
      %3225 = vmatpush1.bf16.msra.mxu0 %v1745
      %3226 = vmatprep.subr.bf16.mxu0 0
      %3227 = vmatpush1.bf16.msra.mxu0 %v1746
      %3228 = vmatprep.subr.bf16.mxu0 0
      %3229 = vmatpush1.bf16.msra.mxu0 %v1747
      %3230 = vmatprep.subr.bf16.mxu0 0
      %3231 = vmatpush1.bf16.msra.mxu0 %v1748
      %3232 = vmatprep.subr.bf16.mxu0 0
      %3233 = vmatpush1.bf16.msra.mxu0 %v1749
      %3234 = vmatprep.subr.bf16.mxu0 0
      %3235 = vmatpush1.bf16.msra.mxu0 %v1750
      %3236 = vmatprep.subr.bf16.mxu0 0
      %3237 = vmatpush1.bf16.msra.mxu0 %v1751
      %3238 = vmatprep.subr.bf16.mxu0 0
      %3239 = vmatpush1.bf16.msra.mxu0 %v1752
      %3240 = vmatprep.subr.bf16.mxu0 0
      %3241 = vmatpush1.bf16.msra.mxu0 %v1753
      %3242 = vmatprep.subr.bf16.mxu0 0
      %3243 = vmatpush1.bf16.msra.mxu0 %v1754
      %3244 = vmatprep.subr.bf16.mxu0 0
      %3245 = vmatpush1.bf16.msra.mxu0 %v1755
      %3246 = vmatprep.mubr.bf16.mxu0 %v2927
      %3247 = vmatmul.mubr.bf16.gmra.mrb[0].mxu0 %v2926
      %v3248 = vpop.f32.mrb[0].mxu0
      %v3249 = vadd.f32 %v3200, %v3248
      %v3250 = vpop.f32.mrb[0].mxu0
      %v3251 = vpop.f32.mrb[0].mxu0
      %v3252 = vadd.f32 %v3203, %v3251
      %v3253 = vpop.f32.mrb[0].mxu0
      %3254 = vmatprep.mubr.bf16.mxu0 %v2952
      %3255 = vmatmul.mubr.bf16.gmra.mrb[0].mxu0 %v2951
      %v3256 = vpop.f32.mrb[0].mxu0
      %v3257 = vadd.f32 %v3208, %v3256
      %v3258 = vpop.f32.mrb[0].mxu0
      %v3259 = vpop.f32.mrb[0].mxu0
      %v3260 = vadd.f32 %v3211, %v3259
      %v3261 = vpop.f32.mrb[0].mxu0
      %3262 = vdwg.mxu0
      %3263 = vmatprep.subr.bf16.mxu0 0
      %3264 = vmatpush1.bf16.msra.mxu0 %v1756
      %3265 = vmatprep.subr.bf16.mxu0 0
      %3266 = vmatpush1.bf16.msra.mxu0 %v1757
      %3267 = vmatprep.subr.bf16.mxu0 0
      %3268 = vmatpush1.bf16.msra.mxu0 %v1758
      %3269 = vmatprep.subr.bf16.mxu0 0
      %3270 = vmatpush1.bf16.msra.mxu0 %v1759
      %3271 = vmatprep.subr.bf16.mxu0 0
      %3272 = vmatpush1.bf16.msra.mxu0 %v1760
      %3273 = vmatprep.subr.bf16.mxu0 0
      %3274 = vmatpush1.bf16.msra.mxu0 %v1761
      %3275 = vmatprep.subr.bf16.mxu0 0
      %3276 = vmatpush1.bf16.msra.mxu0 %v1762
      %3277 = vmatprep.subr.bf16.mxu0 0
      %3278 = vmatpush1.bf16.msra.mxu0 %v1763
      %3279 = vmatprep.subr.bf16.mxu0 0
      %3280 = vmatpush1.bf16.msra.mxu0 %v1764
      %3281 = vmatprep.subr.bf16.mxu0 0
      %3282 = vmatpush1.bf16.msra.mxu0 %v1765
      %3283 = vmatprep.subr.bf16.mxu0 0
      %3284 = vmatpush1.bf16.msra.mxu0 %v1766
      %3285 = vmatprep.subr.bf16.mxu0 0
      %3286 = vmatpush1.bf16.msra.mxu0 %v1767
      %3287 = vmatprep.subr.bf16.mxu0 0
      %3288 = vmatpush1.bf16.msra.mxu0 %v1768
      %3289 = vmatprep.subr.bf16.mxu0 0
      %3290 = vmatpush1.bf16.msra.mxu0 %v1769
      %3291 = vmatprep.subr.bf16.mxu0 0
      %3292 = vmatpush1.bf16.msra.mxu0 %v1770
      %3293 = vmatprep.subr.bf16.mxu0 0
      %3294 = vmatpush1.bf16.msra.mxu0 %v1771
      %3295 = vmatprep.mubr.bf16.mxu0 %v2929
      %3296 = vmatmul.mubr.bf16.gmra.mrb[0].mxu0 %v2928
      %v3297 = vpop.f32.mrb[0].mxu0
      %v3298 = vadd.f32 %v3249, %v3297
      %v3299 = vpop.f32.mrb[0].mxu0
      %v3300 = vpop.f32.mrb[0].mxu0
      %v3301 = vadd.f32 %v3252, %v3300
      %v3302 = vpop.f32.mrb[0].mxu0
      %3303 = vmatprep.mubr.bf16.mxu0 %v2954
      %3304 = vmatmul.mubr.bf16.gmra.mrb[0].mxu0 %v2953
      %v3305 = vpop.f32.mrb[0].mxu0
      %v3306 = vadd.f32 %v3257, %v3305
      %v3307 = vpop.f32.mrb[0].mxu0
      %v3308 = vpop.f32.mrb[0].mxu0
      %v3309 = vadd.f32 %v3260, %v3308
      %v3310 = vpop.f32.mrb[0].mxu0
      %3311 = vdwg.mxu0
      %3312 = vmatprep.subr.bf16.mxu0 0
      %3313 = vmatpush1.bf16.msra.mxu0 %v1772
      %3314 = vmatprep.subr.bf16.mxu0 0
      %3315 = vmatpush1.bf16.msra.mxu0 %v1773
      %3316 = vmatprep.subr.bf16.mxu0 0
      %3317 = vmatpush1.bf16.msra.mxu0 %v1774
      %3318 = vmatprep.subr.bf16.mxu0 0
      %3319 = vmatpush1.bf16.msra.mxu0 %v1775
      %3320 = vmatprep.subr.bf16.mxu0 0
      %3321 = vmatpush1.bf16.msra.mxu0 %v1776
      %3322 = vmatprep.subr.bf16.mxu0 0
      %3323 = vmatpush1.bf16.msra.mxu0 %v1777
      %3324 = vmatprep.subr.bf16.mxu0 0
      %3325 = vmatpush1.bf16.msra.mxu0 %v1778
      %3326 = vmatprep.subr.bf16.mxu0 0
      %3327 = vmatpush1.bf16.msra.mxu0 %v1779
      %3328 = vmatprep.subr.bf16.mxu0 0
      %3329 = vmatpush1.bf16.msra.mxu0 %v1780
      %3330 = vmatprep.subr.bf16.mxu0 0
      %3331 = vmatpush1.bf16.msra.mxu0 %v1781
      %3332 = vmatprep.subr.bf16.mxu0 0
      %3333 = vmatpush1.bf16.msra.mxu0 %v1782
      %3334 = vmatprep.subr.bf16.mxu0 0
      %3335 = vmatpush1.bf16.msra.mxu0 %v1783
      %3336 = vmatprep.subr.bf16.mxu0 0
      %3337 = vmatpush1.bf16.msra.mxu0 %v1784
      %3338 = vmatprep.subr.bf16.mxu0 0
      %3339 = vmatpush1.bf16.msra.mxu0 %v1785
      %3340 = vmatprep.subr.bf16.mxu0 0
      %3341 = vmatpush1.bf16.msra.mxu0 %v1786
      %3342 = vmatprep.subr.bf16.mxu0 0
      %3343 = vmatpush1.bf16.msra.mxu0 %v1787
      %3344 = vmatprep.mubr.bf16.mxu0 %v2931
      %3345 = vmatmul.mubr.bf16.gmra.mrb[0].mxu0 %v2930
      %v3346 = vpop.f32.mrb[0].mxu0
      %v3347 = vadd.f32 %v3298, %v3346
      %v3348 = vpop.f32.mrb[0].mxu0
      %v3349 = vpop.f32.mrb[0].mxu0
      %v3350 = vadd.f32 %v3301, %v3349
      %v3351 = vpop.f32.mrb[0].mxu0
      %3352 = vmatprep.mubr.bf16.mxu0 %v2956
      %3353 = vmatmul.mubr.bf16.gmra.mrb[0].mxu0 %v2955
      %v3354 = vpop.f32.mrb[0].mxu0
      %v3355 = vadd.f32 %v3306, %v3354
      %v3356 = vpop.f32.mrb[0].mxu0
      %v3357 = vpop.f32.mrb[0].mxu0
      %v3358 = vadd.f32 %v3309, %v3357
      %v3359 = vpop.f32.mrb[0].mxu0
      %3360 = vdwg.mxu0
      %3361 = vmatprep.subr.bf16.mxu0 0
      %3362 = vmatpush1.bf16.msra.mxu0 %v1788
      %3363 = vmatprep.subr.bf16.mxu0 0
      %3364 = vmatpush1.bf16.msra.mxu0 %v1789
      %3365 = vmatprep.subr.bf16.mxu0 0
      %3366 = vmatpush1.bf16.msra.mxu0 %v1790
      %3367 = vmatprep.subr.bf16.mxu0 0
      %3368 = vmatpush1.bf16.msra.mxu0 %v1791
      %3369 = vmatprep.subr.bf16.mxu0 0
      %3370 = vmatpush1.bf16.msra.mxu0 %v1792
      %3371 = vmatprep.subr.bf16.mxu0 0
      %3372 = vmatpush1.bf16.msra.mxu0 %v1793
      %3373 = vmatprep.subr.bf16.mxu0 0
      %3374 = vmatpush1.bf16.msra.mxu0 %v1794
      %3375 = vmatprep.subr.bf16.mxu0 0
      %3376 = vmatpush1.bf16.msra.mxu0 %v1795
      %3377 = vmatprep.subr.bf16.mxu0 0
      %3378 = vmatpush1.bf16.msra.mxu0 %v1796
      %3379 = vmatprep.subr.bf16.mxu0 0
      %3380 = vmatpush1.bf16.msra.mxu0 %v1797
      %3381 = vmatprep.subr.bf16.mxu0 0
      %3382 = vmatpush1.bf16.msra.mxu0 %v1798
      %3383 = vmatprep.subr.bf16.mxu0 0
      %3384 = vmatpush1.bf16.msra.mxu0 %v1799
      %3385 = vmatprep.subr.bf16.mxu0 0
      %3386 = vmatpush1.bf16.msra.mxu0 %v1800
      %3387 = vmatprep.subr.bf16.mxu0 0
      %3388 = vmatpush1.bf16.msra.mxu0 %v1801
      %3389 = vmatprep.subr.bf16.mxu0 0
      %3390 = vmatpush1.bf16.msra.mxu0 %v1802
      %3391 = vmatprep.subr.bf16.mxu0 0
      %3392 = vmatpush1.bf16.msra.mxu0 %v1803
      %3393 = vmatprep.mubr.bf16.mxu0 %v2933
      %3394 = vmatmul.mubr.bf16.gmra.mrb[0].mxu0 %v2932
      %v3395 = vpop.f32.mrb[0].mxu0
      %v3396 = vadd.f32 %v3347, %v3395
      %v3397 = vpop.f32.mrb[0].mxu0
      %v3398 = vpop.f32.mrb[0].mxu0
      %v3399 = vadd.f32 %v3350, %v3398
      %v3400 = vpop.f32.mrb[0].mxu0
      %3401 = vmatprep.mubr.bf16.mxu0 %v2958
      %3402 = vmatmul.mubr.bf16.gmra.mrb[0].mxu0 %v2957
      %v3403 = vpop.f32.mrb[0].mxu0
      %v3404 = vadd.f32 %v3355, %v3403
      %v3405 = vpop.f32.mrb[0].mxu0
      %v3406 = vpop.f32.mrb[0].mxu0
      %v3407 = vadd.f32 %v3358, %v3406
      %v3408 = vpop.f32.mrb[0].mxu0
      %3409 = vdwg.mxu0
      %3410 = vmatprep.subr.bf16.mxu0 0
      %3411 = vmatpush1.bf16.msra.mxu0 %v1804
      %3412 = vmatprep.subr.bf16.mxu0 0
      %3413 = vmatpush1.bf16.msra.mxu0 %v1805
      %3414 = vmatprep.subr.bf16.mxu0 0
      %3415 = vmatpush1.bf16.msra.mxu0 %v1806
      %3416 = vmatprep.subr.bf16.mxu0 0
      %3417 = vmatpush1.bf16.msra.mxu0 %v1807
      %3418 = vmatprep.subr.bf16.mxu0 0
      %3419 = vmatpush1.bf16.msra.mxu0 %v1808
      %3420 = vmatprep.subr.bf16.mxu0 0
      %3421 = vmatpush1.bf16.msra.mxu0 %v1809
      %3422 = vmatprep.subr.bf16.mxu0 0
      %3423 = vmatpush1.bf16.msra.mxu0 %v1810
      %3424 = vmatprep.subr.bf16.mxu0 0
      %3425 = vmatpush1.bf16.msra.mxu0 %v1811
      %3426 = vmatprep.subr.bf16.mxu0 0
      %3427 = vmatpush1.bf16.msra.mxu0 %v1812
      %3428 = vmatprep.subr.bf16.mxu0 0
      %3429 = vmatpush1.bf16.msra.mxu0 %v1813
      %3430 = vmatprep.subr.bf16.mxu0 0
      %3431 = vmatpush1.bf16.msra.mxu0 %v1814
      %3432 = vmatprep.subr.bf16.mxu0 0
      %3433 = vmatpush1.bf16.msra.mxu0 %v1815
      %3434 = vmatprep.subr.bf16.mxu0 0
      %3435 = vmatpush1.bf16.msra.mxu0 %v1816
      %3436 = vmatprep.subr.bf16.mxu0 0
      %3437 = vmatpush1.bf16.msra.mxu0 %v1817
      %3438 = vmatprep.subr.bf16.mxu0 0
      %3439 = vmatpush1.bf16.msra.mxu0 %v1818
      %3440 = vmatprep.subr.bf16.mxu0 0
      %3441 = vmatpush1.bf16.msra.mxu0 %v1819
      %3442 = vmatprep.mubr.bf16.mxu0 %v2935
      %3443 = vmatmul.mubr.bf16.gmra.mrb[0].mxu0 %v2934
      %v3444 = vpop.f32.mrb[0].mxu0
      %v3445 = vadd.f32 %v3396, %v3444
      %v3446 = vpop.f32.mrb[0].mxu0
      %v3447 = vpop.f32.mrb[0].mxu0
      %v3448 = vadd.f32 %v3399, %v3447
      %v3449 = vpop.f32.mrb[0].mxu0
      %3450 = vmatprep.mubr.bf16.mxu0 %v2960
      %3451 = vmatmul.mubr.bf16.gmra.mrb[0].mxu0 %v2959
      %v3452 = vpop.f32.mrb[0].mxu0
      %v3453 = vadd.f32 %v3404, %v3452
      %v3454 = vpop.f32.mrb[0].mxu0
      %v3455 = vpop.f32.mrb[0].mxu0
      %v3456 = vadd.f32 %v3407, %v3455
      %v3457 = vpop.f32.mrb[0].mxu0
      %3458 = vdwg.mxu0
      %3459 = vmatprep.subr.bf16.mxu0 0
      %3460 = vmatpush1.bf16.msra.mxu0 %v1820
      %3461 = vmatprep.subr.bf16.mxu0 0
      %3462 = vmatpush1.bf16.msra.mxu0 %v1821
      %3463 = vmatprep.subr.bf16.mxu0 0
      %3464 = vmatpush1.bf16.msra.mxu0 %v1822
      %3465 = vmatprep.subr.bf16.mxu0 0
      %3466 = vmatpush1.bf16.msra.mxu0 %v1823
      %3467 = vmatprep.subr.bf16.mxu0 0
      %3468 = vmatpush1.bf16.msra.mxu0 %v1824
      %3469 = vmatprep.subr.bf16.mxu0 0
      %3470 = vmatpush1.bf16.msra.mxu0 %v1825
      %3471 = vmatprep.subr.bf16.mxu0 0
      %3472 = vmatpush1.bf16.msra.mxu0 %v1826
      %3473 = vmatprep.subr.bf16.mxu0 0
      %3474 = vmatpush1.bf16.msra.mxu0 %v1827
      %3475 = vmatprep.subr.bf16.mxu0 0
      %3476 = vmatpush1.bf16.msra.mxu0 %v1828
      %3477 = vmatprep.subr.bf16.mxu0 0
      %3478 = vmatpush1.bf16.msra.mxu0 %v1829
      %3479 = vmatprep.subr.bf16.mxu0 0
      %3480 = vmatpush1.bf16.msra.mxu0 %v1830
      %3481 = vmatprep.subr.bf16.mxu0 0
      %3482 = vmatpush1.bf16.msra.mxu0 %v1831
      %3483 = vmatprep.subr.bf16.mxu0 0
      %3484 = vmatpush1.bf16.msra.mxu0 %v1832
      %3485 = vmatprep.subr.bf16.mxu0 0
      %3486 = vmatpush1.bf16.msra.mxu0 %v1833
      %3487 = vmatprep.subr.bf16.mxu0 0
      %3488 = vmatpush1.bf16.msra.mxu0 %v1834
      %3489 = vmatprep.subr.bf16.mxu0 0
      %3490 = vmatpush1.bf16.msra.mxu0 %v1835
      %3491 = vmatprep.mubr.bf16.mxu0 %v2937
      %3492 = vmatmul.mubr.bf16.gmra.mrb[0].mxu0 %v2936
      %v3493 = vpop.f32.mrb[0].mxu0
      %v3494 = vadd.f32 %v3445, %v3493
      %v3495 = vpop.f32.mrb[0].mxu0
      %v3496 = vpop.f32.mrb[0].mxu0
      %v3497 = vadd.f32 %v3448, %v3496
      %v3498 = vpop.f32.mrb[0].mxu0
      %3499 = vmatprep.mubr.bf16.mxu0 %v2962
      %3500 = vmatmul.mubr.bf16.gmra.mrb[0].mxu0 %v2961
      %v3501 = vpop.f32.mrb[0].mxu0
      %v3502 = vadd.f32 %v3453, %v3501
      %v3503 = vpop.f32.mrb[0].mxu0
      %v3504 = vpop.f32.mrb[0].mxu0
      %v3505 = vadd.f32 %v3456, %v3504
      %v3506 = vpop.f32.mrb[0].mxu0
      %3507 = vdwg.mxu0
      %3508 = vmatprep.subr.bf16.mxu0 0
      %3509 = vmatpush1.bf16.msra.mxu0 %v1836
      %3510 = vmatprep.subr.bf16.mxu0 0
      %3511 = vmatpush1.bf16.msra.mxu0 %v1837
      %3512 = vmatprep.subr.bf16.mxu0 0
      %3513 = vmatpush1.bf16.msra.mxu0 %v1838
      %3514 = vmatprep.subr.bf16.mxu0 0
      %3515 = vmatpush1.bf16.msra.mxu0 %v1839
      %3516 = vmatprep.subr.bf16.mxu0 0
      %3517 = vmatpush1.bf16.msra.mxu0 %v1840
      %3518 = vmatprep.subr.bf16.mxu0 0
      %3519 = vmatpush1.bf16.msra.mxu0 %v1841
      %3520 = vmatprep.subr.bf16.mxu0 0
      %3521 = vmatpush1.bf16.msra.mxu0 %v1842
      %3522 = vmatprep.subr.bf16.mxu0 0
      %3523 = vmatpush1.bf16.msra.mxu0 %v1843
      %3524 = vmatprep.subr.bf16.mxu0 0
      %3525 = vmatpush1.bf16.msra.mxu0 %v1844
      %3526 = vmatprep.subr.bf16.mxu0 0
      %3527 = vmatpush1.bf16.msra.mxu0 %v1845
      %3528 = vmatprep.subr.bf16.mxu0 0
      %3529 = vmatpush1.bf16.msra.mxu0 %v1846
      %3530 = vmatprep.subr.bf16.mxu0 0
      %3531 = vmatpush1.bf16.msra.mxu0 %v1847
      %3532 = vmatprep.subr.bf16.mxu0 0
      %3533 = vmatpush1.bf16.msra.mxu0 %v1848
      %3534 = vmatprep.subr.bf16.mxu0 0
      %3535 = vmatpush1.bf16.msra.mxu0 %v1849
      %3536 = vmatprep.subr.bf16.mxu0 0
      %3537 = vmatpush1.bf16.msra.mxu0 %v1850
      %3538 = vmatprep.subr.bf16.mxu0 0
      %3539 = vmatpush1.bf16.msra.mxu0 %v1851
      %3540 = vmatprep.mubr.bf16.mxu0 %v2939
      %3541 = vmatmul.mubr.bf16.gmra.mrb[0].mxu0 %v2938
      %v3542 = vpop.f32.mrb[0].mxu0
      %v3543 = vadd.f32 %v3494, %v3542
      %v3544 = vpop.f32.mrb[0].mxu0
      %v3545 = vpop.f32.mrb[0].mxu0
      %v3546 = vadd.f32 %v3497, %v3545
      %v3547 = vpop.f32.mrb[0].mxu0
      %3548 = vmatprep.mubr.bf16.mxu0 %v2964
      %3549 = vmatmul.mubr.bf16.gmra.mrb[0].mxu0 %v2963
      %v3550 = vpop.f32.mrb[0].mxu0
      %v3551 = vadd.f32 %v3502, %v3550
      %v3552 = vpop.f32.mrb[0].mxu0
      %v3553 = vpop.f32.mrb[0].mxu0
      %v3554 = vadd.f32 %v3505, %v3553
      %v3555 = vpop.f32.mrb[0].mxu0
      %3556 = vdwg.mxu0
      %3557 = vmatprep.subr.bf16.mxu0 0
      %3558 = vmatpush1.bf16.msra.mxu0 %v1852
      %3559 = vmatprep.subr.bf16.mxu0 0
      %3560 = vmatpush1.bf16.msra.mxu0 %v1853
      %3561 = vmatprep.subr.bf16.mxu0 0
      %3562 = vmatpush1.bf16.msra.mxu0 %v1854
      %3563 = vmatprep.subr.bf16.mxu0 0
      %3564 = vmatpush1.bf16.msra.mxu0 %v1855
      %3565 = vmatprep.subr.bf16.mxu0 0
      %3566 = vmatpush1.bf16.msra.mxu0 %v1856
      %3567 = vmatprep.subr.bf16.mxu0 0
      %3568 = vmatpush1.bf16.msra.mxu0 %v1857
      %3569 = vmatprep.subr.bf16.mxu0 0
      %3570 = vmatpush1.bf16.msra.mxu0 %v1858
      %3571 = vmatprep.subr.bf16.mxu0 0
      %3572 = vmatpush1.bf16.msra.mxu0 %v1859
      %3573 = vmatprep.subr.bf16.mxu0 0
      %3574 = vmatpush1.bf16.msra.mxu0 %v1860
      %3575 = vmatprep.subr.bf16.mxu0 0
      %3576 = vmatpush1.bf16.msra.mxu0 %v1861
      %3577 = vmatprep.subr.bf16.mxu0 0
      %3578 = vmatpush1.bf16.msra.mxu0 %v1862
      %3579 = vmatprep.subr.bf16.mxu0 0
      %3580 = vmatpush1.bf16.msra.mxu0 %v1863
      %3581 = vmatprep.subr.bf16.mxu0 0
      %3582 = vmatpush1.bf16.msra.mxu0 %v1864
      %3583 = vmatprep.subr.bf16.mxu0 0
      %3584 = vmatpush1.bf16.msra.mxu0 %v1865
      %3585 = vmatprep.subr.bf16.mxu0 0
      %3586 = vmatpush1.bf16.msra.mxu0 %v1866
      %3587 = vmatprep.subr.bf16.mxu0 0
      %3588 = vmatpush1.bf16.msra.mxu0 %v1867
      %3589 = vmatprep.mubr.bf16.mxu0 %v2941
      %3590 = vmatmul.mubr.bf16.gmra.mrb[0].mxu0 %v2940
      %v3591 = vpop.f32.mrb[0].mxu0
      %v3592 = vadd.f32 %v3543, %v3591
      %v3593 = vpop.f32.mrb[0].mxu0
      %v3594 = vpop.f32.mrb[0].mxu0
      %v3595 = vadd.f32 %v3546, %v3594
      %v3596 = vpop.f32.mrb[0].mxu0
      %3597 = vmatprep.mubr.bf16.mxu0 %v2966
      %3598 = vmatmul.mubr.bf16.gmra.mrb[0].mxu0 %v2965
      %v3599 = vpop.f32.mrb[0].mxu0
      %v3600 = vadd.f32 %v3551, %v3599
      %v3601 = vpop.f32.mrb[0].mxu0
      %v3602 = vpop.f32.mrb[0].mxu0
      %v3603 = vadd.f32 %v3554, %v3602
      %v3604 = vpop.f32.mrb[0].mxu0
      %3605 = vdwg.mxu0
      %3606 = vmatprep.subr.bf16.mxu0 0
      %3607 = vmatpush1.bf16.msra.mxu0 %v1868
      %3608 = vmatprep.subr.bf16.mxu0 0
      %3609 = vmatpush1.bf16.msra.mxu0 %v1869
      %3610 = vmatprep.subr.bf16.mxu0 0
      %3611 = vmatpush1.bf16.msra.mxu0 %v1870
      %3612 = vmatprep.subr.bf16.mxu0 0
      %3613 = vmatpush1.bf16.msra.mxu0 %v1871
      %3614 = vmatprep.subr.bf16.mxu0 0
      %3615 = vmatpush1.bf16.msra.mxu0 %v1872
      %3616 = vmatprep.subr.bf16.mxu0 0
      %3617 = vmatpush1.bf16.msra.mxu0 %v1873
      %3618 = vmatprep.subr.bf16.mxu0 0
      %3619 = vmatpush1.bf16.msra.mxu0 %v1874
      %3620 = vmatprep.subr.bf16.mxu0 0
      %3621 = vmatpush1.bf16.msra.mxu0 %v1875
      %3622 = vmatprep.subr.bf16.mxu0 0
      %3623 = vmatpush1.bf16.msra.mxu0 0
      %3624 = vmatprep.subr.bf16.mxu0 0
      %3625 = vmatpush1.bf16.msra.mxu0 0
      %3626 = vmatprep.subr.bf16.mxu0 0
      %3627 = vmatpush1.bf16.msra.mxu0 0
      %3628 = vmatprep.subr.bf16.mxu0 0
      %3629 = vmatpush1.bf16.msra.mxu0 0
      %3630 = vmatprep.subr.bf16.mxu0 0
      %3631 = vmatpush1.bf16.msra.mxu0 0
      %3632 = vmatprep.subr.bf16.mxu0 0
      %3633 = vmatpush1.bf16.msra.mxu0 0
      %3634 = vmatprep.subr.bf16.mxu0 0
      %3635 = vmatpush1.bf16.msra.mxu0 0
      %3636 = vmatprep.subr.bf16.mxu0 0
      %3637 = vmatpush1.bf16.msra.mxu0 0
      %3638 = vmatprep.mubr.bf16.mxu0 0
      %3639 = vmatmul.mubr.bf16.gmra.mrb[0].mxu0 %v2942
      %v3640 = vpop.f32.mrb[0].mxu0
      %v3641 = vadd.f32 %v3592, %v3640
      %v3642 = vpop.f32.mrb[0].mxu0
      %v3643 = vpop.f32.mrb[0].mxu0
      %v3644 = vadd.f32 %v3595, %v3643
      %v3645 = vpop.f32.mrb[0].mxu0
      %3646 = vmatprep.mubr.bf16.mxu0 0
      %3647 = vmatmul.mubr.bf16.gmra.mrb[0].mxu0 %v2967
      %v3648 = vpop.f32.mrb[0].mxu0
      %v3649 = vadd.f32 %v3600, %v3648
      %v3650 = vpop.f32.mrb[0].mxu0
      %v3651 = vpop.f32.mrb[0].mxu0
      %v3652 = vadd.f32 %v3603, %v3651
      %v3653 = vpop.f32.mrb[0].mxu0
      %3654 = vdwg.mxu0
      %v3655 = vmax.f32 %v2699, %v3641
      %v3656 = vmax.f32 %v2702, %v3644
      %v3657 = vmax.f32 %v2707, %v3649
      %v3658 = vmax.f32 %v2710, %v3652
      %s3659 = scalar_lea.vmem %s165, 800
      %v3660 = vld [vmem:[%s3659] sm:$0xff]
      %v3661 = vld [vmem:[%s3659 + $0x8] sm:$0xff]
      %v3662 = vld [vmem:[%s3659 + $0x10] sm:$0xff]
      %v3663 = vld [vmem:[%s3659 + $0x18] sm:$0xff]
      %v3664 = vld [vmem:[%s3659 + $0x20] sm:$0xff]
      %v3665 = vld [vmem:[%s3659 + $0x28] sm:$0xff]
      %v3666 = vld [vmem:[%s3659 + $0x30] sm:$0xff]
      %v3667 = vld [vmem:[%s3659 + $0x38] sm:$0xff]
      %v3668 = vld [vmem:[%s3659 + $0x40] sm:$0xff]
      %v3669 = vld [vmem:[%s3659 + $0x48] sm:$0xff]
      %v3670 = vld [vmem:[%s3659 + $0x50] sm:$0xff]
      %v3671 = vld [vmem:[%s3659 + $0x58] sm:$0xff]
      %v3672 = vld [vmem:[%s3659 + $0x60] sm:$0xf]
      %v3673 = vld [vmem:[%s3659 + $0x64] sm:$0xff]
      %v3674 = vld [vmem:[%s3659 + $0x6c] sm:$0xff]
      %v3675 = vld [vmem:[%s3659 + $0x74] sm:$0xff]
      %v3676 = vld [vmem:[%s3659 + $0x7c] sm:$0xff]
      %v3677 = vld [vmem:[%s3659 + $0x84] sm:$0xff]
      %v3678 = vld [vmem:[%s3659 + $0x8c] sm:$0xff]
      %v3679 = vld [vmem:[%s3659 + $0x94] sm:$0xff]
      %v3680 = vld [vmem:[%s3659 + $0x9c] sm:$0xff]
      %v3681 = vld [vmem:[%s3659 + $0xa4] sm:$0xff]
      %v3682 = vld [vmem:[%s3659 + $0xac] sm:$0xff]
      %v3683 = vld [vmem:[%s3659 + $0xb4] sm:$0xff]
      %v3684 = vld [vmem:[%s3659 + $0xbc] sm:$0xff]
      %v3685 = vld [vmem:[%s3659 + $0xc4] sm:$0xf]
      %v3686 = vld [vmem:[%s3659 + $0xc8] sm:$0xff]
      %v3687 = vld [vmem:[%s3659 + $0xd0] sm:$0xff]
      %v3688 = vld [vmem:[%s3659 + $0xd8] sm:$0xff]
      %v3689 = vld [vmem:[%s3659 + $0xe0] sm:$0xff]
      %v3690 = vld [vmem:[%s3659 + $0xe8] sm:$0xff]
      %v3691 = vld [vmem:[%s3659 + $0xf0] sm:$0xff]
      %v3692 = vld [vmem:[%s3659 + $0xf8] sm:$0xff]
      %v3693 = vld [vmem:[%s3659 + $0x100] sm:$0xff]
      %v3694 = vld [vmem:[%s3659 + $0x108] sm:$0xff]
      %v3695 = vld [vmem:[%s3659 + $0x110] sm:$0xff]
      %v3696 = vld [vmem:[%s3659 + $0x118] sm:$0xff]
      %v3697 = vld [vmem:[%s3659 + $0x120] sm:$0xff]
      %v3698 = vld [vmem:[%s3659 + $0x128] sm:$0xf]
      %v3699 = vld [vmem:[%s3659 + $0x12c] sm:$0x11]
      %v3700 = vld [vmem:[%s3659 + $0x134] sm:$0x11]
      %v3701 = vld [vmem:[%s3659 + $0x13c] sm:$0x11]
      %v3702 = vld [vmem:[%s3659 + $0x144] sm:$0x11]
      %v3703 = vld [vmem:[%s3659 + $0x14c] sm:$0x11]
      %v3704 = vld [vmem:[%s3659 + $0x154] sm:$0x11]
      %v3705 = vld [vmem:[%s3659 + $0x15c] sm:$0x11]
      %v3706 = vld [vmem:[%s3659 + $0x164] sm:$0x11]
      %v3707 = vld [vmem:[%s3659 + $0x16c] sm:$0x11]
      %v3708 = vld [vmem:[%s3659 + $0x174] sm:$0x11]
      %v3709 = vld [vmem:[%s3659 + $0x17c] sm:$0x11]
      %v3710 = vld [vmem:[%s3659 + $0x184] sm:$0x11]
      %v3711 = vld [vmem:[%s3659 + $0x18c] sm:$0x1]
      %v3764 = vunpack.c.l.b16 %v3660
      %v3765 = vunpack.c.h.b16 %v3660
      %v3766 = vunpack.c.l.b16 %v3661
      %v3767 = vunpack.c.h.b16 %v3661
      %v3768 = vunpack.c.l.b16 %v3662
      %v3769 = vunpack.c.h.b16 %v3662
      %v3770 = vunpack.c.l.b16 %v3663
      %v3771 = vunpack.c.h.b16 %v3663
      %v3772 = vunpack.c.l.b16 %v3664
      %v3773 = vunpack.c.h.b16 %v3664
      %v3774 = vunpack.c.l.b16 %v3665
      %v3775 = vunpack.c.h.b16 %v3665
      %v3776 = vunpack.c.l.b16 %v3666
      %v3777 = vunpack.c.h.b16 %v3666
      %v3778 = vunpack.c.l.b16 %v3667
      %v3779 = vunpack.c.h.b16 %v3667
      %v3780 = vunpack.c.l.b16 %v3668
      %v3781 = vunpack.c.h.b16 %v3668
      %v3782 = vunpack.c.l.b16 %v3669
      %v3783 = vunpack.c.h.b16 %v3669
      %v3784 = vunpack.c.l.b16 %v3670
      %v3785 = vunpack.c.h.b16 %v3670
      %v3786 = vunpack.c.l.b16 %v3671
      %v3787 = vunpack.c.h.b16 %v3671
      %v3788 = vunpack.c.l.b16 %v3672
      %v3789 = vunpack.c.l.b16 %v3673
      %v3790 = vunpack.c.h.b16 %v3673
      %v3791 = vunpack.c.l.b16 %v3674
      %v3792 = vunpack.c.h.b16 %v3674
      %v3793 = vunpack.c.l.b16 %v3675
      %v3794 = vunpack.c.h.b16 %v3675
      %v3795 = vunpack.c.l.b16 %v3676
      %v3796 = vunpack.c.h.b16 %v3676
      %v3797 = vunpack.c.l.b16 %v3677
      %v3798 = vunpack.c.h.b16 %v3677
      %v3799 = vunpack.c.l.b16 %v3678
      %v3800 = vunpack.c.h.b16 %v3678
      %v3801 = vunpack.c.l.b16 %v3679
      %v3802 = vunpack.c.h.b16 %v3679
      %v3803 = vunpack.c.l.b16 %v3680
      %v3804 = vunpack.c.h.b16 %v3680
      %v3805 = vunpack.c.l.b16 %v3681
      %v3806 = vunpack.c.h.b16 %v3681
      %v3807 = vunpack.c.l.b16 %v3682
      %v3808 = vunpack.c.h.b16 %v3682
      %v3809 = vunpack.c.l.b16 %v3683
      %v3810 = vunpack.c.h.b16 %v3683
      %v3811 = vunpack.c.l.b16 %v3684
      %v3812 = vunpack.c.h.b16 %v3684
      %v3813 = vunpack.c.l.b16 %v3685
      %v3814 = vunpack.c.l.b16 %v3686
      %v3815 = vunpack.c.h.b16 %v3686
      %v3816 = vunpack.c.l.b16 %v3687
      %v3817 = vunpack.c.h.b16 %v3687
      %v3818 = vunpack.c.l.b16 %v3688
      %v3819 = vunpack.c.h.b16 %v3688
      %v3820 = vunpack.c.l.b16 %v3689
      %v3821 = vunpack.c.h.b16 %v3689
      %v3822 = vunpack.c.l.b16 %v3690
      %v3823 = vunpack.c.h.b16 %v3690
      %v3824 = vunpack.c.l.b16 %v3691
      %v3825 = vunpack.c.h.b16 %v3691
      %v3826 = vunpack.c.l.b16 %v3692
      %v3827 = vunpack.c.h.b16 %v3692
      %v3828 = vunpack.c.l.b16 %v3693
      %v3829 = vunpack.c.h.b16 %v3693
      %v3830 = vunpack.c.l.b16 %v3694
      %v3831 = vunpack.c.h.b16 %v3694
      %v3832 = vunpack.c.l.b16 %v3695
      %v3833 = vunpack.c.h.b16 %v3695
      %v3834 = vunpack.c.l.b16 %v3696
      %v3835 = vunpack.c.h.b16 %v3696
      %v3836 = vunpack.c.l.b16 %v3697
      %v3837 = vunpack.c.h.b16 %v3697
      %v3838 = vunpack.c.l.b16 %v3698
      %v3839 = vunpack.c.l.b16 %v3699
      %v3840 = vunpack.c.h.b16 %v3699
      %v3841 = vunpack.c.l.b16 %v3700
      %v3842 = vunpack.c.h.b16 %v3700
      %v3843 = vunpack.c.l.b16 %v3701
      %v3844 = vunpack.c.h.b16 %v3701
      %v3845 = vunpack.c.l.b16 %v3702
      %v3846 = vunpack.c.h.b16 %v3702
      %v3847 = vunpack.c.l.b16 %v3703
      %v3848 = vunpack.c.h.b16 %v3703
      %v3849 = vunpack.c.l.b16 %v3704
      %v3850 = vunpack.c.h.b16 %v3704
      %v3851 = vunpack.c.l.b16 %v3705
      %v3852 = vunpack.c.h.b16 %v3705
      %v3853 = vunpack.c.l.b16 %v3706
      %v3854 = vunpack.c.h.b16 %v3706
      %v3855 = vunpack.c.l.b16 %v3707
      %v3856 = vunpack.c.h.b16 %v3707
      %v3857 = vunpack.c.l.b16 %v3708
      %v3858 = vunpack.c.h.b16 %v3708
      %v3859 = vunpack.c.l.b16 %v3709
      %v3860 = vunpack.c.h.b16 %v3709
      %v3861 = vunpack.c.l.b16 %v3710
      %v3862 = vunpack.c.h.b16 %v3710
      %v3863 = vunpack.c.l.b16 %v3711
      %v3864 = vpack.c.b16 %v3789, %v3764
      %v3865 = vpack.c.b16 %v3790, %v3765
      %v3866 = vpack.c.b16 %v3791, %v3766
      %v3867 = vpack.c.b16 %v3792, %v3767
      %v3868 = vpack.c.b16 %v3793, %v3768
      %v3869 = vpack.c.b16 %v3794, %v3769
      %v3870 = vpack.c.b16 %v3795, %v3770
      %v3871 = vpack.c.b16 %v3796, %v3771
      %v3872 = vpack.c.b16 %v3797, %v3772
      %v3873 = vpack.c.b16 %v3798, %v3773
      %v3874 = vpack.c.b16 %v3799, %v3774
      %v3875 = vpack.c.b16 %v3800, %v3775
      %v3876 = vpack.c.b16 %v3801, %v3776
      %v3877 = vpack.c.b16 %v3802, %v3777
      %v3878 = vpack.c.b16 %v3803, %v3778
      %v3879 = vpack.c.b16 %v3804, %v3779
      %v3880 = vpack.c.b16 %v3805, %v3780
      %v3881 = vpack.c.b16 %v3806, %v3781
      %v3882 = vpack.c.b16 %v3807, %v3782
      %v3883 = vpack.c.b16 %v3808, %v3783
      %v3884 = vpack.c.b16 %v3809, %v3784
      %v3885 = vpack.c.b16 %v3810, %v3785
      %v3886 = vpack.c.b16 %v3811, %v3786
      %v3887 = vpack.c.b16 %v3812, %v3787
      %v3888 = vpack.c.b16 %v3813, %v3788
      %v3889 = vpack.c.b16 %v3839, %v3814
      %v3890 = vpack.c.b16 %v3840, %v3815
      %v3891 = vpack.c.b16 %v3841, %v3816
      %v3892 = vpack.c.b16 %v3842, %v3817
      %v3893 = vpack.c.b16 %v3843, %v3818
      %v3894 = vpack.c.b16 %v3844, %v3819
      %v3895 = vpack.c.b16 %v3845, %v3820
      %v3896 = vpack.c.b16 %v3846, %v3821
      %v3897 = vpack.c.b16 %v3847, %v3822
      %v3898 = vpack.c.b16 %v3848, %v3823
      %v3899 = vpack.c.b16 %v3849, %v3824
      %v3900 = vpack.c.b16 %v3850, %v3825
      %v3901 = vpack.c.b16 %v3851, %v3826
      %v3902 = vpack.c.b16 %v3852, %v3827
      %v3903 = vpack.c.b16 %v3853, %v3828
      %v3904 = vpack.c.b16 %v3854, %v3829
      %v3905 = vpack.c.b16 %v3855, %v3830
      %v3906 = vpack.c.b16 %v3856, %v3831
      %v3907 = vpack.c.b16 %v3857, %v3832
      %v3908 = vpack.c.b16 %v3858, %v3833
      %v3909 = vpack.c.b16 %v3859, %v3834
      %v3910 = vpack.c.b16 %v3860, %v3835
      %v3911 = vpack.c.b16 %v3861, %v3836
      %v3912 = vpack.c.b16 %v3862, %v3837
      %v3913 = vpack.c.b16 %v3863, %v3838
      %3964 = vmatprep.subr.bf16.mxu0 0
      %3965 = vmatpush1.bf16.msra.mxu0 %v1676
      %3966 = vmatprep.subr.bf16.mxu0 0
      %3967 = vmatpush1.bf16.msra.mxu0 %v1677
      %3968 = vmatprep.subr.bf16.mxu0 0
      %3969 = vmatpush1.bf16.msra.mxu0 %v1678
      %3970 = vmatprep.subr.bf16.mxu0 0
      %3971 = vmatpush1.bf16.msra.mxu0 %v1679
      %3972 = vmatprep.subr.bf16.mxu0 0
      %3973 = vmatpush1.bf16.msra.mxu0 %v1680
      %3974 = vmatprep.subr.bf16.mxu0 0
      %3975 = vmatpush1.bf16.msra.mxu0 %v1681
      %3976 = vmatprep.subr.bf16.mxu0 0
      %3977 = vmatpush1.bf16.msra.mxu0 %v1682
      %3978 = vmatprep.subr.bf16.mxu0 0
      %3979 = vmatpush1.bf16.msra.mxu0 %v1683
      %3980 = vmatprep.subr.bf16.mxu0 0
      %3981 = vmatpush1.bf16.msra.mxu0 %v1684
      %3982 = vmatprep.subr.bf16.mxu0 0
      %3983 = vmatpush1.bf16.msra.mxu0 %v1685
      %3984 = vmatprep.subr.bf16.mxu0 0
      %3985 = vmatpush1.bf16.msra.mxu0 %v1686
      %3986 = vmatprep.subr.bf16.mxu0 0
      %3987 = vmatpush1.bf16.msra.mxu0 %v1687
      %3988 = vmatprep.subr.bf16.mxu0 0
      %3989 = vmatpush1.bf16.msra.mxu0 %v1688
      %3990 = vmatprep.subr.bf16.mxu0 0
      %3991 = vmatpush1.bf16.msra.mxu0 %v1689
      %3992 = vmatprep.subr.bf16.mxu0 0
      %3993 = vmatpush1.bf16.msra.mxu0 %v1690
      %3994 = vmatprep.subr.bf16.mxu0 0
      %3995 = vmatpush1.bf16.msra.mxu0 %v1691
      %3996 = vmatprep.mubr.bf16.mxu0 %v3865
      %3997 = vmatmul.mubr.bf16.gmra.mrb[0].mxu0 %v3864
      %v3998 = vpop.f32.mrb[0].mxu0
      %v3999 = vadd.f32 0.0, %v3998
      %v4000 = vpop.f32.mrb[0].mxu0
      %v4001 = vpop.f32.mrb[0].mxu0
      %v4002 = vadd.f32 0.0, %v4001
      %v4003 = vpop.f32.mrb[0].mxu0
      %4004 = vmatprep.mubr.bf16.mxu0 %v3890
      %4005 = vmatmul.mubr.bf16.gmra.mrb[0].mxu0 %v3889
      %v4006 = vpop.f32.mrb[0].mxu0
      %v4007 = vadd.f32 0.0, %v4006
      %v4008 = vpop.f32.mrb[0].mxu0
      %v4009 = vpop.f32.mrb[0].mxu0
      %v4010 = vadd.f32 0.0, %v4009
      %v4011 = vpop.f32.mrb[0].mxu0
      %4012 = vdwg.mxu0
      %4013 = vmatprep.subr.bf16.mxu0 0
      %4014 = vmatpush1.bf16.msra.mxu0 %v1692
      %4015 = vmatprep.subr.bf16.mxu0 0
      %4016 = vmatpush1.bf16.msra.mxu0 %v1693
      %4017 = vmatprep.subr.bf16.mxu0 0
      %4018 = vmatpush1.bf16.msra.mxu0 %v1694
      %4019 = vmatprep.subr.bf16.mxu0 0
      %4020 = vmatpush1.bf16.msra.mxu0 %v1695
      %4021 = vmatprep.subr.bf16.mxu0 0
      %4022 = vmatpush1.bf16.msra.mxu0 %v1696
      %4023 = vmatprep.subr.bf16.mxu0 0
      %4024 = vmatpush1.bf16.msra.mxu0 %v1697
      %4025 = vmatprep.subr.bf16.mxu0 0
      %4026 = vmatpush1.bf16.msra.mxu0 %v1698
      %4027 = vmatprep.subr.bf16.mxu0 0
      %4028 = vmatpush1.bf16.msra.mxu0 %v1699
      %4029 = vmatprep.subr.bf16.mxu0 0
      %4030 = vmatpush1.bf16.msra.mxu0 %v1700
      %4031 = vmatprep.subr.bf16.mxu0 0
      %4032 = vmatpush1.bf16.msra.mxu0 %v1701
      %4033 = vmatprep.subr.bf16.mxu0 0
      %4034 = vmatpush1.bf16.msra.mxu0 %v1702
      %4035 = vmatprep.subr.bf16.mxu0 0
      %4036 = vmatpush1.bf16.msra.mxu0 %v1703
      %4037 = vmatprep.subr.bf16.mxu0 0
      %4038 = vmatpush1.bf16.msra.mxu0 %v1704
      %4039 = vmatprep.subr.bf16.mxu0 0
      %4040 = vmatpush1.bf16.msra.mxu0 %v1705
      %4041 = vmatprep.subr.bf16.mxu0 0
      %4042 = vmatpush1.bf16.msra.mxu0 %v1706
      %4043 = vmatprep.subr.bf16.mxu0 0
      %4044 = vmatpush1.bf16.msra.mxu0 %v1707
      %4045 = vmatprep.mubr.bf16.mxu0 %v3867
      %4046 = vmatmul.mubr.bf16.gmra.mrb[0].mxu0 %v3866
      %v4047 = vpop.f32.mrb[0].mxu0
      %v4048 = vadd.f32 %v3999, %v4047
      %v4049 = vpop.f32.mrb[0].mxu0
      %v4050 = vpop.f32.mrb[0].mxu0
      %v4051 = vadd.f32 %v4002, %v4050
      %v4052 = vpop.f32.mrb[0].mxu0
      %4053 = vmatprep.mubr.bf16.mxu0 %v3892
      %4054 = vmatmul.mubr.bf16.gmra.mrb[0].mxu0 %v3891
      %v4055 = vpop.f32.mrb[0].mxu0
      %v4056 = vadd.f32 %v4007, %v4055
      %v4057 = vpop.f32.mrb[0].mxu0
      %v4058 = vpop.f32.mrb[0].mxu0
      %v4059 = vadd.f32 %v4010, %v4058
      %v4060 = vpop.f32.mrb[0].mxu0
      %4061 = vdwg.mxu0
      %4062 = vmatprep.subr.bf16.mxu0 0
      %4063 = vmatpush1.bf16.msra.mxu0 %v1708
      %4064 = vmatprep.subr.bf16.mxu0 0
      %4065 = vmatpush1.bf16.msra.mxu0 %v1709
      %4066 = vmatprep.subr.bf16.mxu0 0
      %4067 = vmatpush1.bf16.msra.mxu0 %v1710
      %4068 = vmatprep.subr.bf16.mxu0 0
      %4069 = vmatpush1.bf16.msra.mxu0 %v1711
      %4070 = vmatprep.subr.bf16.mxu0 0
      %4071 = vmatpush1.bf16.msra.mxu0 %v1712
      %4072 = vmatprep.subr.bf16.mxu0 0
      %4073 = vmatpush1.bf16.msra.mxu0 %v1713
      %4074 = vmatprep.subr.bf16.mxu0 0
      %4075 = vmatpush1.bf16.msra.mxu0 %v1714
      %4076 = vmatprep.subr.bf16.mxu0 0
      %4077 = vmatpush1.bf16.msra.mxu0 %v1715
      %4078 = vmatprep.subr.bf16.mxu0 0
      %4079 = vmatpush1.bf16.msra.mxu0 %v1716
      %4080 = vmatprep.subr.bf16.mxu0 0
      %4081 = vmatpush1.bf16.msra.mxu0 %v1717
      %4082 = vmatprep.subr.bf16.mxu0 0
      %4083 = vmatpush1.bf16.msra.mxu0 %v1718
      %4084 = vmatprep.subr.bf16.mxu0 0
      %4085 = vmatpush1.bf16.msra.mxu0 %v1719
      %4086 = vmatprep.subr.bf16.mxu0 0
      %4087 = vmatpush1.bf16.msra.mxu0 %v1720
      %4088 = vmatprep.subr.bf16.mxu0 0
      %4089 = vmatpush1.bf16.msra.mxu0 %v1721
      %4090 = vmatprep.subr.bf16.mxu0 0
      %4091 = vmatpush1.bf16.msra.mxu0 %v1722
      %4092 = vmatprep.subr.bf16.mxu0 0
      %4093 = vmatpush1.bf16.msra.mxu0 %v1723
      %4094 = vmatprep.mubr.bf16.mxu0 %v3869
      %4095 = vmatmul.mubr.bf16.gmra.mrb[0].mxu0 %v3868
      %v4096 = vpop.f32.mrb[0].mxu0
      %v4097 = vadd.f32 %v4048, %v4096
      %v4098 = vpop.f32.mrb[0].mxu0
      %v4099 = vpop.f32.mrb[0].mxu0
      %v4100 = vadd.f32 %v4051, %v4099
      %v4101 = vpop.f32.mrb[0].mxu0
      %4102 = vmatprep.mubr.bf16.mxu0 %v3894
      %4103 = vmatmul.mubr.bf16.gmra.mrb[0].mxu0 %v3893
      %v4104 = vpop.f32.mrb[0].mxu0
      %v4105 = vadd.f32 %v4056, %v4104
      %v4106 = vpop.f32.mrb[0].mxu0
      %v4107 = vpop.f32.mrb[0].mxu0
      %v4108 = vadd.f32 %v4059, %v4107
      %v4109 = vpop.f32.mrb[0].mxu0
      %4110 = vdwg.mxu0
      %4111 = vmatprep.subr.bf16.mxu0 0
      %4112 = vmatpush1.bf16.msra.mxu0 %v1724
      %4113 = vmatprep.subr.bf16.mxu0 0
      %4114 = vmatpush1.bf16.msra.mxu0 %v1725
      %4115 = vmatprep.subr.bf16.mxu0 0
      %4116 = vmatpush1.bf16.msra.mxu0 %v1726
      %4117 = vmatprep.subr.bf16.mxu0 0
      %4118 = vmatpush1.bf16.msra.mxu0 %v1727
      %4119 = vmatprep.subr.bf16.mxu0 0
      %4120 = vmatpush1.bf16.msra.mxu0 %v1728
      %4121 = vmatprep.subr.bf16.mxu0 0
      %4122 = vmatpush1.bf16.msra.mxu0 %v1729
      %4123 = vmatprep.subr.bf16.mxu0 0
      %4124 = vmatpush1.bf16.msra.mxu0 %v1730
      %4125 = vmatprep.subr.bf16.mxu0 0
      %4126 = vmatpush1.bf16.msra.mxu0 %v1731
      %4127 = vmatprep.subr.bf16.mxu0 0
      %4128 = vmatpush1.bf16.msra.mxu0 %v1732
      %4129 = vmatprep.subr.bf16.mxu0 0
      %4130 = vmatpush1.bf16.msra.mxu0 %v1733
      %4131 = vmatprep.subr.bf16.mxu0 0
      %4132 = vmatpush1.bf16.msra.mxu0 %v1734
      %4133 = vmatprep.subr.bf16.mxu0 0
      %4134 = vmatpush1.bf16.msra.mxu0 %v1735
      %4135 = vmatprep.subr.bf16.mxu0 0
      %4136 = vmatpush1.bf16.msra.mxu0 %v1736
      %4137 = vmatprep.subr.bf16.mxu0 0
      %4138 = vmatpush1.bf16.msra.mxu0 %v1737
      %4139 = vmatprep.subr.bf16.mxu0 0
      %4140 = vmatpush1.bf16.msra.mxu0 %v1738
      %4141 = vmatprep.subr.bf16.mxu0 0
      %4142 = vmatpush1.bf16.msra.mxu0 %v1739
      %4143 = vmatprep.mubr.bf16.mxu0 %v3871
      %4144 = vmatmul.mubr.bf16.gmra.mrb[0].mxu0 %v3870
      %v4145 = vpop.f32.mrb[0].mxu0
      %v4146 = vadd.f32 %v4097, %v4145
      %v4147 = vpop.f32.mrb[0].mxu0
      %v4148 = vpop.f32.mrb[0].mxu0
      %v4149 = vadd.f32 %v4100, %v4148
      %v4150 = vpop.f32.mrb[0].mxu0
      %4151 = vmatprep.mubr.bf16.mxu0 %v3896
      %4152 = vmatmul.mubr.bf16.gmra.mrb[0].mxu0 %v3895
      %v4153 = vpop.f32.mrb[0].mxu0
      %v4154 = vadd.f32 %v4105, %v4153
      %v4155 = vpop.f32.mrb[0].mxu0
      %v4156 = vpop.f32.mrb[0].mxu0
      %v4157 = vadd.f32 %v4108, %v4156
      %v4158 = vpop.f32.mrb[0].mxu0
      %4159 = vdwg.mxu0
      %4160 = vmatprep.subr.bf16.mxu0 0
      %4161 = vmatpush1.bf16.msra.mxu0 %v1740
      %4162 = vmatprep.subr.bf16.mxu0 0
      %4163 = vmatpush1.bf16.msra.mxu0 %v1741
      %4164 = vmatprep.subr.bf16.mxu0 0
      %4165 = vmatpush1.bf16.msra.mxu0 %v1742
      %4166 = vmatprep.subr.bf16.mxu0 0
      %4167 = vmatpush1.bf16.msra.mxu0 %v1743
      %4168 = vmatprep.subr.bf16.mxu0 0
      %4169 = vmatpush1.bf16.msra.mxu0 %v1744
      %4170 = vmatprep.subr.bf16.mxu0 0
      %4171 = vmatpush1.bf16.msra.mxu0 %v1745
      %4172 = vmatprep.subr.bf16.mxu0 0
      %4173 = vmatpush1.bf16.msra.mxu0 %v1746
      %4174 = vmatprep.subr.bf16.mxu0 0
      %4175 = vmatpush1.bf16.msra.mxu0 %v1747
      %4176 = vmatprep.subr.bf16.mxu0 0
      %4177 = vmatpush1.bf16.msra.mxu0 %v1748
      %4178 = vmatprep.subr.bf16.mxu0 0
      %4179 = vmatpush1.bf16.msra.mxu0 %v1749
      %4180 = vmatprep.subr.bf16.mxu0 0
      %4181 = vmatpush1.bf16.msra.mxu0 %v1750
      %4182 = vmatprep.subr.bf16.mxu0 0
      %4183 = vmatpush1.bf16.msra.mxu0 %v1751
      %4184 = vmatprep.subr.bf16.mxu0 0
      %4185 = vmatpush1.bf16.msra.mxu0 %v1752
      %4186 = vmatprep.subr.bf16.mxu0 0
      %4187 = vmatpush1.bf16.msra.mxu0 %v1753
      %4188 = vmatprep.subr.bf16.mxu0 0
      %4189 = vmatpush1.bf16.msra.mxu0 %v1754
      %4190 = vmatprep.subr.bf16.mxu0 0
      %4191 = vmatpush1.bf16.msra.mxu0 %v1755
      %4192 = vmatprep.mubr.bf16.mxu0 %v3873
      %4193 = vmatmul.mubr.bf16.gmra.mrb[0].mxu0 %v3872
      %v4194 = vpop.f32.mrb[0].mxu0
      %v4195 = vadd.f32 %v4146, %v4194
      %v4196 = vpop.f32.mrb[0].mxu0
      %v4197 = vpop.f32.mrb[0].mxu0
      %v4198 = vadd.f32 %v4149, %v4197
      %v4199 = vpop.f32.mrb[0].mxu0
      %4200 = vmatprep.mubr.bf16.mxu0 %v3898
      %4201 = vmatmul.mubr.bf16.gmra.mrb[0].mxu0 %v3897
      %v4202 = vpop.f32.mrb[0].mxu0
      %v4203 = vadd.f32 %v4154, %v4202
      %v4204 = vpop.f32.mrb[0].mxu0
      %v4205 = vpop.f32.mrb[0].mxu0
      %v4206 = vadd.f32 %v4157, %v4205
      %v4207 = vpop.f32.mrb[0].mxu0
      %4208 = vdwg.mxu0
      %4209 = vmatprep.subr.bf16.mxu0 0
      %4210 = vmatpush1.bf16.msra.mxu0 %v1756
      %4211 = vmatprep.subr.bf16.mxu0 0
      %4212 = vmatpush1.bf16.msra.mxu0 %v1757
      %4213 = vmatprep.subr.bf16.mxu0 0
      %4214 = vmatpush1.bf16.msra.mxu0 %v1758
      %4215 = vmatprep.subr.bf16.mxu0 0
      %4216 = vmatpush1.bf16.msra.mxu0 %v1759
      %4217 = vmatprep.subr.bf16.mxu0 0
      %4218 = vmatpush1.bf16.msra.mxu0 %v1760
      %4219 = vmatprep.subr.bf16.mxu0 0
      %4220 = vmatpush1.bf16.msra.mxu0 %v1761
      %4221 = vmatprep.subr.bf16.mxu0 0
      %4222 = vmatpush1.bf16.msra.mxu0 %v1762
      %4223 = vmatprep.subr.bf16.mxu0 0
      %4224 = vmatpush1.bf16.msra.mxu0 %v1763
      %4225 = vmatprep.subr.bf16.mxu0 0
      %4226 = vmatpush1.bf16.msra.mxu0 %v1764
      %4227 = vmatprep.subr.bf16.mxu0 0
      %4228 = vmatpush1.bf16.msra.mxu0 %v1765
      %4229 = vmatprep.subr.bf16.mxu0 0
      %4230 = vmatpush1.bf16.msra.mxu0 %v1766
      %4231 = vmatprep.subr.bf16.mxu0 0
      %4232 = vmatpush1.bf16.msra.mxu0 %v1767
      %4233 = vmatprep.subr.bf16.mxu0 0
      %4234 = vmatpush1.bf16.msra.mxu0 %v1768
      %4235 = vmatprep.subr.bf16.mxu0 0
      %4236 = vmatpush1.bf16.msra.mxu0 %v1769
      %4237 = vmatprep.subr.bf16.mxu0 0
      %4238 = vmatpush1.bf16.msra.mxu0 %v1770
      %4239 = vmatprep.subr.bf16.mxu0 0
      %4240 = vmatpush1.bf16.msra.mxu0 %v1771
      %4241 = vmatprep.mubr.bf16.mxu0 %v3875
      %4242 = vmatmul.mubr.bf16.gmra.mrb[0].mxu0 %v3874
      %v4243 = vpop.f32.mrb[0].mxu0
      %v4244 = vadd.f32 %v4195, %v4243
      %v4245 = vpop.f32.mrb[0].mxu0
      %v4246 = vpop.f32.mrb[0].mxu0
      %v4247 = vadd.f32 %v4198, %v4246
      %v4248 = vpop.f32.mrb[0].mxu0
      %4249 = vmatprep.mubr.bf16.mxu0 %v3900
      %4250 = vmatmul.mubr.bf16.gmra.mrb[0].mxu0 %v3899
      %v4251 = vpop.f32.mrb[0].mxu0
      %v4252 = vadd.f32 %v4203, %v4251
      %v4253 = vpop.f32.mrb[0].mxu0
      %v4254 = vpop.f32.mrb[0].mxu0
      %v4255 = vadd.f32 %v4206, %v4254
      %v4256 = vpop.f32.mrb[0].mxu0
      %4257 = vdwg.mxu0
      %4258 = vmatprep.subr.bf16.mxu0 0
      %4259 = vmatpush1.bf16.msra.mxu0 %v1772
      %4260 = vmatprep.subr.bf16.mxu0 0
      %4261 = vmatpush1.bf16.msra.mxu0 %v1773
      %4262 = vmatprep.subr.bf16.mxu0 0
      %4263 = vmatpush1.bf16.msra.mxu0 %v1774
      %4264 = vmatprep.subr.bf16.mxu0 0
      %4265 = vmatpush1.bf16.msra.mxu0 %v1775
      %4266 = vmatprep.subr.bf16.mxu0 0
      %4267 = vmatpush1.bf16.msra.mxu0 %v1776
      %4268 = vmatprep.subr.bf16.mxu0 0
      %4269 = vmatpush1.bf16.msra.mxu0 %v1777
      %4270 = vmatprep.subr.bf16.mxu0 0
      %4271 = vmatpush1.bf16.msra.mxu0 %v1778
      %4272 = vmatprep.subr.bf16.mxu0 0
      %4273 = vmatpush1.bf16.msra.mxu0 %v1779
      %4274 = vmatprep.subr.bf16.mxu0 0
      %4275 = vmatpush1.bf16.msra.mxu0 %v1780
      %4276 = vmatprep.subr.bf16.mxu0 0
      %4277 = vmatpush1.bf16.msra.mxu0 %v1781
      %4278 = vmatprep.subr.bf16.mxu0 0
      %4279 = vmatpush1.bf16.msra.mxu0 %v1782
      %4280 = vmatprep.subr.bf16.mxu0 0
      %4281 = vmatpush1.bf16.msra.mxu0 %v1783
      %4282 = vmatprep.subr.bf16.mxu0 0
      %4283 = vmatpush1.bf16.msra.mxu0 %v1784
      %4284 = vmatprep.subr.bf16.mxu0 0
      %4285 = vmatpush1.bf16.msra.mxu0 %v1785
      %4286 = vmatprep.subr.bf16.mxu0 0
      %4287 = vmatpush1.bf16.msra.mxu0 %v1786
      %4288 = vmatprep.subr.bf16.mxu0 0
      %4289 = vmatpush1.bf16.msra.mxu0 %v1787
      %4290 = vmatprep.mubr.bf16.mxu0 %v3877
      %4291 = vmatmul.mubr.bf16.gmra.mrb[0].mxu0 %v3876
      %v4292 = vpop.f32.mrb[0].mxu0
      %v4293 = vadd.f32 %v4244, %v4292
      %v4294 = vpop.f32.mrb[0].mxu0
      %v4295 = vpop.f32.mrb[0].mxu0
      %v4296 = vadd.f32 %v4247, %v4295
      %v4297 = vpop.f32.mrb[0].mxu0
      %4298 = vmatprep.mubr.bf16.mxu0 %v3902
      %4299 = vmatmul.mubr.bf16.gmra.mrb[0].mxu0 %v3901
      %v4300 = vpop.f32.mrb[0].mxu0
      %v4301 = vadd.f32 %v4252, %v4300
      %v4302 = vpop.f32.mrb[0].mxu0
      %v4303 = vpop.f32.mrb[0].mxu0
      %v4304 = vadd.f32 %v4255, %v4303
      %v4305 = vpop.f32.mrb[0].mxu0
      %4306 = vdwg.mxu0
      %4307 = vmatprep.subr.bf16.mxu0 0
      %4308 = vmatpush1.bf16.msra.mxu0 %v1788
      %4309 = vmatprep.subr.bf16.mxu0 0
      %4310 = vmatpush1.bf16.msra.mxu0 %v1789
      %4311 = vmatprep.subr.bf16.mxu0 0
      %4312 = vmatpush1.bf16.msra.mxu0 %v1790
      %4313 = vmatprep.subr.bf16.mxu0 0
      %4314 = vmatpush1.bf16.msra.mxu0 %v1791
      %4315 = vmatprep.subr.bf16.mxu0 0
      %4316 = vmatpush1.bf16.msra.mxu0 %v1792
      %4317 = vmatprep.subr.bf16.mxu0 0
      %4318 = vmatpush1.bf16.msra.mxu0 %v1793
      %4319 = vmatprep.subr.bf16.mxu0 0
      %4320 = vmatpush1.bf16.msra.mxu0 %v1794
      %4321 = vmatprep.subr.bf16.mxu0 0
      %4322 = vmatpush1.bf16.msra.mxu0 %v1795
      %4323 = vmatprep.subr.bf16.mxu0 0
      %4324 = vmatpush1.bf16.msra.mxu0 %v1796
      %4325 = vmatprep.subr.bf16.mxu0 0
      %4326 = vmatpush1.bf16.msra.mxu0 %v1797
      %4327 = vmatprep.subr.bf16.mxu0 0
      %4328 = vmatpush1.bf16.msra.mxu0 %v1798
      %4329 = vmatprep.subr.bf16.mxu0 0
      %4330 = vmatpush1.bf16.msra.mxu0 %v1799
      %4331 = vmatprep.subr.bf16.mxu0 0
      %4332 = vmatpush1.bf16.msra.mxu0 %v1800
      %4333 = vmatprep.subr.bf16.mxu0 0
      %4334 = vmatpush1.bf16.msra.mxu0 %v1801
      %4335 = vmatprep.subr.bf16.mxu0 0
      %4336 = vmatpush1.bf16.msra.mxu0 %v1802
      %4337 = vmatprep.subr.bf16.mxu0 0
      %4338 = vmatpush1.bf16.msra.mxu0 %v1803
      %4339 = vmatprep.mubr.bf16.mxu0 %v3879
      %4340 = vmatmul.mubr.bf16.gmra.mrb[0].mxu0 %v3878
      %v4341 = vpop.f32.mrb[0].mxu0
      %v4342 = vadd.f32 %v4293, %v4341
      %v4343 = vpop.f32.mrb[0].mxu0
      %v4344 = vpop.f32.mrb[0].mxu0
      %v4345 = vadd.f32 %v4296, %v4344
      %v4346 = vpop.f32.mrb[0].mxu0
      %4347 = vmatprep.mubr.bf16.mxu0 %v3904
      %4348 = vmatmul.mubr.bf16.gmra.mrb[0].mxu0 %v3903
      %v4349 = vpop.f32.mrb[0].mxu0
      %v4350 = vadd.f32 %v4301, %v4349
      %v4351 = vpop.f32.mrb[0].mxu0
      %v4352 = vpop.f32.mrb[0].mxu0
      %v4353 = vadd.f32 %v4304, %v4352
      %v4354 = vpop.f32.mrb[0].mxu0
      %4355 = vdwg.mxu0
      %4356 = vmatprep.subr.bf16.mxu0 0
      %4357 = vmatpush1.bf16.msra.mxu0 %v1804
      %4358 = vmatprep.subr.bf16.mxu0 0
      %4359 = vmatpush1.bf16.msra.mxu0 %v1805
      %4360 = vmatprep.subr.bf16.mxu0 0
      %4361 = vmatpush1.bf16.msra.mxu0 %v1806
      %4362 = vmatprep.subr.bf16.mxu0 0
      %4363 = vmatpush1.bf16.msra.mxu0 %v1807
      %4364 = vmatprep.subr.bf16.mxu0 0
      %4365 = vmatpush1.bf16.msra.mxu0 %v1808
      %4366 = vmatprep.subr.bf16.mxu0 0
      %4367 = vmatpush1.bf16.msra.mxu0 %v1809
      %4368 = vmatprep.subr.bf16.mxu0 0
      %4369 = vmatpush1.bf16.msra.mxu0 %v1810
      %4370 = vmatprep.subr.bf16.mxu0 0
      %4371 = vmatpush1.bf16.msra.mxu0 %v1811
      %4372 = vmatprep.subr.bf16.mxu0 0
      %4373 = vmatpush1.bf16.msra.mxu0 %v1812
      %4374 = vmatprep.subr.bf16.mxu0 0
      %4375 = vmatpush1.bf16.msra.mxu0 %v1813
      %4376 = vmatprep.subr.bf16.mxu0 0
      %4377 = vmatpush1.bf16.msra.mxu0 %v1814
      %4378 = vmatprep.subr.bf16.mxu0 0
      %4379 = vmatpush1.bf16.msra.mxu0 %v1815
      %4380 = vmatprep.subr.bf16.mxu0 0
      %4381 = vmatpush1.bf16.msra.mxu0 %v1816
      %4382 = vmatprep.subr.bf16.mxu0 0
      %4383 = vmatpush1.bf16.msra.mxu0 %v1817
      %4384 = vmatprep.subr.bf16.mxu0 0
      %4385 = vmatpush1.bf16.msra.mxu0 %v1818
      %4386 = vmatprep.subr.bf16.mxu0 0
      %4387 = vmatpush1.bf16.msra.mxu0 %v1819
      %4388 = vmatprep.mubr.bf16.mxu0 %v3881
      %4389 = vmatmul.mubr.bf16.gmra.mrb[0].mxu0 %v3880
      %v4390 = vpop.f32.mrb[0].mxu0
      %v4391 = vadd.f32 %v4342, %v4390
      %v4392 = vpop.f32.mrb[0].mxu0
      %v4393 = vpop.f32.mrb[0].mxu0
      %v4394 = vadd.f32 %v4345, %v4393
      %v4395 = vpop.f32.mrb[0].mxu0
      %4396 = vmatprep.mubr.bf16.mxu0 %v3906
      %4397 = vmatmul.mubr.bf16.gmra.mrb[0].mxu0 %v3905
      %v4398 = vpop.f32.mrb[0].mxu0
      %v4399 = vadd.f32 %v4350, %v4398
      %v4400 = vpop.f32.mrb[0].mxu0
      %v4401 = vpop.f32.mrb[0].mxu0
      %v4402 = vadd.f32 %v4353, %v4401
      %v4403 = vpop.f32.mrb[0].mxu0
      %4404 = vdwg.mxu0
      %4405 = vmatprep.subr.bf16.mxu0 0
      %4406 = vmatpush1.bf16.msra.mxu0 %v1820
      %4407 = vmatprep.subr.bf16.mxu0 0
      %4408 = vmatpush1.bf16.msra.mxu0 %v1821
      %4409 = vmatprep.subr.bf16.mxu0 0
      %4410 = vmatpush1.bf16.msra.mxu0 %v1822
      %4411 = vmatprep.subr.bf16.mxu0 0
      %4412 = vmatpush1.bf16.msra.mxu0 %v1823
      %4413 = vmatprep.subr.bf16.mxu0 0
      %4414 = vmatpush1.bf16.msra.mxu0 %v1824
      %4415 = vmatprep.subr.bf16.mxu0 0
      %4416 = vmatpush1.bf16.msra.mxu0 %v1825
      %4417 = vmatprep.subr.bf16.mxu0 0
      %4418 = vmatpush1.bf16.msra.mxu0 %v1826
      %4419 = vmatprep.subr.bf16.mxu0 0
      %4420 = vmatpush1.bf16.msra.mxu0 %v1827
      %4421 = vmatprep.subr.bf16.mxu0 0
      %4422 = vmatpush1.bf16.msra.mxu0 %v1828
      %4423 = vmatprep.subr.bf16.mxu0 0
      %4424 = vmatpush1.bf16.msra.mxu0 %v1829
      %4425 = vmatprep.subr.bf16.mxu0 0
      %4426 = vmatpush1.bf16.msra.mxu0 %v1830
      %4427 = vmatprep.subr.bf16.mxu0 0
      %4428 = vmatpush1.bf16.msra.mxu0 %v1831
      %4429 = vmatprep.subr.bf16.mxu0 0
      %4430 = vmatpush1.bf16.msra.mxu0 %v1832
      %4431 = vmatprep.subr.bf16.mxu0 0
      %4432 = vmatpush1.bf16.msra.mxu0 %v1833
      %4433 = vmatprep.subr.bf16.mxu0 0
      %4434 = vmatpush1.bf16.msra.mxu0 %v1834
      %4435 = vmatprep.subr.bf16.mxu0 0
      %4436 = vmatpush1.bf16.msra.mxu0 %v1835
      %4437 = vmatprep.mubr.bf16.mxu0 %v3883
      %4438 = vmatmul.mubr.bf16.gmra.mrb[0].mxu0 %v3882
      %v4439 = vpop.f32.mrb[0].mxu0
      %v4440 = vadd.f32 %v4391, %v4439
      %v4441 = vpop.f32.mrb[0].mxu0
      %v4442 = vpop.f32.mrb[0].mxu0
      %v4443 = vadd.f32 %v4394, %v4442
      %v4444 = vpop.f32.mrb[0].mxu0
      %4445 = vmatprep.mubr.bf16.mxu0 %v3908
      %4446 = vmatmul.mubr.bf16.gmra.mrb[0].mxu0 %v3907
      %v4447 = vpop.f32.mrb[0].mxu0
      %v4448 = vadd.f32 %v4399, %v4447
      %v4449 = vpop.f32.mrb[0].mxu0
      %v4450 = vpop.f32.mrb[0].mxu0
      %v4451 = vadd.f32 %v4402, %v4450
      %v4452 = vpop.f32.mrb[0].mxu0
      %4453 = vdwg.mxu0
      %4454 = vmatprep.subr.bf16.mxu0 0
      %4455 = vmatpush1.bf16.msra.mxu0 %v1836
      %4456 = vmatprep.subr.bf16.mxu0 0
      %4457 = vmatpush1.bf16.msra.mxu0 %v1837
      %4458 = vmatprep.subr.bf16.mxu0 0
      %4459 = vmatpush1.bf16.msra.mxu0 %v1838
      %4460 = vmatprep.subr.bf16.mxu0 0
      %4461 = vmatpush1.bf16.msra.mxu0 %v1839
      %4462 = vmatprep.subr.bf16.mxu0 0
      %4463 = vmatpush1.bf16.msra.mxu0 %v1840
      %4464 = vmatprep.subr.bf16.mxu0 0
      %4465 = vmatpush1.bf16.msra.mxu0 %v1841
      %4466 = vmatprep.subr.bf16.mxu0 0
      %4467 = vmatpush1.bf16.msra.mxu0 %v1842
      %4468 = vmatprep.subr.bf16.mxu0 0
      %4469 = vmatpush1.bf16.msra.mxu0 %v1843
      %4470 = vmatprep.subr.bf16.mxu0 0
      %4471 = vmatpush1.bf16.msra.mxu0 %v1844
      %4472 = vmatprep.subr.bf16.mxu0 0
      %4473 = vmatpush1.bf16.msra.mxu0 %v1845
      %4474 = vmatprep.subr.bf16.mxu0 0
      %4475 = vmatpush1.bf16.msra.mxu0 %v1846
      %4476 = vmatprep.subr.bf16.mxu0 0
      %4477 = vmatpush1.bf16.msra.mxu0 %v1847
      %4478 = vmatprep.subr.bf16.mxu0 0
      %4479 = vmatpush1.bf16.msra.mxu0 %v1848
      %4480 = vmatprep.subr.bf16.mxu0 0
      %4481 = vmatpush1.bf16.msra.mxu0 %v1849
      %4482 = vmatprep.subr.bf16.mxu0 0
      %4483 = vmatpush1.bf16.msra.mxu0 %v1850
      %4484 = vmatprep.subr.bf16.mxu0 0
      %4485 = vmatpush1.bf16.msra.mxu0 %v1851
      %4486 = vmatprep.mubr.bf16.mxu0 %v3885
      %4487 = vmatmul.mubr.bf16.gmra.mrb[0].mxu0 %v3884
      %v4488 = vpop.f32.mrb[0].mxu0
      %v4489 = vadd.f32 %v4440, %v4488
      %v4490 = vpop.f32.mrb[0].mxu0
      %v4491 = vpop.f32.mrb[0].mxu0
      %v4492 = vadd.f32 %v4443, %v4491
      %v4493 = vpop.f32.mrb[0].mxu0
      %4494 = vmatprep.mubr.bf16.mxu0 %v3910
      %4495 = vmatmul.mubr.bf16.gmra.mrb[0].mxu0 %v3909
      %v4496 = vpop.f32.mrb[0].mxu0
      %v4497 = vadd.f32 %v4448, %v4496
      %v4498 = vpop.f32.mrb[0].mxu0
      %v4499 = vpop.f32.mrb[0].mxu0
      %v4500 = vadd.f32 %v4451, %v4499
      %v4501 = vpop.f32.mrb[0].mxu0
      %4502 = vdwg.mxu0
      %4503 = vmatprep.subr.bf16.mxu0 0
      %4504 = vmatpush1.bf16.msra.mxu0 %v1852
      %4505 = vmatprep.subr.bf16.mxu0 0
      %4506 = vmatpush1.bf16.msra.mxu0 %v1853
      %4507 = vmatprep.subr.bf16.mxu0 0
      %4508 = vmatpush1.bf16.msra.mxu0 %v1854
      %4509 = vmatprep.subr.bf16.mxu0 0
      %4510 = vmatpush1.bf16.msra.mxu0 %v1855
      %4511 = vmatprep.subr.bf16.mxu0 0
      %4512 = vmatpush1.bf16.msra.mxu0 %v1856
      %4513 = vmatprep.subr.bf16.mxu0 0
      %4514 = vmatpush1.bf16.msra.mxu0 %v1857
      %4515 = vmatprep.subr.bf16.mxu0 0
      %4516 = vmatpush1.bf16.msra.mxu0 %v1858
      %4517 = vmatprep.subr.bf16.mxu0 0
      %4518 = vmatpush1.bf16.msra.mxu0 %v1859
      %4519 = vmatprep.subr.bf16.mxu0 0
      %4520 = vmatpush1.bf16.msra.mxu0 %v1860
      %4521 = vmatprep.subr.bf16.mxu0 0
      %4522 = vmatpush1.bf16.msra.mxu0 %v1861
      %4523 = vmatprep.subr.bf16.mxu0 0
      %4524 = vmatpush1.bf16.msra.mxu0 %v1862
      %4525 = vmatprep.subr.bf16.mxu0 0
      %4526 = vmatpush1.bf16.msra.mxu0 %v1863
      %4527 = vmatprep.subr.bf16.mxu0 0
      %4528 = vmatpush1.bf16.msra.mxu0 %v1864
      %4529 = vmatprep.subr.bf16.mxu0 0
      %4530 = vmatpush1.bf16.msra.mxu0 %v1865
      %4531 = vmatprep.subr.bf16.mxu0 0
      %4532 = vmatpush1.bf16.msra.mxu0 %v1866
      %4533 = vmatprep.subr.bf16.mxu0 0
      %4534 = vmatpush1.bf16.msra.mxu0 %v1867
      %4535 = vmatprep.mubr.bf16.mxu0 %v3887
      %4536 = vmatmul.mubr.bf16.gmra.mrb[0].mxu0 %v3886
      %v4537 = vpop.f32.mrb[0].mxu0
      %v4538 = vadd.f32 %v4489, %v4537
      %v4539 = vpop.f32.mrb[0].mxu0
      %v4540 = vpop.f32.mrb[0].mxu0
      %v4541 = vadd.f32 %v4492, %v4540
      %v4542 = vpop.f32.mrb[0].mxu0
      %4543 = vmatprep.mubr.bf16.mxu0 %v3912
      %4544 = vmatmul.mubr.bf16.gmra.mrb[0].mxu0 %v3911
      %v4545 = vpop.f32.mrb[0].mxu0
      %v4546 = vadd.f32 %v4497, %v4545
      %v4547 = vpop.f32.mrb[0].mxu0
      %v4548 = vpop.f32.mrb[0].mxu0
      %v4549 = vadd.f32 %v4500, %v4548
      %v4550 = vpop.f32.mrb[0].mxu0
      %4551 = vdwg.mxu0
      %4552 = vmatprep.subr.bf16.mxu0 0
      %4553 = vmatpush1.bf16.msra.mxu0 %v1868
      %4554 = vmatprep.subr.bf16.mxu0 0
      %4555 = vmatpush1.bf16.msra.mxu0 %v1869
      %4556 = vmatprep.subr.bf16.mxu0 0
      %4557 = vmatpush1.bf16.msra.mxu0 %v1870
      %4558 = vmatprep.subr.bf16.mxu0 0
      %4559 = vmatpush1.bf16.msra.mxu0 %v1871
      %4560 = vmatprep.subr.bf16.mxu0 0
      %4561 = vmatpush1.bf16.msra.mxu0 %v1872
      %4562 = vmatprep.subr.bf16.mxu0 0
      %4563 = vmatpush1.bf16.msra.mxu0 %v1873
      %4564 = vmatprep.subr.bf16.mxu0 0
      %4565 = vmatpush1.bf16.msra.mxu0 %v1874
      %4566 = vmatprep.subr.bf16.mxu0 0
      %4567 = vmatpush1.bf16.msra.mxu0 %v1875
      %4568 = vmatprep.subr.bf16.mxu0 0
      %4569 = vmatpush1.bf16.msra.mxu0 0
      %4570 = vmatprep.subr.bf16.mxu0 0
      %4571 = vmatpush1.bf16.msra.mxu0 0
      %4572 = vmatprep.subr.bf16.mxu0 0
      %4573 = vmatpush1.bf16.msra.mxu0 0
      %4574 = vmatprep.subr.bf16.mxu0 0
      %4575 = vmatpush1.bf16.msra.mxu0 0
      %4576 = vmatprep.subr.bf16.mxu0 0
      %4577 = vmatpush1.bf16.msra.mxu0 0
      %4578 = vmatprep.subr.bf16.mxu0 0
      %4579 = vmatpush1.bf16.msra.mxu0 0
      %4580 = vmatprep.subr.bf16.mxu0 0
      %4581 = vmatpush1.bf16.msra.mxu0 0
      %4582 = vmatprep.subr.bf16.mxu0 0
      %4583 = vmatpush1.bf16.msra.mxu0 0
      %4584 = vmatprep.mubr.bf16.mxu0 0
      %4585 = vmatmul.mubr.bf16.gmra.mrb[0].mxu0 %v3888
      %v4586 = vpop.f32.mrb[0].mxu0
      %v4587 = vadd.f32 %v4538, %v4586
      %v4588 = vpop.f32.mrb[0].mxu0
      %v4589 = vpop.f32.mrb[0].mxu0
      %v4590 = vadd.f32 %v4541, %v4589
      %v4591 = vpop.f32.mrb[0].mxu0
      %4592 = vmatprep.mubr.bf16.mxu0 0
      %4593 = vmatmul.mubr.bf16.gmra.mrb[0].mxu0 %v3913
      %v4594 = vpop.f32.mrb[0].mxu0
      %v4595 = vadd.f32 %v4546, %v4594
      %v4596 = vpop.f32.mrb[0].mxu0
      %v4597 = vpop.f32.mrb[0].mxu0
      %v4598 = vadd.f32 %v4549, %v4597
      %v4599 = vpop.f32.mrb[0].mxu0
      %4600 = vdwg.mxu0
      %v4601 = vmax.f32 %v3655, %v4587
      %v4602 = vmax.f32 %v3656, %v4590
      %v4603 = vmax.f32 %v3657, %v4595
      %v4604 = vmax.f32 %v3658, %v4598
      %s4605 = scalar_lea.vmem %s165, 1200
      %v4606 = vld [vmem:[%s4605] sm:$0xff]
      %v4607 = vld [vmem:[%s4605 + $0x8] sm:$0xff]
      %v4608 = vld [vmem:[%s4605 + $0x10] sm:$0xff]
      %v4609 = vld [vmem:[%s4605 + $0x18] sm:$0xff]
      %v4610 = vld [vmem:[%s4605 + $0x20] sm:$0xff]
      %v4611 = vld [vmem:[%s4605 + $0x28] sm:$0xff]
      %v4612 = vld [vmem:[%s4605 + $0x30] sm:$0xff]
      %v4613 = vld [vmem:[%s4605 + $0x38] sm:$0xff]
      %v4614 = vld [vmem:[%s4605 + $0x40] sm:$0xff]
      %v4615 = vld [vmem:[%s4605 + $0x48] sm:$0xff]
      %v4616 = vld [vmem:[%s4605 + $0x50] sm:$0xff]
      %v4617 = vld [vmem:[%s4605 + $0x58] sm:$0xff]
      %v4618 = vld [vmem:[%s4605 + $0x60] sm:$0xf]
      %v4619 = vld [vmem:[%s4605 + $0x64] sm:$0xff]
      %v4620 = vld [vmem:[%s4605 + $0x6c] sm:$0xff]
      %v4621 = vld [vmem:[%s4605 + $0x74] sm:$0xff]
      %v4622 = vld [vmem:[%s4605 + $0x7c] sm:$0xff]
      %v4623 = vld [vmem:[%s4605 + $0x84] sm:$0xff]
      %v4624 = vld [vmem:[%s4605 + $0x8c] sm:$0xff]
      %v4625 = vld [vmem:[%s4605 + $0x94] sm:$0xff]
      %v4626 = vld [vmem:[%s4605 + $0x9c] sm:$0xff]
      %v4627 = vld [vmem:[%s4605 + $0xa4] sm:$0xff]
      %v4628 = vld [vmem:[%s4605 + $0xac] sm:$0xff]
      %v4629 = vld [vmem:[%s4605 + $0xb4] sm:$0xff]
      %v4630 = vld [vmem:[%s4605 + $0xbc] sm:$0xff]
      %v4631 = vld [vmem:[%s4605 + $0xc4] sm:$0xf]
      %v4632 = vld [vmem:[%s4605 + $0xc8] sm:$0xff]
      %v4633 = vld [vmem:[%s4605 + $0xd0] sm:$0xff]
      %v4634 = vld [vmem:[%s4605 + $0xd8] sm:$0xff]
      %v4635 = vld [vmem:[%s4605 + $0xe0] sm:$0xff]
      %v4636 = vld [vmem:[%s4605 + $0xe8] sm:$0xff]
      %v4637 = vld [vmem:[%s4605 + $0xf0] sm:$0xff]
      %v4638 = vld [vmem:[%s4605 + $0xf8] sm:$0xff]
      %v4639 = vld [vmem:[%s4605 + $0x100] sm:$0xff]
      %v4640 = vld [vmem:[%s4605 + $0x108] sm:$0xff]
      %v4641 = vld [vmem:[%s4605 + $0x110] sm:$0xff]
      %v4642 = vld [vmem:[%s4605 + $0x118] sm:$0xff]
      %v4643 = vld [vmem:[%s4605 + $0x120] sm:$0xff]
      %v4644 = vld [vmem:[%s4605 + $0x128] sm:$0xf]
      %v4645 = vld [vmem:[%s4605 + $0x12c] sm:$0x11]
      %v4646 = vld [vmem:[%s4605 + $0x134] sm:$0x11]
      %v4647 = vld [vmem:[%s4605 + $0x13c] sm:$0x11]
      %v4648 = vld [vmem:[%s4605 + $0x144] sm:$0x11]
      %v4649 = vld [vmem:[%s4605 + $0x14c] sm:$0x11]
      %v4650 = vld [vmem:[%s4605 + $0x154] sm:$0x11]
      %v4651 = vld [vmem:[%s4605 + $0x15c] sm:$0x11]
      %v4652 = vld [vmem:[%s4605 + $0x164] sm:$0x11]
      %v4653 = vld [vmem:[%s4605 + $0x16c] sm:$0x11]
      %v4654 = vld [vmem:[%s4605 + $0x174] sm:$0x11]
      %v4655 = vld [vmem:[%s4605 + $0x17c] sm:$0x11]
      %v4656 = vld [vmem:[%s4605 + $0x184] sm:$0x11]
      %v4657 = vld [vmem:[%s4605 + $0x18c] sm:$0x1]
      %v4710 = vunpack.c.l.b16 %v4606
      %v4711 = vunpack.c.h.b16 %v4606
      %v4712 = vunpack.c.l.b16 %v4607
      %v4713 = vunpack.c.h.b16 %v4607
      %v4714 = vunpack.c.l.b16 %v4608
      %v4715 = vunpack.c.h.b16 %v4608
      %v4716 = vunpack.c.l.b16 %v4609
      %v4717 = vunpack.c.h.b16 %v4609
      %v4718 = vunpack.c.l.b16 %v4610
      %v4719 = vunpack.c.h.b16 %v4610
      %v4720 = vunpack.c.l.b16 %v4611
      %v4721 = vunpack.c.h.b16 %v4611
      %v4722 = vunpack.c.l.b16 %v4612
      %v4723 = vunpack.c.h.b16 %v4612
      %v4724 = vunpack.c.l.b16 %v4613
      %v4725 = vunpack.c.h.b16 %v4613
      %v4726 = vunpack.c.l.b16 %v4614
      %v4727 = vunpack.c.h.b16 %v4614
      %v4728 = vunpack.c.l.b16 %v4615
      %v4729 = vunpack.c.h.b16 %v4615
      %v4730 = vunpack.c.l.b16 %v4616
      %v4731 = vunpack.c.h.b16 %v4616
      %v4732 = vunpack.c.l.b16 %v4617
      %v4733 = vunpack.c.h.b16 %v4617
      %v4734 = vunpack.c.l.b16 %v4618
      %v4735 = vunpack.c.l.b16 %v4619
      %v4736 = vunpack.c.h.b16 %v4619
      %v4737 = vunpack.c.l.b16 %v4620
      %v4738 = vunpack.c.h.b16 %v4620
      %v4739 = vunpack.c.l.b16 %v4621
      %v4740 = vunpack.c.h.b16 %v4621
      %v4741 = vunpack.c.l.b16 %v4622
      %v4742 = vunpack.c.h.b16 %v4622
      %v4743 = vunpack.c.l.b16 %v4623
      %v4744 = vunpack.c.h.b16 %v4623
      %v4745 = vunpack.c.l.b16 %v4624
      %v4746 = vunpack.c.h.b16 %v4624
      %v4747 = vunpack.c.l.b16 %v4625
      %v4748 = vunpack.c.h.b16 %v4625
      %v4749 = vunpack.c.l.b16 %v4626
      %v4750 = vunpack.c.h.b16 %v4626
      %v4751 = vunpack.c.l.b16 %v4627
      %v4752 = vunpack.c.h.b16 %v4627
      %v4753 = vunpack.c.l.b16 %v4628
      %v4754 = vunpack.c.h.b16 %v4628
      %v4755 = vunpack.c.l.b16 %v4629
      %v4756 = vunpack.c.h.b16 %v4629
      %v4757 = vunpack.c.l.b16 %v4630
      %v4758 = vunpack.c.h.b16 %v4630
      %v4759 = vunpack.c.l.b16 %v4631
      %v4760 = vunpack.c.l.b16 %v4632
      %v4761 = vunpack.c.h.b16 %v4632
      %v4762 = vunpack.c.l.b16 %v4633
      %v4763 = vunpack.c.h.b16 %v4633
      %v4764 = vunpack.c.l.b16 %v4634
      %v4765 = vunpack.c.h.b16 %v4634
      %v4766 = vunpack.c.l.b16 %v4635
      %v4767 = vunpack.c.h.b16 %v4635
      %v4768 = vunpack.c.l.b16 %v4636
      %v4769 = vunpack.c.h.b16 %v4636
      %v4770 = vunpack.c.l.b16 %v4637
      %v4771 = vunpack.c.h.b16 %v4637
      %v4772 = vunpack.c.l.b16 %v4638
      %v4773 = vunpack.c.h.b16 %v4638
      %v4774 = vunpack.c.l.b16 %v4639
      %v4775 = vunpack.c.h.b16 %v4639
      %v4776 = vunpack.c.l.b16 %v4640
      %v4777 = vunpack.c.h.b16 %v4640
      %v4778 = vunpack.c.l.b16 %v4641
      %v4779 = vunpack.c.h.b16 %v4641
      %v4780 = vunpack.c.l.b16 %v4642
      %v4781 = vunpack.c.h.b16 %v4642
      %v4782 = vunpack.c.l.b16 %v4643
      %v4783 = vunpack.c.h.b16 %v4643
      %v4784 = vunpack.c.l.b16 %v4644
      %v4785 = vunpack.c.l.b16 %v4645
      %v4786 = vunpack.c.h.b16 %v4645
      %v4787 = vunpack.c.l.b16 %v4646
      %v4788 = vunpack.c.h.b16 %v4646
      %v4789 = vunpack.c.l.b16 %v4647
      %v4790 = vunpack.c.h.b16 %v4647
      %v4791 = vunpack.c.l.b16 %v4648
      %v4792 = vunpack.c.h.b16 %v4648
      %v4793 = vunpack.c.l.b16 %v4649
      %v4794 = vunpack.c.h.b16 %v4649
      %v4795 = vunpack.c.l.b16 %v4650
      %v4796 = vunpack.c.h.b16 %v4650
      %v4797 = vunpack.c.l.b16 %v4651
      %v4798 = vunpack.c.h.b16 %v4651
      %v4799 = vunpack.c.l.b16 %v4652
      %v4800 = vunpack.c.h.b16 %v4652
      %v4801 = vunpack.c.l.b16 %v4653
      %v4802 = vunpack.c.h.b16 %v4653
      %v4803 = vunpack.c.l.b16 %v4654
      %v4804 = vunpack.c.h.b16 %v4654
      %v4805 = vunpack.c.l.b16 %v4655
      %v4806 = vunpack.c.h.b16 %v4655
      %v4807 = vunpack.c.l.b16 %v4656
      %v4808 = vunpack.c.h.b16 %v4656
      %v4809 = vunpack.c.l.b16 %v4657
      %v4810 = vpack.c.b16 %v4735, %v4710
      %v4811 = vpack.c.b16 %v4736, %v4711
      %v4812 = vpack.c.b16 %v4737, %v4712
      %v4813 = vpack.c.b16 %v4738, %v4713
      %v4814 = vpack.c.b16 %v4739, %v4714
      %v4815 = vpack.c.b16 %v4740, %v4715
      %v4816 = vpack.c.b16 %v4741, %v4716
      %v4817 = vpack.c.b16 %v4742, %v4717
      %v4818 = vpack.c.b16 %v4743, %v4718
      %v4819 = vpack.c.b16 %v4744, %v4719
      %v4820 = vpack.c.b16 %v4745, %v4720
      %v4821 = vpack.c.b16 %v4746, %v4721
      %v4822 = vpack.c.b16 %v4747, %v4722
      %v4823 = vpack.c.b16 %v4748, %v4723
      %v4824 = vpack.c.b16 %v4749, %v4724
      %v4825 = vpack.c.b16 %v4750, %v4725
      %v4826 = vpack.c.b16 %v4751, %v4726
      %v4827 = vpack.c.b16 %v4752, %v4727
      %v4828 = vpack.c.b16 %v4753, %v4728
      %v4829 = vpack.c.b16 %v4754, %v4729
      %v4830 = vpack.c.b16 %v4755, %v4730
      %v4831 = vpack.c.b16 %v4756, %v4731
      %v4832 = vpack.c.b16 %v4757, %v4732
      %v4833 = vpack.c.b16 %v4758, %v4733
      %v4834 = vpack.c.b16 %v4759, %v4734
      %v4835 = vpack.c.b16 %v4785, %v4760
      %v4836 = vpack.c.b16 %v4786, %v4761
      %v4837 = vpack.c.b16 %v4787, %v4762
      %v4838 = vpack.c.b16 %v4788, %v4763
      %v4839 = vpack.c.b16 %v4789, %v4764
      %v4840 = vpack.c.b16 %v4790, %v4765
      %v4841 = vpack.c.b16 %v4791, %v4766
      %v4842 = vpack.c.b16 %v4792, %v4767
      %v4843 = vpack.c.b16 %v4793, %v4768
      %v4844 = vpack.c.b16 %v4794, %v4769
      %v4845 = vpack.c.b16 %v4795, %v4770
      %v4846 = vpack.c.b16 %v4796, %v4771
      %v4847 = vpack.c.b16 %v4797, %v4772
      %v4848 = vpack.c.b16 %v4798, %v4773
      %v4849 = vpack.c.b16 %v4799, %v4774
      %v4850 = vpack.c.b16 %v4800, %v4775
      %v4851 = vpack.c.b16 %v4801, %v4776
      %v4852 = vpack.c.b16 %v4802, %v4777
      %v4853 = vpack.c.b16 %v4803, %v4778
      %v4854 = vpack.c.b16 %v4804, %v4779
      %v4855 = vpack.c.b16 %v4805, %v4780
      %v4856 = vpack.c.b16 %v4806, %v4781
      %v4857 = vpack.c.b16 %v4807, %v4782
      %v4858 = vpack.c.b16 %v4808, %v4783
      %v4859 = vpack.c.b16 %v4809, %v4784
      %4910 = vmatprep.subr.bf16.mxu0 0
      %4911 = vmatpush1.bf16.msra.mxu0 %v1676
      %4912 = vmatprep.subr.bf16.mxu0 0
      %4913 = vmatpush1.bf16.msra.mxu0 %v1677
      %4914 = vmatprep.subr.bf16.mxu0 0
      %4915 = vmatpush1.bf16.msra.mxu0 %v1678
      %4916 = vmatprep.subr.bf16.mxu0 0
      %4917 = vmatpush1.bf16.msra.mxu0 %v1679
      %4918 = vmatprep.subr.bf16.mxu0 0
      %4919 = vmatpush1.bf16.msra.mxu0 %v1680
      %4920 = vmatprep.subr.bf16.mxu0 0
      %4921 = vmatpush1.bf16.msra.mxu0 %v1681
      %4922 = vmatprep.subr.bf16.mxu0 0
      %4923 = vmatpush1.bf16.msra.mxu0 %v1682
      %4924 = vmatprep.subr.bf16.mxu0 0
      %4925 = vmatpush1.bf16.msra.mxu0 %v1683
      %4926 = vmatprep.subr.bf16.mxu0 0
      %4927 = vmatpush1.bf16.msra.mxu0 %v1684
      %4928 = vmatprep.subr.bf16.mxu0 0
      %4929 = vmatpush1.bf16.msra.mxu0 %v1685
      %4930 = vmatprep.subr.bf16.mxu0 0
      %4931 = vmatpush1.bf16.msra.mxu0 %v1686
      %4932 = vmatprep.subr.bf16.mxu0 0
      %4933 = vmatpush1.bf16.msra.mxu0 %v1687
      %4934 = vmatprep.subr.bf16.mxu0 0
      %4935 = vmatpush1.bf16.msra.mxu0 %v1688
      %4936 = vmatprep.subr.bf16.mxu0 0
      %4937 = vmatpush1.bf16.msra.mxu0 %v1689
      %4938 = vmatprep.subr.bf16.mxu0 0
      %4939 = vmatpush1.bf16.msra.mxu0 %v1690
      %4940 = vmatprep.subr.bf16.mxu0 0
      %4941 = vmatpush1.bf16.msra.mxu0 %v1691
      %4942 = vmatprep.mubr.bf16.mxu0 %v4811
      %4943 = vmatmul.mubr.bf16.gmra.mrb[0].mxu0 %v4810
      %v4944 = vpop.f32.mrb[0].mxu0
      %v4945 = vadd.f32 0.0, %v4944
      %v4946 = vpop.f32.mrb[0].mxu0
      %v4947 = vpop.f32.mrb[0].mxu0
      %v4948 = vadd.f32 0.0, %v4947
      %v4949 = vpop.f32.mrb[0].mxu0
      %4950 = vmatprep.mubr.bf16.mxu0 %v4836
      %4951 = vmatmul.mubr.bf16.gmra.mrb[0].mxu0 %v4835
      %v4952 = vpop.f32.mrb[0].mxu0
      %v4953 = vadd.f32 0.0, %v4952
      %v4954 = vpop.f32.mrb[0].mxu0
      %v4955 = vpop.f32.mrb[0].mxu0
      %v4956 = vadd.f32 0.0, %v4955
      %v4957 = vpop.f32.mrb[0].mxu0
      %4958 = vdwg.mxu0
      %4959 = vmatprep.subr.bf16.mxu0 0
      %4960 = vmatpush1.bf16.msra.mxu0 %v1692
      %4961 = vmatprep.subr.bf16.mxu0 0
      %4962 = vmatpush1.bf16.msra.mxu0 %v1693
      %4963 = vmatprep.subr.bf16.mxu0 0
      %4964 = vmatpush1.bf16.msra.mxu0 %v1694
      %4965 = vmatprep.subr.bf16.mxu0 0
      %4966 = vmatpush1.bf16.msra.mxu0 %v1695
      %4967 = vmatprep.subr.bf16.mxu0 0
      %4968 = vmatpush1.bf16.msra.mxu0 %v1696
      %4969 = vmatprep.subr.bf16.mxu0 0
      %4970 = vmatpush1.bf16.msra.mxu0 %v1697
      %4971 = vmatprep.subr.bf16.mxu0 0
      %4972 = vmatpush1.bf16.msra.mxu0 %v1698
      %4973 = vmatprep.subr.bf16.mxu0 0
      %4974 = vmatpush1.bf16.msra.mxu0 %v1699
      %4975 = vmatprep.subr.bf16.mxu0 0
      %4976 = vmatpush1.bf16.msra.mxu0 %v1700
      %4977 = vmatprep.subr.bf16.mxu0 0
      %4978 = vmatpush1.bf16.msra.mxu0 %v1701
      %4979 = vmatprep.subr.bf16.mxu0 0
      %4980 = vmatpush1.bf16.msra.mxu0 %v1702
      %4981 = vmatprep.subr.bf16.mxu0 0
      %4982 = vmatpush1.bf16.msra.mxu0 %v1703
      %4983 = vmatprep.subr.bf16.mxu0 0
      %4984 = vmatpush1.bf16.msra.mxu0 %v1704
      %4985 = vmatprep.subr.bf16.mxu0 0
      %4986 = vmatpush1.bf16.msra.mxu0 %v1705
      %4987 = vmatprep.subr.bf16.mxu0 0
      %4988 = vmatpush1.bf16.msra.mxu0 %v1706
      %4989 = vmatprep.subr.bf16.mxu0 0
      %4990 = vmatpush1.bf16.msra.mxu0 %v1707
      %4991 = vmatprep.mubr.bf16.mxu0 %v4813
      %4992 = vmatmul.mubr.bf16.gmra.mrb[0].mxu0 %v4812
      %v4993 = vpop.f32.mrb[0].mxu0
      %v4994 = vadd.f32 %v4945, %v4993
      %v4995 = vpop.f32.mrb[0].mxu0
      %v4996 = vpop.f32.mrb[0].mxu0
      %v4997 = vadd.f32 %v4948, %v4996
      %v4998 = vpop.f32.mrb[0].mxu0
      %4999 = vmatprep.mubr.bf16.mxu0 %v4838
      %5000 = vmatmul.mubr.bf16.gmra.mrb[0].mxu0 %v4837
      %v5001 = vpop.f32.mrb[0].mxu0
      %v5002 = vadd.f32 %v4953, %v5001
      %v5003 = vpop.f32.mrb[0].mxu0
      %v5004 = vpop.f32.mrb[0].mxu0
      %v5005 = vadd.f32 %v4956, %v5004
      %v5006 = vpop.f32.mrb[0].mxu0
      %5007 = vdwg.mxu0
      %5008 = vmatprep.subr.bf16.mxu0 0
      %5009 = vmatpush1.bf16.msra.mxu0 %v1708
      %5010 = vmatprep.subr.bf16.mxu0 0
      %5011 = vmatpush1.bf16.msra.mxu0 %v1709
      %5012 = vmatprep.subr.bf16.mxu0 0
      %5013 = vmatpush1.bf16.msra.mxu0 %v1710
      %5014 = vmatprep.subr.bf16.mxu0 0
      %5015 = vmatpush1.bf16.msra.mxu0 %v1711
      %5016 = vmatprep.subr.bf16.mxu0 0
      %5017 = vmatpush1.bf16.msra.mxu0 %v1712
      %5018 = vmatprep.subr.bf16.mxu0 0
      %5019 = vmatpush1.bf16.msra.mxu0 %v1713
      %5020 = vmatprep.subr.bf16.mxu0 0
      %5021 = vmatpush1.bf16.msra.mxu0 %v1714
      %5022 = vmatprep.subr.bf16.mxu0 0
      %5023 = vmatpush1.bf16.msra.mxu0 %v1715
      %5024 = vmatprep.subr.bf16.mxu0 0
      %5025 = vmatpush1.bf16.msra.mxu0 %v1716
      %5026 = vmatprep.subr.bf16.mxu0 0
      %5027 = vmatpush1.bf16.msra.mxu0 %v1717
      %5028 = vmatprep.subr.bf16.mxu0 0
      %5029 = vmatpush1.bf16.msra.mxu0 %v1718
      %5030 = vmatprep.subr.bf16.mxu0 0
      %5031 = vmatpush1.bf16.msra.mxu0 %v1719
      %5032 = vmatprep.subr.bf16.mxu0 0
      %5033 = vmatpush1.bf16.msra.mxu0 %v1720
      %5034 = vmatprep.subr.bf16.mxu0 0
      %5035 = vmatpush1.bf16.msra.mxu0 %v1721
      %5036 = vmatprep.subr.bf16.mxu0 0
      %5037 = vmatpush1.bf16.msra.mxu0 %v1722
      %5038 = vmatprep.subr.bf16.mxu0 0
      %5039 = vmatpush1.bf16.msra.mxu0 %v1723
      %5040 = vmatprep.mubr.bf16.mxu0 %v4815
      %5041 = vmatmul.mubr.bf16.gmra.mrb[0].mxu0 %v4814
      %v5042 = vpop.f32.mrb[0].mxu0
      %v5043 = vadd.f32 %v4994, %v5042
      %v5044 = vpop.f32.mrb[0].mxu0
      %v5045 = vpop.f32.mrb[0].mxu0
      %v5046 = vadd.f32 %v4997, %v5045
      %v5047 = vpop.f32.mrb[0].mxu0
      %5048 = vmatprep.mubr.bf16.mxu0 %v4840
      %5049 = vmatmul.mubr.bf16.gmra.mrb[0].mxu0 %v4839
      %v5050 = vpop.f32.mrb[0].mxu0
      %v5051 = vadd.f32 %v5002, %v5050
      %v5052 = vpop.f32.mrb[0].mxu0
      %v5053 = vpop.f32.mrb[0].mxu0
      %v5054 = vadd.f32 %v5005, %v5053
      %v5055 = vpop.f32.mrb[0].mxu0
      %5056 = vdwg.mxu0
      %5057 = vmatprep.subr.bf16.mxu0 0
      %5058 = vmatpush1.bf16.msra.mxu0 %v1724
      %5059 = vmatprep.subr.bf16.mxu0 0
      %5060 = vmatpush1.bf16.msra.mxu0 %v1725
      %5061 = vmatprep.subr.bf16.mxu0 0
      %5062 = vmatpush1.bf16.msra.mxu0 %v1726
      %5063 = vmatprep.subr.bf16.mxu0 0
      %5064 = vmatpush1.bf16.msra.mxu0 %v1727
      %5065 = vmatprep.subr.bf16.mxu0 0
      %5066 = vmatpush1.bf16.msra.mxu0 %v1728
      %5067 = vmatprep.subr.bf16.mxu0 0
      %5068 = vmatpush1.bf16.msra.mxu0 %v1729
      %5069 = vmatprep.subr.bf16.mxu0 0
      %5070 = vmatpush1.bf16.msra.mxu0 %v1730
      %5071 = vmatprep.subr.bf16.mxu0 0
      %5072 = vmatpush1.bf16.msra.mxu0 %v1731
      %5073 = vmatprep.subr.bf16.mxu0 0
      %5074 = vmatpush1.bf16.msra.mxu0 %v1732
      %5075 = vmatprep.subr.bf16.mxu0 0
      %5076 = vmatpush1.bf16.msra.mxu0 %v1733
      %5077 = vmatprep.subr.bf16.mxu0 0
      %5078 = vmatpush1.bf16.msra.mxu0 %v1734
      %5079 = vmatprep.subr.bf16.mxu0 0
      %5080 = vmatpush1.bf16.msra.mxu0 %v1735
      %5081 = vmatprep.subr.bf16.mxu0 0
      %5082 = vmatpush1.bf16.msra.mxu0 %v1736
      %5083 = vmatprep.subr.bf16.mxu0 0
      %5084 = vmatpush1.bf16.msra.mxu0 %v1737
      %5085 = vmatprep.subr.bf16.mxu0 0
      %5086 = vmatpush1.bf16.msra.mxu0 %v1738
      %5087 = vmatprep.subr.bf16.mxu0 0
      %5088 = vmatpush1.bf16.msra.mxu0 %v1739
      %5089 = vmatprep.mubr.bf16.mxu0 %v4817
      %5090 = vmatmul.mubr.bf16.gmra.mrb[0].mxu0 %v4816
      %v5091 = vpop.f32.mrb[0].mxu0
      %v5092 = vadd.f32 %v5043, %v5091
      %v5093 = vpop.f32.mrb[0].mxu0
      %v5094 = vpop.f32.mrb[0].mxu0
      %v5095 = vadd.f32 %v5046, %v5094
      %v5096 = vpop.f32.mrb[0].mxu0
      %5097 = vmatprep.mubr.bf16.mxu0 %v4842
      %5098 = vmatmul.mubr.bf16.gmra.mrb[0].mxu0 %v4841
      %v5099 = vpop.f32.mrb[0].mxu0
      %v5100 = vadd.f32 %v5051, %v5099
      %v5101 = vpop.f32.mrb[0].mxu0
      %v5102 = vpop.f32.mrb[0].mxu0
      %v5103 = vadd.f32 %v5054, %v5102
      %v5104 = vpop.f32.mrb[0].mxu0
      %5105 = vdwg.mxu0
      %5106 = vmatprep.subr.bf16.mxu0 0
      %5107 = vmatpush1.bf16.msra.mxu0 %v1740
      %5108 = vmatprep.subr.bf16.mxu0 0
      %5109 = vmatpush1.bf16.msra.mxu0 %v1741
      %5110 = vmatprep.subr.bf16.mxu0 0
      %5111 = vmatpush1.bf16.msra.mxu0 %v1742
      %5112 = vmatprep.subr.bf16.mxu0 0
      %5113 = vmatpush1.bf16.msra.mxu0 %v1743
      %5114 = vmatprep.subr.bf16.mxu0 0
      %5115 = vmatpush1.bf16.msra.mxu0 %v1744
      %5116 = vmatprep.subr.bf16.mxu0 0
      %5117 = vmatpush1.bf16.msra.mxu0 %v1745
      %5118 = vmatprep.subr.bf16.mxu0 0
      %5119 = vmatpush1.bf16.msra.mxu0 %v1746
      %5120 = vmatprep.subr.bf16.mxu0 0
      %5121 = vmatpush1.bf16.msra.mxu0 %v1747
      %5122 = vmatprep.subr.bf16.mxu0 0
      %5123 = vmatpush1.bf16.msra.mxu0 %v1748
      %5124 = vmatprep.subr.bf16.mxu0 0
      %5125 = vmatpush1.bf16.msra.mxu0 %v1749
      %5126 = vmatprep.subr.bf16.mxu0 0
      %5127 = vmatpush1.bf16.msra.mxu0 %v1750
      %5128 = vmatprep.subr.bf16.mxu0 0
      %5129 = vmatpush1.bf16.msra.mxu0 %v1751
      %5130 = vmatprep.subr.bf16.mxu0 0
      %5131 = vmatpush1.bf16.msra.mxu0 %v1752
      %5132 = vmatprep.subr.bf16.mxu0 0
      %5133 = vmatpush1.bf16.msra.mxu0 %v1753
      %5134 = vmatprep.subr.bf16.mxu0 0
      %5135 = vmatpush1.bf16.msra.mxu0 %v1754
      %5136 = vmatprep.subr.bf16.mxu0 0
      %5137 = vmatpush1.bf16.msra.mxu0 %v1755
      %5138 = vmatprep.mubr.bf16.mxu0 %v4819
      %5139 = vmatmul.mubr.bf16.gmra.mrb[0].mxu0 %v4818
      %v5140 = vpop.f32.mrb[0].mxu0
      %v5141 = vadd.f32 %v5092, %v5140
      %v5142 = vpop.f32.mrb[0].mxu0
      %v5143 = vpop.f32.mrb[0].mxu0
      %v5144 = vadd.f32 %v5095, %v5143
      %v5145 = vpop.f32.mrb[0].mxu0
      %5146 = vmatprep.mubr.bf16.mxu0 %v4844
      %5147 = vmatmul.mubr.bf16.gmra.mrb[0].mxu0 %v4843
      %v5148 = vpop.f32.mrb[0].mxu0
      %v5149 = vadd.f32 %v5100, %v5148
      %v5150 = vpop.f32.mrb[0].mxu0
      %v5151 = vpop.f32.mrb[0].mxu0
      %v5152 = vadd.f32 %v5103, %v5151
      %v5153 = vpop.f32.mrb[0].mxu0
      %5154 = vdwg.mxu0
      %5155 = vmatprep.subr.bf16.mxu0 0
      %5156 = vmatpush1.bf16.msra.mxu0 %v1756
      %5157 = vmatprep.subr.bf16.mxu0 0
      %5158 = vmatpush1.bf16.msra.mxu0 %v1757
      %5159 = vmatprep.subr.bf16.mxu0 0
      %5160 = vmatpush1.bf16.msra.mxu0 %v1758
      %5161 = vmatprep.subr.bf16.mxu0 0
      %5162 = vmatpush1.bf16.msra.mxu0 %v1759
      %5163 = vmatprep.subr.bf16.mxu0 0
      %5164 = vmatpush1.bf16.msra.mxu0 %v1760
      %5165 = vmatprep.subr.bf16.mxu0 0
      %5166 = vmatpush1.bf16.msra.mxu0 %v1761
      %5167 = vmatprep.subr.bf16.mxu0 0
      %5168 = vmatpush1.bf16.msra.mxu0 %v1762
      %5169 = vmatprep.subr.bf16.mxu0 0
      %5170 = vmatpush1.bf16.msra.mxu0 %v1763
      %5171 = vmatprep.subr.bf16.mxu0 0
      %5172 = vmatpush1.bf16.msra.mxu0 %v1764
      %5173 = vmatprep.subr.bf16.mxu0 0
      %5174 = vmatpush1.bf16.msra.mxu0 %v1765
      %5175 = vmatprep.subr.bf16.mxu0 0
      %5176 = vmatpush1.bf16.msra.mxu0 %v1766
      %5177 = vmatprep.subr.bf16.mxu0 0
      %5178 = vmatpush1.bf16.msra.mxu0 %v1767
      %5179 = vmatprep.subr.bf16.mxu0 0
      %5180 = vmatpush1.bf16.msra.mxu0 %v1768
      %5181 = vmatprep.subr.bf16.mxu0 0
      %5182 = vmatpush1.bf16.msra.mxu0 %v1769
      %5183 = vmatprep.subr.bf16.mxu0 0
      %5184 = vmatpush1.bf16.msra.mxu0 %v1770
      %5185 = vmatprep.subr.bf16.mxu0 0
      %5186 = vmatpush1.bf16.msra.mxu0 %v1771
      %5187 = vmatprep.mubr.bf16.mxu0 %v4821
      %5188 = vmatmul.mubr.bf16.gmra.mrb[0].mxu0 %v4820
      %v5189 = vpop.f32.mrb[0].mxu0
      %v5190 = vadd.f32 %v5141, %v5189
      %v5191 = vpop.f32.mrb[0].mxu0
      %v5192 = vpop.f32.mrb[0].mxu0
      %v5193 = vadd.f32 %v5144, %v5192
      %v5194 = vpop.f32.mrb[0].mxu0
      %5195 = vmatprep.mubr.bf16.mxu0 %v4846
      %5196 = vmatmul.mubr.bf16.gmra.mrb[0].mxu0 %v4845
      %v5197 = vpop.f32.mrb[0].mxu0
      %v5198 = vadd.f32 %v5149, %v5197
      %v5199 = vpop.f32.mrb[0].mxu0
      %v5200 = vpop.f32.mrb[0].mxu0
      %v5201 = vadd.f32 %v5152, %v5200
      %v5202 = vpop.f32.mrb[0].mxu0
      %5203 = vdwg.mxu0
      %5204 = vmatprep.subr.bf16.mxu0 0
      %5205 = vmatpush1.bf16.msra.mxu0 %v1772
      %5206 = vmatprep.subr.bf16.mxu0 0
      %5207 = vmatpush1.bf16.msra.mxu0 %v1773
      %5208 = vmatprep.subr.bf16.mxu0 0
      %5209 = vmatpush1.bf16.msra.mxu0 %v1774
      %5210 = vmatprep.subr.bf16.mxu0 0
      %5211 = vmatpush1.bf16.msra.mxu0 %v1775
      %5212 = vmatprep.subr.bf16.mxu0 0
      %5213 = vmatpush1.bf16.msra.mxu0 %v1776
      %5214 = vmatprep.subr.bf16.mxu0 0
      %5215 = vmatpush1.bf16.msra.mxu0 %v1777
      %5216 = vmatprep.subr.bf16.mxu0 0
      %5217 = vmatpush1.bf16.msra.mxu0 %v1778
      %5218 = vmatprep.subr.bf16.mxu0 0
      %5219 = vmatpush1.bf16.msra.mxu0 %v1779
      %5220 = vmatprep.subr.bf16.mxu0 0
      %5221 = vmatpush1.bf16.msra.mxu0 %v1780
      %5222 = vmatprep.subr.bf16.mxu0 0
      %5223 = vmatpush1.bf16.msra.mxu0 %v1781
      %5224 = vmatprep.subr.bf16.mxu0 0
      %5225 = vmatpush1.bf16.msra.mxu0 %v1782
      %5226 = vmatprep.subr.bf16.mxu0 0
      %5227 = vmatpush1.bf16.msra.mxu0 %v1783
      %5228 = vmatprep.subr.bf16.mxu0 0
      %5229 = vmatpush1.bf16.msra.mxu0 %v1784
      %5230 = vmatprep.subr.bf16.mxu0 0
      %5231 = vmatpush1.bf16.msra.mxu0 %v1785
      %5232 = vmatprep.subr.bf16.mxu0 0
      %5233 = vmatpush1.bf16.msra.mxu0 %v1786
      %5234 = vmatprep.subr.bf16.mxu0 0
      %5235 = vmatpush1.bf16.msra.mxu0 %v1787
      %5236 = vmatprep.mubr.bf16.mxu0 %v4823
      %5237 = vmatmul.mubr.bf16.gmra.mrb[0].mxu0 %v4822
      %v5238 = vpop.f32.mrb[0].mxu0
      %v5239 = vadd.f32 %v5190, %v5238
      %v5240 = vpop.f32.mrb[0].mxu0
      %v5241 = vpop.f32.mrb[0].mxu0
      %v5242 = vadd.f32 %v5193, %v5241
      %v5243 = vpop.f32.mrb[0].mxu0
      %5244 = vmatprep.mubr.bf16.mxu0 %v4848
      %5245 = vmatmul.mubr.bf16.gmra.mrb[0].mxu0 %v4847
      %v5246 = vpop.f32.mrb[0].mxu0
      %v5247 = vadd.f32 %v5198, %v5246
      %v5248 = vpop.f32.mrb[0].mxu0
      %v5249 = vpop.f32.mrb[0].mxu0
      %v5250 = vadd.f32 %v5201, %v5249
      %v5251 = vpop.f32.mrb[0].mxu0
      %5252 = vdwg.mxu0
      %5253 = vmatprep.subr.bf16.mxu0 0
      %5254 = vmatpush1.bf16.msra.mxu0 %v1788
      %5255 = vmatprep.subr.bf16.mxu0 0
      %5256 = vmatpush1.bf16.msra.mxu0 %v1789
      %5257 = vmatprep.subr.bf16.mxu0 0
      %5258 = vmatpush1.bf16.msra.mxu0 %v1790
      %5259 = vmatprep.subr.bf16.mxu0 0
      %5260 = vmatpush1.bf16.msra.mxu0 %v1791
      %5261 = vmatprep.subr.bf16.mxu0 0
      %5262 = vmatpush1.bf16.msra.mxu0 %v1792
      %5263 = vmatprep.subr.bf16.mxu0 0
      %5264 = vmatpush1.bf16.msra.mxu0 %v1793
      %5265 = vmatprep.subr.bf16.mxu0 0
      %5266 = vmatpush1.bf16.msra.mxu0 %v1794
      %5267 = vmatprep.subr.bf16.mxu0 0
      %5268 = vmatpush1.bf16.msra.mxu0 %v1795
      %5269 = vmatprep.subr.bf16.mxu0 0
      %5270 = vmatpush1.bf16.msra.mxu0 %v1796
      %5271 = vmatprep.subr.bf16.mxu0 0
      %5272 = vmatpush1.bf16.msra.mxu0 %v1797
      %5273 = vmatprep.subr.bf16.mxu0 0
      %5274 = vmatpush1.bf16.msra.mxu0 %v1798
      %5275 = vmatprep.subr.bf16.mxu0 0
      %5276 = vmatpush1.bf16.msra.mxu0 %v1799
      %5277 = vmatprep.subr.bf16.mxu0 0
      %5278 = vmatpush1.bf16.msra.mxu0 %v1800
      %5279 = vmatprep.subr.bf16.mxu0 0
      %5280 = vmatpush1.bf16.msra.mxu0 %v1801
      %5281 = vmatprep.subr.bf16.mxu0 0
      %5282 = vmatpush1.bf16.msra.mxu0 %v1802
      %5283 = vmatprep.subr.bf16.mxu0 0
      %5284 = vmatpush1.bf16.msra.mxu0 %v1803
      %5285 = vmatprep.mubr.bf16.mxu0 %v4825
      %5286 = vmatmul.mubr.bf16.gmra.mrb[0].mxu0 %v4824
      %v5287 = vpop.f32.mrb[0].mxu0
      %v5288 = vadd.f32 %v5239, %v5287
      %v5289 = vpop.f32.mrb[0].mxu0
      %v5290 = vpop.f32.mrb[0].mxu0
      %v5291 = vadd.f32 %v5242, %v5290
      %v5292 = vpop.f32.mrb[0].mxu0
      %5293 = vmatprep.mubr.bf16.mxu0 %v4850
      %5294 = vmatmul.mubr.bf16.gmra.mrb[0].mxu0 %v4849
      %v5295 = vpop.f32.mrb[0].mxu0
      %v5296 = vadd.f32 %v5247, %v5295
      %v5297 = vpop.f32.mrb[0].mxu0
      %v5298 = vpop.f32.mrb[0].mxu0
      %v5299 = vadd.f32 %v5250, %v5298
      %v5300 = vpop.f32.mrb[0].mxu0
      %5301 = vdwg.mxu0
      %5302 = vmatprep.subr.bf16.mxu0 0
      %5303 = vmatpush1.bf16.msra.mxu0 %v1804
      %5304 = vmatprep.subr.bf16.mxu0 0
      %5305 = vmatpush1.bf16.msra.mxu0 %v1805
      %5306 = vmatprep.subr.bf16.mxu0 0
      %5307 = vmatpush1.bf16.msra.mxu0 %v1806
      %5308 = vmatprep.subr.bf16.mxu0 0
      %5309 = vmatpush1.bf16.msra.mxu0 %v1807
      %5310 = vmatprep.subr.bf16.mxu0 0
      %5311 = vmatpush1.bf16.msra.mxu0 %v1808
      %5312 = vmatprep.subr.bf16.mxu0 0
      %5313 = vmatpush1.bf16.msra.mxu0 %v1809
      %5314 = vmatprep.subr.bf16.mxu0 0
      %5315 = vmatpush1.bf16.msra.mxu0 %v1810
      %5316 = vmatprep.subr.bf16.mxu0 0
      %5317 = vmatpush1.bf16.msra.mxu0 %v1811
      %5318 = vmatprep.subr.bf16.mxu0 0
      %5319 = vmatpush1.bf16.msra.mxu0 %v1812
      %5320 = vmatprep.subr.bf16.mxu0 0
      %5321 = vmatpush1.bf16.msra.mxu0 %v1813
      %5322 = vmatprep.subr.bf16.mxu0 0
      %5323 = vmatpush1.bf16.msra.mxu0 %v1814
      %5324 = vmatprep.subr.bf16.mxu0 0
      %5325 = vmatpush1.bf16.msra.mxu0 %v1815
      %5326 = vmatprep.subr.bf16.mxu0 0
      %5327 = vmatpush1.bf16.msra.mxu0 %v1816
      %5328 = vmatprep.subr.bf16.mxu0 0
      %5329 = vmatpush1.bf16.msra.mxu0 %v1817
      %5330 = vmatprep.subr.bf16.mxu0 0
      %5331 = vmatpush1.bf16.msra.mxu0 %v1818
      %5332 = vmatprep.subr.bf16.mxu0 0
      %5333 = vmatpush1.bf16.msra.mxu0 %v1819
      %5334 = vmatprep.mubr.bf16.mxu0 %v4827
      %5335 = vmatmul.mubr.bf16.gmra.mrb[0].mxu0 %v4826
      %v5336 = vpop.f32.mrb[0].mxu0
      %v5337 = vadd.f32 %v5288, %v5336
      %v5338 = vpop.f32.mrb[0].mxu0
      %v5339 = vpop.f32.mrb[0].mxu0
      %v5340 = vadd.f32 %v5291, %v5339
      %v5341 = vpop.f32.mrb[0].mxu0
      %5342 = vmatprep.mubr.bf16.mxu0 %v4852
      %5343 = vmatmul.mubr.bf16.gmra.mrb[0].mxu0 %v4851
      %v5344 = vpop.f32.mrb[0].mxu0
      %v5345 = vadd.f32 %v5296, %v5344
      %v5346 = vpop.f32.mrb[0].mxu0
      %v5347 = vpop.f32.mrb[0].mxu0
      %v5348 = vadd.f32 %v5299, %v5347
      %v5349 = vpop.f32.mrb[0].mxu0
      %5350 = vdwg.mxu0
      %5351 = vmatprep.subr.bf16.mxu0 0
      %5352 = vmatpush1.bf16.msra.mxu0 %v1820
      %5353 = vmatprep.subr.bf16.mxu0 0
      %5354 = vmatpush1.bf16.msra.mxu0 %v1821
      %5355 = vmatprep.subr.bf16.mxu0 0
      %5356 = vmatpush1.bf16.msra.mxu0 %v1822
      %5357 = vmatprep.subr.bf16.mxu0 0
      %5358 = vmatpush1.bf16.msra.mxu0 %v1823
      %5359 = vmatprep.subr.bf16.mxu0 0
      %5360 = vmatpush1.bf16.msra.mxu0 %v1824
      %5361 = vmatprep.subr.bf16.mxu0 0
      %5362 = vmatpush1.bf16.msra.mxu0 %v1825
      %5363 = vmatprep.subr.bf16.mxu0 0
      %5364 = vmatpush1.bf16.msra.mxu0 %v1826
      %5365 = vmatprep.subr.bf16.mxu0 0
      %5366 = vmatpush1.bf16.msra.mxu0 %v1827
      %5367 = vmatprep.subr.bf16.mxu0 0
      %5368 = vmatpush1.bf16.msra.mxu0 %v1828
      %5369 = vmatprep.subr.bf16.mxu0 0
      %5370 = vmatpush1.bf16.msra.mxu0 %v1829
      %5371 = vmatprep.subr.bf16.mxu0 0
      %5372 = vmatpush1.bf16.msra.mxu0 %v1830
      %5373 = vmatprep.subr.bf16.mxu0 0
      %5374 = vmatpush1.bf16.msra.mxu0 %v1831
      %5375 = vmatprep.subr.bf16.mxu0 0
      %5376 = vmatpush1.bf16.msra.mxu0 %v1832
      %5377 = vmatprep.subr.bf16.mxu0 0
      %5378 = vmatpush1.bf16.msra.mxu0 %v1833
      %5379 = vmatprep.subr.bf16.mxu0 0
      %5380 = vmatpush1.bf16.msra.mxu0 %v1834
      %5381 = vmatprep.subr.bf16.mxu0 0
      %5382 = vmatpush1.bf16.msra.mxu0 %v1835
      %5383 = vmatprep.mubr.bf16.mxu0 %v4829
      %5384 = vmatmul.mubr.bf16.gmra.mrb[0].mxu0 %v4828
      %v5385 = vpop.f32.mrb[0].mxu0
      %v5386 = vadd.f32 %v5337, %v5385
      %v5387 = vpop.f32.mrb[0].mxu0
      %v5388 = vpop.f32.mrb[0].mxu0
      %v5389 = vadd.f32 %v5340, %v5388
      %v5390 = vpop.f32.mrb[0].mxu0
      %5391 = vmatprep.mubr.bf16.mxu0 %v4854
      %5392 = vmatmul.mubr.bf16.gmra.mrb[0].mxu0 %v4853
      %v5393 = vpop.f32.mrb[0].mxu0
      %v5394 = vadd.f32 %v5345, %v5393
      %v5395 = vpop.f32.mrb[0].mxu0
      %v5396 = vpop.f32.mrb[0].mxu0
      %v5397 = vadd.f32 %v5348, %v5396
      %v5398 = vpop.f32.mrb[0].mxu0
      %5399 = vdwg.mxu0
      %5400 = vmatprep.subr.bf16.mxu0 0
      %5401 = vmatpush1.bf16.msra.mxu0 %v1836
      %5402 = vmatprep.subr.bf16.mxu0 0
      %5403 = vmatpush1.bf16.msra.mxu0 %v1837
      %5404 = vmatprep.subr.bf16.mxu0 0
      %5405 = vmatpush1.bf16.msra.mxu0 %v1838
      %5406 = vmatprep.subr.bf16.mxu0 0
      %5407 = vmatpush1.bf16.msra.mxu0 %v1839
      %5408 = vmatprep.subr.bf16.mxu0 0
      %5409 = vmatpush1.bf16.msra.mxu0 %v1840
      %5410 = vmatprep.subr.bf16.mxu0 0
      %5411 = vmatpush1.bf16.msra.mxu0 %v1841
      %5412 = vmatprep.subr.bf16.mxu0 0
      %5413 = vmatpush1.bf16.msra.mxu0 %v1842
      %5414 = vmatprep.subr.bf16.mxu0 0
      %5415 = vmatpush1.bf16.msra.mxu0 %v1843
      %5416 = vmatprep.subr.bf16.mxu0 0
      %5417 = vmatpush1.bf16.msra.mxu0 %v1844
      %5418 = vmatprep.subr.bf16.mxu0 0
      %5419 = vmatpush1.bf16.msra.mxu0 %v1845
      %5420 = vmatprep.subr.bf16.mxu0 0
      %5421 = vmatpush1.bf16.msra.mxu0 %v1846
      %5422 = vmatprep.subr.bf16.mxu0 0
      %5423 = vmatpush1.bf16.msra.mxu0 %v1847
      %5424 = vmatprep.subr.bf16.mxu0 0
      %5425 = vmatpush1.bf16.msra.mxu0 %v1848
      %5426 = vmatprep.subr.bf16.mxu0 0
      %5427 = vmatpush1.bf16.msra.mxu0 %v1849
      %5428 = vmatprep.subr.bf16.mxu0 0
      %5429 = vmatpush1.bf16.msra.mxu0 %v1850
      %5430 = vmatprep.subr.bf16.mxu0 0
      %5431 = vmatpush1.bf16.msra.mxu0 %v1851
      %5432 = vmatprep.mubr.bf16.mxu0 %v4831
      %5433 = vmatmul.mubr.bf16.gmra.mrb[0].mxu0 %v4830
      %v5434 = vpop.f32.mrb[0].mxu0
      %v5435 = vadd.f32 %v5386, %v5434
      %v5436 = vpop.f32.mrb[0].mxu0
      %v5437 = vpop.f32.mrb[0].mxu0
      %v5438 = vadd.f32 %v5389, %v5437
      %v5439 = vpop.f32.mrb[0].mxu0
      %5440 = vmatprep.mubr.bf16.mxu0 %v4856
      %5441 = vmatmul.mubr.bf16.gmra.mrb[0].mxu0 %v4855
      %v5442 = vpop.f32.mrb[0].mxu0
      %v5443 = vadd.f32 %v5394, %v5442
      %v5444 = vpop.f32.mrb[0].mxu0
      %v5445 = vpop.f32.mrb[0].mxu0
      %v5446 = vadd.f32 %v5397, %v5445
      %v5447 = vpop.f32.mrb[0].mxu0
      %5448 = vdwg.mxu0
      %5449 = vmatprep.subr.bf16.mxu0 0
      %5450 = vmatpush1.bf16.msra.mxu0 %v1852
      %5451 = vmatprep.subr.bf16.mxu0 0
      %5452 = vmatpush1.bf16.msra.mxu0 %v1853
      %5453 = vmatprep.subr.bf16.mxu0 0
      %5454 = vmatpush1.bf16.msra.mxu0 %v1854
      %5455 = vmatprep.subr.bf16.mxu0 0
      %5456 = vmatpush1.bf16.msra.mxu0 %v1855
      %5457 = vmatprep.subr.bf16.mxu0 0
      %5458 = vmatpush1.bf16.msra.mxu0 %v1856
      %5459 = vmatprep.subr.bf16.mxu0 0
      %5460 = vmatpush1.bf16.msra.mxu0 %v1857
      %5461 = vmatprep.subr.bf16.mxu0 0
      %5462 = vmatpush1.bf16.msra.mxu0 %v1858
      %5463 = vmatprep.subr.bf16.mxu0 0
      %5464 = vmatpush1.bf16.msra.mxu0 %v1859
      %5465 = vmatprep.subr.bf16.mxu0 0
      %5466 = vmatpush1.bf16.msra.mxu0 %v1860
      %5467 = vmatprep.subr.bf16.mxu0 0
      %5468 = vmatpush1.bf16.msra.mxu0 %v1861
      %5469 = vmatprep.subr.bf16.mxu0 0
      %5470 = vmatpush1.bf16.msra.mxu0 %v1862
      %5471 = vmatprep.subr.bf16.mxu0 0
      %5472 = vmatpush1.bf16.msra.mxu0 %v1863
      %5473 = vmatprep.subr.bf16.mxu0 0
      %5474 = vmatpush1.bf16.msra.mxu0 %v1864
      %5475 = vmatprep.subr.bf16.mxu0 0
      %5476 = vmatpush1.bf16.msra.mxu0 %v1865
      %5477 = vmatprep.subr.bf16.mxu0 0
      %5478 = vmatpush1.bf16.msra.mxu0 %v1866
      %5479 = vmatprep.subr.bf16.mxu0 0
      %5480 = vmatpush1.bf16.msra.mxu0 %v1867
      %5481 = vmatprep.mubr.bf16.mxu0 %v4833
      %5482 = vmatmul.mubr.bf16.gmra.mrb[0].mxu0 %v4832
      %v5483 = vpop.f32.mrb[0].mxu0
      %v5484 = vadd.f32 %v5435, %v5483
      %v5485 = vpop.f32.mrb[0].mxu0
      %v5486 = vpop.f32.mrb[0].mxu0
      %v5487 = vadd.f32 %v5438, %v5486
      %v5488 = vpop.f32.mrb[0].mxu0
      %5489 = vmatprep.mubr.bf16.mxu0 %v4858
      %5490 = vmatmul.mubr.bf16.gmra.mrb[0].mxu0 %v4857
      %v5491 = vpop.f32.mrb[0].mxu0
      %v5492 = vadd.f32 %v5443, %v5491
      %v5493 = vpop.f32.mrb[0].mxu0
      %v5494 = vpop.f32.mrb[0].mxu0
      %v5495 = vadd.f32 %v5446, %v5494
      %v5496 = vpop.f32.mrb[0].mxu0
      %5497 = vdwg.mxu0
      %5498 = vmatprep.subr.bf16.mxu0 0
      %5499 = vmatpush1.bf16.msra.mxu0 %v1868
      %5500 = vmatprep.subr.bf16.mxu0 0
      %5501 = vmatpush1.bf16.msra.mxu0 %v1869
      %5502 = vmatprep.subr.bf16.mxu0 0
      %5503 = vmatpush1.bf16.msra.mxu0 %v1870
      %5504 = vmatprep.subr.bf16.mxu0 0
      %5505 = vmatpush1.bf16.msra.mxu0 %v1871
      %5506 = vmatprep.subr.bf16.mxu0 0
      %5507 = vmatpush1.bf16.msra.mxu0 %v1872
      %5508 = vmatprep.subr.bf16.mxu0 0
      %5509 = vmatpush1.bf16.msra.mxu0 %v1873
      %5510 = vmatprep.subr.bf16.mxu0 0
      %5511 = vmatpush1.bf16.msra.mxu0 %v1874
      %5512 = vmatprep.subr.bf16.mxu0 0
      %5513 = vmatpush1.bf16.msra.mxu0 %v1875
      %5514 = vmatprep.subr.bf16.mxu0 0
      %5515 = vmatpush1.bf16.msra.mxu0 0
      %5516 = vmatprep.subr.bf16.mxu0 0
      %5517 = vmatpush1.bf16.msra.mxu0 0
      %5518 = vmatprep.subr.bf16.mxu0 0
      %5519 = vmatpush1.bf16.msra.mxu0 0
      %5520 = vmatprep.subr.bf16.mxu0 0
      %5521 = vmatpush1.bf16.msra.mxu0 0
      %5522 = vmatprep.subr.bf16.mxu0 0
      %5523 = vmatpush1.bf16.msra.mxu0 0
      %5524 = vmatprep.subr.bf16.mxu0 0
      %5525 = vmatpush1.bf16.msra.mxu0 0
      %5526 = vmatprep.subr.bf16.mxu0 0
      %5527 = vmatpush1.bf16.msra.mxu0 0
      %5528 = vmatprep.subr.bf16.mxu0 0
      %5529 = vmatpush1.bf16.msra.mxu0 0
      %5530 = vmatprep.mubr.bf16.mxu0 0
      %5531 = vmatmul.mubr.bf16.gmra.mrb[0].mxu0 %v4834
      %v5532 = vpop.f32.mrb[0].mxu0
      %v5533 = vadd.f32 %v5484, %v5532
      %v5534 = vpop.f32.mrb[0].mxu0
      %v5535 = vpop.f32.mrb[0].mxu0
      %v5536 = vadd.f32 %v5487, %v5535
      %v5537 = vpop.f32.mrb[0].mxu0
      %5538 = vmatprep.mubr.bf16.mxu0 0
      %5539 = vmatmul.mubr.bf16.gmra.mrb[0].mxu0 %v4859
      %v5540 = vpop.f32.mrb[0].mxu0
      %v5541 = vadd.f32 %v5492, %v5540
      %v5542 = vpop.f32.mrb[0].mxu0
      %v5543 = vpop.f32.mrb[0].mxu0
      %v5544 = vadd.f32 %v5495, %v5543
      %v5545 = vpop.f32.mrb[0].mxu0
      %5546 = vdwg.mxu0
      %v5547 = vmax.f32 %v4601, %v5533
      %v5548 = vmax.f32 %v4602, %v5536
      %v5549 = vmax.f32 %v4603, %v5541
      %v5550 = vmax.f32 %v4604, %v5544
      %v5551 = vld [vmem:[%s2] sm:$0x1]
      %v5553 = vlaneseq
      %v5554 = vshrl.u32 %v5553, 7
      %v5555 = vsub.s32 0, %v5554
      %v5556 = vrot.slane %v5551, %v5555
      %v5558 = vadd.f32 %v5547, %v5556
      %v5559 = vadd.f32 %v5548, %v5556
      %v5560 = vadd.f32 %v5549, %v5556
      %v5561 = vadd.f32 %v5550, %v5556
      %v5562 = vmax.f32 %v5558, 0.0
      %v5563 = vmax.f32 %v5559, 0.0
      %v5564 = vmax.f32 %v5560, 0.0
      %v5565 = vmax.f32 %v5561, 0.0
      %v5566 = vpack.c.bf16 %v5563, %v5562
      %v5567 = vpack.c.bf16 %v5565, %v5564
      %v5570 = vunpack.c.l.b16 %v5566
      %v5571 = vunpack.c.h.b16 %v5566
      %v5572 = vunpack.c.l.b16 %v5567
      %v5573 = vunpack.c.h.b16 %v5567
      %v5574 = vpack.c.b16 %v5570, %v5570
      %v5575 = vpack.c.b16 %v5571, %v5571
      %v5576 = vpack.c.b16 %v5572, %v5572
      %v5577 = vpack.c.b16 %v5573, %v5573
      %5582 = vst [vmem:[%s170] sm:$0xf] %v5574
      %5583 = vst [vmem:[%s170 + $0x4] sm:$0xf] %v5575
      %5584 = vst [vmem:[%s170 + $0x8] sm:$0xf] %v5576
      %vm5585 = vcmask 1040384
      %vm5586 = vsmask.f32 256
      %vm5587 = vmand %vm5585, %vm5586
      %v5588 = vld [vmem:[%s170 + $0xc] sm:$0x1]
      %v5589 = vsel %vm5587, %v5577, %v5588
      %5590 = vst [vmem:[%s170 + $0xc] sm:$0x1] %v5589
      %p5591 = scmp.lt.s32.totalorder %s14, 1
      %s5592 = scalar_select %p5591, %s14, 1
      %s5593 = smul.addr %s5592, 4
      %s5594 = smul.addr %s5593, 4
      %s5595 = scalar_lea.vmem %s3, %s5594
      // Predicated region
      $region33: #{lenet5_tt2_forward.4} parent=31 // pred_check
        %p5596 = pneg %p100
      $region34: #{lenet5_tt2_forward.4} parent=31 // pred_check_branch
        %5598 = sbr.rel (%p5596) target = $region36
      $region35: #{lenet5_tt2_forward.4} parent=31 // pred_region
        _
      $region36: #{lenet5_tt2_forward.4} parent=31 // pred_fallthru
        _
    $region32: #{lenet5_tt2_forward.4} parent=5 // pred_fallthru
      _
    %p5599 = scmp.le.s32.totalorder 2, %s9
    // Predicated region
    $region37: #{lenet5_tt2_forward.4} parent=5 // pred_check
      %p5600 = pneg %p5599
    $region38: #{lenet5_tt2_forward.4} parent=5 // pred_check_branch
      %5602 = sbr.rel (%p5600) target = $region40
    $region39: #{lenet5_tt2_forward.4} parent=5 // pred_region
      %s5603 = ssub.s32 %s9, 2
      // Predicated region
      $region41: #{lenet5_tt2_forward.4} parent=39 // pred_check
        %p5604 = pneg %p106
      $region42: #{lenet5_tt2_forward.4} parent=39 // pred_check_branch
        %5606 = sbr.rel (%p5604) target = $region44
      $region43: #{lenet5_tt2_forward.4} parent=39 // pred_region
        %p5607 = scmp.lt.s32.totalorder %s15, 1
        %s5608 = scalar_select %p5607, %s15, 1
        %s5609 = smul.addr %s5608, 4
        %s5610 = smul.addr %s5609, 4
        %s5611 = scalar_lea.vmem %s3, %s5610
      $region44: #{lenet5_tt2_forward.4} parent=39 // pred_fallthru
        _
    $region40: #{lenet5_tt2_forward.4} parent=5 // pred_fallthru
      _
  $region6: #{lenet5_tt2_forward.4} parent=0 // loop_footer
    %s13 = sadd.s32 1, %s9
  $region7: #{lenet5_tt2_forward.4} parent=0 // loop_footer_branch
    %8 = sbr.rel target = $region3
  $region8: #{lenet5_tt2_forward.4} parent=0 // loop_exit
    _

</llo_original>
